<compile_context>
chip_gen: v7x
topology: tpu7x:2x2x1
jax: 0.10.0
libtpu: 0.0.40
codegen_flags: <defaults>
</compile_context>

<pallas_src>
import jax
import jax.numpy as jnp
from jax.experimental import pallas as pl
from jax.experimental.pallas import tpu as pltpu

# Hyperparameters implied by the module / its filename.
IN_DIM = 1       # c
OUT_DIM = 1
T_IN = 70        # timestep_in  (forward slices x[:, 0:70])
T_OUT = 1        # timestep_out (must be 1 for the final reshape in forward)
HIDDEN = 8       # hidden_layer (hc8)
NUM_LAYERS = 1   # TODO(synk): multi-layer GRU not implemented (num_layers=1 assumed)

assert T_OUT == 1, "on-the-fly fc1 accumulation in the kernel requires T_OUT == 1"


def gru_kernel(x_ref, xr_ref, h0_ref, wihb_ref, biasb_ref, whh_ref, bhn_ref,
               w1_ref, b1_ref, w2t_ref, b2_ref, out_ref, gi_ref):
    # x_ref   : (T, B, 1) VMEM     xr_ref : (B, 1) VMEM   h0_ref : (B, H) VMEM
    # wihb_ref: (1, 1, 3H) VMEM    biasb_ref: (1, 1, 3H) VMEM
    # whh_ref : (H, 3H) VMEM       bhn_ref: (1, H) VMEM
    # w1_ref  : (T,) SMEM          b1_ref : (1,) SMEM
    # w2t_ref : (H, OUT) VMEM      b2_ref : (1, OUT) VMEM
    # out_ref : (B, OUT) VMEM      gi_ref : (T, B, 3H) VMEM scratch
    T = x_ref.shape[0]
    B, H = h0_ref.shape
    H2 = 2 * H

    # Hoisted input projections + folded r/z biases for every timestep at once
    # (C == 1 -> broadcast multiply, no matmul):
    #   gi[t] = x_t * [w_ir|w_iz|w_in] + [b_ir+b_hr | b_iz+b_hz | b_in]
    gi_ref[...] = x_ref[...] * wihb_ref[...] + biasb_ref[...]          # (T, B, 3H)

    whh_f = whh_ref[...]                                               # (H, 3H)
    bhn = bhn_ref[...]                                                 # (1, H)

    h = h0_ref[...]                                                    # (B, H)
    acc = jnp.zeros((B, H), jnp.float32)

    # Fully-unrolled recurrence (T static, tiny body) so the scheduler can
    # overlap the MXU pop of step t with the VPU/EUP tail of step t-1.
    for t in range(T):
        gi = gi_ref[t]                                                 # (B, 3H)
        gh = jnp.dot(h, whh_f, preferred_element_type=jnp.float32)     # (B, 3H)
        s = gi + gh
        rz = jax.nn.sigmoid(s[:, :H2])                                 # one EUP call
        r = rz[:, :H]
        z = rz[:, H:]
        n = jnp.tanh(gi[:, H2:] + r * (gh[:, H2:] + bhn))              # (B, H)
        h = n + z * (h - n)                                            # (1-z)*n + z*h
        # fc1 (Linear over the time axis, T_OUT == 1), scalar weight from SMEM:
        acc = acc + h * w1_ref[t]                                      # (B, H)

    # fc1 bias (scalar), then fc2: (B, H) @ (H, OUT) + b2, then residual term.
    fc1_out = acc + b1_ref[0]                                          # (B, H)
    out2 = jnp.dot(fc1_out, w2t_ref[...],
                   preferred_element_type=jnp.float32) + b2_ref[...]   # (B, OUT)
    out_ref[...] = out2 - 5.0 * xr_ref[...]


def gru_forward(x, params, h0):
    """x: (b, T_total, n, c) float32; h0: (b*n, HIDDEN) (torch h_0 squeezed)."""
    b, T_total, n, c = x.shape
    assert c == IN_DIM and T_total > T_IN
    assert n == 1  # torch reshape (b, 1, c) of x_r requires n == 1

    x_r = x[:, -1, :, :].reshape(b * n, c)              # (B, 1)
    xs = x[:, :T_IN, :, :]                              # (b, T, n, c)
    xs = jnp.transpose(xs, (0, 2, 1, 3)).reshape(b * n, T_IN, c)
    xs_tm = jnp.transpose(xs, (1, 0, 2))                # (T, B, c) time-major

    B = b * n
    B_pad = max(8, ((B + 7) // 8) * 8)                  # pad batch to sublane multiple
    pad = B_pad - B
    if pad:
        xs_tm = jnp.pad(xs_tm, ((0, 0), (0, pad), (0, 0)))
        x_r = jnp.pad(x_r, ((0, pad), (0, 0)))
        h0 = jnp.pad(h0, ((0, pad), (0, 0)))

    vmem = pl.BlockSpec(memory_space=pltpu.MemorySpace.VMEM)
    smem = pl.BlockSpec(memory_space=pltpu.MemorySpace.SMEM)

    out = pl.pallas_call(
        gru_kernel,
        out_shape=jax.ShapeDtypeStruct((B_pad, OUT_DIM), jnp.float32),
        in_specs=[vmem, vmem, vmem,          # x, x_r, h0
                  vmem, vmem, vmem, vmem,    # wih_b, bias_b, whh_f, bhn
                  smem, smem,                # w1 (T,), b1 (1,)
                  vmem, vmem],               # w2t, b2
        out_specs=vmem,
        scratch_shapes=[pltpu.VMEM((T_IN, B_pad, 3 * HIDDEN), jnp.float32)],
    )(xs_tm, x_r, h0,
      params["wih_b"], params["bias_b"], params["whh_f"], params["bhn"],
      params["w1"], params["b1"], params["w2t"], params["b2"])

    out = out[:B].reshape(b, n, 1, 1)                   # (b, n, 1, 1)  (T_OUT*OUT == 1)
    out = jnp.transpose(out, (0, 2, 1, 3))              # (b, 1, n, 1)
    return out


def init_params(key):
    """Deterministic PyTorch-style uniform init, then fuse for the kernel."""
    ks = jax.random.split(key, 8)
    kg = 1.0 / jnp.sqrt(HIDDEN)
    wih = jax.random.uniform(ks[0], (3, IN_DIM, HIDDEN), jnp.float32, -kg, kg)
    whh = jax.random.uniform(ks[1], (3, HIDDEN, HIDDEN), jnp.float32, -kg, kg)
    bih = jax.random.uniform(ks[2], (3, 1, HIDDEN), jnp.float32, -kg, kg)
    bhh = jax.random.uniform(ks[3], (3, 1, HIDDEN), jnp.float32, -kg, kg)
    k1 = 1.0 / jnp.sqrt(T_IN)
    w1 = jax.random.uniform(ks[4], (T_OUT, T_IN), jnp.float32, -k1, k1)     # fc1.weight
    b1 = jax.random.uniform(ks[5], (T_OUT,), jnp.float32, -k1, k1)          # fc1.bias
    k2 = 1.0 / jnp.sqrt(HIDDEN)
    w2 = jax.random.uniform(ks[6], (OUT_DIM, HIDDEN), jnp.float32, -k2, k2)  # fc2.weight
    b2 = jax.random.uniform(ks[7], (OUT_DIM,), jnp.float32, -k2, k2)         # fc2.bias

    H3 = 3 * HIDDEN
    # Fused input-to-hidden row (C == 1): gate order [r, z, n].
    wih_b = jnp.concatenate([wih[0], wih[1], wih[2]], axis=-1).reshape(1, 1, H3)
    # Folded biases: r -> b_ir + b_hr, z -> b_iz + b_hz, n -> b_in only.
    bias_b = jnp.concatenate([bih[0] + bhh[0], bih[1] + bhh[1], bih[2]],
                             axis=-1).reshape(1, 1, H3)
    whh_f = jnp.concatenate([whh[0], whh[1], whh[2]], axis=-1)   # (H, 3H)
    bhn = bhh[2]                                                 # (1, H)

    return dict(wih_b=wih_b, bias_b=bias_b, whh_f=whh_f, bhn=bhn,
                w1=w1.reshape(T_IN), b1=b1.reshape(1),
                w2t=jnp.transpose(w2), b2=b2.reshape(1, OUT_DIM))


if __name__ == "__main__":
    key = jax.random.PRNGKey(0)
    kx, kh, kp = jax.random.split(key, 3)

    b, T_total, n, c = 2, 71, 1, 1             # small shapes consistent with forward
    x = jax.random.normal(kx, (b, T_total, n, c), jnp.float32)
    # torch.randn h_0 of shape (num_layers, batch, hidden) -> deterministic here,
    # already squeezed to (batch, hidden) since num_layers == 1.
    h0 = jax.random.normal(kh, (b * n, HIDDEN), jnp.float32)
    params = init_params(kp)

    out = gru_forward(x, params, h0)
    jax.block_until_ready(out)
    assert out.shape == (b, 1, n, 1), out.shape
    print("KERNEL_OK")
</pallas_src>

<mosaic_0001>
module attributes {stable_mosaic.version = 11 : i64} {
  func.func @gru_kernel(%arg0: memref<70x8x1xf32, #tpu.memory_space<vmem>>, %arg1: memref<8x1xf32, #tpu.memory_space<vmem>>, %arg2: memref<8x8xf32, #tpu.memory_space<vmem>>, %arg3: memref<1x1x24xf32, #tpu.memory_space<vmem>>, %arg4: memref<1x1x24xf32, #tpu.memory_space<vmem>>, %arg5: memref<8x24xf32, #tpu.memory_space<vmem>>, %arg6: memref<1x8xf32, #tpu.memory_space<vmem>>, %arg7: memref<70xf32, #tpu.memory_space<smem>>, %arg8: memref<1xf32, #tpu.memory_space<smem>>, %arg9: memref<8x1xf32, #tpu.memory_space<vmem>>, %arg10: memref<1x1xf32, #tpu.memory_space<vmem>>, %arg11: memref<8x1xf32, #tpu.memory_space<vmem>>, %arg12: memref<70x8x24xf32, #tpu.memory_space<vmem>>) attributes {dimension_semantics = [], scalar_prefetch = 0 : i64, scratch_operands = 1 : i64, tpu.core_type = #tpu.core_type<tc>} {
    %c0 = arith.constant 0 : index
    %c0_0 = arith.constant 0 : index
    %c0_1 = arith.constant 0 : index
    %0 = vector.load %arg0[%c0, %c0_0, %c0_1] : memref<70x8x1xf32, #tpu.memory_space<vmem>>, vector<70x8x1xf32>
    %c0_2 = arith.constant 0 : index
    %c0_3 = arith.constant 0 : index
    %c0_4 = arith.constant 0 : index
    %1 = vector.load %arg3[%c0_2, %c0_3, %c0_4] : memref<1x1x24xf32, #tpu.memory_space<vmem>>, vector<1x1x24xf32>
    %2 = vector.broadcast %0 : vector<70x8x1xf32> to vector<70x8x24xf32>
    %3 = vector.broadcast %1 : vector<1x1x24xf32> to vector<70x8x24xf32>
    %4 = arith.mulf %2, %3 : vector<70x8x24xf32>
    %c0_5 = arith.constant 0 : index
    %c0_6 = arith.constant 0 : index
    %c0_7 = arith.constant 0 : index
    %5 = vector.load %arg4[%c0_5, %c0_6, %c0_7] : memref<1x1x24xf32, #tpu.memory_space<vmem>>, vector<1x1x24xf32>
    %6 = vector.broadcast %5 : vector<1x1x24xf32> to vector<70x8x24xf32>
    %7 = arith.addf %4, %6 : vector<70x8x24xf32>
    %c0_8 = arith.constant 0 : index
    %c0_9 = arith.constant 0 : index
    %c0_10 = arith.constant 0 : index
    %8 = vector.load %arg12[%c0_8, %c0_9, %c0_10] : memref<70x8x24xf32, #tpu.memory_space<vmem>>, vector<70x8x24xf32>
    tpu.vector_store %arg12[%c0_8, %c0_9, %c0_10], %7 {strides = array<i32>} : memref<70x8x24xf32, #tpu.memory_space<vmem>>, vector<70x8x24xf32>,
    %c0_11 = arith.constant 0 : index
    %c0_12 = arith.constant 0 : index
    %9 = vector.load %arg5[%c0_11, %c0_12] : memref<8x24xf32, #tpu.memory_space<vmem>>, vector<8x24xf32>
    %c0_13 = arith.constant 0 : index
    %c0_14 = arith.constant 0 : index
    %10 = vector.load %arg6[%c0_13, %c0_14] : memref<1x8xf32, #tpu.memory_space<vmem>>, vector<1x8xf32>
    %c0_15 = arith.constant 0 : index
    %c0_16 = arith.constant 0 : index
    %11 = vector.load %arg2[%c0_15, %c0_16] : memref<8x8xf32, #tpu.memory_space<vmem>>, vector<8x8xf32>
    %cst = arith.constant 0.000000e+00 : f32
    %12 = vector.broadcast %cst : f32 to vector<8x8xf32>
    %c0_17 = arith.constant 0 : index
    %c0_18 = arith.constant 0 : index
    %c0_19 = arith.constant 0 : index
    %13 = vector.load %arg12[%c0_17, %c0_18, %c0_19] : memref<70x8x24xf32, #tpu.memory_space<vmem>>, vector<1x8x24xf32>
    %14 = vector.shape_cast %13 : vector<1x8x24xf32> to vector<8x24xf32>
    %cst_20 = arith.constant dense<0.000000e+00> : vector<8x24xf32>
    %15 = tpu.matmul %11, %9, %cst_20 {dimension_numbers = #tpu.dot_dimension_numbers<[1], [0], [0], [1], [0, 0, 1, 1], [], []>} : vector<8x8xf32>, vector<8x24xf32>, vector<8x24xf32> -> vector<8x24xf32>
    %16 = arith.addf %14, %15 : vector<8x24xf32>
    %17 = vector.extract_strided_slice %16 {offsets = [0, 0], sizes = [8, 16], strides = [1, 1]} : vector<8x24xf32> to vector<8x16xf32>
    %18 = arith.negf %17 : vector<8x16xf32>
    %19 = math.exp %18 : vector<8x16xf32>
    %cst_21 = arith.constant 1.000000e+00 : f32
    %20 = vector.broadcast %cst_21 : f32 to vector<8x16xf32>
    %21 = arith.addf %20, %19 : vector<8x16xf32>
    %22 = arith.divf %20, %21 : vector<8x16xf32>
    %23 = vector.extract_strided_slice %22 {offsets = [0, 0], sizes = [8, 8], strides = [1, 1]} : vector<8x16xf32> to vector<8x8xf32>
    %24 = vector.extract_strided_slice %22 {offsets = [0, 8], sizes = [8, 8], strides = [1, 1]} : vector<8x16xf32> to vector<8x8xf32>
    %25 = vector.extract_strided_slice %14 {offsets = [0, 16], sizes = [8, 8], strides = [1, 1]} : vector<8x24xf32> to vector<8x8xf32>
    %26 = vector.extract_strided_slice %15 {offsets = [0, 16], sizes = [8, 8], strides = [1, 1]} : vector<8x24xf32> to vector<8x8xf32>
    %27 = vector.broadcast %10 : vector<1x8xf32> to vector<8x8xf32>
    %28 = arith.addf %26, %27 : vector<8x8xf32>
    %29 = arith.mulf %23, %28 : vector<8x8xf32>
    %30 = arith.addf %25, %29 : vector<8x8xf32>
    %31 = math.tanh %30 : vector<8x8xf32>
    %32 = arith.subf %11, %31 : vector<8x8xf32>
    %33 = arith.mulf %24, %32 : vector<8x8xf32>
    %34 = arith.addf %31, %33 : vector<8x8xf32>
    %c0_22 = arith.constant 0 : index
    %35 = memref.load %arg7[%c0_22] : memref<70xf32, #tpu.memory_space<smem>>
    %36 = vector.broadcast %35 : f32 to vector<8x8xf32>
    %37 = arith.mulf %34, %36 : vector<8x8xf32>
    %38 = arith.addf %12, %37 : vector<8x8xf32>
    %c1 = arith.constant 1 : index
    %c0_23 = arith.constant 0 : index
    %c0_24 = arith.constant 0 : index
    %39 = vector.load %arg12[%c1, %c0_23, %c0_24] : memref<70x8x24xf32, #tpu.memory_space<vmem>>, vector<1x8x24xf32>
    %40 = vector.shape_cast %39 : vector<1x8x24xf32> to vector<8x24xf32>
    %cst_25 = arith.constant dense<0.000000e+00> : vector<8x24xf32>
    %41 = tpu.matmul %34, %9, %cst_25 {dimension_numbers = #tpu.dot_dimension_numbers<[1], [0], [0], [1], [0, 0, 1, 1], [], []>} : vector<8x8xf32>, vector<8x24xf32>, vector<8x24xf32> -> vector<8x24xf32>
    %42 = arith.addf %40, %41 : vector<8x24xf32>
    %43 = vector.extract_strided_slice %42 {offsets = [0, 0], sizes = [8, 16], strides = [1, 1]} : vector<8x24xf32> to vector<8x16xf32>
    %44 = arith.negf %43 : vector<8x16xf32>
    %45 = math.exp %44 : vector<8x16xf32>
    %cst_26 = arith.constant 1.000000e+00 : f32
    %46 = vector.broadcast %cst_26 : f32 to vector<8x16xf32>
    %47 = arith.addf %46, %45 : vector<8x16xf32>
    %48 = arith.divf %46, %47 : vector<8x16xf32>
    %49 = vector.extract_strided_slice %48 {offsets = [0, 0], sizes = [8, 8], strides = [1, 1]} : vector<8x16xf32> to vector<8x8xf32>
    %50 = vector.extract_strided_slice %48 {offsets = [0, 8], sizes = [8, 8], strides = [1, 1]} : vector<8x16xf32> to vector<8x8xf32>
    %51 = vector.extract_strided_slice %40 {offsets = [0, 16], sizes = [8, 8], strides = [1, 1]} : vector<8x24xf32> to vector<8x8xf32>
    %52 = vector.extract_strided_slice %41 {offsets = [0, 16], sizes = [8, 8], strides = [1, 1]} : vector<8x24xf32> to vector<8x8xf32>
    %53 = vector.broadcast %10 : vector<1x8xf32> to vector<8x8xf32>
    %54 = arith.addf %52, %53 : vector<8x8xf32>
    %55 = arith.mulf %49, %54 : vector<8x8xf32>
    %56 = arith.addf %51, %55 : vector<8x8xf32>
    %57 = math.tanh %56 : vector<8x8xf32>
    %58 = arith.subf %34, %57 : vector<8x8xf32>
    %59 = arith.mulf %50, %58 : vector<8x8xf32>
    %60 = arith.addf %57, %59 : vector<8x8xf32>
    %c1_27 = arith.constant 1 : index
    %61 = memref.load %arg7[%c1_27] : memref<70xf32, #tpu.memory_space<smem>>
    %62 = vector.broadcast %61 : f32 to vector<8x8xf32>
    %63 = arith.mulf %60, %62 : vector<8x8xf32>
    %64 = arith.addf %38, %63 : vector<8x8xf32>
    %c2 = arith.constant 2 : index
    %c0_28 = arith.constant 0 : index
    %c0_29 = arith.constant 0 : index
    %65 = vector.load %arg12[%c2, %c0_28, %c0_29] : memref<70x8x24xf32, #tpu.memory_space<vmem>>, vector<1x8x24xf32>
    %66 = vector.shape_cast %65 : vector<1x8x24xf32> to vector<8x24xf32>
    %cst_30 = arith.constant dense<0.000000e+00> : vector<8x24xf32>
    %67 = tpu.matmul %60, %9, %cst_30 {dimension_numbers = #tpu.dot_dimension_numbers<[1], [0], [0], [1], [0, 0, 1, 1], [], []>} : vector<8x8xf32>, vector<8x24xf32>, vector<8x24xf32> -> vector<8x24xf32>
    %68 = arith.addf %66, %67 : vector<8x24xf32>
    %69 = vector.extract_strided_slice %68 {offsets = [0, 0], sizes = [8, 16], strides = [1, 1]} : vector<8x24xf32> to vector<8x16xf32>
    %70 = arith.negf %69 : vector<8x16xf32>
    %71 = math.exp %70 : vector<8x16xf32>
    %cst_31 = arith.constant 1.000000e+00 : f32
    %72 = vector.broadcast %cst_31 : f32 to vector<8x16xf32>
    %73 = arith.addf %72, %71 : vector<8x16xf32>
    %74 = arith.divf %72, %73 : vector<8x16xf32>
    %75 = vector.extract_strided_slice %74 {offsets = [0, 0], sizes = [8, 8], strides = [1, 1]} : vector<8x16xf32> to vector<8x8xf32>
    %76 = vector.extract_strided_slice %74 {offsets = [0, 8], sizes = [8, 8], strides = [1, 1]} : vector<8x16xf32> to vector<8x8xf32>
    %77 = vector.extract_strided_slice %66 {offsets = [0, 16], sizes = [8, 8], strides = [1, 1]} : vector<8x24xf32> to vector<8x8xf32>
    %78 = vector.extract_strided_slice %67 {offsets = [0, 16], sizes = [8, 8], strides = [1, 1]} : vector<8x24xf32> to vector<8x8xf32>
    %79 = vector.broadcast %10 : vector<1x8xf32> to vector<8x8xf32>
    %80 = arith.addf %78, %79 : vector<8x8xf32>
    %81 = arith.mulf %75, %80 : vector<8x8xf32>
    %82 = arith.addf %77, %81 : vector<8x8xf32>
    %83 = math.tanh %82 : vector<8x8xf32>
    %84 = arith.subf %60, %83 : vector<8x8xf32>
    %85 = arith.mulf %76, %84 : vector<8x8xf32>
    %86 = arith.addf %83, %85 : vector<8x8xf32>
    %c2_32 = arith.constant 2 : index
    %87 = memref.load %arg7[%c2_32] : memref<70xf32, #tpu.memory_space<smem>>
    %88 = vector.broadcast %87 : f32 to vector<8x8xf32>
    %89 = arith.mulf %86, %88 : vector<8x8xf32>
    %90 = arith.addf %64, %89 : vector<8x8xf32>
    %c3 = arith.constant 3 : index
    %c0_33 = arith.constant 0 : index
    %c0_34 = arith.constant 0 : index
    %91 = vector.load %arg12[%c3, %c0_33, %c0_34] : memref<70x8x24xf32, #tpu.memory_space<vmem>>, vector<1x8x24xf32>
    %92 = vector.shape_cast %91 : vector<1x8x24xf32> to vector<8x24xf32>
    %cst_35 = arith.constant dense<0.000000e+00> : vector<8x24xf32>
    %93 = tpu.matmul %86, %9, %cst_35 {dimension_numbers = #tpu.dot_dimension_numbers<[1], [0], [0], [1], [0, 0, 1, 1], [], []>} : vector<8x8xf32>, vector<8x24xf32>, vector<8x24xf32> -> vector<8x24xf32>
    %94 = arith.addf %92, %93 : vector<8x24xf32>
    %95 = vector.extract_strided_slice %94 {offsets = [0, 0], sizes = [8, 16], strides = [1, 1]} : vector<8x24xf32> to vector<8x16xf32>
    %96 = arith.negf %95 : vector<8x16xf32>
    %97 = math.exp %96 : vector<8x16xf32>
    %cst_36 = arith.constant 1.000000e+00 : f32
    %98 = vector.broadcast %cst_36 : f32 to vector<8x16xf32>
    %99 = arith.addf %98, %97 : vector<8x16xf32>
    %100 = arith.divf %98, %99 : vector<8x16xf32>
    %101 = vector.extract_strided_slice %100 {offsets = [0, 0], sizes = [8, 8], strides = [1, 1]} : vector<8x16xf32> to vector<8x8xf32>
    %102 = vector.extract_strided_slice %100 {offsets = [0, 8], sizes = [8, 8], strides = [1, 1]} : vector<8x16xf32> to vector<8x8xf32>
    %103 = vector.extract_strided_slice %92 {offsets = [0, 16], sizes = [8, 8], strides = [1, 1]} : vector<8x24xf32> to vector<8x8xf32>
    %104 = vector.extract_strided_slice %93 {offsets = [0, 16], sizes = [8, 8], strides = [1, 1]} : vector<8x24xf32> to vector<8x8xf32>
    %105 = vector.broadcast %10 : vector<1x8xf32> to vector<8x8xf32>
    %106 = arith.addf %104, %105 : vector<8x8xf32>
    %107 = arith.mulf %101, %106 : vector<8x8xf32>
    %108 = arith.addf %103, %107 : vector<8x8xf32>
    %109 = math.tanh %108 : vector<8x8xf32>
    %110 = arith.subf %86, %109 : vector<8x8xf32>
    %111 = arith.mulf %102, %110 : vector<8x8xf32>
    %112 = arith.addf %109, %111 : vector<8x8xf32>
    %c3_37 = arith.constant 3 : index
    %113 = memref.load %arg7[%c3_37] : memref<70xf32, #tpu.memory_space<smem>>
    %114 = vector.broadcast %113 : f32 to vector<8x8xf32>
    %115 = arith.mulf %112, %114 : vector<8x8xf32>
    %116 = arith.addf %90, %115 : vector<8x8xf32>
    %c4 = arith.constant 4 : index
    %c0_38 = arith.constant 0 : index
    %c0_39 = arith.constant 0 : index
    %117 = vector.load %arg12[%c4, %c0_38, %c0_39] : memref<70x8x24xf32, #tpu.memory_space<vmem>>, vector<1x8x24xf32>
    %118 = vector.shape_cast %117 : vector<1x8x24xf32> to vector<8x24xf32>
    %cst_40 = arith.constant dense<0.000000e+00> : vector<8x24xf32>
    %119 = tpu.matmul %112, %9, %cst_40 {dimension_numbers = #tpu.dot_dimension_numbers<[1], [0], [0], [1], [0, 0, 1, 1], [], []>} : vector<8x8xf32>, vector<8x24xf32>, vector<8x24xf32> -> vector<8x24xf32>
    %120 = arith.addf %118, %119 : vector<8x24xf32>
    %121 = vector.extract_strided_slice %120 {offsets = [0, 0], sizes = [8, 16], strides = [1, 1]} : vector<8x24xf32> to vector<8x16xf32>
    %122 = arith.negf %121 : vector<8x16xf32>
    %123 = math.exp %122 : vector<8x16xf32>
    %cst_41 = arith.constant 1.000000e+00 : f32
    %124 = vector.broadcast %cst_41 : f32 to vector<8x16xf32>
    %125 = arith.addf %124, %123 : vector<8x16xf32>
    %126 = arith.divf %124, %125 : vector<8x16xf32>
    %127 = vector.extract_strided_slice %126 {offsets = [0, 0], sizes = [8, 8], strides = [1, 1]} : vector<8x16xf32> to vector<8x8xf32>
    %128 = vector.extract_strided_slice %126 {offsets = [0, 8], sizes = [8, 8], strides = [1, 1]} : vector<8x16xf32> to vector<8x8xf32>
    %129 = vector.extract_strided_slice %118 {offsets = [0, 16], sizes = [8, 8], strides = [1, 1]} : vector<8x24xf32> to vector<8x8xf32>
    %130 = vector.extract_strided_slice %119 {offsets = [0, 16], sizes = [8, 8], strides = [1, 1]} : vector<8x24xf32> to vector<8x8xf32>
    %131 = vector.broadcast %10 : vector<1x8xf32> to vector<8x8xf32>
    %132 = arith.addf %130, %131 : vector<8x8xf32>
    %133 = arith.mulf %127, %132 : vector<8x8xf32>
    %134 = arith.addf %129, %133 : vector<8x8xf32>
    %135 = math.tanh %134 : vector<8x8xf32>
    %136 = arith.subf %112, %135 : vector<8x8xf32>
    %137 = arith.mulf %128, %136 : vector<8x8xf32>
    %138 = arith.addf %135, %137 : vector<8x8xf32>
    %c4_42 = arith.constant 4 : index
    %139 = memref.load %arg7[%c4_42] : memref<70xf32, #tpu.memory_space<smem>>
    %140 = vector.broadcast %139 : f32 to vector<8x8xf32>
    %141 = arith.mulf %138, %140 : vector<8x8xf32>
    %142 = arith.addf %116, %141 : vector<8x8xf32>
    %c5 = arith.constant 5 : index
    %c0_43 = arith.constant 0 : index
    %c0_44 = arith.constant 0 : index
    %143 = vector.load %arg12[%c5, %c0_43, %c0_44] : memref<70x8x24xf32, #tpu.memory_space<vmem>>, vector<1x8x24xf32>
    %144 = vector.shape_cast %143 : vector<1x8x24xf32> to vector<8x24xf32>
    %cst_45 = arith.constant dense<0.000000e+00> : vector<8x24xf32>
    %145 = tpu.matmul %138, %9, %cst_45 {dimension_numbers = #tpu.dot_dimension_numbers<[1], [0], [0], [1], [0, 0, 1, 1], [], []>} : vector<8x8xf32>, vector<8x24xf32>, vector<8x24xf32> -> vector<8x24xf32>
    %146 = arith.addf %144, %145 : vector<8x24xf32>
    %147 = vector.extract_strided_slice %146 {offsets = [0, 0], sizes = [8, 16], strides = [1, 1]} : vector<8x24xf32> to vector<8x16xf32>
    %148 = arith.negf %147 : vector<8x16xf32>
    %149 = math.exp %148 : vector<8x16xf32>
    %cst_46 = arith.constant 1.000000e+00 : f32
    %150 = vector.broadcast %cst_46 : f32 to vector<8x16xf32>
    %151 = arith.addf %150, %149 : vector<8x16xf32>
    %152 = arith.divf %150, %151 : vector<8x16xf32>
    %153 = vector.extract_strided_slice %152 {offsets = [0, 0], sizes = [8, 8], strides = [1, 1]} : vector<8x16xf32> to vector<8x8xf32>
    %154 = vector.extract_strided_slice %152 {offsets = [0, 8], sizes = [8, 8], strides = [1, 1]} : vector<8x16xf32> to vector<8x8xf32>
    %155 = vector.extract_strided_slice %144 {offsets = [0, 16], sizes = [8, 8], strides = [1, 1]} : vector<8x24xf32> to vector<8x8xf32>
    %156 = vector.extract_strided_slice %145 {offsets = [0, 16], sizes = [8, 8], strides = [1, 1]} : vector<8x24xf32> to vector<8x8xf32>
    %157 = vector.broadcast %10 : vector<1x8xf32> to vector<8x8xf32>
    %158 = arith.addf %156, %157 : vector<8x8xf32>
    %159 = arith.mulf %153, %158 : vector<8x8xf32>
    %160 = arith.addf %155, %159 : vector<8x8xf32>
    %161 = math.tanh %160 : vector<8x8xf32>
    %162 = arith.subf %138, %161 : vector<8x8xf32>
    %163 = arith.mulf %154, %162 : vector<8x8xf32>
    %164 = arith.addf %161, %163 : vector<8x8xf32>
    %c5_47 = arith.constant 5 : index
    %165 = memref.load %arg7[%c5_47] : memref<70xf32, #tpu.memory_space<smem>>
    %166 = vector.broadcast %165 : f32 to vector<8x8xf32>
    %167 = arith.mulf %164, %166 : vector<8x8xf32>
    %168 = arith.addf %142, %167 : vector<8x8xf32>
    %c6 = arith.constant 6 : index
    %c0_48 = arith.constant 0 : index
    %c0_49 = arith.constant 0 : index
    %169 = vector.load %arg12[%c6, %c0_48, %c0_49] : memref<70x8x24xf32, #tpu.memory_space<vmem>>, vector<1x8x24xf32>
    %170 = vector.shape_cast %169 : vector<1x8x24xf32> to vector<8x24xf32>
    %cst_50 = arith.constant dense<0.000000e+00> : vector<8x24xf32>
    %171 = tpu.matmul %164, %9, %cst_50 {dimension_numbers = #tpu.dot_dimension_numbers<[1], [0], [0], [1], [0, 0, 1, 1], [], []>} : vector<8x8xf32>, vector<8x24xf32>, vector<8x24xf32> -> vector<8x24xf32>
    %172 = arith.addf %170, %171 : vector<8x24xf32>
    %173 = vector.extract_strided_slice %172 {offsets = [0, 0], sizes = [8, 16], strides = [1, 1]} : vector<8x24xf32> to vector<8x16xf32>
    %174 = arith.negf %173 : vector<8x16xf32>
    %175 = math.exp %174 : vector<8x16xf32>
    %cst_51 = arith.constant 1.000000e+00 : f32
    %176 = vector.broadcast %cst_51 : f32 to vector<8x16xf32>
    %177 = arith.addf %176, %175 : vector<8x16xf32>
    %178 = arith.divf %176, %177 : vector<8x16xf32>
    %179 = vector.extract_strided_slice %178 {offsets = [0, 0], sizes = [8, 8], strides = [1, 1]} : vector<8x16xf32> to vector<8x8xf32>
    %180 = vector.extract_strided_slice %178 {offsets = [0, 8], sizes = [8, 8], strides = [1, 1]} : vector<8x16xf32> to vector<8x8xf32>
    %181 = vector.extract_strided_slice %170 {offsets = [0, 16], sizes = [8, 8], strides = [1, 1]} : vector<8x24xf32> to vector<8x8xf32>
    %182 = vector.extract_strided_slice %171 {offsets = [0, 16], sizes = [8, 8], strides = [1, 1]} : vector<8x24xf32> to vector<8x8xf32>
    %183 = vector.broadcast %10 : vector<1x8xf32> to vector<8x8xf32>
    %184 = arith.addf %182, %183 : vector<8x8xf32>
    %185 = arith.mulf %179, %184 : vector<8x8xf32>
    %186 = arith.addf %181, %185 : vector<8x8xf32>
    %187 = math.tanh %186 : vector<8x8xf32>
    %188 = arith.subf %164, %187 : vector<8x8xf32>
    %189 = arith.mulf %180, %188 : vector<8x8xf32>
    %190 = arith.addf %187, %189 : vector<8x8xf32>
    %c6_52 = arith.constant 6 : index
    %191 = memref.load %arg7[%c6_52] : memref<70xf32, #tpu.memory_space<smem>>
    %192 = vector.broadcast %191 : f32 to vector<8x8xf32>
    %193 = arith.mulf %190, %192 : vector<8x8xf32>
    %194 = arith.addf %168, %193 : vector<8x8xf32>
    %c7 = arith.constant 7 : index
    %c0_53 = arith.constant 0 : index
    %c0_54 = arith.constant 0 : index
    %195 = vector.load %arg12[%c7, %c0_53, %c0_54] : memref<70x8x24xf32, #tpu.memory_space<vmem>>, vector<1x8x24xf32>
    %196 = vector.shape_cast %195 : vector<1x8x24xf32> to vector<8x24xf32>
    %cst_55 = arith.constant dense<0.000000e+00> : vector<8x24xf32>
    %197 = tpu.matmul %190, %9, %cst_55 {dimension_numbers = #tpu.dot_dimension_numbers<[1], [0], [0], [1], [0, 0, 1, 1], [], []>} : vector<8x8xf32>, vector<8x24xf32>, vector<8x24xf32> -> vector<8x24xf32>
    %198 = arith.addf %196, %197 : vector<8x24xf32>
    %199 = vector.extract_strided_slice %198 {offsets = [0, 0], sizes = [8, 16], strides = [1, 1]} : vector<8x24xf32> to vector<8x16xf32>
    %200 = arith.negf %199 : vector<8x16xf32>
    %201 = math.exp %200 : vector<8x16xf32>
    %cst_56 = arith.constant 1.000000e+00 : f32
    %202 = vector.broadcast %cst_56 : f32 to vector<8x16xf32>
    %203 = arith.addf %202, %201 : vector<8x16xf32>
    %204 = arith.divf %202, %203 : vector<8x16xf32>
    %205 = vector.extract_strided_slice %204 {offsets = [0, 0], sizes = [8, 8], strides = [1, 1]} : vector<8x16xf32> to vector<8x8xf32>
    %206 = vector.extract_strided_slice %204 {offsets = [0, 8], sizes = [8, 8], strides = [1, 1]} : vector<8x16xf32> to vector<8x8xf32>
    %207 = vector.extract_strided_slice %196 {offsets = [0, 16], sizes = [8, 8], strides = [1, 1]} : vector<8x24xf32> to vector<8x8xf32>
    %208 = vector.extract_strided_slice %197 {offsets = [0, 16], sizes = [8, 8], strides = [1, 1]} : vector<8x24xf32> to vector<8x8xf32>
    %209 = vector.broadcast %10 : vector<1x8xf32> to vector<8x8xf32>
    %210 = arith.addf %208, %209 : vector<8x8xf32>
    %211 = arith.mulf %205, %210 : vector<8x8xf32>
    %212 = arith.addf %207, %211 : vector<8x8xf32>
    %213 = math.tanh %212 : vector<8x8xf32>
    %214 = arith.subf %190, %213 : vector<8x8xf32>
    %215 = arith.mulf %206, %214 : vector<8x8xf32>
    %216 = arith.addf %213, %215 : vector<8x8xf32>
    %c7_57 = arith.constant 7 : index
    %217 = memref.load %arg7[%c7_57] : memref<70xf32, #tpu.memory_space<smem>>
    %218 = vector.broadcast %217 : f32 to vector<8x8xf32>
    %219 = arith.mulf %216, %218 : vector<8x8xf32>
    %220 = arith.addf %194, %219 : vector<8x8xf32>
    %c8 = arith.constant 8 : index
    %c0_58 = arith.constant 0 : index
    %c0_59 = arith.constant 0 : index
    %221 = vector.load %arg12[%c8, %c0_58, %c0_59] : memref<70x8x24xf32, #tpu.memory_space<vmem>>, vector<1x8x24xf32>
    %222 = vector.shape_cast %221 : vector<1x8x24xf32> to vector<8x24xf32>
    %cst_60 = arith.constant dense<0.000000e+00> : vector<8x24xf32>
    %223 = tpu.matmul %216, %9, %cst_60 {dimension_numbers = #tpu.dot_dimension_numbers<[1], [0], [0], [1], [0, 0, 1, 1], [], []>} : vector<8x8xf32>, vector<8x24xf32>, vector<8x24xf32> -> vector<8x24xf32>
    %224 = arith.addf %222, %223 : vector<8x24xf32>
    %225 = vector.extract_strided_slice %224 {offsets = [0, 0], sizes = [8, 16], strides = [1, 1]} : vector<8x24xf32> to vector<8x16xf32>
    %226 = arith.negf %225 : vector<8x16xf32>
    %227 = math.exp %226 : vector<8x16xf32>
    %cst_61 = arith.constant 1.000000e+00 : f32
    %228 = vector.broadcast %cst_61 : f32 to vector<8x16xf32>
    %229 = arith.addf %228, %227 : vector<8x16xf32>
    %230 = arith.divf %228, %229 : vector<8x16xf32>
    %231 = vector.extract_strided_slice %230 {offsets = [0, 0], sizes = [8, 8], strides = [1, 1]} : vector<8x16xf32> to vector<8x8xf32>
    %232 = vector.extract_strided_slice %230 {offsets = [0, 8], sizes = [8, 8], strides = [1, 1]} : vector<8x16xf32> to vector<8x8xf32>
    %233 = vector.extract_strided_slice %222 {offsets = [0, 16], sizes = [8, 8], strides = [1, 1]} : vector<8x24xf32> to vector<8x8xf32>
    %234 = vector.extract_strided_slice %223 {offsets = [0, 16], sizes = [8, 8], strides = [1, 1]} : vector<8x24xf32> to vector<8x8xf32>
    %235 = vector.broadcast %10 : vector<1x8xf32> to vector<8x8xf32>
    %236 = arith.addf %234, %235 : vector<8x8xf32>
    %237 = arith.mulf %231, %236 : vector<8x8xf32>
    %238 = arith.addf %233, %237 : vector<8x8xf32>
    %239 = math.tanh %238 : vector<8x8xf32>
    %240 = arith.subf %216, %239 : vector<8x8xf32>
    %241 = arith.mulf %232, %240 : vector<8x8xf32>
    %242 = arith.addf %239, %241 : vector<8x8xf32>
    %c8_62 = arith.constant 8 : index
    %243 = memref.load %arg7[%c8_62] : memref<70xf32, #tpu.memory_space<smem>>
    %244 = vector.broadcast %243 : f32 to vector<8x8xf32>
    %245 = arith.mulf %242, %244 : vector<8x8xf32>
    %246 = arith.addf %220, %245 : vector<8x8xf32>
    %c9 = arith.constant 9 : index
    %c0_63 = arith.constant 0 : index
    %c0_64 = arith.constant 0 : index
    %247 = vector.load %arg12[%c9, %c0_63, %c0_64] : memref<70x8x24xf32, #tpu.memory_space<vmem>>, vector<1x8x24xf32>
    %248 = vector.shape_cast %247 : vector<1x8x24xf32> to vector<8x24xf32>
    %cst_65 = arith.constant dense<0.000000e+00> : vector<8x24xf32>
    %249 = tpu.matmul %242, %9, %cst_65 {dimension_numbers = #tpu.dot_dimension_numbers<[1], [0], [0], [1], [0, 0, 1, 1], [], []>} : vector<8x8xf32>, vector<8x24xf32>, vector<8x24xf32> -> vector<8x24xf32>
    %250 = arith.addf %248, %249 : vector<8x24xf32>
    %251 = vector.extract_strided_slice %250 {offsets = [0, 0], sizes = [8, 16], strides = [1, 1]} : vector<8x24xf32> to vector<8x16xf32>
    %252 = arith.negf %251 : vector<8x16xf32>
    %253 = math.exp %252 : vector<8x16xf32>
    %cst_66 = arith.constant 1.000000e+00 : f32
    %254 = vector.broadcast %cst_66 : f32 to vector<8x16xf32>
    %255 = arith.addf %254, %253 : vector<8x16xf32>
    %256 = arith.divf %254, %255 : vector<8x16xf32>
    %257 = vector.extract_strided_slice %256 {offsets = [0, 0], sizes = [8, 8], strides = [1, 1]} : vector<8x16xf32> to vector<8x8xf32>
    %258 = vector.extract_strided_slice %256 {offsets = [0, 8], sizes = [8, 8], strides = [1, 1]} : vector<8x16xf32> to vector<8x8xf32>
    %259 = vector.extract_strided_slice %248 {offsets = [0, 16], sizes = [8, 8], strides = [1, 1]} : vector<8x24xf32> to vector<8x8xf32>
    %260 = vector.extract_strided_slice %249 {offsets = [0, 16], sizes = [8, 8], strides = [1, 1]} : vector<8x24xf32> to vector<8x8xf32>
    %261 = vector.broadcast %10 : vector<1x8xf32> to vector<8x8xf32>
    %262 = arith.addf %260, %261 : vector<8x8xf32>
    %263 = arith.mulf %257, %262 : vector<8x8xf32>
    %264 = arith.addf %259, %263 : vector<8x8xf32>
    %265 = math.tanh %264 : vector<8x8xf32>
    %266 = arith.subf %242, %265 : vector<8x8xf32>
    %267 = arith.mulf %258, %266 : vector<8x8xf32>
    %268 = arith.addf %265, %267 : vector<8x8xf32>
    %c9_67 = arith.constant 9 : index
    %269 = memref.load %arg7[%c9_67] : memref<70xf32, #tpu.memory_space<smem>>
    %270 = vector.broadcast %269 : f32 to vector<8x8xf32>
    %271 = arith.mulf %268, %270 : vector<8x8xf32>
    %272 = arith.addf %246, %271 : vector<8x8xf32>
    %c10 = arith.constant 10 : index
    %c0_68 = arith.constant 0 : index
    %c0_69 = arith.constant 0 : index
    %273 = vector.load %arg12[%c10, %c0_68, %c0_69] : memref<70x8x24xf32, #tpu.memory_space<vmem>>, vector<1x8x24xf32>
    %274 = vector.shape_cast %273 : vector<1x8x24xf32> to vector<8x24xf32>
    %cst_70 = arith.constant dense<0.000000e+00> : vector<8x24xf32>
    %275 = tpu.matmul %268, %9, %cst_70 {dimension_numbers = #tpu.dot_dimension_numbers<[1], [0], [0], [1], [0, 0, 1, 1], [], []>} : vector<8x8xf32>, vector<8x24xf32>, vector<8x24xf32> -> vector<8x24xf32>
    %276 = arith.addf %274, %275 : vector<8x24xf32>
    %277 = vector.extract_strided_slice %276 {offsets = [0, 0], sizes = [8, 16], strides = [1, 1]} : vector<8x24xf32> to vector<8x16xf32>
    %278 = arith.negf %277 : vector<8x16xf32>
    %279 = math.exp %278 : vector<8x16xf32>
    %cst_71 = arith.constant 1.000000e+00 : f32
    %280 = vector.broadcast %cst_71 : f32 to vector<8x16xf32>
    %281 = arith.addf %280, %279 : vector<8x16xf32>
    %282 = arith.divf %280, %281 : vector<8x16xf32>
    %283 = vector.extract_strided_slice %282 {offsets = [0, 0], sizes = [8, 8], strides = [1, 1]} : vector<8x16xf32> to vector<8x8xf32>
    %284 = vector.extract_strided_slice %282 {offsets = [0, 8], sizes = [8, 8], strides = [1, 1]} : vector<8x16xf32> to vector<8x8xf32>
    %285 = vector.extract_strided_slice %274 {offsets = [0, 16], sizes = [8, 8], strides = [1, 1]} : vector<8x24xf32> to vector<8x8xf32>
    %286 = vector.extract_strided_slice %275 {offsets = [0, 16], sizes = [8, 8], strides = [1, 1]} : vector<8x24xf32> to vector<8x8xf32>
    %287 = vector.broadcast %10 : vector<1x8xf32> to vector<8x8xf32>
    %288 = arith.addf %286, %287 : vector<8x8xf32>
    %289 = arith.mulf %283, %288 : vector<8x8xf32>
    %290 = arith.addf %285, %289 : vector<8x8xf32>
    %291 = math.tanh %290 : vector<8x8xf32>
    %292 = arith.subf %268, %291 : vector<8x8xf32>
    %293 = arith.mulf %284, %292 : vector<8x8xf32>
    %294 = arith.addf %291, %293 : vector<8x8xf32>
    %c10_72 = arith.constant 10 : index
    %295 = memref.load %arg7[%c10_72] : memref<70xf32, #tpu.memory_space<smem>>
    %296 = vector.broadcast %295 : f32 to vector<8x8xf32>
    %297 = arith.mulf %294, %296 : vector<8x8xf32>
    %298 = arith.addf %272, %297 : vector<8x8xf32>
    %c11 = arith.constant 11 : index
    %c0_73 = arith.constant 0 : index
    %c0_74 = arith.constant 0 : index
    %299 = vector.load %arg12[%c11, %c0_73, %c0_74] : memref<70x8x24xf32, #tpu.memory_space<vmem>>, vector<1x8x24xf32>
    %300 = vector.shape_cast %299 : vector<1x8x24xf32> to vector<8x24xf32>
    %cst_75 = arith.constant dense<0.000000e+00> : vector<8x24xf32>
    %301 = tpu.matmul %294, %9, %cst_75 {dimension_numbers = #tpu.dot_dimension_numbers<[1], [0], [0], [1], [0, 0, 1, 1], [], []>} : vector<8x8xf32>, vector<8x24xf32>, vector<8x24xf32> -> vector<8x24xf32>
    %302 = arith.addf %300, %301 : vector<8x24xf32>
    %303 = vector.extract_strided_slice %302 {offsets = [0, 0], sizes = [8, 16], strides = [1, 1]} : vector<8x24xf32> to vector<8x16xf32>
    %304 = arith.negf %303 : vector<8x16xf32>
    %305 = math.exp %304 : vector<8x16xf32>
    %cst_76 = arith.constant 1.000000e+00 : f32
    %306 = vector.broadcast %cst_76 : f32 to vector<8x16xf32>
    %307 = arith.addf %306, %305 : vector<8x16xf32>
    %308 = arith.divf %306, %307 : vector<8x16xf32>
    %309 = vector.extract_strided_slice %308 {offsets = [0, 0], sizes = [8, 8], strides = [1, 1]} : vector<8x16xf32> to vector<8x8xf32>
    %310 = vector.extract_strided_slice %308 {offsets = [0, 8], sizes = [8, 8], strides = [1, 1]} : vector<8x16xf32> to vector<8x8xf32>
    %311 = vector.extract_strided_slice %300 {offsets = [0, 16], sizes = [8, 8], strides = [1, 1]} : vector<8x24xf32> to vector<8x8xf32>
    %312 = vector.extract_strided_slice %301 {offsets = [0, 16], sizes = [8, 8], strides = [1, 1]} : vector<8x24xf32> to vector<8x8xf32>
    %313 = vector.broadcast %10 : vector<1x8xf32> to vector<8x8xf32>
    %314 = arith.addf %312, %313 : vector<8x8xf32>
    %315 = arith.mulf %309, %314 : vector<8x8xf32>
    %316 = arith.addf %311, %315 : vector<8x8xf32>
    %317 = math.tanh %316 : vector<8x8xf32>
    %318 = arith.subf %294, %317 : vector<8x8xf32>
    %319 = arith.mulf %310, %318 : vector<8x8xf32>
    %320 = arith.addf %317, %319 : vector<8x8xf32>
    %c11_77 = arith.constant 11 : index
    %321 = memref.load %arg7[%c11_77] : memref<70xf32, #tpu.memory_space<smem>>
    %322 = vector.broadcast %321 : f32 to vector<8x8xf32>
    %323 = arith.mulf %320, %322 : vector<8x8xf32>
    %324 = arith.addf %298, %323 : vector<8x8xf32>
    %c12 = arith.constant 12 : index
    %c0_78 = arith.constant 0 : index
    %c0_79 = arith.constant 0 : index
    %325 = vector.load %arg12[%c12, %c0_78, %c0_79] : memref<70x8x24xf32, #tpu.memory_space<vmem>>, vector<1x8x24xf32>
    %326 = vector.shape_cast %325 : vector<1x8x24xf32> to vector<8x24xf32>
    %cst_80 = arith.constant dense<0.000000e+00> : vector<8x24xf32>
    %327 = tpu.matmul %320, %9, %cst_80 {dimension_numbers = #tpu.dot_dimension_numbers<[1], [0], [0], [1], [0, 0, 1, 1], [], []>} : vector<8x8xf32>, vector<8x24xf32>, vector<8x24xf32> -> vector<8x24xf32>
    %328 = arith.addf %326, %327 : vector<8x24xf32>
    %329 = vector.extract_strided_slice %328 {offsets = [0, 0], sizes = [8, 16], strides = [1, 1]} : vector<8x24xf32> to vector<8x16xf32>
    %330 = arith.negf %329 : vector<8x16xf32>
    %331 = math.exp %330 : vector<8x16xf32>
    %cst_81 = arith.constant 1.000000e+00 : f32
    %332 = vector.broadcast %cst_81 : f32 to vector<8x16xf32>
    %333 = arith.addf %332, %331 : vector<8x16xf32>
    %334 = arith.divf %332, %333 : vector<8x16xf32>
    %335 = vector.extract_strided_slice %334 {offsets = [0, 0], sizes = [8, 8], strides = [1, 1]} : vector<8x16xf32> to vector<8x8xf32>
    %336 = vector.extract_strided_slice %334 {offsets = [0, 8], sizes = [8, 8], strides = [1, 1]} : vector<8x16xf32> to vector<8x8xf32>
    %337 = vector.extract_strided_slice %326 {offsets = [0, 16], sizes = [8, 8], strides = [1, 1]} : vector<8x24xf32> to vector<8x8xf32>
    %338 = vector.extract_strided_slice %327 {offsets = [0, 16], sizes = [8, 8], strides = [1, 1]} : vector<8x24xf32> to vector<8x8xf32>
    %339 = vector.broadcast %10 : vector<1x8xf32> to vector<8x8xf32>
    %340 = arith.addf %338, %339 : vector<8x8xf32>
    %341 = arith.mulf %335, %340 : vector<8x8xf32>
    %342 = arith.addf %337, %341 : vector<8x8xf32>
    %343 = math.tanh %342 : vector<8x8xf32>
    %344 = arith.subf %320, %343 : vector<8x8xf32>
    %345 = arith.mulf %336, %344 : vector<8x8xf32>
    %346 = arith.addf %343, %345 : vector<8x8xf32>
    %c12_82 = arith.constant 12 : index
    %347 = memref.load %arg7[%c12_82] : memref<70xf32, #tpu.memory_space<smem>>
    %348 = vector.broadcast %347 : f32 to vector<8x8xf32>
    %349 = arith.mulf %346, %348 : vector<8x8xf32>
    %350 = arith.addf %324, %349 : vector<8x8xf32>
    %c13 = arith.constant 13 : index
    %c0_83 = arith.constant 0 : index
    %c0_84 = arith.constant 0 : index
    %351 = vector.load %arg12[%c13, %c0_83, %c0_84] : memref<70x8x24xf32, #tpu.memory_space<vmem>>, vector<1x8x24xf32>
    %352 = vector.shape_cast %351 : vector<1x8x24xf32> to vector<8x24xf32>
    %cst_85 = arith.constant dense<0.000000e+00> : vector<8x24xf32>
    %353 = tpu.matmul %346, %9, %cst_85 {dimension_numbers = #tpu.dot_dimension_numbers<[1], [0], [0], [1], [0, 0, 1, 1], [], []>} : vector<8x8xf32>, vector<8x24xf32>, vector<8x24xf32> -> vector<8x24xf32>
    %354 = arith.addf %352, %353 : vector<8x24xf32>
    %355 = vector.extract_strided_slice %354 {offsets = [0, 0], sizes = [8, 16], strides = [1, 1]} : vector<8x24xf32> to vector<8x16xf32>
    %356 = arith.negf %355 : vector<8x16xf32>
    %357 = math.exp %356 : vector<8x16xf32>
    %cst_86 = arith.constant 1.000000e+00 : f32
    %358 = vector.broadcast %cst_86 : f32 to vector<8x16xf32>
    %359 = arith.addf %358, %357 : vector<8x16xf32>
    %360 = arith.divf %358, %359 : vector<8x16xf32>
    %361 = vector.extract_strided_slice %360 {offsets = [0, 0], sizes = [8, 8], strides = [1, 1]} : vector<8x16xf32> to vector<8x8xf32>
    %362 = vector.extract_strided_slice %360 {offsets = [0, 8], sizes = [8, 8], strides = [1, 1]} : vector<8x16xf32> to vector<8x8xf32>
    %363 = vector.extract_strided_slice %352 {offsets = [0, 16], sizes = [8, 8], strides = [1, 1]} : vector<8x24xf32> to vector<8x8xf32>
    %364 = vector.extract_strided_slice %353 {offsets = [0, 16], sizes = [8, 8], strides = [1, 1]} : vector<8x24xf32> to vector<8x8xf32>
    %365 = vector.broadcast %10 : vector<1x8xf32> to vector<8x8xf32>
    %366 = arith.addf %364, %365 : vector<8x8xf32>
    %367 = arith.mulf %361, %366 : vector<8x8xf32>
    %368 = arith.addf %363, %367 : vector<8x8xf32>
    %369 = math.tanh %368 : vector<8x8xf32>
    %370 = arith.subf %346, %369 : vector<8x8xf32>
    %371 = arith.mulf %362, %370 : vector<8x8xf32>
    %372 = arith.addf %369, %371 : vector<8x8xf32>
    %c13_87 = arith.constant 13 : index
    %373 = memref.load %arg7[%c13_87] : memref<70xf32, #tpu.memory_space<smem>>
    %374 = vector.broadcast %373 : f32 to vector<8x8xf32>
    %375 = arith.mulf %372, %374 : vector<8x8xf32>
    %376 = arith.addf %350, %375 : vector<8x8xf32>
    %c14 = arith.constant 14 : index
    %c0_88 = arith.constant 0 : index
    %c0_89 = arith.constant 0 : index
    %377 = vector.load %arg12[%c14, %c0_88, %c0_89] : memref<70x8x24xf32, #tpu.memory_space<vmem>>, vector<1x8x24xf32>
    %378 = vector.shape_cast %377 : vector<1x8x24xf32> to vector<8x24xf32>
    %cst_90 = arith.constant dense<0.000000e+00> : vector<8x24xf32>
    %379 = tpu.matmul %372, %9, %cst_90 {dimension_numbers = #tpu.dot_dimension_numbers<[1], [0], [0], [1], [0, 0, 1, 1], [], []>} : vector<8x8xf32>, vector<8x24xf32>, vector<8x24xf32> -> vector<8x24xf32>
    %380 = arith.addf %378, %379 : vector<8x24xf32>
    %381 = vector.extract_strided_slice %380 {offsets = [0, 0], sizes = [8, 16], strides = [1, 1]} : vector<8x24xf32> to vector<8x16xf32>
    %382 = arith.negf %381 : vector<8x16xf32>
    %383 = math.exp %382 : vector<8x16xf32>
    %cst_91 = arith.constant 1.000000e+00 : f32
    %384 = vector.broadcast %cst_91 : f32 to vector<8x16xf32>
    %385 = arith.addf %384, %383 : vector<8x16xf32>
    %386 = arith.divf %384, %385 : vector<8x16xf32>
    %387 = vector.extract_strided_slice %386 {offsets = [0, 0], sizes = [8, 8], strides = [1, 1]} : vector<8x16xf32> to vector<8x8xf32>
    %388 = vector.extract_strided_slice %386 {offsets = [0, 8], sizes = [8, 8], strides = [1, 1]} : vector<8x16xf32> to vector<8x8xf32>
    %389 = vector.extract_strided_slice %378 {offsets = [0, 16], sizes = [8, 8], strides = [1, 1]} : vector<8x24xf32> to vector<8x8xf32>
    %390 = vector.extract_strided_slice %379 {offsets = [0, 16], sizes = [8, 8], strides = [1, 1]} : vector<8x24xf32> to vector<8x8xf32>
    %391 = vector.broadcast %10 : vector<1x8xf32> to vector<8x8xf32>
    %392 = arith.addf %390, %391 : vector<8x8xf32>
    %393 = arith.mulf %387, %392 : vector<8x8xf32>
    %394 = arith.addf %389, %393 : vector<8x8xf32>
    %395 = math.tanh %394 : vector<8x8xf32>
    %396 = arith.subf %372, %395 : vector<8x8xf32>
    %397 = arith.mulf %388, %396 : vector<8x8xf32>
    %398 = arith.addf %395, %397 : vector<8x8xf32>
    %c14_92 = arith.constant 14 : index
    %399 = memref.load %arg7[%c14_92] : memref<70xf32, #tpu.memory_space<smem>>
    %400 = vector.broadcast %399 : f32 to vector<8x8xf32>
    %401 = arith.mulf %398, %400 : vector<8x8xf32>
    %402 = arith.addf %376, %401 : vector<8x8xf32>
    %c15 = arith.constant 15 : index
    %c0_93 = arith.constant 0 : index
    %c0_94 = arith.constant 0 : index
    %403 = vector.load %arg12[%c15, %c0_93, %c0_94] : memref<70x8x24xf32, #tpu.memory_space<vmem>>, vector<1x8x24xf32>
    %404 = vector.shape_cast %403 : vector<1x8x24xf32> to vector<8x24xf32>
    %cst_95 = arith.constant dense<0.000000e+00> : vector<8x24xf32>
    %405 = tpu.matmul %398, %9, %cst_95 {dimension_numbers = #tpu.dot_dimension_numbers<[1], [0], [0], [1], [0, 0, 1, 1], [], []>} : vector<8x8xf32>, vector<8x24xf32>, vector<8x24xf32> -> vector<8x24xf32>
    %406 = arith.addf %404, %405 : vector<8x24xf32>
    %407 = vector.extract_strided_slice %406 {offsets = [0, 0], sizes = [8, 16], strides = [1, 1]} : vector<8x24xf32> to vector<8x16xf32>
    %408 = arith.negf %407 : vector<8x16xf32>
    %409 = math.exp %408 : vector<8x16xf32>
    %cst_96 = arith.constant 1.000000e+00 : f32
    %410 = vector.broadcast %cst_96 : f32 to vector<8x16xf32>
    %411 = arith.addf %410, %409 : vector<8x16xf32>
    %412 = arith.divf %410, %411 : vector<8x16xf32>
    %413 = vector.extract_strided_slice %412 {offsets = [0, 0], sizes = [8, 8], strides = [1, 1]} : vector<8x16xf32> to vector<8x8xf32>
    %414 = vector.extract_strided_slice %412 {offsets = [0, 8], sizes = [8, 8], strides = [1, 1]} : vector<8x16xf32> to vector<8x8xf32>
    %415 = vector.extract_strided_slice %404 {offsets = [0, 16], sizes = [8, 8], strides = [1, 1]} : vector<8x24xf32> to vector<8x8xf32>
    %416 = vector.extract_strided_slice %405 {offsets = [0, 16], sizes = [8, 8], strides = [1, 1]} : vector<8x24xf32> to vector<8x8xf32>
    %417 = vector.broadcast %10 : vector<1x8xf32> to vector<8x8xf32>
    %418 = arith.addf %416, %417 : vector<8x8xf32>
    %419 = arith.mulf %413, %418 : vector<8x8xf32>
    %420 = arith.addf %415, %419 : vector<8x8xf32>
    %421 = math.tanh %420 : vector<8x8xf32>
    %422 = arith.subf %398, %421 : vector<8x8xf32>
    %423 = arith.mulf %414, %422 : vector<8x8xf32>
    %424 = arith.addf %421, %423 : vector<8x8xf32>
    %c15_97 = arith.constant 15 : index
    %425 = memref.load %arg7[%c15_97] : memref<70xf32, #tpu.memory_space<smem>>
    %426 = vector.broadcast %425 : f32 to vector<8x8xf32>
    %427 = arith.mulf %424, %426 : vector<8x8xf32>
    %428 = arith.addf %402, %427 : vector<8x8xf32>
    %c16 = arith.constant 16 : index
    %c0_98 = arith.constant 0 : index
    %c0_99 = arith.constant 0 : index
    %429 = vector.load %arg12[%c16, %c0_98, %c0_99] : memref<70x8x24xf32, #tpu.memory_space<vmem>>, vector<1x8x24xf32>
    %430 = vector.shape_cast %429 : vector<1x8x24xf32> to vector<8x24xf32>
    %cst_100 = arith.constant dense<0.000000e+00> : vector<8x24xf32>
    %431 = tpu.matmul %424, %9, %cst_100 {dimension_numbers = #tpu.dot_dimension_numbers<[1], [0], [0], [1], [0, 0, 1, 1], [], []>} : vector<8x8xf32>, vector<8x24xf32>, vector<8x24xf32> -> vector<8x24xf32>
    %432 = arith.addf %430, %431 : vector<8x24xf32>
    %433 = vector.extract_strided_slice %432 {offsets = [0, 0], sizes = [8, 16], strides = [1, 1]} : vector<8x24xf32> to vector<8x16xf32>
    %434 = arith.negf %433 : vector<8x16xf32>
    %435 = math.exp %434 : vector<8x16xf32>
    %cst_101 = arith.constant 1.000000e+00 : f32
    %436 = vector.broadcast %cst_101 : f32 to vector<8x16xf32>
    %437 = arith.addf %436, %435 : vector<8x16xf32>
    %438 = arith.divf %436, %437 : vector<8x16xf32>
    %439 = vector.extract_strided_slice %438 {offsets = [0, 0], sizes = [8, 8], strides = [1, 1]} : vector<8x16xf32> to vector<8x8xf32>
    %440 = vector.extract_strided_slice %438 {offsets = [0, 8], sizes = [8, 8], strides = [1, 1]} : vector<8x16xf32> to vector<8x8xf32>
    %441 = vector.extract_strided_slice %430 {offsets = [0, 16], sizes = [8, 8], strides = [1, 1]} : vector<8x24xf32> to vector<8x8xf32>
    %442 = vector.extract_strided_slice %431 {offsets = [0, 16], sizes = [8, 8], strides = [1, 1]} : vector<8x24xf32> to vector<8x8xf32>
    %443 = vector.broadcast %10 : vector<1x8xf32> to vector<8x8xf32>
    %444 = arith.addf %442, %443 : vector<8x8xf32>
    %445 = arith.mulf %439, %444 : vector<8x8xf32>
    %446 = arith.addf %441, %445 : vector<8x8xf32>
    %447 = math.tanh %446 : vector<8x8xf32>
    %448 = arith.subf %424, %447 : vector<8x8xf32>
    %449 = arith.mulf %440, %448 : vector<8x8xf32>
    %450 = arith.addf %447, %449 : vector<8x8xf32>
    %c16_102 = arith.constant 16 : index
    %451 = memref.load %arg7[%c16_102] : memref<70xf32, #tpu.memory_space<smem>>
    %452 = vector.broadcast %451 : f32 to vector<8x8xf32>
    %453 = arith.mulf %450, %452 : vector<8x8xf32>
    %454 = arith.addf %428, %453 : vector<8x8xf32>
    %c17 = arith.constant 17 : index
    %c0_103 = arith.constant 0 : index
    %c0_104 = arith.constant 0 : index
    %455 = vector.load %arg12[%c17, %c0_103, %c0_104] : memref<70x8x24xf32, #tpu.memory_space<vmem>>, vector<1x8x24xf32>
    %456 = vector.shape_cast %455 : vector<1x8x24xf32> to vector<8x24xf32>
    %cst_105 = arith.constant dense<0.000000e+00> : vector<8x24xf32>
    %457 = tpu.matmul %450, %9, %cst_105 {dimension_numbers = #tpu.dot_dimension_numbers<[1], [0], [0], [1], [0, 0, 1, 1], [], []>} : vector<8x8xf32>, vector<8x24xf32>, vector<8x24xf32> -> vector<8x24xf32>
    %458 = arith.addf %456, %457 : vector<8x24xf32>
    %459 = vector.extract_strided_slice %458 {offsets = [0, 0], sizes = [8, 16], strides = [1, 1]} : vector<8x24xf32> to vector<8x16xf32>
    %460 = arith.negf %459 : vector<8x16xf32>
    %461 = math.exp %460 : vector<8x16xf32>
    %cst_106 = arith.constant 1.000000e+00 : f32
    %462 = vector.broadcast %cst_106 : f32 to vector<8x16xf32>
    %463 = arith.addf %462, %461 : vector<8x16xf32>
    %464 = arith.divf %462, %463 : vector<8x16xf32>
    %465 = vector.extract_strided_slice %464 {offsets = [0, 0], sizes = [8, 8], strides = [1, 1]} : vector<8x16xf32> to vector<8x8xf32>
    %466 = vector.extract_strided_slice %464 {offsets = [0, 8], sizes = [8, 8], strides = [1, 1]} : vector<8x16xf32> to vector<8x8xf32>
    %467 = vector.extract_strided_slice %456 {offsets = [0, 16], sizes = [8, 8], strides = [1, 1]} : vector<8x24xf32> to vector<8x8xf32>
    %468 = vector.extract_strided_slice %457 {offsets = [0, 16], sizes = [8, 8], strides = [1, 1]} : vector<8x24xf32> to vector<8x8xf32>
    %469 = vector.broadcast %10 : vector<1x8xf32> to vector<8x8xf32>
    %470 = arith.addf %468, %469 : vector<8x8xf32>
    %471 = arith.mulf %465, %470 : vector<8x8xf32>
    %472 = arith.addf %467, %471 : vector<8x8xf32>
    %473 = math.tanh %472 : vector<8x8xf32>
    %474 = arith.subf %450, %473 : vector<8x8xf32>
    %475 = arith.mulf %466, %474 : vector<8x8xf32>
    %476 = arith.addf %473, %475 : vector<8x8xf32>
    %c17_107 = arith.constant 17 : index
    %477 = memref.load %arg7[%c17_107] : memref<70xf32, #tpu.memory_space<smem>>
    %478 = vector.broadcast %477 : f32 to vector<8x8xf32>
    %479 = arith.mulf %476, %478 : vector<8x8xf32>
    %480 = arith.addf %454, %479 : vector<8x8xf32>
    %c18 = arith.constant 18 : index
    %c0_108 = arith.constant 0 : index
    %c0_109 = arith.constant 0 : index
    %481 = vector.load %arg12[%c18, %c0_108, %c0_109] : memref<70x8x24xf32, #tpu.memory_space<vmem>>, vector<1x8x24xf32>
    %482 = vector.shape_cast %481 : vector<1x8x24xf32> to vector<8x24xf32>
    %cst_110 = arith.constant dense<0.000000e+00> : vector<8x24xf32>
    %483 = tpu.matmul %476, %9, %cst_110 {dimension_numbers = #tpu.dot_dimension_numbers<[1], [0], [0], [1], [0, 0, 1, 1], [], []>} : vector<8x8xf32>, vector<8x24xf32>, vector<8x24xf32> -> vector<8x24xf32>
    %484 = arith.addf %482, %483 : vector<8x24xf32>
    %485 = vector.extract_strided_slice %484 {offsets = [0, 0], sizes = [8, 16], strides = [1, 1]} : vector<8x24xf32> to vector<8x16xf32>
    %486 = arith.negf %485 : vector<8x16xf32>
    %487 = math.exp %486 : vector<8x16xf32>
    %cst_111 = arith.constant 1.000000e+00 : f32
    %488 = vector.broadcast %cst_111 : f32 to vector<8x16xf32>
    %489 = arith.addf %488, %487 : vector<8x16xf32>
    %490 = arith.divf %488, %489 : vector<8x16xf32>
    %491 = vector.extract_strided_slice %490 {offsets = [0, 0], sizes = [8, 8], strides = [1, 1]} : vector<8x16xf32> to vector<8x8xf32>
    %492 = vector.extract_strided_slice %490 {offsets = [0, 8], sizes = [8, 8], strides = [1, 1]} : vector<8x16xf32> to vector<8x8xf32>
    %493 = vector.extract_strided_slice %482 {offsets = [0, 16], sizes = [8, 8], strides = [1, 1]} : vector<8x24xf32> to vector<8x8xf32>
    %494 = vector.extract_strided_slice %483 {offsets = [0, 16], sizes = [8, 8], strides = [1, 1]} : vector<8x24xf32> to vector<8x8xf32>
    %495 = vector.broadcast %10 : vector<1x8xf32> to vector<8x8xf32>
    %496 = arith.addf %494, %495 : vector<8x8xf32>
    %497 = arith.mulf %491, %496 : vector<8x8xf32>
    %498 = arith.addf %493, %497 : vector<8x8xf32>
    %499 = math.tanh %498 : vector<8x8xf32>
    %500 = arith.subf %476, %499 : vector<8x8xf32>
    %501 = arith.mulf %492, %500 : vector<8x8xf32>
    %502 = arith.addf %499, %501 : vector<8x8xf32>
    %c18_112 = arith.constant 18 : index
    %503 = memref.load %arg7[%c18_112] : memref<70xf32, #tpu.memory_space<smem>>
    %504 = vector.broadcast %503 : f32 to vector<8x8xf32>
    %505 = arith.mulf %502, %504 : vector<8x8xf32>
    %506 = arith.addf %480, %505 : vector<8x8xf32>
    %c19 = arith.constant 19 : index
    %c0_113 = arith.constant 0 : index
    %c0_114 = arith.constant 0 : index
    %507 = vector.load %arg12[%c19, %c0_113, %c0_114] : memref<70x8x24xf32, #tpu.memory_space<vmem>>, vector<1x8x24xf32>
    %508 = vector.shape_cast %507 : vector<1x8x24xf32> to vector<8x24xf32>
    %cst_115 = arith.constant dense<0.000000e+00> : vector<8x24xf32>
    %509 = tpu.matmul %502, %9, %cst_115 {dimension_numbers = #tpu.dot_dimension_numbers<[1], [0], [0], [1], [0, 0, 1, 1], [], []>} : vector<8x8xf32>, vector<8x24xf32>, vector<8x24xf32> -> vector<8x24xf32>
    %510 = arith.addf %508, %509 : vector<8x24xf32>
    %511 = vector.extract_strided_slice %510 {offsets = [0, 0], sizes = [8, 16], strides = [1, 1]} : vector<8x24xf32> to vector<8x16xf32>
    %512 = arith.negf %511 : vector<8x16xf32>
    %513 = math.exp %512 : vector<8x16xf32>
    %cst_116 = arith.constant 1.000000e+00 : f32
    %514 = vector.broadcast %cst_116 : f32 to vector<8x16xf32>
    %515 = arith.addf %514, %513 : vector<8x16xf32>
    %516 = arith.divf %514, %515 : vector<8x16xf32>
    %517 = vector.extract_strided_slice %516 {offsets = [0, 0], sizes = [8, 8], strides = [1, 1]} : vector<8x16xf32> to vector<8x8xf32>
    %518 = vector.extract_strided_slice %516 {offsets = [0, 8], sizes = [8, 8], strides = [1, 1]} : vector<8x16xf32> to vector<8x8xf32>
    %519 = vector.extract_strided_slice %508 {offsets = [0, 16], sizes = [8, 8], strides = [1, 1]} : vector<8x24xf32> to vector<8x8xf32>
    %520 = vector.extract_strided_slice %509 {offsets = [0, 16], sizes = [8, 8], strides = [1, 1]} : vector<8x24xf32> to vector<8x8xf32>
    %521 = vector.broadcast %10 : vector<1x8xf32> to vector<8x8xf32>
    %522 = arith.addf %520, %521 : vector<8x8xf32>
    %523 = arith.mulf %517, %522 : vector<8x8xf32>
    %524 = arith.addf %519, %523 : vector<8x8xf32>
    %525 = math.tanh %524 : vector<8x8xf32>
    %526 = arith.subf %502, %525 : vector<8x8xf32>
    %527 = arith.mulf %518, %526 : vector<8x8xf32>
    %528 = arith.addf %525, %527 : vector<8x8xf32>
    %c19_117 = arith.constant 19 : index
    %529 = memref.load %arg7[%c19_117] : memref<70xf32, #tpu.memory_space<smem>>
    %530 = vector.broadcast %529 : f32 to vector<8x8xf32>
    %531 = arith.mulf %528, %530 : vector<8x8xf32>
    %532 = arith.addf %506, %531 : vector<8x8xf32>
    %c20 = arith.constant 20 : index
    %c0_118 = arith.constant 0 : index
    %c0_119 = arith.constant 0 : index
    %533 = vector.load %arg12[%c20, %c0_118, %c0_119] : memref<70x8x24xf32, #tpu.memory_space<vmem>>, vector<1x8x24xf32>
    %534 = vector.shape_cast %533 : vector<1x8x24xf32> to vector<8x24xf32>
    %cst_120 = arith.constant dense<0.000000e+00> : vector<8x24xf32>
    %535 = tpu.matmul %528, %9, %cst_120 {dimension_numbers = #tpu.dot_dimension_numbers<[1], [0], [0], [1], [0, 0, 1, 1], [], []>} : vector<8x8xf32>, vector<8x24xf32>, vector<8x24xf32> -> vector<8x24xf32>
    %536 = arith.addf %534, %535 : vector<8x24xf32>
    %537 = vector.extract_strided_slice %536 {offsets = [0, 0], sizes = [8, 16], strides = [1, 1]} : vector<8x24xf32> to vector<8x16xf32>
    %538 = arith.negf %537 : vector<8x16xf32>
    %539 = math.exp %538 : vector<8x16xf32>
    %cst_121 = arith.constant 1.000000e+00 : f32
    %540 = vector.broadcast %cst_121 : f32 to vector<8x16xf32>
    %541 = arith.addf %540, %539 : vector<8x16xf32>
    %542 = arith.divf %540, %541 : vector<8x16xf32>
    %543 = vector.extract_strided_slice %542 {offsets = [0, 0], sizes = [8, 8], strides = [1, 1]} : vector<8x16xf32> to vector<8x8xf32>
    %544 = vector.extract_strided_slice %542 {offsets = [0, 8], sizes = [8, 8], strides = [1, 1]} : vector<8x16xf32> to vector<8x8xf32>
    %545 = vector.extract_strided_slice %534 {offsets = [0, 16], sizes = [8, 8], strides = [1, 1]} : vector<8x24xf32> to vector<8x8xf32>
    %546 = vector.extract_strided_slice %535 {offsets = [0, 16], sizes = [8, 8], strides = [1, 1]} : vector<8x24xf32> to vector<8x8xf32>
    %547 = vector.broadcast %10 : vector<1x8xf32> to vector<8x8xf32>
    %548 = arith.addf %546, %547 : vector<8x8xf32>
    %549 = arith.mulf %543, %548 : vector<8x8xf32>
    %550 = arith.addf %545, %549 : vector<8x8xf32>
    %551 = math.tanh %550 : vector<8x8xf32>
    %552 = arith.subf %528, %551 : vector<8x8xf32>
    %553 = arith.mulf %544, %552 : vector<8x8xf32>
    %554 = arith.addf %551, %553 : vector<8x8xf32>
    %c20_122 = arith.constant 20 : index
    %555 = memref.load %arg7[%c20_122] : memref<70xf32, #tpu.memory_space<smem>>
    %556 = vector.broadcast %555 : f32 to vector<8x8xf32>
    %557 = arith.mulf %554, %556 : vector<8x8xf32>
    %558 = arith.addf %532, %557 : vector<8x8xf32>
    %c21 = arith.constant 21 : index
    %c0_123 = arith.constant 0 : index
    %c0_124 = arith.constant 0 : index
    %559 = vector.load %arg12[%c21, %c0_123, %c0_124] : memref<70x8x24xf32, #tpu.memory_space<vmem>>, vector<1x8x24xf32>
    %560 = vector.shape_cast %559 : vector<1x8x24xf32> to vector<8x24xf32>
    %cst_125 = arith.constant dense<0.000000e+00> : vector<8x24xf32>
    %561 = tpu.matmul %554, %9, %cst_125 {dimension_numbers = #tpu.dot_dimension_numbers<[1], [0], [0], [1], [0, 0, 1, 1], [], []>} : vector<8x8xf32>, vector<8x24xf32>, vector<8x24xf32> -> vector<8x24xf32>
    %562 = arith.addf %560, %561 : vector<8x24xf32>
    %563 = vector.extract_strided_slice %562 {offsets = [0, 0], sizes = [8, 16], strides = [1, 1]} : vector<8x24xf32> to vector<8x16xf32>
    %564 = arith.negf %563 : vector<8x16xf32>
    %565 = math.exp %564 : vector<8x16xf32>
    %cst_126 = arith.constant 1.000000e+00 : f32
    %566 = vector.broadcast %cst_126 : f32 to vector<8x16xf32>
    %567 = arith.addf %566, %565 : vector<8x16xf32>
    %568 = arith.divf %566, %567 : vector<8x16xf32>
    %569 = vector.extract_strided_slice %568 {offsets = [0, 0], sizes = [8, 8], strides = [1, 1]} : vector<8x16xf32> to vector<8x8xf32>
    %570 = vector.extract_strided_slice %568 {offsets = [0, 8], sizes = [8, 8], strides = [1, 1]} : vector<8x16xf32> to vector<8x8xf32>
    %571 = vector.extract_strided_slice %560 {offsets = [0, 16], sizes = [8, 8], strides = [1, 1]} : vector<8x24xf32> to vector<8x8xf32>
    %572 = vector.extract_strided_slice %561 {offsets = [0, 16], sizes = [8, 8], strides = [1, 1]} : vector<8x24xf32> to vector<8x8xf32>
    %573 = vector.broadcast %10 : vector<1x8xf32> to vector<8x8xf32>
    %574 = arith.addf %572, %573 : vector<8x8xf32>
    %575 = arith.mulf %569, %574 : vector<8x8xf32>
    %576 = arith.addf %571, %575 : vector<8x8xf32>
    %577 = math.tanh %576 : vector<8x8xf32>
    %578 = arith.subf %554, %577 : vector<8x8xf32>
    %579 = arith.mulf %570, %578 : vector<8x8xf32>
    %580 = arith.addf %577, %579 : vector<8x8xf32>
    %c21_127 = arith.constant 21 : index
    %581 = memref.load %arg7[%c21_127] : memref<70xf32, #tpu.memory_space<smem>>
    %582 = vector.broadcast %581 : f32 to vector<8x8xf32>
    %583 = arith.mulf %580, %582 : vector<8x8xf32>
    %584 = arith.addf %558, %583 : vector<8x8xf32>
    %c22 = arith.constant 22 : index
    %c0_128 = arith.constant 0 : index
    %c0_129 = arith.constant 0 : index
    %585 = vector.load %arg12[%c22, %c0_128, %c0_129] : memref<70x8x24xf32, #tpu.memory_space<vmem>>, vector<1x8x24xf32>
    %586 = vector.shape_cast %585 : vector<1x8x24xf32> to vector<8x24xf32>
    %cst_130 = arith.constant dense<0.000000e+00> : vector<8x24xf32>
    %587 = tpu.matmul %580, %9, %cst_130 {dimension_numbers = #tpu.dot_dimension_numbers<[1], [0], [0], [1], [0, 0, 1, 1], [], []>} : vector<8x8xf32>, vector<8x24xf32>, vector<8x24xf32> -> vector<8x24xf32>
    %588 = arith.addf %586, %587 : vector<8x24xf32>
    %589 = vector.extract_strided_slice %588 {offsets = [0, 0], sizes = [8, 16], strides = [1, 1]} : vector<8x24xf32> to vector<8x16xf32>
    %590 = arith.negf %589 : vector<8x16xf32>
    %591 = math.exp %590 : vector<8x16xf32>
    %cst_131 = arith.constant 1.000000e+00 : f32
    %592 = vector.broadcast %cst_131 : f32 to vector<8x16xf32>
    %593 = arith.addf %592, %591 : vector<8x16xf32>
    %594 = arith.divf %592, %593 : vector<8x16xf32>
    %595 = vector.extract_strided_slice %594 {offsets = [0, 0], sizes = [8, 8], strides = [1, 1]} : vector<8x16xf32> to vector<8x8xf32>
    %596 = vector.extract_strided_slice %594 {offsets = [0, 8], sizes = [8, 8], strides = [1, 1]} : vector<8x16xf32> to vector<8x8xf32>
    %597 = vector.extract_strided_slice %586 {offsets = [0, 16], sizes = [8, 8], strides = [1, 1]} : vector<8x24xf32> to vector<8x8xf32>
    %598 = vector.extract_strided_slice %587 {offsets = [0, 16], sizes = [8, 8], strides = [1, 1]} : vector<8x24xf32> to vector<8x8xf32>
    %599 = vector.broadcast %10 : vector<1x8xf32> to vector<8x8xf32>
    %600 = arith.addf %598, %599 : vector<8x8xf32>
    %601 = arith.mulf %595, %600 : vector<8x8xf32>
    %602 = arith.addf %597, %601 : vector<8x8xf32>
    %603 = math.tanh %602 : vector<8x8xf32>
    %604 = arith.subf %580, %603 : vector<8x8xf32>
    %605 = arith.mulf %596, %604 : vector<8x8xf32>
    %606 = arith.addf %603, %605 : vector<8x8xf32>
    %c22_132 = arith.constant 22 : index
    %607 = memref.load %arg7[%c22_132] : memref<70xf32, #tpu.memory_space<smem>>
    %608 = vector.broadcast %607 : f32 to vector<8x8xf32>
    %609 = arith.mulf %606, %608 : vector<8x8xf32>
    %610 = arith.addf %584, %609 : vector<8x8xf32>
    %c23 = arith.constant 23 : index
    %c0_133 = arith.constant 0 : index
    %c0_134 = arith.constant 0 : index
    %611 = vector.load %arg12[%c23, %c0_133, %c0_134] : memref<70x8x24xf32, #tpu.memory_space<vmem>>, vector<1x8x24xf32>
    %612 = vector.shape_cast %611 : vector<1x8x24xf32> to vector<8x24xf32>
    %cst_135 = arith.constant dense<0.000000e+00> : vector<8x24xf32>
    %613 = tpu.matmul %606, %9, %cst_135 {dimension_numbers = #tpu.dot_dimension_numbers<[1], [0], [0], [1], [0, 0, 1, 1], [], []>} : vector<8x8xf32>, vector<8x24xf32>, vector<8x24xf32> -> vector<8x24xf32>
    %614 = arith.addf %612, %613 : vector<8x24xf32>
    %615 = vector.extract_strided_slice %614 {offsets = [0, 0], sizes = [8, 16], strides = [1, 1]} : vector<8x24xf32> to vector<8x16xf32>
    %616 = arith.negf %615 : vector<8x16xf32>
    %617 = math.exp %616 : vector<8x16xf32>
    %cst_136 = arith.constant 1.000000e+00 : f32
    %618 = vector.broadcast %cst_136 : f32 to vector<8x16xf32>
    %619 = arith.addf %618, %617 : vector<8x16xf32>
    %620 = arith.divf %618, %619 : vector<8x16xf32>
    %621 = vector.extract_strided_slice %620 {offsets = [0, 0], sizes = [8, 8], strides = [1, 1]} : vector<8x16xf32> to vector<8x8xf32>
    %622 = vector.extract_strided_slice %620 {offsets = [0, 8], sizes = [8, 8], strides = [1, 1]} : vector<8x16xf32> to vector<8x8xf32>
    %623 = vector.extract_strided_slice %612 {offsets = [0, 16], sizes = [8, 8], strides = [1, 1]} : vector<8x24xf32> to vector<8x8xf32>
    %624 = vector.extract_strided_slice %613 {offsets = [0, 16], sizes = [8, 8], strides = [1, 1]} : vector<8x24xf32> to vector<8x8xf32>
    %625 = vector.broadcast %10 : vector<1x8xf32> to vector<8x8xf32>
    %626 = arith.addf %624, %625 : vector<8x8xf32>
    %627 = arith.mulf %621, %626 : vector<8x8xf32>
    %628 = arith.addf %623, %627 : vector<8x8xf32>
    %629 = math.tanh %628 : vector<8x8xf32>
    %630 = arith.subf %606, %629 : vector<8x8xf32>
    %631 = arith.mulf %622, %630 : vector<8x8xf32>
    %632 = arith.addf %629, %631 : vector<8x8xf32>
    %c23_137 = arith.constant 23 : index
    %633 = memref.load %arg7[%c23_137] : memref<70xf32, #tpu.memory_space<smem>>
    %634 = vector.broadcast %633 : f32 to vector<8x8xf32>
    %635 = arith.mulf %632, %634 : vector<8x8xf32>
    %636 = arith.addf %610, %635 : vector<8x8xf32>
    %c24 = arith.constant 24 : index
    %c0_138 = arith.constant 0 : index
    %c0_139 = arith.constant 0 : index
    %637 = vector.load %arg12[%c24, %c0_138, %c0_139] : memref<70x8x24xf32, #tpu.memory_space<vmem>>, vector<1x8x24xf32>
    %638 = vector.shape_cast %637 : vector<1x8x24xf32> to vector<8x24xf32>
    %cst_140 = arith.constant dense<0.000000e+00> : vector<8x24xf32>
    %639 = tpu.matmul %632, %9, %cst_140 {dimension_numbers = #tpu.dot_dimension_numbers<[1], [0], [0], [1], [0, 0, 1, 1], [], []>} : vector<8x8xf32>, vector<8x24xf32>, vector<8x24xf32> -> vector<8x24xf32>
    %640 = arith.addf %638, %639 : vector<8x24xf32>
    %641 = vector.extract_strided_slice %640 {offsets = [0, 0], sizes = [8, 16], strides = [1, 1]} : vector<8x24xf32> to vector<8x16xf32>
    %642 = arith.negf %641 : vector<8x16xf32>
    %643 = math.exp %642 : vector<8x16xf32>
    %cst_141 = arith.constant 1.000000e+00 : f32
    %644 = vector.broadcast %cst_141 : f32 to vector<8x16xf32>
    %645 = arith.addf %644, %643 : vector<8x16xf32>
    %646 = arith.divf %644, %645 : vector<8x16xf32>
    %647 = vector.extract_strided_slice %646 {offsets = [0, 0], sizes = [8, 8], strides = [1, 1]} : vector<8x16xf32> to vector<8x8xf32>
    %648 = vector.extract_strided_slice %646 {offsets = [0, 8], sizes = [8, 8], strides = [1, 1]} : vector<8x16xf32> to vector<8x8xf32>
    %649 = vector.extract_strided_slice %638 {offsets = [0, 16], sizes = [8, 8], strides = [1, 1]} : vector<8x24xf32> to vector<8x8xf32>
    %650 = vector.extract_strided_slice %639 {offsets = [0, 16], sizes = [8, 8], strides = [1, 1]} : vector<8x24xf32> to vector<8x8xf32>
    %651 = vector.broadcast %10 : vector<1x8xf32> to vector<8x8xf32>
    %652 = arith.addf %650, %651 : vector<8x8xf32>
    %653 = arith.mulf %647, %652 : vector<8x8xf32>
    %654 = arith.addf %649, %653 : vector<8x8xf32>
    %655 = math.tanh %654 : vector<8x8xf32>
    %656 = arith.subf %632, %655 : vector<8x8xf32>
    %657 = arith.mulf %648, %656 : vector<8x8xf32>
    %658 = arith.addf %655, %657 : vector<8x8xf32>
    %c24_142 = arith.constant 24 : index
    %659 = memref.load %arg7[%c24_142] : memref<70xf32, #tpu.memory_space<smem>>
    %660 = vector.broadcast %659 : f32 to vector<8x8xf32>
    %661 = arith.mulf %658, %660 : vector<8x8xf32>
    %662 = arith.addf %636, %661 : vector<8x8xf32>
    %c25 = arith.constant 25 : index
    %c0_143 = arith.constant 0 : index
    %c0_144 = arith.constant 0 : index
    %663 = vector.load %arg12[%c25, %c0_143, %c0_144] : memref<70x8x24xf32, #tpu.memory_space<vmem>>, vector<1x8x24xf32>
    %664 = vector.shape_cast %663 : vector<1x8x24xf32> to vector<8x24xf32>
    %cst_145 = arith.constant dense<0.000000e+00> : vector<8x24xf32>
    %665 = tpu.matmul %658, %9, %cst_145 {dimension_numbers = #tpu.dot_dimension_numbers<[1], [0], [0], [1], [0, 0, 1, 1], [], []>} : vector<8x8xf32>, vector<8x24xf32>, vector<8x24xf32> -> vector<8x24xf32>
    %666 = arith.addf %664, %665 : vector<8x24xf32>
    %667 = vector.extract_strided_slice %666 {offsets = [0, 0], sizes = [8, 16], strides = [1, 1]} : vector<8x24xf32> to vector<8x16xf32>
    %668 = arith.negf %667 : vector<8x16xf32>
    %669 = math.exp %668 : vector<8x16xf32>
    %cst_146 = arith.constant 1.000000e+00 : f32
    %670 = vector.broadcast %cst_146 : f32 to vector<8x16xf32>
    %671 = arith.addf %670, %669 : vector<8x16xf32>
    %672 = arith.divf %670, %671 : vector<8x16xf32>
    %673 = vector.extract_strided_slice %672 {offsets = [0, 0], sizes = [8, 8], strides = [1, 1]} : vector<8x16xf32> to vector<8x8xf32>
    %674 = vector.extract_strided_slice %672 {offsets = [0, 8], sizes = [8, 8], strides = [1, 1]} : vector<8x16xf32> to vector<8x8xf32>
    %675 = vector.extract_strided_slice %664 {offsets = [0, 16], sizes = [8, 8], strides = [1, 1]} : vector<8x24xf32> to vector<8x8xf32>
    %676 = vector.extract_strided_slice %665 {offsets = [0, 16], sizes = [8, 8], strides = [1, 1]} : vector<8x24xf32> to vector<8x8xf32>
    %677 = vector.broadcast %10 : vector<1x8xf32> to vector<8x8xf32>
    %678 = arith.addf %676, %677 : vector<8x8xf32>
    %679 = arith.mulf %673, %678 : vector<8x8xf32>
    %680 = arith.addf %675, %679 : vector<8x8xf32>
    %681 = math.tanh %680 : vector<8x8xf32>
    %682 = arith.subf %658, %681 : vector<8x8xf32>
    %683 = arith.mulf %674, %682 : vector<8x8xf32>
    %684 = arith.addf %681, %683 : vector<8x8xf32>
    %c25_147 = arith.constant 25 : index
    %685 = memref.load %arg7[%c25_147] : memref<70xf32, #tpu.memory_space<smem>>
    %686 = vector.broadcast %685 : f32 to vector<8x8xf32>
    %687 = arith.mulf %684, %686 : vector<8x8xf32>
    %688 = arith.addf %662, %687 : vector<8x8xf32>
    %c26 = arith.constant 26 : index
    %c0_148 = arith.constant 0 : index
    %c0_149 = arith.constant 0 : index
    %689 = vector.load %arg12[%c26, %c0_148, %c0_149] : memref<70x8x24xf32, #tpu.memory_space<vmem>>, vector<1x8x24xf32>
    %690 = vector.shape_cast %689 : vector<1x8x24xf32> to vector<8x24xf32>
    %cst_150 = arith.constant dense<0.000000e+00> : vector<8x24xf32>
    %691 = tpu.matmul %684, %9, %cst_150 {dimension_numbers = #tpu.dot_dimension_numbers<[1], [0], [0], [1], [0, 0, 1, 1], [], []>} : vector<8x8xf32>, vector<8x24xf32>, vector<8x24xf32> -> vector<8x24xf32>
    %692 = arith.addf %690, %691 : vector<8x24xf32>
    %693 = vector.extract_strided_slice %692 {offsets = [0, 0], sizes = [8, 16], strides = [1, 1]} : vector<8x24xf32> to vector<8x16xf32>
    %694 = arith.negf %693 : vector<8x16xf32>
    %695 = math.exp %694 : vector<8x16xf32>
    %cst_151 = arith.constant 1.000000e+00 : f32
    %696 = vector.broadcast %cst_151 : f32 to vector<8x16xf32>
    %697 = arith.addf %696, %695 : vector<8x16xf32>
    %698 = arith.divf %696, %697 : vector<8x16xf32>
    %699 = vector.extract_strided_slice %698 {offsets = [0, 0], sizes = [8, 8], strides = [1, 1]} : vector<8x16xf32> to vector<8x8xf32>
    %700 = vector.extract_strided_slice %698 {offsets = [0, 8], sizes = [8, 8], strides = [1, 1]} : vector<8x16xf32> to vector<8x8xf32>
    %701 = vector.extract_strided_slice %690 {offsets = [0, 16], sizes = [8, 8], strides = [1, 1]} : vector<8x24xf32> to vector<8x8xf32>
    %702 = vector.extract_strided_slice %691 {offsets = [0, 16], sizes = [8, 8], strides = [1, 1]} : vector<8x24xf32> to vector<8x8xf32>
    %703 = vector.broadcast %10 : vector<1x8xf32> to vector<8x8xf32>
    %704 = arith.addf %702, %703 : vector<8x8xf32>
    %705 = arith.mulf %699, %704 : vector<8x8xf32>
    %706 = arith.addf %701, %705 : vector<8x8xf32>
    %707 = math.tanh %706 : vector<8x8xf32>
    %708 = arith.subf %684, %707 : vector<8x8xf32>
    %709 = arith.mulf %700, %708 : vector<8x8xf32>
    %710 = arith.addf %707, %709 : vector<8x8xf32>
    %c26_152 = arith.constant 26 : index
    %711 = memref.load %arg7[%c26_152] : memref<70xf32, #tpu.memory_space<smem>>
    %712 = vector.broadcast %711 : f32 to vector<8x8xf32>
    %713 = arith.mulf %710, %712 : vector<8x8xf32>
    %714 = arith.addf %688, %713 : vector<8x8xf32>
    %c27 = arith.constant 27 : index
    %c0_153 = arith.constant 0 : index
    %c0_154 = arith.constant 0 : index
    %715 = vector.load %arg12[%c27, %c0_153, %c0_154] : memref<70x8x24xf32, #tpu.memory_space<vmem>>, vector<1x8x24xf32>
    %716 = vector.shape_cast %715 : vector<1x8x24xf32> to vector<8x24xf32>
    %cst_155 = arith.constant dense<0.000000e+00> : vector<8x24xf32>
    %717 = tpu.matmul %710, %9, %cst_155 {dimension_numbers = #tpu.dot_dimension_numbers<[1], [0], [0], [1], [0, 0, 1, 1], [], []>} : vector<8x8xf32>, vector<8x24xf32>, vector<8x24xf32> -> vector<8x24xf32>
    %718 = arith.addf %716, %717 : vector<8x24xf32>
    %719 = vector.extract_strided_slice %718 {offsets = [0, 0], sizes = [8, 16], strides = [1, 1]} : vector<8x24xf32> to vector<8x16xf32>
    %720 = arith.negf %719 : vector<8x16xf32>
    %721 = math.exp %720 : vector<8x16xf32>
    %cst_156 = arith.constant 1.000000e+00 : f32
    %722 = vector.broadcast %cst_156 : f32 to vector<8x16xf32>
    %723 = arith.addf %722, %721 : vector<8x16xf32>
    %724 = arith.divf %722, %723 : vector<8x16xf32>
    %725 = vector.extract_strided_slice %724 {offsets = [0, 0], sizes = [8, 8], strides = [1, 1]} : vector<8x16xf32> to vector<8x8xf32>
    %726 = vector.extract_strided_slice %724 {offsets = [0, 8], sizes = [8, 8], strides = [1, 1]} : vector<8x16xf32> to vector<8x8xf32>
    %727 = vector.extract_strided_slice %716 {offsets = [0, 16], sizes = [8, 8], strides = [1, 1]} : vector<8x24xf32> to vector<8x8xf32>
    %728 = vector.extract_strided_slice %717 {offsets = [0, 16], sizes = [8, 8], strides = [1, 1]} : vector<8x24xf32> to vector<8x8xf32>
    %729 = vector.broadcast %10 : vector<1x8xf32> to vector<8x8xf32>
    %730 = arith.addf %728, %729 : vector<8x8xf32>
    %731 = arith.mulf %725, %730 : vector<8x8xf32>
    %732 = arith.addf %727, %731 : vector<8x8xf32>
    %733 = math.tanh %732 : vector<8x8xf32>
    %734 = arith.subf %710, %733 : vector<8x8xf32>
    %735 = arith.mulf %726, %734 : vector<8x8xf32>
    %736 = arith.addf %733, %735 : vector<8x8xf32>
    %c27_157 = arith.constant 27 : index
    %737 = memref.load %arg7[%c27_157] : memref<70xf32, #tpu.memory_space<smem>>
    %738 = vector.broadcast %737 : f32 to vector<8x8xf32>
    %739 = arith.mulf %736, %738 : vector<8x8xf32>
    %740 = arith.addf %714, %739 : vector<8x8xf32>
    %c28 = arith.constant 28 : index
    %c0_158 = arith.constant 0 : index
    %c0_159 = arith.constant 0 : index
    %741 = vector.load %arg12[%c28, %c0_158, %c0_159] : memref<70x8x24xf32, #tpu.memory_space<vmem>>, vector<1x8x24xf32>
    %742 = vector.shape_cast %741 : vector<1x8x24xf32> to vector<8x24xf32>
    %cst_160 = arith.constant dense<0.000000e+00> : vector<8x24xf32>
    %743 = tpu.matmul %736, %9, %cst_160 {dimension_numbers = #tpu.dot_dimension_numbers<[1], [0], [0], [1], [0, 0, 1, 1], [], []>} : vector<8x8xf32>, vector<8x24xf32>, vector<8x24xf32> -> vector<8x24xf32>
    %744 = arith.addf %742, %743 : vector<8x24xf32>
    %745 = vector.extract_strided_slice %744 {offsets = [0, 0], sizes = [8, 16], strides = [1, 1]} : vector<8x24xf32> to vector<8x16xf32>
    %746 = arith.negf %745 : vector<8x16xf32>
    %747 = math.exp %746 : vector<8x16xf32>
    %cst_161 = arith.constant 1.000000e+00 : f32
    %748 = vector.broadcast %cst_161 : f32 to vector<8x16xf32>
    %749 = arith.addf %748, %747 : vector<8x16xf32>
    %750 = arith.divf %748, %749 : vector<8x16xf32>
    %751 = vector.extract_strided_slice %750 {offsets = [0, 0], sizes = [8, 8], strides = [1, 1]} : vector<8x16xf32> to vector<8x8xf32>
    %752 = vector.extract_strided_slice %750 {offsets = [0, 8], sizes = [8, 8], strides = [1, 1]} : vector<8x16xf32> to vector<8x8xf32>
    %753 = vector.extract_strided_slice %742 {offsets = [0, 16], sizes = [8, 8], strides = [1, 1]} : vector<8x24xf32> to vector<8x8xf32>
    %754 = vector.extract_strided_slice %743 {offsets = [0, 16], sizes = [8, 8], strides = [1, 1]} : vector<8x24xf32> to vector<8x8xf32>
    %755 = vector.broadcast %10 : vector<1x8xf32> to vector<8x8xf32>
    %756 = arith.addf %754, %755 : vector<8x8xf32>
    %757 = arith.mulf %751, %756 : vector<8x8xf32>
    %758 = arith.addf %753, %757 : vector<8x8xf32>
    %759 = math.tanh %758 : vector<8x8xf32>
    %760 = arith.subf %736, %759 : vector<8x8xf32>
    %761 = arith.mulf %752, %760 : vector<8x8xf32>
    %762 = arith.addf %759, %761 : vector<8x8xf32>
    %c28_162 = arith.constant 28 : index
    %763 = memref.load %arg7[%c28_162] : memref<70xf32, #tpu.memory_space<smem>>
    %764 = vector.broadcast %763 : f32 to vector<8x8xf32>
    %765 = arith.mulf %762, %764 : vector<8x8xf32>
    %766 = arith.addf %740, %765 : vector<8x8xf32>
    %c29 = arith.constant 29 : index
    %c0_163 = arith.constant 0 : index
    %c0_164 = arith.constant 0 : index
    %767 = vector.load %arg12[%c29, %c0_163, %c0_164] : memref<70x8x24xf32, #tpu.memory_space<vmem>>, vector<1x8x24xf32>
    %768 = vector.shape_cast %767 : vector<1x8x24xf32> to vector<8x24xf32>
    %cst_165 = arith.constant dense<0.000000e+00> : vector<8x24xf32>
    %769 = tpu.matmul %762, %9, %cst_165 {dimension_numbers = #tpu.dot_dimension_numbers<[1], [0], [0], [1], [0, 0, 1, 1], [], []>} : vector<8x8xf32>, vector<8x24xf32>, vector<8x24xf32> -> vector<8x24xf32>
    %770 = arith.addf %768, %769 : vector<8x24xf32>
    %771 = vector.extract_strided_slice %770 {offsets = [0, 0], sizes = [8, 16], strides = [1, 1]} : vector<8x24xf32> to vector<8x16xf32>
    %772 = arith.negf %771 : vector<8x16xf32>
    %773 = math.exp %772 : vector<8x16xf32>
    %cst_166 = arith.constant 1.000000e+00 : f32
    %774 = vector.broadcast %cst_166 : f32 to vector<8x16xf32>
    %775 = arith.addf %774, %773 : vector<8x16xf32>
    %776 = arith.divf %774, %775 : vector<8x16xf32>
    %777 = vector.extract_strided_slice %776 {offsets = [0, 0], sizes = [8, 8], strides = [1, 1]} : vector<8x16xf32> to vector<8x8xf32>
    %778 = vector.extract_strided_slice %776 {offsets = [0, 8], sizes = [8, 8], strides = [1, 1]} : vector<8x16xf32> to vector<8x8xf32>
    %779 = vector.extract_strided_slice %768 {offsets = [0, 16], sizes = [8, 8], strides = [1, 1]} : vector<8x24xf32> to vector<8x8xf32>
    %780 = vector.extract_strided_slice %769 {offsets = [0, 16], sizes = [8, 8], strides = [1, 1]} : vector<8x24xf32> to vector<8x8xf32>
    %781 = vector.broadcast %10 : vector<1x8xf32> to vector<8x8xf32>
    %782 = arith.addf %780, %781 : vector<8x8xf32>
    %783 = arith.mulf %777, %782 : vector<8x8xf32>
    %784 = arith.addf %779, %783 : vector<8x8xf32>
    %785 = math.tanh %784 : vector<8x8xf32>
    %786 = arith.subf %762, %785 : vector<8x8xf32>
    %787 = arith.mulf %778, %786 : vector<8x8xf32>
    %788 = arith.addf %785, %787 : vector<8x8xf32>
    %c29_167 = arith.constant 29 : index
    %789 = memref.load %arg7[%c29_167] : memref<70xf32, #tpu.memory_space<smem>>
    %790 = vector.broadcast %789 : f32 to vector<8x8xf32>
    %791 = arith.mulf %788, %790 : vector<8x8xf32>
    %792 = arith.addf %766, %791 : vector<8x8xf32>
    %c30 = arith.constant 30 : index
    %c0_168 = arith.constant 0 : index
    %c0_169 = arith.constant 0 : index
    %793 = vector.load %arg12[%c30, %c0_168, %c0_169] : memref<70x8x24xf32, #tpu.memory_space<vmem>>, vector<1x8x24xf32>
    %794 = vector.shape_cast %793 : vector<1x8x24xf32> to vector<8x24xf32>
    %cst_170 = arith.constant dense<0.000000e+00> : vector<8x24xf32>
    %795 = tpu.matmul %788, %9, %cst_170 {dimension_numbers = #tpu.dot_dimension_numbers<[1], [0], [0], [1], [0, 0, 1, 1], [], []>} : vector<8x8xf32>, vector<8x24xf32>, vector<8x24xf32> -> vector<8x24xf32>
    %796 = arith.addf %794, %795 : vector<8x24xf32>
    %797 = vector.extract_strided_slice %796 {offsets = [0, 0], sizes = [8, 16], strides = [1, 1]} : vector<8x24xf32> to vector<8x16xf32>
    %798 = arith.negf %797 : vector<8x16xf32>
    %799 = math.exp %798 : vector<8x16xf32>
    %cst_171 = arith.constant 1.000000e+00 : f32
    %800 = vector.broadcast %cst_171 : f32 to vector<8x16xf32>
    %801 = arith.addf %800, %799 : vector<8x16xf32>
    %802 = arith.divf %800, %801 : vector<8x16xf32>
    %803 = vector.extract_strided_slice %802 {offsets = [0, 0], sizes = [8, 8], strides = [1, 1]} : vector<8x16xf32> to vector<8x8xf32>
    %804 = vector.extract_strided_slice %802 {offsets = [0, 8], sizes = [8, 8], strides = [1, 1]} : vector<8x16xf32> to vector<8x8xf32>
    %805 = vector.extract_strided_slice %794 {offsets = [0, 16], sizes = [8, 8], strides = [1, 1]} : vector<8x24xf32> to vector<8x8xf32>
    %806 = vector.extract_strided_slice %795 {offsets = [0, 16], sizes = [8, 8], strides = [1, 1]} : vector<8x24xf32> to vector<8x8xf32>
    %807 = vector.broadcast %10 : vector<1x8xf32> to vector<8x8xf32>
    %808 = arith.addf %806, %807 : vector<8x8xf32>
    %809 = arith.mulf %803, %808 : vector<8x8xf32>
    %810 = arith.addf %805, %809 : vector<8x8xf32>
    %811 = math.tanh %810 : vector<8x8xf32>
    %812 = arith.subf %788, %811 : vector<8x8xf32>
    %813 = arith.mulf %804, %812 : vector<8x8xf32>
    %814 = arith.addf %811, %813 : vector<8x8xf32>
    %c30_172 = arith.constant 30 : index
    %815 = memref.load %arg7[%c30_172] : memref<70xf32, #tpu.memory_space<smem>>
    %816 = vector.broadcast %815 : f32 to vector<8x8xf32>
    %817 = arith.mulf %814, %816 : vector<8x8xf32>
    %818 = arith.addf %792, %817 : vector<8x8xf32>
    %c31 = arith.constant 31 : index
    %c0_173 = arith.constant 0 : index
    %c0_174 = arith.constant 0 : index
    %819 = vector.load %arg12[%c31, %c0_173, %c0_174] : memref<70x8x24xf32, #tpu.memory_space<vmem>>, vector<1x8x24xf32>
    %820 = vector.shape_cast %819 : vector<1x8x24xf32> to vector<8x24xf32>
    %cst_175 = arith.constant dense<0.000000e+00> : vector<8x24xf32>
    %821 = tpu.matmul %814, %9, %cst_175 {dimension_numbers = #tpu.dot_dimension_numbers<[1], [0], [0], [1], [0, 0, 1, 1], [], []>} : vector<8x8xf32>, vector<8x24xf32>, vector<8x24xf32> -> vector<8x24xf32>
    %822 = arith.addf %820, %821 : vector<8x24xf32>
    %823 = vector.extract_strided_slice %822 {offsets = [0, 0], sizes = [8, 16], strides = [1, 1]} : vector<8x24xf32> to vector<8x16xf32>
    %824 = arith.negf %823 : vector<8x16xf32>
    %825 = math.exp %824 : vector<8x16xf32>
    %cst_176 = arith.constant 1.000000e+00 : f32
    %826 = vector.broadcast %cst_176 : f32 to vector<8x16xf32>
    %827 = arith.addf %826, %825 : vector<8x16xf32>
    %828 = arith.divf %826, %827 : vector<8x16xf32>
    %829 = vector.extract_strided_slice %828 {offsets = [0, 0], sizes = [8, 8], strides = [1, 1]} : vector<8x16xf32> to vector<8x8xf32>
    %830 = vector.extract_strided_slice %828 {offsets = [0, 8], sizes = [8, 8], strides = [1, 1]} : vector<8x16xf32> to vector<8x8xf32>
    %831 = vector.extract_strided_slice %820 {offsets = [0, 16], sizes = [8, 8], strides = [1, 1]} : vector<8x24xf32> to vector<8x8xf32>
    %832 = vector.extract_strided_slice %821 {offsets = [0, 16], sizes = [8, 8], strides = [1, 1]} : vector<8x24xf32> to vector<8x8xf32>
    %833 = vector.broadcast %10 : vector<1x8xf32> to vector<8x8xf32>
    %834 = arith.addf %832, %833 : vector<8x8xf32>
    %835 = arith.mulf %829, %834 : vector<8x8xf32>
    %836 = arith.addf %831, %835 : vector<8x8xf32>
    %837 = math.tanh %836 : vector<8x8xf32>
    %838 = arith.subf %814, %837 : vector<8x8xf32>
    %839 = arith.mulf %830, %838 : vector<8x8xf32>
    %840 = arith.addf %837, %839 : vector<8x8xf32>
    %c31_177 = arith.constant 31 : index
    %841 = memref.load %arg7[%c31_177] : memref<70xf32, #tpu.memory_space<smem>>
    %842 = vector.broadcast %841 : f32 to vector<8x8xf32>
    %843 = arith.mulf %840, %842 : vector<8x8xf32>
    %844 = arith.addf %818, %843 : vector<8x8xf32>
    %c32 = arith.constant 32 : index
    %c0_178 = arith.constant 0 : index
    %c0_179 = arith.constant 0 : index
    %845 = vector.load %arg12[%c32, %c0_178, %c0_179] : memref<70x8x24xf32, #tpu.memory_space<vmem>>, vector<1x8x24xf32>
    %846 = vector.shape_cast %845 : vector<1x8x24xf32> to vector<8x24xf32>
    %cst_180 = arith.constant dense<0.000000e+00> : vector<8x24xf32>
    %847 = tpu.matmul %840, %9, %cst_180 {dimension_numbers = #tpu.dot_dimension_numbers<[1], [0], [0], [1], [0, 0, 1, 1], [], []>} : vector<8x8xf32>, vector<8x24xf32>, vector<8x24xf32> -> vector<8x24xf32>
    %848 = arith.addf %846, %847 : vector<8x24xf32>
    %849 = vector.extract_strided_slice %848 {offsets = [0, 0], sizes = [8, 16], strides = [1, 1]} : vector<8x24xf32> to vector<8x16xf32>
    %850 = arith.negf %849 : vector<8x16xf32>
    %851 = math.exp %850 : vector<8x16xf32>
    %cst_181 = arith.constant 1.000000e+00 : f32
    %852 = vector.broadcast %cst_181 : f32 to vector<8x16xf32>
    %853 = arith.addf %852, %851 : vector<8x16xf32>
    %854 = arith.divf %852, %853 : vector<8x16xf32>
    %855 = vector.extract_strided_slice %854 {offsets = [0, 0], sizes = [8, 8], strides = [1, 1]} : vector<8x16xf32> to vector<8x8xf32>
    %856 = vector.extract_strided_slice %854 {offsets = [0, 8], sizes = [8, 8], strides = [1, 1]} : vector<8x16xf32> to vector<8x8xf32>
    %857 = vector.extract_strided_slice %846 {offsets = [0, 16], sizes = [8, 8], strides = [1, 1]} : vector<8x24xf32> to vector<8x8xf32>
    %858 = vector.extract_strided_slice %847 {offsets = [0, 16], sizes = [8, 8], strides = [1, 1]} : vector<8x24xf32> to vector<8x8xf32>
    %859 = vector.broadcast %10 : vector<1x8xf32> to vector<8x8xf32>
    %860 = arith.addf %858, %859 : vector<8x8xf32>
    %861 = arith.mulf %855, %860 : vector<8x8xf32>
    %862 = arith.addf %857, %861 : vector<8x8xf32>
    %863 = math.tanh %862 : vector<8x8xf32>
    %864 = arith.subf %840, %863 : vector<8x8xf32>
    %865 = arith.mulf %856, %864 : vector<8x8xf32>
    %866 = arith.addf %863, %865 : vector<8x8xf32>
    %c32_182 = arith.constant 32 : index
    %867 = memref.load %arg7[%c32_182] : memref<70xf32, #tpu.memory_space<smem>>
    %868 = vector.broadcast %867 : f32 to vector<8x8xf32>
    %869 = arith.mulf %866, %868 : vector<8x8xf32>
    %870 = arith.addf %844, %869 : vector<8x8xf32>
    %c33 = arith.constant 33 : index
    %c0_183 = arith.constant 0 : index
    %c0_184 = arith.constant 0 : index
    %871 = vector.load %arg12[%c33, %c0_183, %c0_184] : memref<70x8x24xf32, #tpu.memory_space<vmem>>, vector<1x8x24xf32>
    %872 = vector.shape_cast %871 : vector<1x8x24xf32> to vector<8x24xf32>
    %cst_185 = arith.constant dense<0.000000e+00> : vector<8x24xf32>
    %873 = tpu.matmul %866, %9, %cst_185 {dimension_numbers = #tpu.dot_dimension_numbers<[1], [0], [0], [1], [0, 0, 1, 1], [], []>} : vector<8x8xf32>, vector<8x24xf32>, vector<8x24xf32> -> vector<8x24xf32>
    %874 = arith.addf %872, %873 : vector<8x24xf32>
    %875 = vector.extract_strided_slice %874 {offsets = [0, 0], sizes = [8, 16], strides = [1, 1]} : vector<8x24xf32> to vector<8x16xf32>
    %876 = arith.negf %875 : vector<8x16xf32>
    %877 = math.exp %876 : vector<8x16xf32>
    %cst_186 = arith.constant 1.000000e+00 : f32
    %878 = vector.broadcast %cst_186 : f32 to vector<8x16xf32>
    %879 = arith.addf %878, %877 : vector<8x16xf32>
    %880 = arith.divf %878, %879 : vector<8x16xf32>
    %881 = vector.extract_strided_slice %880 {offsets = [0, 0], sizes = [8, 8], strides = [1, 1]} : vector<8x16xf32> to vector<8x8xf32>
    %882 = vector.extract_strided_slice %880 {offsets = [0, 8], sizes = [8, 8], strides = [1, 1]} : vector<8x16xf32> to vector<8x8xf32>
    %883 = vector.extract_strided_slice %872 {offsets = [0, 16], sizes = [8, 8], strides = [1, 1]} : vector<8x24xf32> to vector<8x8xf32>
    %884 = vector.extract_strided_slice %873 {offsets = [0, 16], sizes = [8, 8], strides = [1, 1]} : vector<8x24xf32> to vector<8x8xf32>
    %885 = vector.broadcast %10 : vector<1x8xf32> to vector<8x8xf32>
    %886 = arith.addf %884, %885 : vector<8x8xf32>
    %887 = arith.mulf %881, %886 : vector<8x8xf32>
    %888 = arith.addf %883, %887 : vector<8x8xf32>
    %889 = math.tanh %888 : vector<8x8xf32>
    %890 = arith.subf %866, %889 : vector<8x8xf32>
    %891 = arith.mulf %882, %890 : vector<8x8xf32>
    %892 = arith.addf %889, %891 : vector<8x8xf32>
    %c33_187 = arith.constant 33 : index
    %893 = memref.load %arg7[%c33_187] : memref<70xf32, #tpu.memory_space<smem>>
    %894 = vector.broadcast %893 : f32 to vector<8x8xf32>
    %895 = arith.mulf %892, %894 : vector<8x8xf32>
    %896 = arith.addf %870, %895 : vector<8x8xf32>
    %c34 = arith.constant 34 : index
    %c0_188 = arith.constant 0 : index
    %c0_189 = arith.constant 0 : index
    %897 = vector.load %arg12[%c34, %c0_188, %c0_189] : memref<70x8x24xf32, #tpu.memory_space<vmem>>, vector<1x8x24xf32>
    %898 = vector.shape_cast %897 : vector<1x8x24xf32> to vector<8x24xf32>
    %cst_190 = arith.constant dense<0.000000e+00> : vector<8x24xf32>
    %899 = tpu.matmul %892, %9, %cst_190 {dimension_numbers = #tpu.dot_dimension_numbers<[1], [0], [0], [1], [0, 0, 1, 1], [], []>} : vector<8x8xf32>, vector<8x24xf32>, vector<8x24xf32> -> vector<8x24xf32>
    %900 = arith.addf %898, %899 : vector<8x24xf32>
    %901 = vector.extract_strided_slice %900 {offsets = [0, 0], sizes = [8, 16], strides = [1, 1]} : vector<8x24xf32> to vector<8x16xf32>
    %902 = arith.negf %901 : vector<8x16xf32>
    %903 = math.exp %902 : vector<8x16xf32>
    %cst_191 = arith.constant 1.000000e+00 : f32
    %904 = vector.broadcast %cst_191 : f32 to vector<8x16xf32>
    %905 = arith.addf %904, %903 : vector<8x16xf32>
    %906 = arith.divf %904, %905 : vector<8x16xf32>
    %907 = vector.extract_strided_slice %906 {offsets = [0, 0], sizes = [8, 8], strides = [1, 1]} : vector<8x16xf32> to vector<8x8xf32>
    %908 = vector.extract_strided_slice %906 {offsets = [0, 8], sizes = [8, 8], strides = [1, 1]} : vector<8x16xf32> to vector<8x8xf32>
    %909 = vector.extract_strided_slice %898 {offsets = [0, 16], sizes = [8, 8], strides = [1, 1]} : vector<8x24xf32> to vector<8x8xf32>
    %910 = vector.extract_strided_slice %899 {offsets = [0, 16], sizes = [8, 8], strides = [1, 1]} : vector<8x24xf32> to vector<8x8xf32>
    %911 = vector.broadcast %10 : vector<1x8xf32> to vector<8x8xf32>
    %912 = arith.addf %910, %911 : vector<8x8xf32>
    %913 = arith.mulf %907, %912 : vector<8x8xf32>
    %914 = arith.addf %909, %913 : vector<8x8xf32>
    %915 = math.tanh %914 : vector<8x8xf32>
    %916 = arith.subf %892, %915 : vector<8x8xf32>
    %917 = arith.mulf %908, %916 : vector<8x8xf32>
    %918 = arith.addf %915, %917 : vector<8x8xf32>
    %c34_192 = arith.constant 34 : index
    %919 = memref.load %arg7[%c34_192] : memref<70xf32, #tpu.memory_space<smem>>
    %920 = vector.broadcast %919 : f32 to vector<8x8xf32>
    %921 = arith.mulf %918, %920 : vector<8x8xf32>
    %922 = arith.addf %896, %921 : vector<8x8xf32>
    %c35 = arith.constant 35 : index
    %c0_193 = arith.constant 0 : index
    %c0_194 = arith.constant 0 : index
    %923 = vector.load %arg12[%c35, %c0_193, %c0_194] : memref<70x8x24xf32, #tpu.memory_space<vmem>>, vector<1x8x24xf32>
    %924 = vector.shape_cast %923 : vector<1x8x24xf32> to vector<8x24xf32>
    %cst_195 = arith.constant dense<0.000000e+00> : vector<8x24xf32>
    %925 = tpu.matmul %918, %9, %cst_195 {dimension_numbers = #tpu.dot_dimension_numbers<[1], [0], [0], [1], [0, 0, 1, 1], [], []>} : vector<8x8xf32>, vector<8x24xf32>, vector<8x24xf32> -> vector<8x24xf32>
    %926 = arith.addf %924, %925 : vector<8x24xf32>
    %927 = vector.extract_strided_slice %926 {offsets = [0, 0], sizes = [8, 16], strides = [1, 1]} : vector<8x24xf32> to vector<8x16xf32>
    %928 = arith.negf %927 : vector<8x16xf32>
    %929 = math.exp %928 : vector<8x16xf32>
    %cst_196 = arith.constant 1.000000e+00 : f32
    %930 = vector.broadcast %cst_196 : f32 to vector<8x16xf32>
    %931 = arith.addf %930, %929 : vector<8x16xf32>
    %932 = arith.divf %930, %931 : vector<8x16xf32>
    %933 = vector.extract_strided_slice %932 {offsets = [0, 0], sizes = [8, 8], strides = [1, 1]} : vector<8x16xf32> to vector<8x8xf32>
    %934 = vector.extract_strided_slice %932 {offsets = [0, 8], sizes = [8, 8], strides = [1, 1]} : vector<8x16xf32> to vector<8x8xf32>
    %935 = vector.extract_strided_slice %924 {offsets = [0, 16], sizes = [8, 8], strides = [1, 1]} : vector<8x24xf32> to vector<8x8xf32>
    %936 = vector.extract_strided_slice %925 {offsets = [0, 16], sizes = [8, 8], strides = [1, 1]} : vector<8x24xf32> to vector<8x8xf32>
    %937 = vector.broadcast %10 : vector<1x8xf32> to vector<8x8xf32>
    %938 = arith.addf %936, %937 : vector<8x8xf32>
    %939 = arith.mulf %933, %938 : vector<8x8xf32>
    %940 = arith.addf %935, %939 : vector<8x8xf32>
    %941 = math.tanh %940 : vector<8x8xf32>
    %942 = arith.subf %918, %941 : vector<8x8xf32>
    %943 = arith.mulf %934, %942 : vector<8x8xf32>
    %944 = arith.addf %941, %943 : vector<8x8xf32>
    %c35_197 = arith.constant 35 : index
    %945 = memref.load %arg7[%c35_197] : memref<70xf32, #tpu.memory_space<smem>>
    %946 = vector.broadcast %945 : f32 to vector<8x8xf32>
    %947 = arith.mulf %944, %946 : vector<8x8xf32>
    %948 = arith.addf %922, %947 : vector<8x8xf32>
    %c36 = arith.constant 36 : index
    %c0_198 = arith.constant 0 : index
    %c0_199 = arith.constant 0 : index
    %949 = vector.load %arg12[%c36, %c0_198, %c0_199] : memref<70x8x24xf32, #tpu.memory_space<vmem>>, vector<1x8x24xf32>
    %950 = vector.shape_cast %949 : vector<1x8x24xf32> to vector<8x24xf32>
    %cst_200 = arith.constant dense<0.000000e+00> : vector<8x24xf32>
    %951 = tpu.matmul %944, %9, %cst_200 {dimension_numbers = #tpu.dot_dimension_numbers<[1], [0], [0], [1], [0, 0, 1, 1], [], []>} : vector<8x8xf32>, vector<8x24xf32>, vector<8x24xf32> -> vector<8x24xf32>
    %952 = arith.addf %950, %951 : vector<8x24xf32>
    %953 = vector.extract_strided_slice %952 {offsets = [0, 0], sizes = [8, 16], strides = [1, 1]} : vector<8x24xf32> to vector<8x16xf32>
    %954 = arith.negf %953 : vector<8x16xf32>
    %955 = math.exp %954 : vector<8x16xf32>
    %cst_201 = arith.constant 1.000000e+00 : f32
    %956 = vector.broadcast %cst_201 : f32 to vector<8x16xf32>
    %957 = arith.addf %956, %955 : vector<8x16xf32>
    %958 = arith.divf %956, %957 : vector<8x16xf32>
    %959 = vector.extract_strided_slice %958 {offsets = [0, 0], sizes = [8, 8], strides = [1, 1]} : vector<8x16xf32> to vector<8x8xf32>
    %960 = vector.extract_strided_slice %958 {offsets = [0, 8], sizes = [8, 8], strides = [1, 1]} : vector<8x16xf32> to vector<8x8xf32>
    %961 = vector.extract_strided_slice %950 {offsets = [0, 16], sizes = [8, 8], strides = [1, 1]} : vector<8x24xf32> to vector<8x8xf32>
    %962 = vector.extract_strided_slice %951 {offsets = [0, 16], sizes = [8, 8], strides = [1, 1]} : vector<8x24xf32> to vector<8x8xf32>
    %963 = vector.broadcast %10 : vector<1x8xf32> to vector<8x8xf32>
    %964 = arith.addf %962, %963 : vector<8x8xf32>
    %965 = arith.mulf %959, %964 : vector<8x8xf32>
    %966 = arith.addf %961, %965 : vector<8x8xf32>
    %967 = math.tanh %966 : vector<8x8xf32>
    %968 = arith.subf %944, %967 : vector<8x8xf32>
    %969 = arith.mulf %960, %968 : vector<8x8xf32>
    %970 = arith.addf %967, %969 : vector<8x8xf32>
    %c36_202 = arith.constant 36 : index
    %971 = memref.load %arg7[%c36_202] : memref<70xf32, #tpu.memory_space<smem>>
    %972 = vector.broadcast %971 : f32 to vector<8x8xf32>
    %973 = arith.mulf %970, %972 : vector<8x8xf32>
    %974 = arith.addf %948, %973 : vector<8x8xf32>
    %c37 = arith.constant 37 : index
    %c0_203 = arith.constant 0 : index
    %c0_204 = arith.constant 0 : index
    %975 = vector.load %arg12[%c37, %c0_203, %c0_204] : memref<70x8x24xf32, #tpu.memory_space<vmem>>, vector<1x8x24xf32>
    %976 = vector.shape_cast %975 : vector<1x8x24xf32> to vector<8x24xf32>
    %cst_205 = arith.constant dense<0.000000e+00> : vector<8x24xf32>
    %977 = tpu.matmul %970, %9, %cst_205 {dimension_numbers = #tpu.dot_dimension_numbers<[1], [0], [0], [1], [0, 0, 1, 1], [], []>} : vector<8x8xf32>, vector<8x24xf32>, vector<8x24xf32> -> vector<8x24xf32>
    %978 = arith.addf %976, %977 : vector<8x24xf32>
    %979 = vector.extract_strided_slice %978 {offsets = [0, 0], sizes = [8, 16], strides = [1, 1]} : vector<8x24xf32> to vector<8x16xf32>
    %980 = arith.negf %979 : vector<8x16xf32>
    %981 = math.exp %980 : vector<8x16xf32>
    %cst_206 = arith.constant 1.000000e+00 : f32
    %982 = vector.broadcast %cst_206 : f32 to vector<8x16xf32>
    %983 = arith.addf %982, %981 : vector<8x16xf32>
    %984 = arith.divf %982, %983 : vector<8x16xf32>
    %985 = vector.extract_strided_slice %984 {offsets = [0, 0], sizes = [8, 8], strides = [1, 1]} : vector<8x16xf32> to vector<8x8xf32>
    %986 = vector.extract_strided_slice %984 {offsets = [0, 8], sizes = [8, 8], strides = [1, 1]} : vector<8x16xf32> to vector<8x8xf32>
    %987 = vector.extract_strided_slice %976 {offsets = [0, 16], sizes = [8, 8], strides = [1, 1]} : vector<8x24xf32> to vector<8x8xf32>
    %988 = vector.extract_strided_slice %977 {offsets = [0, 16], sizes = [8, 8], strides = [1, 1]} : vector<8x24xf32> to vector<8x8xf32>
    %989 = vector.broadcast %10 : vector<1x8xf32> to vector<8x8xf32>
    %990 = arith.addf %988, %989 : vector<8x8xf32>
    %991 = arith.mulf %985, %990 : vector<8x8xf32>
    %992 = arith.addf %987, %991 : vector<8x8xf32>
    %993 = math.tanh %992 : vector<8x8xf32>
    %994 = arith.subf %970, %993 : vector<8x8xf32>
    %995 = arith.mulf %986, %994 : vector<8x8xf32>
    %996 = arith.addf %993, %995 : vector<8x8xf32>
    %c37_207 = arith.constant 37 : index
    %997 = memref.load %arg7[%c37_207] : memref<70xf32, #tpu.memory_space<smem>>
    %998 = vector.broadcast %997 : f32 to vector<8x8xf32>
    %999 = arith.mulf %996, %998 : vector<8x8xf32>
    %1000 = arith.addf %974, %999 : vector<8x8xf32>
    %c38 = arith.constant 38 : index
    %c0_208 = arith.constant 0 : index
    %c0_209 = arith.constant 0 : index
    %1001 = vector.load %arg12[%c38, %c0_208, %c0_209] : memref<70x8x24xf32, #tpu.memory_space<vmem>>, vector<1x8x24xf32>
    %1002 = vector.shape_cast %1001 : vector<1x8x24xf32> to vector<8x24xf32>
    %cst_210 = arith.constant dense<0.000000e+00> : vector<8x24xf32>
    %1003 = tpu.matmul %996, %9, %cst_210 {dimension_numbers = #tpu.dot_dimension_numbers<[1], [0], [0], [1], [0, 0, 1, 1], [], []>} : vector<8x8xf32>, vector<8x24xf32>, vector<8x24xf32> -> vector<8x24xf32>
    %1004 = arith.addf %1002, %1003 : vector<8x24xf32>
    %1005 = vector.extract_strided_slice %1004 {offsets = [0, 0], sizes = [8, 16], strides = [1, 1]} : vector<8x24xf32> to vector<8x16xf32>
    %1006 = arith.negf %1005 : vector<8x16xf32>
    %1007 = math.exp %1006 : vector<8x16xf32>
    %cst_211 = arith.constant 1.000000e+00 : f32
    %1008 = vector.broadcast %cst_211 : f32 to vector<8x16xf32>
    %1009 = arith.addf %1008, %1007 : vector<8x16xf32>
    %1010 = arith.divf %1008, %1009 : vector<8x16xf32>
    %1011 = vector.extract_strided_slice %1010 {offsets = [0, 0], sizes = [8, 8], strides = [1, 1]} : vector<8x16xf32> to vector<8x8xf32>
    %1012 = vector.extract_strided_slice %1010 {offsets = [0, 8], sizes = [8, 8], strides = [1, 1]} : vector<8x16xf32> to vector<8x8xf32>
    %1013 = vector.extract_strided_slice %1002 {offsets = [0, 16], sizes = [8, 8], strides = [1, 1]} : vector<8x24xf32> to vector<8x8xf32>
    %1014 = vector.extract_strided_slice %1003 {offsets = [0, 16], sizes = [8, 8], strides = [1, 1]} : vector<8x24xf32> to vector<8x8xf32>
    %1015 = vector.broadcast %10 : vector<1x8xf32> to vector<8x8xf32>
    %1016 = arith.addf %1014, %1015 : vector<8x8xf32>
    %1017 = arith.mulf %1011, %1016 : vector<8x8xf32>
    %1018 = arith.addf %1013, %1017 : vector<8x8xf32>
    %1019 = math.tanh %1018 : vector<8x8xf32>
    %1020 = arith.subf %996, %1019 : vector<8x8xf32>
    %1021 = arith.mulf %1012, %1020 : vector<8x8xf32>
    %1022 = arith.addf %1019, %1021 : vector<8x8xf32>
    %c38_212 = arith.constant 38 : index
    %1023 = memref.load %arg7[%c38_212] : memref<70xf32, #tpu.memory_space<smem>>
    %1024 = vector.broadcast %1023 : f32 to vector<8x8xf32>
    %1025 = arith.mulf %1022, %1024 : vector<8x8xf32>
    %1026 = arith.addf %1000, %1025 : vector<8x8xf32>
    %c39 = arith.constant 39 : index
    %c0_213 = arith.constant 0 : index
    %c0_214 = arith.constant 0 : index
    %1027 = vector.load %arg12[%c39, %c0_213, %c0_214] : memref<70x8x24xf32, #tpu.memory_space<vmem>>, vector<1x8x24xf32>
    %1028 = vector.shape_cast %1027 : vector<1x8x24xf32> to vector<8x24xf32>
    %cst_215 = arith.constant dense<0.000000e+00> : vector<8x24xf32>
    %1029 = tpu.matmul %1022, %9, %cst_215 {dimension_numbers = #tpu.dot_dimension_numbers<[1], [0], [0], [1], [0, 0, 1, 1], [], []>} : vector<8x8xf32>, vector<8x24xf32>, vector<8x24xf32> -> vector<8x24xf32>
    %1030 = arith.addf %1028, %1029 : vector<8x24xf32>
    %1031 = vector.extract_strided_slice %1030 {offsets = [0, 0], sizes = [8, 16], strides = [1, 1]} : vector<8x24xf32> to vector<8x16xf32>
    %1032 = arith.negf %1031 : vector<8x16xf32>
    %1033 = math.exp %1032 : vector<8x16xf32>
    %cst_216 = arith.constant 1.000000e+00 : f32
    %1034 = vector.broadcast %cst_216 : f32 to vector<8x16xf32>
    %1035 = arith.addf %1034, %1033 : vector<8x16xf32>
    %1036 = arith.divf %1034, %1035 : vector<8x16xf32>
    %1037 = vector.extract_strided_slice %1036 {offsets = [0, 0], sizes = [8, 8], strides = [1, 1]} : vector<8x16xf32> to vector<8x8xf32>
    %1038 = vector.extract_strided_slice %1036 {offsets = [0, 8], sizes = [8, 8], strides = [1, 1]} : vector<8x16xf32> to vector<8x8xf32>
    %1039 = vector.extract_strided_slice %1028 {offsets = [0, 16], sizes = [8, 8], strides = [1, 1]} : vector<8x24xf32> to vector<8x8xf32>
    %1040 = vector.extract_strided_slice %1029 {offsets = [0, 16], sizes = [8, 8], strides = [1, 1]} : vector<8x24xf32> to vector<8x8xf32>
    %1041 = vector.broadcast %10 : vector<1x8xf32> to vector<8x8xf32>
    %1042 = arith.addf %1040, %1041 : vector<8x8xf32>
    %1043 = arith.mulf %1037, %1042 : vector<8x8xf32>
    %1044 = arith.addf %1039, %1043 : vector<8x8xf32>
    %1045 = math.tanh %1044 : vector<8x8xf32>
    %1046 = arith.subf %1022, %1045 : vector<8x8xf32>
    %1047 = arith.mulf %1038, %1046 : vector<8x8xf32>
    %1048 = arith.addf %1045, %1047 : vector<8x8xf32>
    %c39_217 = arith.constant 39 : index
    %1049 = memref.load %arg7[%c39_217] : memref<70xf32, #tpu.memory_space<smem>>
    %1050 = vector.broadcast %1049 : f32 to vector<8x8xf32>
    %1051 = arith.mulf %1048, %1050 : vector<8x8xf32>
    %1052 = arith.addf %1026, %1051 : vector<8x8xf32>
    %c40 = arith.constant 40 : index
    %c0_218 = arith.constant 0 : index
    %c0_219 = arith.constant 0 : index
    %1053 = vector.load %arg12[%c40, %c0_218, %c0_219] : memref<70x8x24xf32, #tpu.memory_space<vmem>>, vector<1x8x24xf32>
    %1054 = vector.shape_cast %1053 : vector<1x8x24xf32> to vector<8x24xf32>
    %cst_220 = arith.constant dense<0.000000e+00> : vector<8x24xf32>
    %1055 = tpu.matmul %1048, %9, %cst_220 {dimension_numbers = #tpu.dot_dimension_numbers<[1], [0], [0], [1], [0, 0, 1, 1], [], []>} : vector<8x8xf32>, vector<8x24xf32>, vector<8x24xf32> -> vector<8x24xf32>
    %1056 = arith.addf %1054, %1055 : vector<8x24xf32>
    %1057 = vector.extract_strided_slice %1056 {offsets = [0, 0], sizes = [8, 16], strides = [1, 1]} : vector<8x24xf32> to vector<8x16xf32>
    %1058 = arith.negf %1057 : vector<8x16xf32>
    %1059 = math.exp %1058 : vector<8x16xf32>
    %cst_221 = arith.constant 1.000000e+00 : f32
    %1060 = vector.broadcast %cst_221 : f32 to vector<8x16xf32>
    %1061 = arith.addf %1060, %1059 : vector<8x16xf32>
    %1062 = arith.divf %1060, %1061 : vector<8x16xf32>
    %1063 = vector.extract_strided_slice %1062 {offsets = [0, 0], sizes = [8, 8], strides = [1, 1]} : vector<8x16xf32> to vector<8x8xf32>
    %1064 = vector.extract_strided_slice %1062 {offsets = [0, 8], sizes = [8, 8], strides = [1, 1]} : vector<8x16xf32> to vector<8x8xf32>
    %1065 = vector.extract_strided_slice %1054 {offsets = [0, 16], sizes = [8, 8], strides = [1, 1]} : vector<8x24xf32> to vector<8x8xf32>
    %1066 = vector.extract_strided_slice %1055 {offsets = [0, 16], sizes = [8, 8], strides = [1, 1]} : vector<8x24xf32> to vector<8x8xf32>
    %1067 = vector.broadcast %10 : vector<1x8xf32> to vector<8x8xf32>
    %1068 = arith.addf %1066, %1067 : vector<8x8xf32>
    %1069 = arith.mulf %1063, %1068 : vector<8x8xf32>
    %1070 = arith.addf %1065, %1069 : vector<8x8xf32>
    %1071 = math.tanh %1070 : vector<8x8xf32>
    %1072 = arith.subf %1048, %1071 : vector<8x8xf32>
    %1073 = arith.mulf %1064, %1072 : vector<8x8xf32>
    %1074 = arith.addf %1071, %1073 : vector<8x8xf32>
    %c40_222 = arith.constant 40 : index
    %1075 = memref.load %arg7[%c40_222] : memref<70xf32, #tpu.memory_space<smem>>
    %1076 = vector.broadcast %1075 : f32 to vector<8x8xf32>
    %1077 = arith.mulf %1074, %1076 : vector<8x8xf32>
    %1078 = arith.addf %1052, %1077 : vector<8x8xf32>
    %c41 = arith.constant 41 : index
    %c0_223 = arith.constant 0 : index
    %c0_224 = arith.constant 0 : index
    %1079 = vector.load %arg12[%c41, %c0_223, %c0_224] : memref<70x8x24xf32, #tpu.memory_space<vmem>>, vector<1x8x24xf32>
    %1080 = vector.shape_cast %1079 : vector<1x8x24xf32> to vector<8x24xf32>
    %cst_225 = arith.constant dense<0.000000e+00> : vector<8x24xf32>
    %1081 = tpu.matmul %1074, %9, %cst_225 {dimension_numbers = #tpu.dot_dimension_numbers<[1], [0], [0], [1], [0, 0, 1, 1], [], []>} : vector<8x8xf32>, vector<8x24xf32>, vector<8x24xf32> -> vector<8x24xf32>
    %1082 = arith.addf %1080, %1081 : vector<8x24xf32>
    %1083 = vector.extract_strided_slice %1082 {offsets = [0, 0], sizes = [8, 16], strides = [1, 1]} : vector<8x24xf32> to vector<8x16xf32>
    %1084 = arith.negf %1083 : vector<8x16xf32>
    %1085 = math.exp %1084 : vector<8x16xf32>
    %cst_226 = arith.constant 1.000000e+00 : f32
    %1086 = vector.broadcast %cst_226 : f32 to vector<8x16xf32>
    %1087 = arith.addf %1086, %1085 : vector<8x16xf32>
    %1088 = arith.divf %1086, %1087 : vector<8x16xf32>
    %1089 = vector.extract_strided_slice %1088 {offsets = [0, 0], sizes = [8, 8], strides = [1, 1]} : vector<8x16xf32> to vector<8x8xf32>
    %1090 = vector.extract_strided_slice %1088 {offsets = [0, 8], sizes = [8, 8], strides = [1, 1]} : vector<8x16xf32> to vector<8x8xf32>
    %1091 = vector.extract_strided_slice %1080 {offsets = [0, 16], sizes = [8, 8], strides = [1, 1]} : vector<8x24xf32> to vector<8x8xf32>
    %1092 = vector.extract_strided_slice %1081 {offsets = [0, 16], sizes = [8, 8], strides = [1, 1]} : vector<8x24xf32> to vector<8x8xf32>
    %1093 = vector.broadcast %10 : vector<1x8xf32> to vector<8x8xf32>
    %1094 = arith.addf %1092, %1093 : vector<8x8xf32>
    %1095 = arith.mulf %1089, %1094 : vector<8x8xf32>
    %1096 = arith.addf %1091, %1095 : vector<8x8xf32>
    %1097 = math.tanh %1096 : vector<8x8xf32>
    %1098 = arith.subf %1074, %1097 : vector<8x8xf32>
    %1099 = arith.mulf %1090, %1098 : vector<8x8xf32>
    %1100 = arith.addf %1097, %1099 : vector<8x8xf32>
    %c41_227 = arith.constant 41 : index
    %1101 = memref.load %arg7[%c41_227] : memref<70xf32, #tpu.memory_space<smem>>
    %1102 = vector.broadcast %1101 : f32 to vector<8x8xf32>
    %1103 = arith.mulf %1100, %1102 : vector<8x8xf32>
    %1104 = arith.addf %1078, %1103 : vector<8x8xf32>
    %c42 = arith.constant 42 : index
    %c0_228 = arith.constant 0 : index
    %c0_229 = arith.constant 0 : index
    %1105 = vector.load %arg12[%c42, %c0_228, %c0_229] : memref<70x8x24xf32, #tpu.memory_space<vmem>>, vector<1x8x24xf32>
    %1106 = vector.shape_cast %1105 : vector<1x8x24xf32> to vector<8x24xf32>
    %cst_230 = arith.constant dense<0.000000e+00> : vector<8x24xf32>
    %1107 = tpu.matmul %1100, %9, %cst_230 {dimension_numbers = #tpu.dot_dimension_numbers<[1], [0], [0], [1], [0, 0, 1, 1], [], []>} : vector<8x8xf32>, vector<8x24xf32>, vector<8x24xf32> -> vector<8x24xf32>
    %1108 = arith.addf %1106, %1107 : vector<8x24xf32>
    %1109 = vector.extract_strided_slice %1108 {offsets = [0, 0], sizes = [8, 16], strides = [1, 1]} : vector<8x24xf32> to vector<8x16xf32>
    %1110 = arith.negf %1109 : vector<8x16xf32>
    %1111 = math.exp %1110 : vector<8x16xf32>
    %cst_231 = arith.constant 1.000000e+00 : f32
    %1112 = vector.broadcast %cst_231 : f32 to vector<8x16xf32>
    %1113 = arith.addf %1112, %1111 : vector<8x16xf32>
    %1114 = arith.divf %1112, %1113 : vector<8x16xf32>
    %1115 = vector.extract_strided_slice %1114 {offsets = [0, 0], sizes = [8, 8], strides = [1, 1]} : vector<8x16xf32> to vector<8x8xf32>
    %1116 = vector.extract_strided_slice %1114 {offsets = [0, 8], sizes = [8, 8], strides = [1, 1]} : vector<8x16xf32> to vector<8x8xf32>
    %1117 = vector.extract_strided_slice %1106 {offsets = [0, 16], sizes = [8, 8], strides = [1, 1]} : vector<8x24xf32> to vector<8x8xf32>
    %1118 = vector.extract_strided_slice %1107 {offsets = [0, 16], sizes = [8, 8], strides = [1, 1]} : vector<8x24xf32> to vector<8x8xf32>
    %1119 = vector.broadcast %10 : vector<1x8xf32> to vector<8x8xf32>
    %1120 = arith.addf %1118, %1119 : vector<8x8xf32>
    %1121 = arith.mulf %1115, %1120 : vector<8x8xf32>
    %1122 = arith.addf %1117, %1121 : vector<8x8xf32>
    %1123 = math.tanh %1122 : vector<8x8xf32>
    %1124 = arith.subf %1100, %1123 : vector<8x8xf32>
    %1125 = arith.mulf %1116, %1124 : vector<8x8xf32>
    %1126 = arith.addf %1123, %1125 : vector<8x8xf32>
    %c42_232 = arith.constant 42 : index
    %1127 = memref.load %arg7[%c42_232] : memref<70xf32, #tpu.memory_space<smem>>
    %1128 = vector.broadcast %1127 : f32 to vector<8x8xf32>
    %1129 = arith.mulf %1126, %1128 : vector<8x8xf32>
    %1130 = arith.addf %1104, %1129 : vector<8x8xf32>
    %c43 = arith.constant 43 : index
    %c0_233 = arith.constant 0 : index
    %c0_234 = arith.constant 0 : index
    %1131 = vector.load %arg12[%c43, %c0_233, %c0_234] : memref<70x8x24xf32, #tpu.memory_space<vmem>>, vector<1x8x24xf32>
    %1132 = vector.shape_cast %1131 : vector<1x8x24xf32> to vector<8x24xf32>
    %cst_235 = arith.constant dense<0.000000e+00> : vector<8x24xf32>
    %1133 = tpu.matmul %1126, %9, %cst_235 {dimension_numbers = #tpu.dot_dimension_numbers<[1], [0], [0], [1], [0, 0, 1, 1], [], []>} : vector<8x8xf32>, vector<8x24xf32>, vector<8x24xf32> -> vector<8x24xf32>
    %1134 = arith.addf %1132, %1133 : vector<8x24xf32>
    %1135 = vector.extract_strided_slice %1134 {offsets = [0, 0], sizes = [8, 16], strides = [1, 1]} : vector<8x24xf32> to vector<8x16xf32>
    %1136 = arith.negf %1135 : vector<8x16xf32>
    %1137 = math.exp %1136 : vector<8x16xf32>
    %cst_236 = arith.constant 1.000000e+00 : f32
    %1138 = vector.broadcast %cst_236 : f32 to vector<8x16xf32>
    %1139 = arith.addf %1138, %1137 : vector<8x16xf32>
    %1140 = arith.divf %1138, %1139 : vector<8x16xf32>
    %1141 = vector.extract_strided_slice %1140 {offsets = [0, 0], sizes = [8, 8], strides = [1, 1]} : vector<8x16xf32> to vector<8x8xf32>
    %1142 = vector.extract_strided_slice %1140 {offsets = [0, 8], sizes = [8, 8], strides = [1, 1]} : vector<8x16xf32> to vector<8x8xf32>
    %1143 = vector.extract_strided_slice %1132 {offsets = [0, 16], sizes = [8, 8], strides = [1, 1]} : vector<8x24xf32> to vector<8x8xf32>
    %1144 = vector.extract_strided_slice %1133 {offsets = [0, 16], sizes = [8, 8], strides = [1, 1]} : vector<8x24xf32> to vector<8x8xf32>
    %1145 = vector.broadcast %10 : vector<1x8xf32> to vector<8x8xf32>
    %1146 = arith.addf %1144, %1145 : vector<8x8xf32>
    %1147 = arith.mulf %1141, %1146 : vector<8x8xf32>
    %1148 = arith.addf %1143, %1147 : vector<8x8xf32>
    %1149 = math.tanh %1148 : vector<8x8xf32>
    %1150 = arith.subf %1126, %1149 : vector<8x8xf32>
    %1151 = arith.mulf %1142, %1150 : vector<8x8xf32>
    %1152 = arith.addf %1149, %1151 : vector<8x8xf32>
    %c43_237 = arith.constant 43 : index
    %1153 = memref.load %arg7[%c43_237] : memref<70xf32, #tpu.memory_space<smem>>
    %1154 = vector.broadcast %1153 : f32 to vector<8x8xf32>
    %1155 = arith.mulf %1152, %1154 : vector<8x8xf32>
    %1156 = arith.addf %1130, %1155 : vector<8x8xf32>
    %c44 = arith.constant 44 : index
    %c0_238 = arith.constant 0 : index
    %c0_239 = arith.constant 0 : index
    %1157 = vector.load %arg12[%c44, %c0_238, %c0_239] : memref<70x8x24xf32, #tpu.memory_space<vmem>>, vector<1x8x24xf32>
    %1158 = vector.shape_cast %1157 : vector<1x8x24xf32> to vector<8x24xf32>
    %cst_240 = arith.constant dense<0.000000e+00> : vector<8x24xf32>
    %1159 = tpu.matmul %1152, %9, %cst_240 {dimension_numbers = #tpu.dot_dimension_numbers<[1], [0], [0], [1], [0, 0, 1, 1], [], []>} : vector<8x8xf32>, vector<8x24xf32>, vector<8x24xf32> -> vector<8x24xf32>
    %1160 = arith.addf %1158, %1159 : vector<8x24xf32>
    %1161 = vector.extract_strided_slice %1160 {offsets = [0, 0], sizes = [8, 16], strides = [1, 1]} : vector<8x24xf32> to vector<8x16xf32>
    %1162 = arith.negf %1161 : vector<8x16xf32>
    %1163 = math.exp %1162 : vector<8x16xf32>
    %cst_241 = arith.constant 1.000000e+00 : f32
    %1164 = vector.broadcast %cst_241 : f32 to vector<8x16xf32>
    %1165 = arith.addf %1164, %1163 : vector<8x16xf32>
    %1166 = arith.divf %1164, %1165 : vector<8x16xf32>
    %1167 = vector.extract_strided_slice %1166 {offsets = [0, 0], sizes = [8, 8], strides = [1, 1]} : vector<8x16xf32> to vector<8x8xf32>
    %1168 = vector.extract_strided_slice %1166 {offsets = [0, 8], sizes = [8, 8], strides = [1, 1]} : vector<8x16xf32> to vector<8x8xf32>
    %1169 = vector.extract_strided_slice %1158 {offsets = [0, 16], sizes = [8, 8], strides = [1, 1]} : vector<8x24xf32> to vector<8x8xf32>
    %1170 = vector.extract_strided_slice %1159 {offsets = [0, 16], sizes = [8, 8], strides = [1, 1]} : vector<8x24xf32> to vector<8x8xf32>
    %1171 = vector.broadcast %10 : vector<1x8xf32> to vector<8x8xf32>
    %1172 = arith.addf %1170, %1171 : vector<8x8xf32>
    %1173 = arith.mulf %1167, %1172 : vector<8x8xf32>
    %1174 = arith.addf %1169, %1173 : vector<8x8xf32>
    %1175 = math.tanh %1174 : vector<8x8xf32>
    %1176 = arith.subf %1152, %1175 : vector<8x8xf32>
    %1177 = arith.mulf %1168, %1176 : vector<8x8xf32>
    %1178 = arith.addf %1175, %1177 : vector<8x8xf32>
    %c44_242 = arith.constant 44 : index
    %1179 = memref.load %arg7[%c44_242] : memref<70xf32, #tpu.memory_space<smem>>
    %1180 = vector.broadcast %1179 : f32 to vector<8x8xf32>
    %1181 = arith.mulf %1178, %1180 : vector<8x8xf32>
    %1182 = arith.addf %1156, %1181 : vector<8x8xf32>
    %c45 = arith.constant 45 : index
    %c0_243 = arith.constant 0 : index
    %c0_244 = arith.constant 0 : index
    %1183 = vector.load %arg12[%c45, %c0_243, %c0_244] : memref<70x8x24xf32, #tpu.memory_space<vmem>>, vector<1x8x24xf32>
    %1184 = vector.shape_cast %1183 : vector<1x8x24xf32> to vector<8x24xf32>
    %cst_245 = arith.constant dense<0.000000e+00> : vector<8x24xf32>
    %1185 = tpu.matmul %1178, %9, %cst_245 {dimension_numbers = #tpu.dot_dimension_numbers<[1], [0], [0], [1], [0, 0, 1, 1], [], []>} : vector<8x8xf32>, vector<8x24xf32>, vector<8x24xf32> -> vector<8x24xf32>
    %1186 = arith.addf %1184, %1185 : vector<8x24xf32>
    %1187 = vector.extract_strided_slice %1186 {offsets = [0, 0], sizes = [8, 16], strides = [1, 1]} : vector<8x24xf32> to vector<8x16xf32>
    %1188 = arith.negf %1187 : vector<8x16xf32>
    %1189 = math.exp %1188 : vector<8x16xf32>
    %cst_246 = arith.constant 1.000000e+00 : f32
    %1190 = vector.broadcast %cst_246 : f32 to vector<8x16xf32>
    %1191 = arith.addf %1190, %1189 : vector<8x16xf32>
    %1192 = arith.divf %1190, %1191 : vector<8x16xf32>
    %1193 = vector.extract_strided_slice %1192 {offsets = [0, 0], sizes = [8, 8], strides = [1, 1]} : vector<8x16xf32> to vector<8x8xf32>
    %1194 = vector.extract_strided_slice %1192 {offsets = [0, 8], sizes = [8, 8], strides = [1, 1]} : vector<8x16xf32> to vector<8x8xf32>
    %1195 = vector.extract_strided_slice %1184 {offsets = [0, 16], sizes = [8, 8], strides = [1, 1]} : vector<8x24xf32> to vector<8x8xf32>
    %1196 = vector.extract_strided_slice %1185 {offsets = [0, 16], sizes = [8, 8], strides = [1, 1]} : vector<8x24xf32> to vector<8x8xf32>
    %1197 = vector.broadcast %10 : vector<1x8xf32> to vector<8x8xf32>
    %1198 = arith.addf %1196, %1197 : vector<8x8xf32>
    %1199 = arith.mulf %1193, %1198 : vector<8x8xf32>
    %1200 = arith.addf %1195, %1199 : vector<8x8xf32>
    %1201 = math.tanh %1200 : vector<8x8xf32>
    %1202 = arith.subf %1178, %1201 : vector<8x8xf32>
    %1203 = arith.mulf %1194, %1202 : vector<8x8xf32>
    %1204 = arith.addf %1201, %1203 : vector<8x8xf32>
    %c45_247 = arith.constant 45 : index
    %1205 = memref.load %arg7[%c45_247] : memref<70xf32, #tpu.memory_space<smem>>
    %1206 = vector.broadcast %1205 : f32 to vector<8x8xf32>
    %1207 = arith.mulf %1204, %1206 : vector<8x8xf32>
    %1208 = arith.addf %1182, %1207 : vector<8x8xf32>
    %c46 = arith.constant 46 : index
    %c0_248 = arith.constant 0 : index
    %c0_249 = arith.constant 0 : index
    %1209 = vector.load %arg12[%c46, %c0_248, %c0_249] : memref<70x8x24xf32, #tpu.memory_space<vmem>>, vector<1x8x24xf32>
    %1210 = vector.shape_cast %1209 : vector<1x8x24xf32> to vector<8x24xf32>
    %cst_250 = arith.constant dense<0.000000e+00> : vector<8x24xf32>
    %1211 = tpu.matmul %1204, %9, %cst_250 {dimension_numbers = #tpu.dot_dimension_numbers<[1], [0], [0], [1], [0, 0, 1, 1], [], []>} : vector<8x8xf32>, vector<8x24xf32>, vector<8x24xf32> -> vector<8x24xf32>
    %1212 = arith.addf %1210, %1211 : vector<8x24xf32>
    %1213 = vector.extract_strided_slice %1212 {offsets = [0, 0], sizes = [8, 16], strides = [1, 1]} : vector<8x24xf32> to vector<8x16xf32>
    %1214 = arith.negf %1213 : vector<8x16xf32>
    %1215 = math.exp %1214 : vector<8x16xf32>
    %cst_251 = arith.constant 1.000000e+00 : f32
    %1216 = vector.broadcast %cst_251 : f32 to vector<8x16xf32>
    %1217 = arith.addf %1216, %1215 : vector<8x16xf32>
    %1218 = arith.divf %1216, %1217 : vector<8x16xf32>
    %1219 = vector.extract_strided_slice %1218 {offsets = [0, 0], sizes = [8, 8], strides = [1, 1]} : vector<8x16xf32> to vector<8x8xf32>
    %1220 = vector.extract_strided_slice %1218 {offsets = [0, 8], sizes = [8, 8], strides = [1, 1]} : vector<8x16xf32> to vector<8x8xf32>
    %1221 = vector.extract_strided_slice %1210 {offsets = [0, 16], sizes = [8, 8], strides = [1, 1]} : vector<8x24xf32> to vector<8x8xf32>
    %1222 = vector.extract_strided_slice %1211 {offsets = [0, 16], sizes = [8, 8], strides = [1, 1]} : vector<8x24xf32> to vector<8x8xf32>
    %1223 = vector.broadcast %10 : vector<1x8xf32> to vector<8x8xf32>
    %1224 = arith.addf %1222, %1223 : vector<8x8xf32>
    %1225 = arith.mulf %1219, %1224 : vector<8x8xf32>
    %1226 = arith.addf %1221, %1225 : vector<8x8xf32>
    %1227 = math.tanh %1226 : vector<8x8xf32>
    %1228 = arith.subf %1204, %1227 : vector<8x8xf32>
    %1229 = arith.mulf %1220, %1228 : vector<8x8xf32>
    %1230 = arith.addf %1227, %1229 : vector<8x8xf32>
    %c46_252 = arith.constant 46 : index
    %1231 = memref.load %arg7[%c46_252] : memref<70xf32, #tpu.memory_space<smem>>
    %1232 = vector.broadcast %1231 : f32 to vector<8x8xf32>
    %1233 = arith.mulf %1230, %1232 : vector<8x8xf32>
    %1234 = arith.addf %1208, %1233 : vector<8x8xf32>
    %c47 = arith.constant 47 : index
    %c0_253 = arith.constant 0 : index
    %c0_254 = arith.constant 0 : index
    %1235 = vector.load %arg12[%c47, %c0_253, %c0_254] : memref<70x8x24xf32, #tpu.memory_space<vmem>>, vector<1x8x24xf32>
    %1236 = vector.shape_cast %1235 : vector<1x8x24xf32> to vector<8x24xf32>
    %cst_255 = arith.constant dense<0.000000e+00> : vector<8x24xf32>
    %1237 = tpu.matmul %1230, %9, %cst_255 {dimension_numbers = #tpu.dot_dimension_numbers<[1], [0], [0], [1], [0, 0, 1, 1], [], []>} : vector<8x8xf32>, vector<8x24xf32>, vector<8x24xf32> -> vector<8x24xf32>
    %1238 = arith.addf %1236, %1237 : vector<8x24xf32>
    %1239 = vector.extract_strided_slice %1238 {offsets = [0, 0], sizes = [8, 16], strides = [1, 1]} : vector<8x24xf32> to vector<8x16xf32>
    %1240 = arith.negf %1239 : vector<8x16xf32>
    %1241 = math.exp %1240 : vector<8x16xf32>
    %cst_256 = arith.constant 1.000000e+00 : f32
    %1242 = vector.broadcast %cst_256 : f32 to vector<8x16xf32>
    %1243 = arith.addf %1242, %1241 : vector<8x16xf32>
    %1244 = arith.divf %1242, %1243 : vector<8x16xf32>
    %1245 = vector.extract_strided_slice %1244 {offsets = [0, 0], sizes = [8, 8], strides = [1, 1]} : vector<8x16xf32> to vector<8x8xf32>
    %1246 = vector.extract_strided_slice %1244 {offsets = [0, 8], sizes = [8, 8], strides = [1, 1]} : vector<8x16xf32> to vector<8x8xf32>
    %1247 = vector.extract_strided_slice %1236 {offsets = [0, 16], sizes = [8, 8], strides = [1, 1]} : vector<8x24xf32> to vector<8x8xf32>
    %1248 = vector.extract_strided_slice %1237 {offsets = [0, 16], sizes = [8, 8], strides = [1, 1]} : vector<8x24xf32> to vector<8x8xf32>
    %1249 = vector.broadcast %10 : vector<1x8xf32> to vector<8x8xf32>
    %1250 = arith.addf %1248, %1249 : vector<8x8xf32>
    %1251 = arith.mulf %1245, %1250 : vector<8x8xf32>
    %1252 = arith.addf %1247, %1251 : vector<8x8xf32>
    %1253 = math.tanh %1252 : vector<8x8xf32>
    %1254 = arith.subf %1230, %1253 : vector<8x8xf32>
    %1255 = arith.mulf %1246, %1254 : vector<8x8xf32>
    %1256 = arith.addf %1253, %1255 : vector<8x8xf32>
    %c47_257 = arith.constant 47 : index
    %1257 = memref.load %arg7[%c47_257] : memref<70xf32, #tpu.memory_space<smem>>
    %1258 = vector.broadcast %1257 : f32 to vector<8x8xf32>
    %1259 = arith.mulf %1256, %1258 : vector<8x8xf32>
    %1260 = arith.addf %1234, %1259 : vector<8x8xf32>
    %c48 = arith.constant 48 : index
    %c0_258 = arith.constant 0 : index
    %c0_259 = arith.constant 0 : index
    %1261 = vector.load %arg12[%c48, %c0_258, %c0_259] : memref<70x8x24xf32, #tpu.memory_space<vmem>>, vector<1x8x24xf32>
    %1262 = vector.shape_cast %1261 : vector<1x8x24xf32> to vector<8x24xf32>
    %cst_260 = arith.constant dense<0.000000e+00> : vector<8x24xf32>
    %1263 = tpu.matmul %1256, %9, %cst_260 {dimension_numbers = #tpu.dot_dimension_numbers<[1], [0], [0], [1], [0, 0, 1, 1], [], []>} : vector<8x8xf32>, vector<8x24xf32>, vector<8x24xf32> -> vector<8x24xf32>
    %1264 = arith.addf %1262, %1263 : vector<8x24xf32>
    %1265 = vector.extract_strided_slice %1264 {offsets = [0, 0], sizes = [8, 16], strides = [1, 1]} : vector<8x24xf32> to vector<8x16xf32>
    %1266 = arith.negf %1265 : vector<8x16xf32>
    %1267 = math.exp %1266 : vector<8x16xf32>
    %cst_261 = arith.constant 1.000000e+00 : f32
    %1268 = vector.broadcast %cst_261 : f32 to vector<8x16xf32>
    %1269 = arith.addf %1268, %1267 : vector<8x16xf32>
    %1270 = arith.divf %1268, %1269 : vector<8x16xf32>
    %1271 = vector.extract_strided_slice %1270 {offsets = [0, 0], sizes = [8, 8], strides = [1, 1]} : vector<8x16xf32> to vector<8x8xf32>
    %1272 = vector.extract_strided_slice %1270 {offsets = [0, 8], sizes = [8, 8], strides = [1, 1]} : vector<8x16xf32> to vector<8x8xf32>
    %1273 = vector.extract_strided_slice %1262 {offsets = [0, 16], sizes = [8, 8], strides = [1, 1]} : vector<8x24xf32> to vector<8x8xf32>
    %1274 = vector.extract_strided_slice %1263 {offsets = [0, 16], sizes = [8, 8], strides = [1, 1]} : vector<8x24xf32> to vector<8x8xf32>
    %1275 = vector.broadcast %10 : vector<1x8xf32> to vector<8x8xf32>
    %1276 = arith.addf %1274, %1275 : vector<8x8xf32>
    %1277 = arith.mulf %1271, %1276 : vector<8x8xf32>
    %1278 = arith.addf %1273, %1277 : vector<8x8xf32>
    %1279 = math.tanh %1278 : vector<8x8xf32>
    %1280 = arith.subf %1256, %1279 : vector<8x8xf32>
    %1281 = arith.mulf %1272, %1280 : vector<8x8xf32>
    %1282 = arith.addf %1279, %1281 : vector<8x8xf32>
    %c48_262 = arith.constant 48 : index
    %1283 = memref.load %arg7[%c48_262] : memref<70xf32, #tpu.memory_space<smem>>
    %1284 = vector.broadcast %1283 : f32 to vector<8x8xf32>
    %1285 = arith.mulf %1282, %1284 : vector<8x8xf32>
    %1286 = arith.addf %1260, %1285 : vector<8x8xf32>
    %c49 = arith.constant 49 : index
    %c0_263 = arith.constant 0 : index
    %c0_264 = arith.constant 0 : index
    %1287 = vector.load %arg12[%c49, %c0_263, %c0_264] : memref<70x8x24xf32, #tpu.memory_space<vmem>>, vector<1x8x24xf32>
    %1288 = vector.shape_cast %1287 : vector<1x8x24xf32> to vector<8x24xf32>
    %cst_265 = arith.constant dense<0.000000e+00> : vector<8x24xf32>
    %1289 = tpu.matmul %1282, %9, %cst_265 {dimension_numbers = #tpu.dot_dimension_numbers<[1], [0], [0], [1], [0, 0, 1, 1], [], []>} : vector<8x8xf32>, vector<8x24xf32>, vector<8x24xf32> -> vector<8x24xf32>
    %1290 = arith.addf %1288, %1289 : vector<8x24xf32>
    %1291 = vector.extract_strided_slice %1290 {offsets = [0, 0], sizes = [8, 16], strides = [1, 1]} : vector<8x24xf32> to vector<8x16xf32>
    %1292 = arith.negf %1291 : vector<8x16xf32>
    %1293 = math.exp %1292 : vector<8x16xf32>
    %cst_266 = arith.constant 1.000000e+00 : f32
    %1294 = vector.broadcast %cst_266 : f32 to vector<8x16xf32>
    %1295 = arith.addf %1294, %1293 : vector<8x16xf32>
    %1296 = arith.divf %1294, %1295 : vector<8x16xf32>
    %1297 = vector.extract_strided_slice %1296 {offsets = [0, 0], sizes = [8, 8], strides = [1, 1]} : vector<8x16xf32> to vector<8x8xf32>
    %1298 = vector.extract_strided_slice %1296 {offsets = [0, 8], sizes = [8, 8], strides = [1, 1]} : vector<8x16xf32> to vector<8x8xf32>
    %1299 = vector.extract_strided_slice %1288 {offsets = [0, 16], sizes = [8, 8], strides = [1, 1]} : vector<8x24xf32> to vector<8x8xf32>
    %1300 = vector.extract_strided_slice %1289 {offsets = [0, 16], sizes = [8, 8], strides = [1, 1]} : vector<8x24xf32> to vector<8x8xf32>
    %1301 = vector.broadcast %10 : vector<1x8xf32> to vector<8x8xf32>
    %1302 = arith.addf %1300, %1301 : vector<8x8xf32>
    %1303 = arith.mulf %1297, %1302 : vector<8x8xf32>
    %1304 = arith.addf %1299, %1303 : vector<8x8xf32>
    %1305 = math.tanh %1304 : vector<8x8xf32>
    %1306 = arith.subf %1282, %1305 : vector<8x8xf32>
    %1307 = arith.mulf %1298, %1306 : vector<8x8xf32>
    %1308 = arith.addf %1305, %1307 : vector<8x8xf32>
    %c49_267 = arith.constant 49 : index
    %1309 = memref.load %arg7[%c49_267] : memref<70xf32, #tpu.memory_space<smem>>
    %1310 = vector.broadcast %1309 : f32 to vector<8x8xf32>
    %1311 = arith.mulf %1308, %1310 : vector<8x8xf32>
    %1312 = arith.addf %1286, %1311 : vector<8x8xf32>
    %c50 = arith.constant 50 : index
    %c0_268 = arith.constant 0 : index
    %c0_269 = arith.constant 0 : index
    %1313 = vector.load %arg12[%c50, %c0_268, %c0_269] : memref<70x8x24xf32, #tpu.memory_space<vmem>>, vector<1x8x24xf32>
    %1314 = vector.shape_cast %1313 : vector<1x8x24xf32> to vector<8x24xf32>
    %cst_270 = arith.constant dense<0.000000e+00> : vector<8x24xf32>
    %1315 = tpu.matmul %1308, %9, %cst_270 {dimension_numbers = #tpu.dot_dimension_numbers<[1], [0], [0], [1], [0, 0, 1, 1], [], []>} : vector<8x8xf32>, vector<8x24xf32>, vector<8x24xf32> -> vector<8x24xf32>
    %1316 = arith.addf %1314, %1315 : vector<8x24xf32>
    %1317 = vector.extract_strided_slice %1316 {offsets = [0, 0], sizes = [8, 16], strides = [1, 1]} : vector<8x24xf32> to vector<8x16xf32>
    %1318 = arith.negf %1317 : vector<8x16xf32>
    %1319 = math.exp %1318 : vector<8x16xf32>
    %cst_271 = arith.constant 1.000000e+00 : f32
    %1320 = vector.broadcast %cst_271 : f32 to vector<8x16xf32>
    %1321 = arith.addf %1320, %1319 : vector<8x16xf32>
    %1322 = arith.divf %1320, %1321 : vector<8x16xf32>
    %1323 = vector.extract_strided_slice %1322 {offsets = [0, 0], sizes = [8, 8], strides = [1, 1]} : vector<8x16xf32> to vector<8x8xf32>
    %1324 = vector.extract_strided_slice %1322 {offsets = [0, 8], sizes = [8, 8], strides = [1, 1]} : vector<8x16xf32> to vector<8x8xf32>
    %1325 = vector.extract_strided_slice %1314 {offsets = [0, 16], sizes = [8, 8], strides = [1, 1]} : vector<8x24xf32> to vector<8x8xf32>
    %1326 = vector.extract_strided_slice %1315 {offsets = [0, 16], sizes = [8, 8], strides = [1, 1]} : vector<8x24xf32> to vector<8x8xf32>
    %1327 = vector.broadcast %10 : vector<1x8xf32> to vector<8x8xf32>
    %1328 = arith.addf %1326, %1327 : vector<8x8xf32>
    %1329 = arith.mulf %1323, %1328 : vector<8x8xf32>
    %1330 = arith.addf %1325, %1329 : vector<8x8xf32>
    %1331 = math.tanh %1330 : vector<8x8xf32>
    %1332 = arith.subf %1308, %1331 : vector<8x8xf32>
    %1333 = arith.mulf %1324, %1332 : vector<8x8xf32>
    %1334 = arith.addf %1331, %1333 : vector<8x8xf32>
    %c50_272 = arith.constant 50 : index
    %1335 = memref.load %arg7[%c50_272] : memref<70xf32, #tpu.memory_space<smem>>
    %1336 = vector.broadcast %1335 : f32 to vector<8x8xf32>
    %1337 = arith.mulf %1334, %1336 : vector<8x8xf32>
    %1338 = arith.addf %1312, %1337 : vector<8x8xf32>
    %c51 = arith.constant 51 : index
    %c0_273 = arith.constant 0 : index
    %c0_274 = arith.constant 0 : index
    %1339 = vector.load %arg12[%c51, %c0_273, %c0_274] : memref<70x8x24xf32, #tpu.memory_space<vmem>>, vector<1x8x24xf32>
    %1340 = vector.shape_cast %1339 : vector<1x8x24xf32> to vector<8x24xf32>
    %cst_275 = arith.constant dense<0.000000e+00> : vector<8x24xf32>
    %1341 = tpu.matmul %1334, %9, %cst_275 {dimension_numbers = #tpu.dot_dimension_numbers<[1], [0], [0], [1], [0, 0, 1, 1], [], []>} : vector<8x8xf32>, vector<8x24xf32>, vector<8x24xf32> -> vector<8x24xf32>
    %1342 = arith.addf %1340, %1341 : vector<8x24xf32>
    %1343 = vector.extract_strided_slice %1342 {offsets = [0, 0], sizes = [8, 16], strides = [1, 1]} : vector<8x24xf32> to vector<8x16xf32>
    %1344 = arith.negf %1343 : vector<8x16xf32>
    %1345 = math.exp %1344 : vector<8x16xf32>
    %cst_276 = arith.constant 1.000000e+00 : f32
    %1346 = vector.broadcast %cst_276 : f32 to vector<8x16xf32>
    %1347 = arith.addf %1346, %1345 : vector<8x16xf32>
    %1348 = arith.divf %1346, %1347 : vector<8x16xf32>
    %1349 = vector.extract_strided_slice %1348 {offsets = [0, 0], sizes = [8, 8], strides = [1, 1]} : vector<8x16xf32> to vector<8x8xf32>
    %1350 = vector.extract_strided_slice %1348 {offsets = [0, 8], sizes = [8, 8], strides = [1, 1]} : vector<8x16xf32> to vector<8x8xf32>
    %1351 = vector.extract_strided_slice %1340 {offsets = [0, 16], sizes = [8, 8], strides = [1, 1]} : vector<8x24xf32> to vector<8x8xf32>
    %1352 = vector.extract_strided_slice %1341 {offsets = [0, 16], sizes = [8, 8], strides = [1, 1]} : vector<8x24xf32> to vector<8x8xf32>
    %1353 = vector.broadcast %10 : vector<1x8xf32> to vector<8x8xf32>
    %1354 = arith.addf %1352, %1353 : vector<8x8xf32>
    %1355 = arith.mulf %1349, %1354 : vector<8x8xf32>
    %1356 = arith.addf %1351, %1355 : vector<8x8xf32>
    %1357 = math.tanh %1356 : vector<8x8xf32>
    %1358 = arith.subf %1334, %1357 : vector<8x8xf32>
    %1359 = arith.mulf %1350, %1358 : vector<8x8xf32>
    %1360 = arith.addf %1357, %1359 : vector<8x8xf32>
    %c51_277 = arith.constant 51 : index
    %1361 = memref.load %arg7[%c51_277] : memref<70xf32, #tpu.memory_space<smem>>
    %1362 = vector.broadcast %1361 : f32 to vector<8x8xf32>
    %1363 = arith.mulf %1360, %1362 : vector<8x8xf32>
    %1364 = arith.addf %1338, %1363 : vector<8x8xf32>
    %c52 = arith.constant 52 : index
    %c0_278 = arith.constant 0 : index
    %c0_279 = arith.constant 0 : index
    %1365 = vector.load %arg12[%c52, %c0_278, %c0_279] : memref<70x8x24xf32, #tpu.memory_space<vmem>>, vector<1x8x24xf32>
    %1366 = vector.shape_cast %1365 : vector<1x8x24xf32> to vector<8x24xf32>
    %cst_280 = arith.constant dense<0.000000e+00> : vector<8x24xf32>
    %1367 = tpu.matmul %1360, %9, %cst_280 {dimension_numbers = #tpu.dot_dimension_numbers<[1], [0], [0], [1], [0, 0, 1, 1], [], []>} : vector<8x8xf32>, vector<8x24xf32>, vector<8x24xf32> -> vector<8x24xf32>
    %1368 = arith.addf %1366, %1367 : vector<8x24xf32>
    %1369 = vector.extract_strided_slice %1368 {offsets = [0, 0], sizes = [8, 16], strides = [1, 1]} : vector<8x24xf32> to vector<8x16xf32>
    %1370 = arith.negf %1369 : vector<8x16xf32>
    %1371 = math.exp %1370 : vector<8x16xf32>
    %cst_281 = arith.constant 1.000000e+00 : f32
    %1372 = vector.broadcast %cst_281 : f32 to vector<8x16xf32>
    %1373 = arith.addf %1372, %1371 : vector<8x16xf32>
    %1374 = arith.divf %1372, %1373 : vector<8x16xf32>
    %1375 = vector.extract_strided_slice %1374 {offsets = [0, 0], sizes = [8, 8], strides = [1, 1]} : vector<8x16xf32> to vector<8x8xf32>
    %1376 = vector.extract_strided_slice %1374 {offsets = [0, 8], sizes = [8, 8], strides = [1, 1]} : vector<8x16xf32> to vector<8x8xf32>
    %1377 = vector.extract_strided_slice %1366 {offsets = [0, 16], sizes = [8, 8], strides = [1, 1]} : vector<8x24xf32> to vector<8x8xf32>
    %1378 = vector.extract_strided_slice %1367 {offsets = [0, 16], sizes = [8, 8], strides = [1, 1]} : vector<8x24xf32> to vector<8x8xf32>
    %1379 = vector.broadcast %10 : vector<1x8xf32> to vector<8x8xf32>
    %1380 = arith.addf %1378, %1379 : vector<8x8xf32>
    %1381 = arith.mulf %1375, %1380 : vector<8x8xf32>
    %1382 = arith.addf %1377, %1381 : vector<8x8xf32>
    %1383 = math.tanh %1382 : vector<8x8xf32>
    %1384 = arith.subf %1360, %1383 : vector<8x8xf32>
    %1385 = arith.mulf %1376, %1384 : vector<8x8xf32>
    %1386 = arith.addf %1383, %1385 : vector<8x8xf32>
    %c52_282 = arith.constant 52 : index
    %1387 = memref.load %arg7[%c52_282] : memref<70xf32, #tpu.memory_space<smem>>
    %1388 = vector.broadcast %1387 : f32 to vector<8x8xf32>
    %1389 = arith.mulf %1386, %1388 : vector<8x8xf32>
    %1390 = arith.addf %1364, %1389 : vector<8x8xf32>
    %c53 = arith.constant 53 : index
    %c0_283 = arith.constant 0 : index
    %c0_284 = arith.constant 0 : index
    %1391 = vector.load %arg12[%c53, %c0_283, %c0_284] : memref<70x8x24xf32, #tpu.memory_space<vmem>>, vector<1x8x24xf32>
    %1392 = vector.shape_cast %1391 : vector<1x8x24xf32> to vector<8x24xf32>
    %cst_285 = arith.constant dense<0.000000e+00> : vector<8x24xf32>
    %1393 = tpu.matmul %1386, %9, %cst_285 {dimension_numbers = #tpu.dot_dimension_numbers<[1], [0], [0], [1], [0, 0, 1, 1], [], []>} : vector<8x8xf32>, vector<8x24xf32>, vector<8x24xf32> -> vector<8x24xf32>
    %1394 = arith.addf %1392, %1393 : vector<8x24xf32>
    %1395 = vector.extract_strided_slice %1394 {offsets = [0, 0], sizes = [8, 16], strides = [1, 1]} : vector<8x24xf32> to vector<8x16xf32>
    %1396 = arith.negf %1395 : vector<8x16xf32>
    %1397 = math.exp %1396 : vector<8x16xf32>
    %cst_286 = arith.constant 1.000000e+00 : f32
    %1398 = vector.broadcast %cst_286 : f32 to vector<8x16xf32>
    %1399 = arith.addf %1398, %1397 : vector<8x16xf32>
    %1400 = arith.divf %1398, %1399 : vector<8x16xf32>
    %1401 = vector.extract_strided_slice %1400 {offsets = [0, 0], sizes = [8, 8], strides = [1, 1]} : vector<8x16xf32> to vector<8x8xf32>
    %1402 = vector.extract_strided_slice %1400 {offsets = [0, 8], sizes = [8, 8], strides = [1, 1]} : vector<8x16xf32> to vector<8x8xf32>
    %1403 = vector.extract_strided_slice %1392 {offsets = [0, 16], sizes = [8, 8], strides = [1, 1]} : vector<8x24xf32> to vector<8x8xf32>
    %1404 = vector.extract_strided_slice %1393 {offsets = [0, 16], sizes = [8, 8], strides = [1, 1]} : vector<8x24xf32> to vector<8x8xf32>
    %1405 = vector.broadcast %10 : vector<1x8xf32> to vector<8x8xf32>
    %1406 = arith.addf %1404, %1405 : vector<8x8xf32>
    %1407 = arith.mulf %1401, %1406 : vector<8x8xf32>
    %1408 = arith.addf %1403, %1407 : vector<8x8xf32>
    %1409 = math.tanh %1408 : vector<8x8xf32>
    %1410 = arith.subf %1386, %1409 : vector<8x8xf32>
    %1411 = arith.mulf %1402, %1410 : vector<8x8xf32>
    %1412 = arith.addf %1409, %1411 : vector<8x8xf32>
    %c53_287 = arith.constant 53 : index
    %1413 = memref.load %arg7[%c53_287] : memref<70xf32, #tpu.memory_space<smem>>
    %1414 = vector.broadcast %1413 : f32 to vector<8x8xf32>
    %1415 = arith.mulf %1412, %1414 : vector<8x8xf32>
    %1416 = arith.addf %1390, %1415 : vector<8x8xf32>
    %c54 = arith.constant 54 : index
    %c0_288 = arith.constant 0 : index
    %c0_289 = arith.constant 0 : index
    %1417 = vector.load %arg12[%c54, %c0_288, %c0_289] : memref<70x8x24xf32, #tpu.memory_space<vmem>>, vector<1x8x24xf32>
    %1418 = vector.shape_cast %1417 : vector<1x8x24xf32> to vector<8x24xf32>
    %cst_290 = arith.constant dense<0.000000e+00> : vector<8x24xf32>
    %1419 = tpu.matmul %1412, %9, %cst_290 {dimension_numbers = #tpu.dot_dimension_numbers<[1], [0], [0], [1], [0, 0, 1, 1], [], []>} : vector<8x8xf32>, vector<8x24xf32>, vector<8x24xf32> -> vector<8x24xf32>
    %1420 = arith.addf %1418, %1419 : vector<8x24xf32>
    %1421 = vector.extract_strided_slice %1420 {offsets = [0, 0], sizes = [8, 16], strides = [1, 1]} : vector<8x24xf32> to vector<8x16xf32>
    %1422 = arith.negf %1421 : vector<8x16xf32>
    %1423 = math.exp %1422 : vector<8x16xf32>
    %cst_291 = arith.constant 1.000000e+00 : f32
    %1424 = vector.broadcast %cst_291 : f32 to vector<8x16xf32>
    %1425 = arith.addf %1424, %1423 : vector<8x16xf32>
    %1426 = arith.divf %1424, %1425 : vector<8x16xf32>
    %1427 = vector.extract_strided_slice %1426 {offsets = [0, 0], sizes = [8, 8], strides = [1, 1]} : vector<8x16xf32> to vector<8x8xf32>
    %1428 = vector.extract_strided_slice %1426 {offsets = [0, 8], sizes = [8, 8], strides = [1, 1]} : vector<8x16xf32> to vector<8x8xf32>
    %1429 = vector.extract_strided_slice %1418 {offsets = [0, 16], sizes = [8, 8], strides = [1, 1]} : vector<8x24xf32> to vector<8x8xf32>
    %1430 = vector.extract_strided_slice %1419 {offsets = [0, 16], sizes = [8, 8], strides = [1, 1]} : vector<8x24xf32> to vector<8x8xf32>
    %1431 = vector.broadcast %10 : vector<1x8xf32> to vector<8x8xf32>
    %1432 = arith.addf %1430, %1431 : vector<8x8xf32>
    %1433 = arith.mulf %1427, %1432 : vector<8x8xf32>
    %1434 = arith.addf %1429, %1433 : vector<8x8xf32>
    %1435 = math.tanh %1434 : vector<8x8xf32>
    %1436 = arith.subf %1412, %1435 : vector<8x8xf32>
    %1437 = arith.mulf %1428, %1436 : vector<8x8xf32>
    %1438 = arith.addf %1435, %1437 : vector<8x8xf32>
    %c54_292 = arith.constant 54 : index
    %1439 = memref.load %arg7[%c54_292] : memref<70xf32, #tpu.memory_space<smem>>
    %1440 = vector.broadcast %1439 : f32 to vector<8x8xf32>
    %1441 = arith.mulf %1438, %1440 : vector<8x8xf32>
    %1442 = arith.addf %1416, %1441 : vector<8x8xf32>
    %c55 = arith.constant 55 : index
    %c0_293 = arith.constant 0 : index
    %c0_294 = arith.constant 0 : index
    %1443 = vector.load %arg12[%c55, %c0_293, %c0_294] : memref<70x8x24xf32, #tpu.memory_space<vmem>>, vector<1x8x24xf32>
    %1444 = vector.shape_cast %1443 : vector<1x8x24xf32> to vector<8x24xf32>
    %cst_295 = arith.constant dense<0.000000e+00> : vector<8x24xf32>
    %1445 = tpu.matmul %1438, %9, %cst_295 {dimension_numbers = #tpu.dot_dimension_numbers<[1], [0], [0], [1], [0, 0, 1, 1], [], []>} : vector<8x8xf32>, vector<8x24xf32>, vector<8x24xf32> -> vector<8x24xf32>
    %1446 = arith.addf %1444, %1445 : vector<8x24xf32>
    %1447 = vector.extract_strided_slice %1446 {offsets = [0, 0], sizes = [8, 16], strides = [1, 1]} : vector<8x24xf32> to vector<8x16xf32>
    %1448 = arith.negf %1447 : vector<8x16xf32>
    %1449 = math.exp %1448 : vector<8x16xf32>
    %cst_296 = arith.constant 1.000000e+00 : f32
    %1450 = vector.broadcast %cst_296 : f32 to vector<8x16xf32>
    %1451 = arith.addf %1450, %1449 : vector<8x16xf32>
    %1452 = arith.divf %1450, %1451 : vector<8x16xf32>
    %1453 = vector.extract_strided_slice %1452 {offsets = [0, 0], sizes = [8, 8], strides = [1, 1]} : vector<8x16xf32> to vector<8x8xf32>
    %1454 = vector.extract_strided_slice %1452 {offsets = [0, 8], sizes = [8, 8], strides = [1, 1]} : vector<8x16xf32> to vector<8x8xf32>
    %1455 = vector.extract_strided_slice %1444 {offsets = [0, 16], sizes = [8, 8], strides = [1, 1]} : vector<8x24xf32> to vector<8x8xf32>
    %1456 = vector.extract_strided_slice %1445 {offsets = [0, 16], sizes = [8, 8], strides = [1, 1]} : vector<8x24xf32> to vector<8x8xf32>
    %1457 = vector.broadcast %10 : vector<1x8xf32> to vector<8x8xf32>
    %1458 = arith.addf %1456, %1457 : vector<8x8xf32>
    %1459 = arith.mulf %1453, %1458 : vector<8x8xf32>
    %1460 = arith.addf %1455, %1459 : vector<8x8xf32>
    %1461 = math.tanh %1460 : vector<8x8xf32>
    %1462 = arith.subf %1438, %1461 : vector<8x8xf32>
    %1463 = arith.mulf %1454, %1462 : vector<8x8xf32>
    %1464 = arith.addf %1461, %1463 : vector<8x8xf32>
    %c55_297 = arith.constant 55 : index
    %1465 = memref.load %arg7[%c55_297] : memref<70xf32, #tpu.memory_space<smem>>
    %1466 = vector.broadcast %1465 : f32 to vector<8x8xf32>
    %1467 = arith.mulf %1464, %1466 : vector<8x8xf32>
    %1468 = arith.addf %1442, %1467 : vector<8x8xf32>
    %c56 = arith.constant 56 : index
    %c0_298 = arith.constant 0 : index
    %c0_299 = arith.constant 0 : index
    %1469 = vector.load %arg12[%c56, %c0_298, %c0_299] : memref<70x8x24xf32, #tpu.memory_space<vmem>>, vector<1x8x24xf32>
    %1470 = vector.shape_cast %1469 : vector<1x8x24xf32> to vector<8x24xf32>
    %cst_300 = arith.constant dense<0.000000e+00> : vector<8x24xf32>
    %1471 = tpu.matmul %1464, %9, %cst_300 {dimension_numbers = #tpu.dot_dimension_numbers<[1], [0], [0], [1], [0, 0, 1, 1], [], []>} : vector<8x8xf32>, vector<8x24xf32>, vector<8x24xf32> -> vector<8x24xf32>
    %1472 = arith.addf %1470, %1471 : vector<8x24xf32>
    %1473 = vector.extract_strided_slice %1472 {offsets = [0, 0], sizes = [8, 16], strides = [1, 1]} : vector<8x24xf32> to vector<8x16xf32>
    %1474 = arith.negf %1473 : vector<8x16xf32>
    %1475 = math.exp %1474 : vector<8x16xf32>
    %cst_301 = arith.constant 1.000000e+00 : f32
    %1476 = vector.broadcast %cst_301 : f32 to vector<8x16xf32>
    %1477 = arith.addf %1476, %1475 : vector<8x16xf32>
    %1478 = arith.divf %1476, %1477 : vector<8x16xf32>
    %1479 = vector.extract_strided_slice %1478 {offsets = [0, 0], sizes = [8, 8], strides = [1, 1]} : vector<8x16xf32> to vector<8x8xf32>
    %1480 = vector.extract_strided_slice %1478 {offsets = [0, 8], sizes = [8, 8], strides = [1, 1]} : vector<8x16xf32> to vector<8x8xf32>
    %1481 = vector.extract_strided_slice %1470 {offsets = [0, 16], sizes = [8, 8], strides = [1, 1]} : vector<8x24xf32> to vector<8x8xf32>
    %1482 = vector.extract_strided_slice %1471 {offsets = [0, 16], sizes = [8, 8], strides = [1, 1]} : vector<8x24xf32> to vector<8x8xf32>
    %1483 = vector.broadcast %10 : vector<1x8xf32> to vector<8x8xf32>
    %1484 = arith.addf %1482, %1483 : vector<8x8xf32>
    %1485 = arith.mulf %1479, %1484 : vector<8x8xf32>
    %1486 = arith.addf %1481, %1485 : vector<8x8xf32>
    %1487 = math.tanh %1486 : vector<8x8xf32>
    %1488 = arith.subf %1464, %1487 : vector<8x8xf32>
    %1489 = arith.mulf %1480, %1488 : vector<8x8xf32>
    %1490 = arith.addf %1487, %1489 : vector<8x8xf32>
    %c56_302 = arith.constant 56 : index
    %1491 = memref.load %arg7[%c56_302] : memref<70xf32, #tpu.memory_space<smem>>
    %1492 = vector.broadcast %1491 : f32 to vector<8x8xf32>
    %1493 = arith.mulf %1490, %1492 : vector<8x8xf32>
    %1494 = arith.addf %1468, %1493 : vector<8x8xf32>
    %c57 = arith.constant 57 : index
    %c0_303 = arith.constant 0 : index
    %c0_304 = arith.constant 0 : index
    %1495 = vector.load %arg12[%c57, %c0_303, %c0_304] : memref<70x8x24xf32, #tpu.memory_space<vmem>>, vector<1x8x24xf32>
    %1496 = vector.shape_cast %1495 : vector<1x8x24xf32> to vector<8x24xf32>
    %cst_305 = arith.constant dense<0.000000e+00> : vector<8x24xf32>
    %1497 = tpu.matmul %1490, %9, %cst_305 {dimension_numbers = #tpu.dot_dimension_numbers<[1], [0], [0], [1], [0, 0, 1, 1], [], []>} : vector<8x8xf32>, vector<8x24xf32>, vector<8x24xf32> -> vector<8x24xf32>
    %1498 = arith.addf %1496, %1497 : vector<8x24xf32>
    %1499 = vector.extract_strided_slice %1498 {offsets = [0, 0], sizes = [8, 16], strides = [1, 1]} : vector<8x24xf32> to vector<8x16xf32>
    %1500 = arith.negf %1499 : vector<8x16xf32>
    %1501 = math.exp %1500 : vector<8x16xf32>
    %cst_306 = arith.constant 1.000000e+00 : f32
    %1502 = vector.broadcast %cst_306 : f32 to vector<8x16xf32>
    %1503 = arith.addf %1502, %1501 : vector<8x16xf32>
    %1504 = arith.divf %1502, %1503 : vector<8x16xf32>
    %1505 = vector.extract_strided_slice %1504 {offsets = [0, 0], sizes = [8, 8], strides = [1, 1]} : vector<8x16xf32> to vector<8x8xf32>
    %1506 = vector.extract_strided_slice %1504 {offsets = [0, 8], sizes = [8, 8], strides = [1, 1]} : vector<8x16xf32> to vector<8x8xf32>
    %1507 = vector.extract_strided_slice %1496 {offsets = [0, 16], sizes = [8, 8], strides = [1, 1]} : vector<8x24xf32> to vector<8x8xf32>
    %1508 = vector.extract_strided_slice %1497 {offsets = [0, 16], sizes = [8, 8], strides = [1, 1]} : vector<8x24xf32> to vector<8x8xf32>
    %1509 = vector.broadcast %10 : vector<1x8xf32> to vector<8x8xf32>
    %1510 = arith.addf %1508, %1509 : vector<8x8xf32>
    %1511 = arith.mulf %1505, %1510 : vector<8x8xf32>
    %1512 = arith.addf %1507, %1511 : vector<8x8xf32>
    %1513 = math.tanh %1512 : vector<8x8xf32>
    %1514 = arith.subf %1490, %1513 : vector<8x8xf32>
    %1515 = arith.mulf %1506, %1514 : vector<8x8xf32>
    %1516 = arith.addf %1513, %1515 : vector<8x8xf32>
    %c57_307 = arith.constant 57 : index
    %1517 = memref.load %arg7[%c57_307] : memref<70xf32, #tpu.memory_space<smem>>
    %1518 = vector.broadcast %1517 : f32 to vector<8x8xf32>
    %1519 = arith.mulf %1516, %1518 : vector<8x8xf32>
    %1520 = arith.addf %1494, %1519 : vector<8x8xf32>
    %c58 = arith.constant 58 : index
    %c0_308 = arith.constant 0 : index
    %c0_309 = arith.constant 0 : index
    %1521 = vector.load %arg12[%c58, %c0_308, %c0_309] : memref<70x8x24xf32, #tpu.memory_space<vmem>>, vector<1x8x24xf32>
    %1522 = vector.shape_cast %1521 : vector<1x8x24xf32> to vector<8x24xf32>
    %cst_310 = arith.constant dense<0.000000e+00> : vector<8x24xf32>
    %1523 = tpu.matmul %1516, %9, %cst_310 {dimension_numbers = #tpu.dot_dimension_numbers<[1], [0], [0], [1], [0, 0, 1, 1], [], []>} : vector<8x8xf32>, vector<8x24xf32>, vector<8x24xf32> -> vector<8x24xf32>
    %1524 = arith.addf %1522, %1523 : vector<8x24xf32>
    %1525 = vector.extract_strided_slice %1524 {offsets = [0, 0], sizes = [8, 16], strides = [1, 1]} : vector<8x24xf32> to vector<8x16xf32>
    %1526 = arith.negf %1525 : vector<8x16xf32>
    %1527 = math.exp %1526 : vector<8x16xf32>
    %cst_311 = arith.constant 1.000000e+00 : f32
    %1528 = vector.broadcast %cst_311 : f32 to vector<8x16xf32>
    %1529 = arith.addf %1528, %1527 : vector<8x16xf32>
    %1530 = arith.divf %1528, %1529 : vector<8x16xf32>
    %1531 = vector.extract_strided_slice %1530 {offsets = [0, 0], sizes = [8, 8], strides = [1, 1]} : vector<8x16xf32> to vector<8x8xf32>
    %1532 = vector.extract_strided_slice %1530 {offsets = [0, 8], sizes = [8, 8], strides = [1, 1]} : vector<8x16xf32> to vector<8x8xf32>
    %1533 = vector.extract_strided_slice %1522 {offsets = [0, 16], sizes = [8, 8], strides = [1, 1]} : vector<8x24xf32> to vector<8x8xf32>
    %1534 = vector.extract_strided_slice %1523 {offsets = [0, 16], sizes = [8, 8], strides = [1, 1]} : vector<8x24xf32> to vector<8x8xf32>
    %1535 = vector.broadcast %10 : vector<1x8xf32> to vector<8x8xf32>
    %1536 = arith.addf %1534, %1535 : vector<8x8xf32>
    %1537 = arith.mulf %1531, %1536 : vector<8x8xf32>
    %1538 = arith.addf %1533, %1537 : vector<8x8xf32>
    %1539 = math.tanh %1538 : vector<8x8xf32>
    %1540 = arith.subf %1516, %1539 : vector<8x8xf32>
    %1541 = arith.mulf %1532, %1540 : vector<8x8xf32>
    %1542 = arith.addf %1539, %1541 : vector<8x8xf32>
    %c58_312 = arith.constant 58 : index
    %1543 = memref.load %arg7[%c58_312] : memref<70xf32, #tpu.memory_space<smem>>
    %1544 = vector.broadcast %1543 : f32 to vector<8x8xf32>
    %1545 = arith.mulf %1542, %1544 : vector<8x8xf32>
    %1546 = arith.addf %1520, %1545 : vector<8x8xf32>
    %c59 = arith.constant 59 : index
    %c0_313 = arith.constant 0 : index
    %c0_314 = arith.constant 0 : index
    %1547 = vector.load %arg12[%c59, %c0_313, %c0_314] : memref<70x8x24xf32, #tpu.memory_space<vmem>>, vector<1x8x24xf32>
    %1548 = vector.shape_cast %1547 : vector<1x8x24xf32> to vector<8x24xf32>
    %cst_315 = arith.constant dense<0.000000e+00> : vector<8x24xf32>
    %1549 = tpu.matmul %1542, %9, %cst_315 {dimension_numbers = #tpu.dot_dimension_numbers<[1], [0], [0], [1], [0, 0, 1, 1], [], []>} : vector<8x8xf32>, vector<8x24xf32>, vector<8x24xf32> -> vector<8x24xf32>
    %1550 = arith.addf %1548, %1549 : vector<8x24xf32>
    %1551 = vector.extract_strided_slice %1550 {offsets = [0, 0], sizes = [8, 16], strides = [1, 1]} : vector<8x24xf32> to vector<8x16xf32>
    %1552 = arith.negf %1551 : vector<8x16xf32>
    %1553 = math.exp %1552 : vector<8x16xf32>
    %cst_316 = arith.constant 1.000000e+00 : f32
    %1554 = vector.broadcast %cst_316 : f32 to vector<8x16xf32>
    %1555 = arith.addf %1554, %1553 : vector<8x16xf32>
    %1556 = arith.divf %1554, %1555 : vector<8x16xf32>
    %1557 = vector.extract_strided_slice %1556 {offsets = [0, 0], sizes = [8, 8], strides = [1, 1]} : vector<8x16xf32> to vector<8x8xf32>
    %1558 = vector.extract_strided_slice %1556 {offsets = [0, 8], sizes = [8, 8], strides = [1, 1]} : vector<8x16xf32> to vector<8x8xf32>
    %1559 = vector.extract_strided_slice %1548 {offsets = [0, 16], sizes = [8, 8], strides = [1, 1]} : vector<8x24xf32> to vector<8x8xf32>
    %1560 = vector.extract_strided_slice %1549 {offsets = [0, 16], sizes = [8, 8], strides = [1, 1]} : vector<8x24xf32> to vector<8x8xf32>
    %1561 = vector.broadcast %10 : vector<1x8xf32> to vector<8x8xf32>
    %1562 = arith.addf %1560, %1561 : vector<8x8xf32>
    %1563 = arith.mulf %1557, %1562 : vector<8x8xf32>
    %1564 = arith.addf %1559, %1563 : vector<8x8xf32>
    %1565 = math.tanh %1564 : vector<8x8xf32>
    %1566 = arith.subf %1542, %1565 : vector<8x8xf32>
    %1567 = arith.mulf %1558, %1566 : vector<8x8xf32>
    %1568 = arith.addf %1565, %1567 : vector<8x8xf32>
    %c59_317 = arith.constant 59 : index
    %1569 = memref.load %arg7[%c59_317] : memref<70xf32, #tpu.memory_space<smem>>
    %1570 = vector.broadcast %1569 : f32 to vector<8x8xf32>
    %1571 = arith.mulf %1568, %1570 : vector<8x8xf32>
    %1572 = arith.addf %1546, %1571 : vector<8x8xf32>
    %c60 = arith.constant 60 : index
    %c0_318 = arith.constant 0 : index
    %c0_319 = arith.constant 0 : index
    %1573 = vector.load %arg12[%c60, %c0_318, %c0_319] : memref<70x8x24xf32, #tpu.memory_space<vmem>>, vector<1x8x24xf32>
    %1574 = vector.shape_cast %1573 : vector<1x8x24xf32> to vector<8x24xf32>
    %cst_320 = arith.constant dense<0.000000e+00> : vector<8x24xf32>
    %1575 = tpu.matmul %1568, %9, %cst_320 {dimension_numbers = #tpu.dot_dimension_numbers<[1], [0], [0], [1], [0, 0, 1, 1], [], []>} : vector<8x8xf32>, vector<8x24xf32>, vector<8x24xf32> -> vector<8x24xf32>
    %1576 = arith.addf %1574, %1575 : vector<8x24xf32>
    %1577 = vector.extract_strided_slice %1576 {offsets = [0, 0], sizes = [8, 16], strides = [1, 1]} : vector<8x24xf32> to vector<8x16xf32>
    %1578 = arith.negf %1577 : vector<8x16xf32>
    %1579 = math.exp %1578 : vector<8x16xf32>
    %cst_321 = arith.constant 1.000000e+00 : f32
    %1580 = vector.broadcast %cst_321 : f32 to vector<8x16xf32>
    %1581 = arith.addf %1580, %1579 : vector<8x16xf32>
    %1582 = arith.divf %1580, %1581 : vector<8x16xf32>
    %1583 = vector.extract_strided_slice %1582 {offsets = [0, 0], sizes = [8, 8], strides = [1, 1]} : vector<8x16xf32> to vector<8x8xf32>
    %1584 = vector.extract_strided_slice %1582 {offsets = [0, 8], sizes = [8, 8], strides = [1, 1]} : vector<8x16xf32> to vector<8x8xf32>
    %1585 = vector.extract_strided_slice %1574 {offsets = [0, 16], sizes = [8, 8], strides = [1, 1]} : vector<8x24xf32> to vector<8x8xf32>
    %1586 = vector.extract_strided_slice %1575 {offsets = [0, 16], sizes = [8, 8], strides = [1, 1]} : vector<8x24xf32> to vector<8x8xf32>
    %1587 = vector.broadcast %10 : vector<1x8xf32> to vector<8x8xf32>
    %1588 = arith.addf %1586, %1587 : vector<8x8xf32>
    %1589 = arith.mulf %1583, %1588 : vector<8x8xf32>
    %1590 = arith.addf %1585, %1589 : vector<8x8xf32>
    %1591 = math.tanh %1590 : vector<8x8xf32>
    %1592 = arith.subf %1568, %1591 : vector<8x8xf32>
    %1593 = arith.mulf %1584, %1592 : vector<8x8xf32>
    %1594 = arith.addf %1591, %1593 : vector<8x8xf32>
    %c60_322 = arith.constant 60 : index
    %1595 = memref.load %arg7[%c60_322] : memref<70xf32, #tpu.memory_space<smem>>
    %1596 = vector.broadcast %1595 : f32 to vector<8x8xf32>
    %1597 = arith.mulf %1594, %1596 : vector<8x8xf32>
    %1598 = arith.addf %1572, %1597 : vector<8x8xf32>
    %c61 = arith.constant 61 : index
    %c0_323 = arith.constant 0 : index
    %c0_324 = arith.constant 0 : index
    %1599 = vector.load %arg12[%c61, %c0_323, %c0_324] : memref<70x8x24xf32, #tpu.memory_space<vmem>>, vector<1x8x24xf32>
    %1600 = vector.shape_cast %1599 : vector<1x8x24xf32> to vector<8x24xf32>
    %cst_325 = arith.constant dense<0.000000e+00> : vector<8x24xf32>
    %1601 = tpu.matmul %1594, %9, %cst_325 {dimension_numbers = #tpu.dot_dimension_numbers<[1], [0], [0], [1], [0, 0, 1, 1], [], []>} : vector<8x8xf32>, vector<8x24xf32>, vector<8x24xf32> -> vector<8x24xf32>
    %1602 = arith.addf %1600, %1601 : vector<8x24xf32>
    %1603 = vector.extract_strided_slice %1602 {offsets = [0, 0], sizes = [8, 16], strides = [1, 1]} : vector<8x24xf32> to vector<8x16xf32>
    %1604 = arith.negf %1603 : vector<8x16xf32>
    %1605 = math.exp %1604 : vector<8x16xf32>
    %cst_326 = arith.constant 1.000000e+00 : f32
    %1606 = vector.broadcast %cst_326 : f32 to vector<8x16xf32>
    %1607 = arith.addf %1606, %1605 : vector<8x16xf32>
    %1608 = arith.divf %1606, %1607 : vector<8x16xf32>
    %1609 = vector.extract_strided_slice %1608 {offsets = [0, 0], sizes = [8, 8], strides = [1, 1]} : vector<8x16xf32> to vector<8x8xf32>
    %1610 = vector.extract_strided_slice %1608 {offsets = [0, 8], sizes = [8, 8], strides = [1, 1]} : vector<8x16xf32> to vector<8x8xf32>
    %1611 = vector.extract_strided_slice %1600 {offsets = [0, 16], sizes = [8, 8], strides = [1, 1]} : vector<8x24xf32> to vector<8x8xf32>
    %1612 = vector.extract_strided_slice %1601 {offsets = [0, 16], sizes = [8, 8], strides = [1, 1]} : vector<8x24xf32> to vector<8x8xf32>
    %1613 = vector.broadcast %10 : vector<1x8xf32> to vector<8x8xf32>
    %1614 = arith.addf %1612, %1613 : vector<8x8xf32>
    %1615 = arith.mulf %1609, %1614 : vector<8x8xf32>
    %1616 = arith.addf %1611, %1615 : vector<8x8xf32>
    %1617 = math.tanh %1616 : vector<8x8xf32>
    %1618 = arith.subf %1594, %1617 : vector<8x8xf32>
    %1619 = arith.mulf %1610, %1618 : vector<8x8xf32>
    %1620 = arith.addf %1617, %1619 : vector<8x8xf32>
    %c61_327 = arith.constant 61 : index
    %1621 = memref.load %arg7[%c61_327] : memref<70xf32, #tpu.memory_space<smem>>
    %1622 = vector.broadcast %1621 : f32 to vector<8x8xf32>
    %1623 = arith.mulf %1620, %1622 : vector<8x8xf32>
    %1624 = arith.addf %1598, %1623 : vector<8x8xf32>
    %c62 = arith.constant 62 : index
    %c0_328 = arith.constant 0 : index
    %c0_329 = arith.constant 0 : index
    %1625 = vector.load %arg12[%c62, %c0_328, %c0_329] : memref<70x8x24xf32, #tpu.memory_space<vmem>>, vector<1x8x24xf32>
    %1626 = vector.shape_cast %1625 : vector<1x8x24xf32> to vector<8x24xf32>
    %cst_330 = arith.constant dense<0.000000e+00> : vector<8x24xf32>
    %1627 = tpu.matmul %1620, %9, %cst_330 {dimension_numbers = #tpu.dot_dimension_numbers<[1], [0], [0], [1], [0, 0, 1, 1], [], []>} : vector<8x8xf32>, vector<8x24xf32>, vector<8x24xf32> -> vector<8x24xf32>
    %1628 = arith.addf %1626, %1627 : vector<8x24xf32>
    %1629 = vector.extract_strided_slice %1628 {offsets = [0, 0], sizes = [8, 16], strides = [1, 1]} : vector<8x24xf32> to vector<8x16xf32>
    %1630 = arith.negf %1629 : vector<8x16xf32>
    %1631 = math.exp %1630 : vector<8x16xf32>
    %cst_331 = arith.constant 1.000000e+00 : f32
    %1632 = vector.broadcast %cst_331 : f32 to vector<8x16xf32>
    %1633 = arith.addf %1632, %1631 : vector<8x16xf32>
    %1634 = arith.divf %1632, %1633 : vector<8x16xf32>
    %1635 = vector.extract_strided_slice %1634 {offsets = [0, 0], sizes = [8, 8], strides = [1, 1]} : vector<8x16xf32> to vector<8x8xf32>
    %1636 = vector.extract_strided_slice %1634 {offsets = [0, 8], sizes = [8, 8], strides = [1, 1]} : vector<8x16xf32> to vector<8x8xf32>
    %1637 = vector.extract_strided_slice %1626 {offsets = [0, 16], sizes = [8, 8], strides = [1, 1]} : vector<8x24xf32> to vector<8x8xf32>
    %1638 = vector.extract_strided_slice %1627 {offsets = [0, 16], sizes = [8, 8], strides = [1, 1]} : vector<8x24xf32> to vector<8x8xf32>
    %1639 = vector.broadcast %10 : vector<1x8xf32> to vector<8x8xf32>
    %1640 = arith.addf %1638, %1639 : vector<8x8xf32>
    %1641 = arith.mulf %1635, %1640 : vector<8x8xf32>
    %1642 = arith.addf %1637, %1641 : vector<8x8xf32>
    %1643 = math.tanh %1642 : vector<8x8xf32>
    %1644 = arith.subf %1620, %1643 : vector<8x8xf32>
    %1645 = arith.mulf %1636, %1644 : vector<8x8xf32>
    %1646 = arith.addf %1643, %1645 : vector<8x8xf32>
    %c62_332 = arith.constant 62 : index
    %1647 = memref.load %arg7[%c62_332] : memref<70xf32, #tpu.memory_space<smem>>
    %1648 = vector.broadcast %1647 : f32 to vector<8x8xf32>
    %1649 = arith.mulf %1646, %1648 : vector<8x8xf32>
    %1650 = arith.addf %1624, %1649 : vector<8x8xf32>
    %c63 = arith.constant 63 : index
    %c0_333 = arith.constant 0 : index
    %c0_334 = arith.constant 0 : index
    %1651 = vector.load %arg12[%c63, %c0_333, %c0_334] : memref<70x8x24xf32, #tpu.memory_space<vmem>>, vector<1x8x24xf32>
    %1652 = vector.shape_cast %1651 : vector<1x8x24xf32> to vector<8x24xf32>
    %cst_335 = arith.constant dense<0.000000e+00> : vector<8x24xf32>
    %1653 = tpu.matmul %1646, %9, %cst_335 {dimension_numbers = #tpu.dot_dimension_numbers<[1], [0], [0], [1], [0, 0, 1, 1], [], []>} : vector<8x8xf32>, vector<8x24xf32>, vector<8x24xf32> -> vector<8x24xf32>
    %1654 = arith.addf %1652, %1653 : vector<8x24xf32>
    %1655 = vector.extract_strided_slice %1654 {offsets = [0, 0], sizes = [8, 16], strides = [1, 1]} : vector<8x24xf32> to vector<8x16xf32>
    %1656 = arith.negf %1655 : vector<8x16xf32>
    %1657 = math.exp %1656 : vector<8x16xf32>
    %cst_336 = arith.constant 1.000000e+00 : f32
    %1658 = vector.broadcast %cst_336 : f32 to vector<8x16xf32>
    %1659 = arith.addf %1658, %1657 : vector<8x16xf32>
    %1660 = arith.divf %1658, %1659 : vector<8x16xf32>
    %1661 = vector.extract_strided_slice %1660 {offsets = [0, 0], sizes = [8, 8], strides = [1, 1]} : vector<8x16xf32> to vector<8x8xf32>
    %1662 = vector.extract_strided_slice %1660 {offsets = [0, 8], sizes = [8, 8], strides = [1, 1]} : vector<8x16xf32> to vector<8x8xf32>
    %1663 = vector.extract_strided_slice %1652 {offsets = [0, 16], sizes = [8, 8], strides = [1, 1]} : vector<8x24xf32> to vector<8x8xf32>
    %1664 = vector.extract_strided_slice %1653 {offsets = [0, 16], sizes = [8, 8], strides = [1, 1]} : vector<8x24xf32> to vector<8x8xf32>
    %1665 = vector.broadcast %10 : vector<1x8xf32> to vector<8x8xf32>
    %1666 = arith.addf %1664, %1665 : vector<8x8xf32>
    %1667 = arith.mulf %1661, %1666 : vector<8x8xf32>
    %1668 = arith.addf %1663, %1667 : vector<8x8xf32>
    %1669 = math.tanh %1668 : vector<8x8xf32>
    %1670 = arith.subf %1646, %1669 : vector<8x8xf32>
    %1671 = arith.mulf %1662, %1670 : vector<8x8xf32>
    %1672 = arith.addf %1669, %1671 : vector<8x8xf32>
    %c63_337 = arith.constant 63 : index
    %1673 = memref.load %arg7[%c63_337] : memref<70xf32, #tpu.memory_space<smem>>
    %1674 = vector.broadcast %1673 : f32 to vector<8x8xf32>
    %1675 = arith.mulf %1672, %1674 : vector<8x8xf32>
    %1676 = arith.addf %1650, %1675 : vector<8x8xf32>
    %c64 = arith.constant 64 : index
    %c0_338 = arith.constant 0 : index
    %c0_339 = arith.constant 0 : index
    %1677 = vector.load %arg12[%c64, %c0_338, %c0_339] : memref<70x8x24xf32, #tpu.memory_space<vmem>>, vector<1x8x24xf32>
    %1678 = vector.shape_cast %1677 : vector<1x8x24xf32> to vector<8x24xf32>
    %cst_340 = arith.constant dense<0.000000e+00> : vector<8x24xf32>
    %1679 = tpu.matmul %1672, %9, %cst_340 {dimension_numbers = #tpu.dot_dimension_numbers<[1], [0], [0], [1], [0, 0, 1, 1], [], []>} : vector<8x8xf32>, vector<8x24xf32>, vector<8x24xf32> -> vector<8x24xf32>
    %1680 = arith.addf %1678, %1679 : vector<8x24xf32>
    %1681 = vector.extract_strided_slice %1680 {offsets = [0, 0], sizes = [8, 16], strides = [1, 1]} : vector<8x24xf32> to vector<8x16xf32>
    %1682 = arith.negf %1681 : vector<8x16xf32>
    %1683 = math.exp %1682 : vector<8x16xf32>
    %cst_341 = arith.constant 1.000000e+00 : f32
    %1684 = vector.broadcast %cst_341 : f32 to vector<8x16xf32>
    %1685 = arith.addf %1684, %1683 : vector<8x16xf32>
    %1686 = arith.divf %1684, %1685 : vector<8x16xf32>
    %1687 = vector.extract_strided_slice %1686 {offsets = [0, 0], sizes = [8, 8], strides = [1, 1]} : vector<8x16xf32> to vector<8x8xf32>
    %1688 = vector.extract_strided_slice %1686 {offsets = [0, 8], sizes = [8, 8], strides = [1, 1]} : vector<8x16xf32> to vector<8x8xf32>
    %1689 = vector.extract_strided_slice %1678 {offsets = [0, 16], sizes = [8, 8], strides = [1, 1]} : vector<8x24xf32> to vector<8x8xf32>
    %1690 = vector.extract_strided_slice %1679 {offsets = [0, 16], sizes = [8, 8], strides = [1, 1]} : vector<8x24xf32> to vector<8x8xf32>
    %1691 = vector.broadcast %10 : vector<1x8xf32> to vector<8x8xf32>
    %1692 = arith.addf %1690, %1691 : vector<8x8xf32>
    %1693 = arith.mulf %1687, %1692 : vector<8x8xf32>
    %1694 = arith.addf %1689, %1693 : vector<8x8xf32>
    %1695 = math.tanh %1694 : vector<8x8xf32>
    %1696 = arith.subf %1672, %1695 : vector<8x8xf32>
    %1697 = arith.mulf %1688, %1696 : vector<8x8xf32>
    %1698 = arith.addf %1695, %1697 : vector<8x8xf32>
    %c64_342 = arith.constant 64 : index
    %1699 = memref.load %arg7[%c64_342] : memref<70xf32, #tpu.memory_space<smem>>
    %1700 = vector.broadcast %1699 : f32 to vector<8x8xf32>
    %1701 = arith.mulf %1698, %1700 : vector<8x8xf32>
    %1702 = arith.addf %1676, %1701 : vector<8x8xf32>
    %c65 = arith.constant 65 : index
    %c0_343 = arith.constant 0 : index
    %c0_344 = arith.constant 0 : index
    %1703 = vector.load %arg12[%c65, %c0_343, %c0_344] : memref<70x8x24xf32, #tpu.memory_space<vmem>>, vector<1x8x24xf32>
    %1704 = vector.shape_cast %1703 : vector<1x8x24xf32> to vector<8x24xf32>
    %cst_345 = arith.constant dense<0.000000e+00> : vector<8x24xf32>
    %1705 = tpu.matmul %1698, %9, %cst_345 {dimension_numbers = #tpu.dot_dimension_numbers<[1], [0], [0], [1], [0, 0, 1, 1], [], []>} : vector<8x8xf32>, vector<8x24xf32>, vector<8x24xf32> -> vector<8x24xf32>
    %1706 = arith.addf %1704, %1705 : vector<8x24xf32>
    %1707 = vector.extract_strided_slice %1706 {offsets = [0, 0], sizes = [8, 16], strides = [1, 1]} : vector<8x24xf32> to vector<8x16xf32>
    %1708 = arith.negf %1707 : vector<8x16xf32>
    %1709 = math.exp %1708 : vector<8x16xf32>
    %cst_346 = arith.constant 1.000000e+00 : f32
    %1710 = vector.broadcast %cst_346 : f32 to vector<8x16xf32>
    %1711 = arith.addf %1710, %1709 : vector<8x16xf32>
    %1712 = arith.divf %1710, %1711 : vector<8x16xf32>
    %1713 = vector.extract_strided_slice %1712 {offsets = [0, 0], sizes = [8, 8], strides = [1, 1]} : vector<8x16xf32> to vector<8x8xf32>
    %1714 = vector.extract_strided_slice %1712 {offsets = [0, 8], sizes = [8, 8], strides = [1, 1]} : vector<8x16xf32> to vector<8x8xf32>
    %1715 = vector.extract_strided_slice %1704 {offsets = [0, 16], sizes = [8, 8], strides = [1, 1]} : vector<8x24xf32> to vector<8x8xf32>
    %1716 = vector.extract_strided_slice %1705 {offsets = [0, 16], sizes = [8, 8], strides = [1, 1]} : vector<8x24xf32> to vector<8x8xf32>
    %1717 = vector.broadcast %10 : vector<1x8xf32> to vector<8x8xf32>
    %1718 = arith.addf %1716, %1717 : vector<8x8xf32>
    %1719 = arith.mulf %1713, %1718 : vector<8x8xf32>
    %1720 = arith.addf %1715, %1719 : vector<8x8xf32>
    %1721 = math.tanh %1720 : vector<8x8xf32>
    %1722 = arith.subf %1698, %1721 : vector<8x8xf32>
    %1723 = arith.mulf %1714, %1722 : vector<8x8xf32>
    %1724 = arith.addf %1721, %1723 : vector<8x8xf32>
    %c65_347 = arith.constant 65 : index
    %1725 = memref.load %arg7[%c65_347] : memref<70xf32, #tpu.memory_space<smem>>
    %1726 = vector.broadcast %1725 : f32 to vector<8x8xf32>
    %1727 = arith.mulf %1724, %1726 : vector<8x8xf32>
    %1728 = arith.addf %1702, %1727 : vector<8x8xf32>
    %c66 = arith.constant 66 : index
    %c0_348 = arith.constant 0 : index
    %c0_349 = arith.constant 0 : index
    %1729 = vector.load %arg12[%c66, %c0_348, %c0_349] : memref<70x8x24xf32, #tpu.memory_space<vmem>>, vector<1x8x24xf32>
    %1730 = vector.shape_cast %1729 : vector<1x8x24xf32> to vector<8x24xf32>
    %cst_350 = arith.constant dense<0.000000e+00> : vector<8x24xf32>
    %1731 = tpu.matmul %1724, %9, %cst_350 {dimension_numbers = #tpu.dot_dimension_numbers<[1], [0], [0], [1], [0, 0, 1, 1], [], []>} : vector<8x8xf32>, vector<8x24xf32>, vector<8x24xf32> -> vector<8x24xf32>
    %1732 = arith.addf %1730, %1731 : vector<8x24xf32>
    %1733 = vector.extract_strided_slice %1732 {offsets = [0, 0], sizes = [8, 16], strides = [1, 1]} : vector<8x24xf32> to vector<8x16xf32>
    %1734 = arith.negf %1733 : vector<8x16xf32>
    %1735 = math.exp %1734 : vector<8x16xf32>
    %cst_351 = arith.constant 1.000000e+00 : f32
    %1736 = vector.broadcast %cst_351 : f32 to vector<8x16xf32>
    %1737 = arith.addf %1736, %1735 : vector<8x16xf32>
    %1738 = arith.divf %1736, %1737 : vector<8x16xf32>
    %1739 = vector.extract_strided_slice %1738 {offsets = [0, 0], sizes = [8, 8], strides = [1, 1]} : vector<8x16xf32> to vector<8x8xf32>
    %1740 = vector.extract_strided_slice %1738 {offsets = [0, 8], sizes = [8, 8], strides = [1, 1]} : vector<8x16xf32> to vector<8x8xf32>
    %1741 = vector.extract_strided_slice %1730 {offsets = [0, 16], sizes = [8, 8], strides = [1, 1]} : vector<8x24xf32> to vector<8x8xf32>
    %1742 = vector.extract_strided_slice %1731 {offsets = [0, 16], sizes = [8, 8], strides = [1, 1]} : vector<8x24xf32> to vector<8x8xf32>
    %1743 = vector.broadcast %10 : vector<1x8xf32> to vector<8x8xf32>
    %1744 = arith.addf %1742, %1743 : vector<8x8xf32>
    %1745 = arith.mulf %1739, %1744 : vector<8x8xf32>
    %1746 = arith.addf %1741, %1745 : vector<8x8xf32>
    %1747 = math.tanh %1746 : vector<8x8xf32>
    %1748 = arith.subf %1724, %1747 : vector<8x8xf32>
    %1749 = arith.mulf %1740, %1748 : vector<8x8xf32>
    %1750 = arith.addf %1747, %1749 : vector<8x8xf32>
    %c66_352 = arith.constant 66 : index
    %1751 = memref.load %arg7[%c66_352] : memref<70xf32, #tpu.memory_space<smem>>
    %1752 = vector.broadcast %1751 : f32 to vector<8x8xf32>
    %1753 = arith.mulf %1750, %1752 : vector<8x8xf32>
    %1754 = arith.addf %1728, %1753 : vector<8x8xf32>
    %c67 = arith.constant 67 : index
    %c0_353 = arith.constant 0 : index
    %c0_354 = arith.constant 0 : index
    %1755 = vector.load %arg12[%c67, %c0_353, %c0_354] : memref<70x8x24xf32, #tpu.memory_space<vmem>>, vector<1x8x24xf32>
    %1756 = vector.shape_cast %1755 : vector<1x8x24xf32> to vector<8x24xf32>
    %cst_355 = arith.constant dense<0.000000e+00> : vector<8x24xf32>
    %1757 = tpu.matmul %1750, %9, %cst_355 {dimension_numbers = #tpu.dot_dimension_numbers<[1], [0], [0], [1], [0, 0, 1, 1], [], []>} : vector<8x8xf32>, vector<8x24xf32>, vector<8x24xf32> -> vector<8x24xf32>
    %1758 = arith.addf %1756, %1757 : vector<8x24xf32>
    %1759 = vector.extract_strided_slice %1758 {offsets = [0, 0], sizes = [8, 16], strides = [1, 1]} : vector<8x24xf32> to vector<8x16xf32>
    %1760 = arith.negf %1759 : vector<8x16xf32>
    %1761 = math.exp %1760 : vector<8x16xf32>
    %cst_356 = arith.constant 1.000000e+00 : f32
    %1762 = vector.broadcast %cst_356 : f32 to vector<8x16xf32>
    %1763 = arith.addf %1762, %1761 : vector<8x16xf32>
    %1764 = arith.divf %1762, %1763 : vector<8x16xf32>
    %1765 = vector.extract_strided_slice %1764 {offsets = [0, 0], sizes = [8, 8], strides = [1, 1]} : vector<8x16xf32> to vector<8x8xf32>
    %1766 = vector.extract_strided_slice %1764 {offsets = [0, 8], sizes = [8, 8], strides = [1, 1]} : vector<8x16xf32> to vector<8x8xf32>
    %1767 = vector.extract_strided_slice %1756 {offsets = [0, 16], sizes = [8, 8], strides = [1, 1]} : vector<8x24xf32> to vector<8x8xf32>
    %1768 = vector.extract_strided_slice %1757 {offsets = [0, 16], sizes = [8, 8], strides = [1, 1]} : vector<8x24xf32> to vector<8x8xf32>
    %1769 = vector.broadcast %10 : vector<1x8xf32> to vector<8x8xf32>
    %1770 = arith.addf %1768, %1769 : vector<8x8xf32>
    %1771 = arith.mulf %1765, %1770 : vector<8x8xf32>
    %1772 = arith.addf %1767, %1771 : vector<8x8xf32>
    %1773 = math.tanh %1772 : vector<8x8xf32>
    %1774 = arith.subf %1750, %1773 : vector<8x8xf32>
    %1775 = arith.mulf %1766, %1774 : vector<8x8xf32>
    %1776 = arith.addf %1773, %1775 : vector<8x8xf32>
    %c67_357 = arith.constant 67 : index
    %1777 = memref.load %arg7[%c67_357] : memref<70xf32, #tpu.memory_space<smem>>
    %1778 = vector.broadcast %1777 : f32 to vector<8x8xf32>
    %1779 = arith.mulf %1776, %1778 : vector<8x8xf32>
    %1780 = arith.addf %1754, %1779 : vector<8x8xf32>
    %c68 = arith.constant 68 : index
    %c0_358 = arith.constant 0 : index
    %c0_359 = arith.constant 0 : index
    %1781 = vector.load %arg12[%c68, %c0_358, %c0_359] : memref<70x8x24xf32, #tpu.memory_space<vmem>>, vector<1x8x24xf32>
    %1782 = vector.shape_cast %1781 : vector<1x8x24xf32> to vector<8x24xf32>
    %cst_360 = arith.constant dense<0.000000e+00> : vector<8x24xf32>
    %1783 = tpu.matmul %1776, %9, %cst_360 {dimension_numbers = #tpu.dot_dimension_numbers<[1], [0], [0], [1], [0, 0, 1, 1], [], []>} : vector<8x8xf32>, vector<8x24xf32>, vector<8x24xf32> -> vector<8x24xf32>
    %1784 = arith.addf %1782, %1783 : vector<8x24xf32>
    %1785 = vector.extract_strided_slice %1784 {offsets = [0, 0], sizes = [8, 16], strides = [1, 1]} : vector<8x24xf32> to vector<8x16xf32>
    %1786 = arith.negf %1785 : vector<8x16xf32>
    %1787 = math.exp %1786 : vector<8x16xf32>
    %cst_361 = arith.constant 1.000000e+00 : f32
    %1788 = vector.broadcast %cst_361 : f32 to vector<8x16xf32>
    %1789 = arith.addf %1788, %1787 : vector<8x16xf32>
    %1790 = arith.divf %1788, %1789 : vector<8x16xf32>
    %1791 = vector.extract_strided_slice %1790 {offsets = [0, 0], sizes = [8, 8], strides = [1, 1]} : vector<8x16xf32> to vector<8x8xf32>
    %1792 = vector.extract_strided_slice %1790 {offsets = [0, 8], sizes = [8, 8], strides = [1, 1]} : vector<8x16xf32> to vector<8x8xf32>
    %1793 = vector.extract_strided_slice %1782 {offsets = [0, 16], sizes = [8, 8], strides = [1, 1]} : vector<8x24xf32> to vector<8x8xf32>
    %1794 = vector.extract_strided_slice %1783 {offsets = [0, 16], sizes = [8, 8], strides = [1, 1]} : vector<8x24xf32> to vector<8x8xf32>
    %1795 = vector.broadcast %10 : vector<1x8xf32> to vector<8x8xf32>
    %1796 = arith.addf %1794, %1795 : vector<8x8xf32>
    %1797 = arith.mulf %1791, %1796 : vector<8x8xf32>
    %1798 = arith.addf %1793, %1797 : vector<8x8xf32>
    %1799 = math.tanh %1798 : vector<8x8xf32>
    %1800 = arith.subf %1776, %1799 : vector<8x8xf32>
    %1801 = arith.mulf %1792, %1800 : vector<8x8xf32>
    %1802 = arith.addf %1799, %1801 : vector<8x8xf32>
    %c68_362 = arith.constant 68 : index
    %1803 = memref.load %arg7[%c68_362] : memref<70xf32, #tpu.memory_space<smem>>
    %1804 = vector.broadcast %1803 : f32 to vector<8x8xf32>
    %1805 = arith.mulf %1802, %1804 : vector<8x8xf32>
    %1806 = arith.addf %1780, %1805 : vector<8x8xf32>
    %c69 = arith.constant 69 : index
    %c0_363 = arith.constant 0 : index
    %c0_364 = arith.constant 0 : index
    %1807 = vector.load %arg12[%c69, %c0_363, %c0_364] : memref<70x8x24xf32, #tpu.memory_space<vmem>>, vector<1x8x24xf32>
    %1808 = vector.shape_cast %1807 : vector<1x8x24xf32> to vector<8x24xf32>
    %cst_365 = arith.constant dense<0.000000e+00> : vector<8x24xf32>
    %1809 = tpu.matmul %1802, %9, %cst_365 {dimension_numbers = #tpu.dot_dimension_numbers<[1], [0], [0], [1], [0, 0, 1, 1], [], []>} : vector<8x8xf32>, vector<8x24xf32>, vector<8x24xf32> -> vector<8x24xf32>
    %1810 = arith.addf %1808, %1809 : vector<8x24xf32>
    %1811 = vector.extract_strided_slice %1810 {offsets = [0, 0], sizes = [8, 16], strides = [1, 1]} : vector<8x24xf32> to vector<8x16xf32>
    %1812 = arith.negf %1811 : vector<8x16xf32>
    %1813 = math.exp %1812 : vector<8x16xf32>
    %cst_366 = arith.constant 1.000000e+00 : f32
    %1814 = vector.broadcast %cst_366 : f32 to vector<8x16xf32>
    %1815 = arith.addf %1814, %1813 : vector<8x16xf32>
    %1816 = arith.divf %1814, %1815 : vector<8x16xf32>
    %1817 = vector.extract_strided_slice %1816 {offsets = [0, 0], sizes = [8, 8], strides = [1, 1]} : vector<8x16xf32> to vector<8x8xf32>
    %1818 = vector.extract_strided_slice %1816 {offsets = [0, 8], sizes = [8, 8], strides = [1, 1]} : vector<8x16xf32> to vector<8x8xf32>
    %1819 = vector.extract_strided_slice %1808 {offsets = [0, 16], sizes = [8, 8], strides = [1, 1]} : vector<8x24xf32> to vector<8x8xf32>
    %1820 = vector.extract_strided_slice %1809 {offsets = [0, 16], sizes = [8, 8], strides = [1, 1]} : vector<8x24xf32> to vector<8x8xf32>
    %1821 = vector.broadcast %10 : vector<1x8xf32> to vector<8x8xf32>
    %1822 = arith.addf %1820, %1821 : vector<8x8xf32>
    %1823 = arith.mulf %1817, %1822 : vector<8x8xf32>
    %1824 = arith.addf %1819, %1823 : vector<8x8xf32>
    %1825 = math.tanh %1824 : vector<8x8xf32>
    %1826 = arith.subf %1802, %1825 : vector<8x8xf32>
    %1827 = arith.mulf %1818, %1826 : vector<8x8xf32>
    %1828 = arith.addf %1825, %1827 : vector<8x8xf32>
    %c69_367 = arith.constant 69 : index
    %1829 = memref.load %arg7[%c69_367] : memref<70xf32, #tpu.memory_space<smem>>
    %1830 = vector.broadcast %1829 : f32 to vector<8x8xf32>
    %1831 = arith.mulf %1828, %1830 : vector<8x8xf32>
    %1832 = arith.addf %1806, %1831 : vector<8x8xf32>
    %c0_368 = arith.constant 0 : index
    %1833 = memref.load %arg8[%c0_368] : memref<1xf32, #tpu.memory_space<smem>>
    %1834 = vector.broadcast %1833 : f32 to vector<8x8xf32>
    %1835 = arith.addf %1832, %1834 : vector<8x8xf32>
    %c0_369 = arith.constant 0 : index
    %c0_370 = arith.constant 0 : index
    %1836 = vector.load %arg9[%c0_369, %c0_370] : memref<8x1xf32, #tpu.memory_space<vmem>>, vector<8x1xf32>
    %cst_371 = arith.constant dense<0.000000e+00> : vector<8x1xf32>
    %1837 = tpu.matmul %1835, %1836, %cst_371 {dimension_numbers = #tpu.dot_dimension_numbers<[1], [0], [0], [1], [0, 0, 1, 1], [], []>} : vector<8x8xf32>, vector<8x1xf32>, vector<8x1xf32> -> vector<8x1xf32>
    %c0_372 = arith.constant 0 : index
    %c0_373 = arith.constant 0 : index
    %1838 = vector.load %arg10[%c0_372, %c0_373] : memref<1x1xf32, #tpu.memory_space<vmem>>, vector<1x1xf32>
    %1839 = vector.broadcast %1838 : vector<1x1xf32> to vector<8x1xf32>
    %1840 = arith.addf %1837, %1839 : vector<8x1xf32>
    %c0_374 = arith.constant 0 : index
    %c0_375 = arith.constant 0 : index
    %1841 = vector.load %arg1[%c0_374, %c0_375] : memref<8x1xf32, #tpu.memory_space<vmem>>, vector<8x1xf32>
    %cst_376 = arith.constant 5.000000e+00 : f32
    %1842 = vector.broadcast %cst_376 : f32 to vector<8x1xf32>
    %1843 = arith.mulf %1842, %1841 : vector<8x1xf32>
    %1844 = arith.subf %1840, %1843 : vector<8x1xf32>
    %c0_377 = arith.constant 0 : index
    %c0_378 = arith.constant 0 : index
    %1845 = vector.load %arg11[%c0_377, %c0_378] : memref<8x1xf32, #tpu.memory_space<vmem>>, vector<8x1xf32>
    tpu.vector_store %arg11[%c0_377, %c0_378], %1844 {strides = array<i32>} : memref<8x1xf32, #tpu.memory_space<vmem>>, vector<8x1xf32>,
    return
  }
}

</mosaic_0001>

<llo_original>
// kernel: tpu_custom_call.1
$region0: #{tpu_custom_call.1}
  #allocation0 [shape = 'u32[]', space=smem, size = 0x4, offset = 0x4, fixed_abs, tag = 'smem constant byte address 0x4 - core index']
  #allocation1 [shape = 'u32[144,128]{1,0:T(1,128)}', space=vmem, size = 0x12000, scoped, tag = 'internal scratch']
  #allocation2 [shape = 'f32[70,8,24]{2,1,0:T(8,128)}', space=vmem, size = 0x46000, scoped, tag = 'scratch operand']
  #allocation3 [shape = 'f32[1]{0:T(128)S(6)}', space=smem, size = 0x200, scoped, tag = 'scoped memory for tpu_custom_call.1']
  #allocation4 [shape = 'f32[1,1]{1,0:T(1,128)S(1)}', space=vmem, size = 0x200, scoped, tag = 'scoped memory for tpu_custom_call.1']
  %s0 = inlined_call_operand.vmem [shape: f32[70,8,1], index: 0, kind: input, shape index: {}]
  %s1 = inlined_call_operand.vmem [shape: f32[8,1], index: 1, kind: input, shape index: {}]
  %s2 = inlined_call_operand.vmem [shape: f32[8,8], index: 2, kind: input, shape index: {}]
  %s3 = inlined_call_operand.vmem [shape: f32[1,1,24], index: 3, kind: input, shape index: {}]
  %s4 = inlined_call_operand.vmem [shape: f32[1,1,24], index: 4, kind: input, shape index: {}]
  %s5 = inlined_call_operand.vmem [shape: f32[8,24], index: 5, kind: input, shape index: {}]
  %s6 = inlined_call_operand.vmem [shape: f32[1,8], index: 6, kind: input, shape index: {}]
  %s7 = inlined_call_operand.vmem [shape: f32[70], index: 7, kind: input, shape index: {}]
  %s8 = inlined_call_operand.<no memory space> [shape: f32[1], index: 8, kind: input, shape index: {}]
  %s9 = inlined_call_operand.vmem [shape: f32[8,1], index: 9, kind: input, shape index: {}]
  %s10 = inlined_call_operand.<no memory space> [shape: f32[1,1], index: 10, kind: input, shape index: {}]
  %s11 = inlined_call_operand.vmem [shape: f32[8,1], index: 11, kind: output, shape index: {}]
  %s12 = sld [smem:[#allocation0]]
  $region58: #{tpu_custom_call.1} parent=0
    _
  %s14 = ssub.s32 1, %s12
  %s15 = scalar_select 0, %s14, %s12
  %16 = sst [smem:[#allocation3]] %s8
  %v17 = vstv %s10
  %18 = vst [vmem:[#allocation4] sm:$0x1] %v17
  $region1: #{tpu_custom_call.1} parent=0
    #allocation5 [shape = 'u8[512]{0}', space=smem, size = 0x200, scoped, tag = 'input window, operand 7, single buffered']
    #allocation6 [shape = 's32[1]{0}', space=sflag, size = 0x4, scoped, tag = 'scoped memory for tpu_custom_call.1']
    %19 = vsyncpa [#allocation6], 0
    // Predicated region
    $region2: #{tpu_custom_call.1} parent=1 // pred_check
      _
    $region3: #{tpu_custom_call.1} parent=1 // pred_check_branch
      %21 = sbr.rel (0) target = $region5
    $region4: #{tpu_custom_call.1} parent=1 // pred_region
      _
    $region5: #{tpu_custom_call.1} parent=1 // pred_fallthru
      _
    // Predicated region
    $region6: #{tpu_custom_call.1} parent=1 // pred_check
      _
    $region7: #{tpu_custom_call.1} parent=1 // pred_check_branch
      %23 = sbr.rel (0) target = $region9
    $region8: #{tpu_custom_call.1} parent=1 // pred_region
      _
    $region9: #{tpu_custom_call.1} parent=1 // pred_fallthru
      _
    // Predicated region
    $region10: #{tpu_custom_call.1} parent=1 // pred_check
      _
    $region11: #{tpu_custom_call.1} parent=1 // pred_check_branch
      %25 = sbr.rel (0) target = $region13
    $region12: #{tpu_custom_call.1} parent=1 // pred_region
      _
    $region13: #{tpu_custom_call.1} parent=1 // pred_fallthru
      _
    // Predicated region
    $region14: #{tpu_custom_call.1} parent=1 // pred_check
      _
    $region15: #{tpu_custom_call.1} parent=1 // pred_check_branch
      %27 = sbr.rel (0) target = $region17
    $region16: #{tpu_custom_call.1} parent=1 // pred_region
      _
    $region17: #{tpu_custom_call.1} parent=1 // pred_fallthru
      _
    // Predicated region
    $region18: #{tpu_custom_call.1} parent=1 // pred_check
      _
    $region19: #{tpu_custom_call.1} parent=1 // pred_check_branch
      %29 = sbr.rel (0) target = $region21
    $region20: #{tpu_custom_call.1} parent=1 // pred_region
      _
    $region21: #{tpu_custom_call.1} parent=1 // pred_fallthru
      _
    // Predicated region
    $region22: #{tpu_custom_call.1} parent=1 // pred_check
      _
    $region23: #{tpu_custom_call.1} parent=1 // pred_check_branch
      %31 = sbr.rel (0) target = $region25
    $region24: #{tpu_custom_call.1} parent=1 // pred_region
      _
    $region25: #{tpu_custom_call.1} parent=1 // pred_fallthru
      _
    // Predicated region
    $region26: #{tpu_custom_call.1} parent=1 // pred_check
      _
    $region27: #{tpu_custom_call.1} parent=1 // pred_check_branch
      %33 = sbr.rel (0) target = $region29
    $region28: #{tpu_custom_call.1} parent=1 // pred_region
      _
    $region29: #{tpu_custom_call.1} parent=1 // pred_fallthru
      _
    // Predicated region
    $region30: #{tpu_custom_call.1} parent=1 // pred_check
      _
    $region31: #{tpu_custom_call.1} parent=1 // pred_check_branch
      %35 = sbr.rel (0) target = $region33
    $region32: #{tpu_custom_call.1} parent=1 // pred_region
      %s37 = ssub.s32 16, 16
      %38 = vsyncadd [#allocation6], %s37
      %s40 = sshll.u32 %s7, 4
      %s41 = int_to_ptr.vmem [resolvable:$true] %s40
      %43 = dma.vmem_to_smem %s41, 16, [#allocation5], [#allocation6]
    $region33: #{tpu_custom_call.1} parent=1 // pred_fallthru
      _
    // Predicated region
    $region34: #{tpu_custom_call.1} parent=1 // pred_check
      _
    $region35: #{tpu_custom_call.1} parent=1 // pred_check_branch
      %45 = sbr.rel (0) target = $region37
    $region36: #{tpu_custom_call.1} parent=1 // pred_region
      _
    $region37: #{tpu_custom_call.1} parent=1 // pred_fallthru
      _
    // Predicated region
    $region38: #{tpu_custom_call.1} parent=1 // pred_check
      _
    $region39: #{tpu_custom_call.1} parent=1 // pred_check_branch
      %47 = sbr.rel (0) target = $region41
    $region40: #{tpu_custom_call.1} parent=1 // pred_region
      _
    $region41: #{tpu_custom_call.1} parent=1 // pred_fallthru
      _
    // Predicated region
    $region42: #{tpu_custom_call.1} parent=1 // pred_check
      _
    $region43: #{tpu_custom_call.1} parent=1 // pred_check_branch
      %49 = sbr.rel (0) target = $region45
    $region44: #{tpu_custom_call.1} parent=1 // pred_region
      _
    $region45: #{tpu_custom_call.1} parent=1 // pred_fallthru
      _
    // Predicated region
    $region46: #{tpu_custom_call.1} parent=1 // pred_check
      _
    $region47: #{tpu_custom_call.1} parent=1 // pred_check_branch
      %51 = sbr.rel (0) target = $region49
    $region48: #{tpu_custom_call.1} parent=1 // pred_region
      %52 = dma.done [#allocation6], 16
    $region49: #{tpu_custom_call.1} parent=1 // pred_fallthru
      _
    %53 = sfence
    %v54 = vld [vmem:[%s0] sm:$0xff]
    %v55 = vld [vmem:[%s0 + $0x8] sm:$0xff]
    %v56 = vld [vmem:[%s0 + $0x10] sm:$0xff]
    %v57 = vld [vmem:[%s0 + $0x18] sm:$0xff]
    %v58 = vld [vmem:[%s0 + $0x20] sm:$0xff]
    %v59 = vld [vmem:[%s0 + $0x28] sm:$0xff]
    %v60 = vld [vmem:[%s0 + $0x30] sm:$0xff]
    %v61 = vld [vmem:[%s0 + $0x38] sm:$0xff]
    %v62 = vld [vmem:[%s0 + $0x40] sm:$0xff]
    %v63 = vld [vmem:[%s0 + $0x48] sm:$0xff]
    %v64 = vld [vmem:[%s0 + $0x50] sm:$0xff]
    %v65 = vld [vmem:[%s0 + $0x58] sm:$0xff]
    %v66 = vld [vmem:[%s0 + $0x60] sm:$0xff]
    %v67 = vld [vmem:[%s0 + $0x68] sm:$0xff]
    %v68 = vld [vmem:[%s0 + $0x70] sm:$0xff]
    %v69 = vld [vmem:[%s0 + $0x78] sm:$0xff]
    %v70 = vld [vmem:[%s0 + $0x80] sm:$0xff]
    %v71 = vld [vmem:[%s0 + $0x88] sm:$0xff]
    %v72 = vld [vmem:[%s0 + $0x90] sm:$0xff]
    %v73 = vld [vmem:[%s0 + $0x98] sm:$0xff]
    %v74 = vld [vmem:[%s0 + $0xa0] sm:$0xff]
    %v75 = vld [vmem:[%s0 + $0xa8] sm:$0xff]
    %v76 = vld [vmem:[%s0 + $0xb0] sm:$0xff]
    %v77 = vld [vmem:[%s0 + $0xb8] sm:$0xff]
    %v78 = vld [vmem:[%s0 + $0xc0] sm:$0xff]
    %v79 = vld [vmem:[%s0 + $0xc8] sm:$0xff]
    %v80 = vld [vmem:[%s0 + $0xd0] sm:$0xff]
    %v81 = vld [vmem:[%s0 + $0xd8] sm:$0xff]
    %v82 = vld [vmem:[%s0 + $0xe0] sm:$0xff]
    %v83 = vld [vmem:[%s0 + $0xe8] sm:$0xff]
    %v84 = vld [vmem:[%s0 + $0xf0] sm:$0xff]
    %v85 = vld [vmem:[%s0 + $0xf8] sm:$0xff]
    %v86 = vld [vmem:[%s0 + $0x100] sm:$0xff]
    %v87 = vld [vmem:[%s0 + $0x108] sm:$0xff]
    %v88 = vld [vmem:[%s0 + $0x110] sm:$0xff]
    %v89 = vld [vmem:[%s0 + $0x118] sm:$0xff]
    %v90 = vld [vmem:[%s0 + $0x120] sm:$0xff]
    %v91 = vld [vmem:[%s0 + $0x128] sm:$0xff]
    %v92 = vld [vmem:[%s0 + $0x130] sm:$0xff]
    %v93 = vld [vmem:[%s0 + $0x138] sm:$0xff]
    %v94 = vld [vmem:[%s0 + $0x140] sm:$0xff]
    %v95 = vld [vmem:[%s0 + $0x148] sm:$0xff]
    %v96 = vld [vmem:[%s0 + $0x150] sm:$0xff]
    %v97 = vld [vmem:[%s0 + $0x158] sm:$0xff]
    %v98 = vld [vmem:[%s0 + $0x160] sm:$0xff]
    %v99 = vld [vmem:[%s0 + $0x168] sm:$0xff]
    %v100 = vld [vmem:[%s0 + $0x170] sm:$0xff]
    %v101 = vld [vmem:[%s0 + $0x178] sm:$0xff]
    %v102 = vld [vmem:[%s0 + $0x180] sm:$0xff]
    %v103 = vld [vmem:[%s0 + $0x188] sm:$0xff]
    %v104 = vld [vmem:[%s0 + $0x190] sm:$0xff]
    %v105 = vld [vmem:[%s0 + $0x198] sm:$0xff]
    %v106 = vld [vmem:[%s0 + $0x1a0] sm:$0xff]
    %v107 = vld [vmem:[%s0 + $0x1a8] sm:$0xff]
    %v108 = vld [vmem:[%s0 + $0x1b0] sm:$0xff]
    %v109 = vld [vmem:[%s0 + $0x1b8] sm:$0xff]
    %v110 = vld [vmem:[%s0 + $0x1c0] sm:$0xff]
    %v111 = vld [vmem:[%s0 + $0x1c8] sm:$0xff]
    %v112 = vld [vmem:[%s0 + $0x1d0] sm:$0xff]
    %v113 = vld [vmem:[%s0 + $0x1d8] sm:$0xff]
    %v114 = vld [vmem:[%s0 + $0x1e0] sm:$0xff]
    %v115 = vld [vmem:[%s0 + $0x1e8] sm:$0xff]
    %v116 = vld [vmem:[%s0 + $0x1f0] sm:$0xff]
    %v117 = vld [vmem:[%s0 + $0x1f8] sm:$0xff]
    %v118 = vld [vmem:[%s0 + $0x200] sm:$0xff]
    %v119 = vld [vmem:[%s0 + $0x208] sm:$0xff]
    %v120 = vld [vmem:[%s0 + $0x210] sm:$0xff]
    %v121 = vld [vmem:[%s0 + $0x218] sm:$0xff]
    %v122 = vld [vmem:[%s0 + $0x220] sm:$0xff]
    %v123 = vld [vmem:[%s0 + $0x228] sm:$0xff]
    %v124 = vld [vmem:[%s3] sm:$0x1]
    %126 = vset.pattern.permute.xlu0 0
    %127 = vperm.xlu0 %126, %v54
    %v128 = vpop.permute.xlu0 %127
    %131 = vset.pattern.permute.xlu0 0
    %132 = vperm.xlu0 %131, %v55
    %v133 = vpop.permute.xlu0 %132
    %136 = vset.pattern.permute.xlu0 0
    %137 = vperm.xlu0 %136, %v56
    %v138 = vpop.permute.xlu0 %137
    %141 = vset.pattern.permute.xlu0 0
    %142 = vperm.xlu0 %141, %v57
    %v143 = vpop.permute.xlu0 %142
    %146 = vset.pattern.permute.xlu0 0
    %147 = vperm.xlu0 %146, %v58
    %v148 = vpop.permute.xlu0 %147
    %151 = vset.pattern.permute.xlu0 0
    %152 = vperm.xlu0 %151, %v59
    %v153 = vpop.permute.xlu0 %152
    %156 = vset.pattern.permute.xlu0 0
    %157 = vperm.xlu0 %156, %v60
    %v158 = vpop.permute.xlu0 %157
    %161 = vset.pattern.permute.xlu0 0
    %162 = vperm.xlu0 %161, %v61
    %v163 = vpop.permute.xlu0 %162
    %166 = vset.pattern.permute.xlu0 0
    %167 = vperm.xlu0 %166, %v62
    %v168 = vpop.permute.xlu0 %167
    %171 = vset.pattern.permute.xlu0 0
    %172 = vperm.xlu0 %171, %v63
    %v173 = vpop.permute.xlu0 %172
    %176 = vset.pattern.permute.xlu0 0
    %177 = vperm.xlu0 %176, %v64
    %v178 = vpop.permute.xlu0 %177
    %181 = vset.pattern.permute.xlu0 0
    %182 = vperm.xlu0 %181, %v65
    %v183 = vpop.permute.xlu0 %182
    %186 = vset.pattern.permute.xlu0 0
    %187 = vperm.xlu0 %186, %v66
    %v188 = vpop.permute.xlu0 %187
    %191 = vset.pattern.permute.xlu0 0
    %192 = vperm.xlu0 %191, %v67
    %v193 = vpop.permute.xlu0 %192
    %196 = vset.pattern.permute.xlu0 0
    %197 = vperm.xlu0 %196, %v68
    %v198 = vpop.permute.xlu0 %197
    %201 = vset.pattern.permute.xlu0 0
    %202 = vperm.xlu0 %201, %v69
    %v203 = vpop.permute.xlu0 %202
    %206 = vset.pattern.permute.xlu0 0
    %207 = vperm.xlu0 %206, %v70
    %v208 = vpop.permute.xlu0 %207
    %211 = vset.pattern.permute.xlu0 0
    %212 = vperm.xlu0 %211, %v71
    %v213 = vpop.permute.xlu0 %212
    %216 = vset.pattern.permute.xlu0 0
    %217 = vperm.xlu0 %216, %v72
    %v218 = vpop.permute.xlu0 %217
    %221 = vset.pattern.permute.xlu0 0
    %222 = vperm.xlu0 %221, %v73
    %v223 = vpop.permute.xlu0 %222
    %226 = vset.pattern.permute.xlu0 0
    %227 = vperm.xlu0 %226, %v74
    %v228 = vpop.permute.xlu0 %227
    %231 = vset.pattern.permute.xlu0 0
    %232 = vperm.xlu0 %231, %v75
    %v233 = vpop.permute.xlu0 %232
    %236 = vset.pattern.permute.xlu0 0
    %237 = vperm.xlu0 %236, %v76
    %v238 = vpop.permute.xlu0 %237
    %241 = vset.pattern.permute.xlu0 0
    %242 = vperm.xlu0 %241, %v77
    %v243 = vpop.permute.xlu0 %242
    %246 = vset.pattern.permute.xlu0 0
    %247 = vperm.xlu0 %246, %v78
    %v248 = vpop.permute.xlu0 %247
    %251 = vset.pattern.permute.xlu0 0
    %252 = vperm.xlu0 %251, %v79
    %v253 = vpop.permute.xlu0 %252
    %256 = vset.pattern.permute.xlu0 0
    %257 = vperm.xlu0 %256, %v80
    %v258 = vpop.permute.xlu0 %257
    %261 = vset.pattern.permute.xlu0 0
    %262 = vperm.xlu0 %261, %v81
    %v263 = vpop.permute.xlu0 %262
    %266 = vset.pattern.permute.xlu0 0
    %267 = vperm.xlu0 %266, %v82
    %v268 = vpop.permute.xlu0 %267
    %271 = vset.pattern.permute.xlu0 0
    %272 = vperm.xlu0 %271, %v83
    %v273 = vpop.permute.xlu0 %272
    %276 = vset.pattern.permute.xlu0 0
    %277 = vperm.xlu0 %276, %v84
    %v278 = vpop.permute.xlu0 %277
    %281 = vset.pattern.permute.xlu0 0
    %282 = vperm.xlu0 %281, %v85
    %v283 = vpop.permute.xlu0 %282
    %286 = vset.pattern.permute.xlu0 0
    %287 = vperm.xlu0 %286, %v86
    %v288 = vpop.permute.xlu0 %287
    %291 = vset.pattern.permute.xlu0 0
    %292 = vperm.xlu0 %291, %v87
    %v293 = vpop.permute.xlu0 %292
    %296 = vset.pattern.permute.xlu0 0
    %297 = vperm.xlu0 %296, %v88
    %v298 = vpop.permute.xlu0 %297
    %301 = vset.pattern.permute.xlu0 0
    %302 = vperm.xlu0 %301, %v89
    %v303 = vpop.permute.xlu0 %302
    %306 = vset.pattern.permute.xlu0 0
    %307 = vperm.xlu0 %306, %v90
    %v308 = vpop.permute.xlu0 %307
    %311 = vset.pattern.permute.xlu0 0
    %312 = vperm.xlu0 %311, %v91
    %v313 = vpop.permute.xlu0 %312
    %316 = vset.pattern.permute.xlu0 0
    %317 = vperm.xlu0 %316, %v92
    %v318 = vpop.permute.xlu0 %317
    %321 = vset.pattern.permute.xlu0 0
    %322 = vperm.xlu0 %321, %v93
    %v323 = vpop.permute.xlu0 %322
    %326 = vset.pattern.permute.xlu0 0
    %327 = vperm.xlu0 %326, %v94
    %v328 = vpop.permute.xlu0 %327
    %331 = vset.pattern.permute.xlu0 0
    %332 = vperm.xlu0 %331, %v95
    %v333 = vpop.permute.xlu0 %332
    %336 = vset.pattern.permute.xlu0 0
    %337 = vperm.xlu0 %336, %v96
    %v338 = vpop.permute.xlu0 %337
    %341 = vset.pattern.permute.xlu0 0
    %342 = vperm.xlu0 %341, %v97
    %v343 = vpop.permute.xlu0 %342
    %346 = vset.pattern.permute.xlu0 0
    %347 = vperm.xlu0 %346, %v98
    %v348 = vpop.permute.xlu0 %347
    %351 = vset.pattern.permute.xlu0 0
    %352 = vperm.xlu0 %351, %v99
    %v353 = vpop.permute.xlu0 %352
    %356 = vset.pattern.permute.xlu0 0
    %357 = vperm.xlu0 %356, %v100
    %v358 = vpop.permute.xlu0 %357
    %361 = vset.pattern.permute.xlu0 0
    %362 = vperm.xlu0 %361, %v101
    %v363 = vpop.permute.xlu0 %362
    %366 = vset.pattern.permute.xlu0 0
    %367 = vperm.xlu0 %366, %v102
    %v368 = vpop.permute.xlu0 %367
    %371 = vset.pattern.permute.xlu0 0
    %372 = vperm.xlu0 %371, %v103
    %v373 = vpop.permute.xlu0 %372
    %376 = vset.pattern.permute.xlu0 0
    %377 = vperm.xlu0 %376, %v104
    %v378 = vpop.permute.xlu0 %377
    %381 = vset.pattern.permute.xlu0 0
    %382 = vperm.xlu0 %381, %v105
    %v383 = vpop.permute.xlu0 %382
    %386 = vset.pattern.permute.xlu0 0
    %387 = vperm.xlu0 %386, %v106
    %v388 = vpop.permute.xlu0 %387
    %391 = vset.pattern.permute.xlu0 0
    %392 = vperm.xlu0 %391, %v107
    %v393 = vpop.permute.xlu0 %392
    %396 = vset.pattern.permute.xlu0 0
    %397 = vperm.xlu0 %396, %v108
    %v398 = vpop.permute.xlu0 %397
    %401 = vset.pattern.permute.xlu0 0
    %402 = vperm.xlu0 %401, %v109
    %v403 = vpop.permute.xlu0 %402
    %406 = vset.pattern.permute.xlu0 0
    %407 = vperm.xlu0 %406, %v110
    %v408 = vpop.permute.xlu0 %407
    %411 = vset.pattern.permute.xlu0 0
    %412 = vperm.xlu0 %411, %v111
    %v413 = vpop.permute.xlu0 %412
    %416 = vset.pattern.permute.xlu0 0
    %417 = vperm.xlu0 %416, %v112
    %v418 = vpop.permute.xlu0 %417
    %421 = vset.pattern.permute.xlu0 0
    %422 = vperm.xlu0 %421, %v113
    %v423 = vpop.permute.xlu0 %422
    %426 = vset.pattern.permute.xlu0 0
    %427 = vperm.xlu0 %426, %v114
    %v428 = vpop.permute.xlu0 %427
    %431 = vset.pattern.permute.xlu0 0
    %432 = vperm.xlu0 %431, %v115
    %v433 = vpop.permute.xlu0 %432
    %436 = vset.pattern.permute.xlu0 0
    %437 = vperm.xlu0 %436, %v116
    %v438 = vpop.permute.xlu0 %437
    %441 = vset.pattern.permute.xlu0 0
    %442 = vperm.xlu0 %441, %v117
    %v443 = vpop.permute.xlu0 %442
    %446 = vset.pattern.permute.xlu0 0
    %447 = vperm.xlu0 %446, %v118
    %v448 = vpop.permute.xlu0 %447
    %451 = vset.pattern.permute.xlu0 0
    %452 = vperm.xlu0 %451, %v119
    %v453 = vpop.permute.xlu0 %452
    %456 = vset.pattern.permute.xlu0 0
    %457 = vperm.xlu0 %456, %v120
    %v458 = vpop.permute.xlu0 %457
    %461 = vset.pattern.permute.xlu0 0
    %462 = vperm.xlu0 %461, %v121
    %v463 = vpop.permute.xlu0 %462
    %466 = vset.pattern.permute.xlu0 0
    %467 = vperm.xlu0 %466, %v122
    %v468 = vpop.permute.xlu0 %467
    %471 = vset.pattern.permute.xlu0 0
    %472 = vperm.xlu0 %471, %v123
    %v473 = vpop.permute.xlu0 %472
    %v476 = vlaneseq
    %v477 = vshrl.u32 %v476, 7
    %v478 = vsub.s32 0, %v477
    %v479 = vrot.slane %v124, %v478
    %v481 = vmul.f32 %v128, %v479
    %v482 = vmul.f32 %v133, %v479
    %v483 = vmul.f32 %v138, %v479
    %v484 = vmul.f32 %v143, %v479
    %v485 = vmul.f32 %v148, %v479
    %v486 = vmul.f32 %v153, %v479
    %v487 = vmul.f32 %v158, %v479
    %v488 = vmul.f32 %v163, %v479
    %v489 = vmul.f32 %v168, %v479
    %v490 = vmul.f32 %v173, %v479
    %v491 = vmul.f32 %v178, %v479
    %v492 = vmul.f32 %v183, %v479
    %v493 = vmul.f32 %v188, %v479
    %v494 = vmul.f32 %v193, %v479
    %v495 = vmul.f32 %v198, %v479
    %v496 = vmul.f32 %v203, %v479
    %v497 = vmul.f32 %v208, %v479
    %v498 = vmul.f32 %v213, %v479
    %v499 = vmul.f32 %v218, %v479
    %v500 = vmul.f32 %v223, %v479
    %v501 = vmul.f32 %v228, %v479
    %v502 = vmul.f32 %v233, %v479
    %v503 = vmul.f32 %v238, %v479
    %v504 = vmul.f32 %v243, %v479
    %v505 = vmul.f32 %v248, %v479
    %v506 = vmul.f32 %v253, %v479
    %v507 = vmul.f32 %v258, %v479
    %v508 = vmul.f32 %v263, %v479
    %v509 = vmul.f32 %v268, %v479
    %v510 = vmul.f32 %v273, %v479
    %v511 = vmul.f32 %v278, %v479
    %v512 = vmul.f32 %v283, %v479
    %v513 = vmul.f32 %v288, %v479
    %v514 = vmul.f32 %v293, %v479
    %v515 = vmul.f32 %v298, %v479
    %v516 = vmul.f32 %v303, %v479
    %v517 = vmul.f32 %v308, %v479
    %v518 = vmul.f32 %v313, %v479
    %v519 = vmul.f32 %v318, %v479
    %v520 = vmul.f32 %v323, %v479
    %v521 = vmul.f32 %v328, %v479
    %v522 = vmul.f32 %v333, %v479
    %v523 = vmul.f32 %v338, %v479
    %v524 = vmul.f32 %v343, %v479
    %v525 = vmul.f32 %v348, %v479
    %v526 = vmul.f32 %v353, %v479
    %v527 = vmul.f32 %v358, %v479
    %v528 = vmul.f32 %v363, %v479
    %v529 = vmul.f32 %v368, %v479
    %v530 = vmul.f32 %v373, %v479
    %v531 = vmul.f32 %v378, %v479
    %v532 = vmul.f32 %v383, %v479
    %v533 = vmul.f32 %v388, %v479
    %v534 = vmul.f32 %v393, %v479
    %v535 = vmul.f32 %v398, %v479
    %v536 = vmul.f32 %v403, %v479
    %v537 = vmul.f32 %v408, %v479
    %v538 = vmul.f32 %v413, %v479
    %v539 = vmul.f32 %v418, %v479
    %v540 = vmul.f32 %v423, %v479
    %v541 = vmul.f32 %v428, %v479
    %v542 = vmul.f32 %v433, %v479
    %v543 = vmul.f32 %v438, %v479
    %v544 = vmul.f32 %v443, %v479
    %v545 = vmul.f32 %v448, %v479
    %v546 = vmul.f32 %v453, %v479
    %v547 = vmul.f32 %v458, %v479
    %v548 = vmul.f32 %v463, %v479
    %v549 = vmul.f32 %v468, %v479
    %v550 = vmul.f32 %v473, %v479
    %v551 = vld [vmem:[%s4] sm:$0x1]
    %v553 = vlaneseq
    %v554 = vshrl.u32 %v553, 7
    %v555 = vsub.s32 0, %v554
    %v556 = vrot.slane %v551, %v555
    %v558 = vadd.f32 %v481, %v556
    %v559 = vadd.f32 %v482, %v556
    %v560 = vadd.f32 %v483, %v556
    %v561 = vadd.f32 %v484, %v556
    %v562 = vadd.f32 %v485, %v556
    %v563 = vadd.f32 %v486, %v556
    %v564 = vadd.f32 %v487, %v556
    %v565 = vadd.f32 %v488, %v556
    %v566 = vadd.f32 %v489, %v556
    %v567 = vadd.f32 %v490, %v556
    %v568 = vadd.f32 %v491, %v556
    %v569 = vadd.f32 %v492, %v556
    %v570 = vadd.f32 %v493, %v556
    %v571 = vadd.f32 %v494, %v556
    %v572 = vadd.f32 %v495, %v556
    %v573 = vadd.f32 %v496, %v556
    %v574 = vadd.f32 %v497, %v556
    %v575 = vadd.f32 %v498, %v556
    %v576 = vadd.f32 %v499, %v556
    %v577 = vadd.f32 %v500, %v556
    %v578 = vadd.f32 %v501, %v556
    %v579 = vadd.f32 %v502, %v556
    %v580 = vadd.f32 %v503, %v556
    %v581 = vadd.f32 %v504, %v556
    %v582 = vadd.f32 %v505, %v556
    %v583 = vadd.f32 %v506, %v556
    %v584 = vadd.f32 %v507, %v556
    %v585 = vadd.f32 %v508, %v556
    %v586 = vadd.f32 %v509, %v556
    %v587 = vadd.f32 %v510, %v556
    %v588 = vadd.f32 %v511, %v556
    %v589 = vadd.f32 %v512, %v556
    %v590 = vadd.f32 %v513, %v556
    %v591 = vadd.f32 %v514, %v556
    %v592 = vadd.f32 %v515, %v556
    %v593 = vadd.f32 %v516, %v556
    %v594 = vadd.f32 %v517, %v556
    %v595 = vadd.f32 %v518, %v556
    %v596 = vadd.f32 %v519, %v556
    %v597 = vadd.f32 %v520, %v556
    %v598 = vadd.f32 %v521, %v556
    %v599 = vadd.f32 %v522, %v556
    %v600 = vadd.f32 %v523, %v556
    %v601 = vadd.f32 %v524, %v556
    %v602 = vadd.f32 %v525, %v556
    %v603 = vadd.f32 %v526, %v556
    %v604 = vadd.f32 %v527, %v556
    %v605 = vadd.f32 %v528, %v556
    %v606 = vadd.f32 %v529, %v556
    %v607 = vadd.f32 %v530, %v556
    %v608 = vadd.f32 %v531, %v556
    %v609 = vadd.f32 %v532, %v556
    %v610 = vadd.f32 %v533, %v556
    %v611 = vadd.f32 %v534, %v556
    %v612 = vadd.f32 %v535, %v556
    %v613 = vadd.f32 %v536, %v556
    %v614 = vadd.f32 %v537, %v556
    %v615 = vadd.f32 %v538, %v556
    %v616 = vadd.f32 %v539, %v556
    %v617 = vadd.f32 %v540, %v556
    %v618 = vadd.f32 %v541, %v556
    %v619 = vadd.f32 %v542, %v556
    %v620 = vadd.f32 %v543, %v556
    %v621 = vadd.f32 %v544, %v556
    %v622 = vadd.f32 %v545, %v556
    %v623 = vadd.f32 %v546, %v556
    %v624 = vadd.f32 %v547, %v556
    %v625 = vadd.f32 %v548, %v556
    %v626 = vadd.f32 %v549, %v556
    %v627 = vadd.f32 %v550, %v556
    %vm628 = vcmask 195584
    %629 = vst.msk [vmem:[#allocation2] sm:$0xff] %vm628, %v558
    %630 = vst.msk [vmem:[#allocation2 + $0x8] sm:$0xff] %vm628, %v559
    %631 = vst.msk [vmem:[#allocation2 + $0x10] sm:$0xff] %vm628, %v560
    %632 = vst.msk [vmem:[#allocation2 + $0x18] sm:$0xff] %vm628, %v561
    %633 = vst.msk [vmem:[#allocation2 + $0x20] sm:$0xff] %vm628, %v562
    %634 = vst.msk [vmem:[#allocation2 + $0x28] sm:$0xff] %vm628, %v563
    %635 = vst.msk [vmem:[#allocation2 + $0x30] sm:$0xff] %vm628, %v564
    %636 = vst.msk [vmem:[#allocation2 + $0x38] sm:$0xff] %vm628, %v565
    %637 = vst.msk [vmem:[#allocation2 + $0x40] sm:$0xff] %vm628, %v566
    %638 = vst.msk [vmem:[#allocation2 + $0x48] sm:$0xff] %vm628, %v567
    %639 = vst.msk [vmem:[#allocation2 + $0x50] sm:$0xff] %vm628, %v568
    %640 = vst.msk [vmem:[#allocation2 + $0x58] sm:$0xff] %vm628, %v569
    %641 = vst.msk [vmem:[#allocation2 + $0x60] sm:$0xff] %vm628, %v570
    %642 = vst.msk [vmem:[#allocation2 + $0x68] sm:$0xff] %vm628, %v571
    %643 = vst.msk [vmem:[#allocation2 + $0x70] sm:$0xff] %vm628, %v572
    %644 = vst.msk [vmem:[#allocation2 + $0x78] sm:$0xff] %vm628, %v573
    %645 = vst.msk [vmem:[#allocation2 + $0x80] sm:$0xff] %vm628, %v574
    %646 = vst.msk [vmem:[#allocation2 + $0x88] sm:$0xff] %vm628, %v575
    %647 = vst.msk [vmem:[#allocation2 + $0x90] sm:$0xff] %vm628, %v576
    %648 = vst.msk [vmem:[#allocation2 + $0x98] sm:$0xff] %vm628, %v577
    %649 = vst.msk [vmem:[#allocation2 + $0xa0] sm:$0xff] %vm628, %v578
    %650 = vst.msk [vmem:[#allocation2 + $0xa8] sm:$0xff] %vm628, %v579
    %651 = vst.msk [vmem:[#allocation2 + $0xb0] sm:$0xff] %vm628, %v580
    %652 = vst.msk [vmem:[#allocation2 + $0xb8] sm:$0xff] %vm628, %v581
    %653 = vst.msk [vmem:[#allocation2 + $0xc0] sm:$0xff] %vm628, %v582
    %654 = vst.msk [vmem:[#allocation2 + $0xc8] sm:$0xff] %vm628, %v583
    %655 = vst.msk [vmem:[#allocation2 + $0xd0] sm:$0xff] %vm628, %v584
    %656 = vst.msk [vmem:[#allocation2 + $0xd8] sm:$0xff] %vm628, %v585
    %657 = vst.msk [vmem:[#allocation2 + $0xe0] sm:$0xff] %vm628, %v586
    %658 = vst.msk [vmem:[#allocation2 + $0xe8] sm:$0xff] %vm628, %v587
    %659 = vst.msk [vmem:[#allocation2 + $0xf0] sm:$0xff] %vm628, %v588
    %660 = vst.msk [vmem:[#allocation2 + $0xf8] sm:$0xff] %vm628, %v589
    %661 = vst.msk [vmem:[#allocation2 + $0x100] sm:$0xff] %vm628, %v590
    %662 = vst.msk [vmem:[#allocation2 + $0x108] sm:$0xff] %vm628, %v591
    %663 = vst.msk [vmem:[#allocation2 + $0x110] sm:$0xff] %vm628, %v592
    %664 = vst.msk [vmem:[#allocation2 + $0x118] sm:$0xff] %vm628, %v593
    %665 = vst.msk [vmem:[#allocation2 + $0x120] sm:$0xff] %vm628, %v594
    %666 = vst.msk [vmem:[#allocation2 + $0x128] sm:$0xff] %vm628, %v595
    %667 = vst.msk [vmem:[#allocation2 + $0x130] sm:$0xff] %vm628, %v596
    %668 = vst.msk [vmem:[#allocation2 + $0x138] sm:$0xff] %vm628, %v597
    %669 = vst.msk [vmem:[#allocation2 + $0x140] sm:$0xff] %vm628, %v598
    %670 = vst.msk [vmem:[#allocation2 + $0x148] sm:$0xff] %vm628, %v599
    %671 = vst.msk [vmem:[#allocation2 + $0x150] sm:$0xff] %vm628, %v600
    %672 = vst.msk [vmem:[#allocation2 + $0x158] sm:$0xff] %vm628, %v601
    %673 = vst.msk [vmem:[#allocation2 + $0x160] sm:$0xff] %vm628, %v602
    %674 = vst.msk [vmem:[#allocation2 + $0x168] sm:$0xff] %vm628, %v603
    %675 = vst.msk [vmem:[#allocation2 + $0x170] sm:$0xff] %vm628, %v604
    %676 = vst.msk [vmem:[#allocation2 + $0x178] sm:$0xff] %vm628, %v605
    %677 = vst.msk [vmem:[#allocation2 + $0x180] sm:$0xff] %vm628, %v606
    %678 = vst.msk [vmem:[#allocation2 + $0x188] sm:$0xff] %vm628, %v607
    %679 = vst.msk [vmem:[#allocation2 + $0x190] sm:$0xff] %vm628, %v608
    %680 = vst.msk [vmem:[#allocation2 + $0x198] sm:$0xff] %vm628, %v609
    %681 = vst.msk [vmem:[#allocation2 + $0x1a0] sm:$0xff] %vm628, %v610
    %682 = vst.msk [vmem:[#allocation2 + $0x1a8] sm:$0xff] %vm628, %v611
    %683 = vst.msk [vmem:[#allocation2 + $0x1b0] sm:$0xff] %vm628, %v612
    %684 = vst.msk [vmem:[#allocation2 + $0x1b8] sm:$0xff] %vm628, %v613
    %685 = vst.msk [vmem:[#allocation2 + $0x1c0] sm:$0xff] %vm628, %v614
    %686 = vst.msk [vmem:[#allocation2 + $0x1c8] sm:$0xff] %vm628, %v615
    %687 = vst.msk [vmem:[#allocation2 + $0x1d0] sm:$0xff] %vm628, %v616
    %688 = vst.msk [vmem:[#allocation2 + $0x1d8] sm:$0xff] %vm628, %v617
    %689 = vst.msk [vmem:[#allocation2 + $0x1e0] sm:$0xff] %vm628, %v618
    %690 = vst.msk [vmem:[#allocation2 + $0x1e8] sm:$0xff] %vm628, %v619
    %691 = vst.msk [vmem:[#allocation2 + $0x1f0] sm:$0xff] %vm628, %v620
    %692 = vst.msk [vmem:[#allocation2 + $0x1f8] sm:$0xff] %vm628, %v621
    %693 = vst.msk [vmem:[#allocation2 + $0x200] sm:$0xff] %vm628, %v622
    %694 = vst.msk [vmem:[#allocation2 + $0x208] sm:$0xff] %vm628, %v623
    %695 = vst.msk [vmem:[#allocation2 + $0x210] sm:$0xff] %vm628, %v624
    %696 = vst.msk [vmem:[#allocation2 + $0x218] sm:$0xff] %vm628, %v625
    %697 = vst.msk [vmem:[#allocation2 + $0x220] sm:$0xff] %vm628, %v626
    %698 = vst.msk [vmem:[#allocation2 + $0x228] sm:$0xff] %vm628, %v627
    %v699 = vld [vmem:[%s5] sm:$0xff]
    %v700 = vld [vmem:[%s6] sm:$0x1]
    %v701 = vld [vmem:[%s2] sm:$0xff]
    %v702 = vld [vmem:[#allocation2] sm:$0xff]
    %vm703 = vcmask 64512
    %v705 = vsel %vm703, %v701, 0
    %707 = vmatprep.subr.mxu0 0.0
    %708 = vmatpush1.msra.mxu0 %v699
    %709 = vmatprep.subr.mxu0 0.0
    %710 = vmatpush1.msra.mxu0 0.0
    %711 = vmatprep.subr.mxu0 0.0
    %712 = vmatpush1.msra.mxu0 0.0
    %713 = vmatprep.subr.mxu0 0.0
    %714 = vmatpush1.msra.mxu0 0.0
    %715 = vmatprep.subr.mxu0 0.0
    %716 = vmatpush1.msra.mxu0 0.0
    %717 = vmatprep.subr.mxu0 0.0
    %718 = vmatpush1.msra.mxu0 0.0
    %719 = vmatprep.subr.mxu0 0.0
    %720 = vmatpush1.msra.mxu0 0.0
    %721 = vmatprep.subr.mxu0 0.0
    %722 = vmatpush1.msra.mxu0 0.0
    %723 = vmatprep.subr.mxu0 0.0
    %724 = vmatpush1.msra.mxu0 0.0
    %725 = vmatprep.subr.mxu0 0.0
    %726 = vmatpush1.msra.mxu0 0.0
    %727 = vmatprep.subr.mxu0 0.0
    %728 = vmatpush1.msra.mxu0 0.0
    %729 = vmatprep.subr.mxu0 0.0
    %730 = vmatpush1.msra.mxu0 0.0
    %731 = vmatprep.subr.mxu0 0.0
    %732 = vmatpush1.msra.mxu0 0.0
    %733 = vmatprep.subr.mxu0 0.0
    %734 = vmatpush1.msra.mxu0 0.0
    %735 = vmatprep.subr.mxu0 0.0
    %736 = vmatpush1.msra.mxu0 0.0
    %737 = vmatprep.subr.mxu0 0.0
    %738 = vmatpush1.msra.mxu0 0.0
    %739 = vmatprep.subr.mxu0 0.0
    %740 = vmatpush1.msra.mxu0 0.0
    %741 = vmatprep.subr.mxu0 0.0
    %742 = vmatpush1.msra.mxu0 0.0
    %743 = vmatprep.subr.mxu0 0.0
    %744 = vmatpush1.msra.mxu0 0.0
    %745 = vmatprep.subr.mxu0 0.0
    %746 = vmatpush1.msra.mxu0 0.0
    %747 = vmatprep.subr.mxu0 0.0
    %748 = vmatpush1.msra.mxu0 0.0
    %749 = vmatprep.subr.mxu0 0.0
    %750 = vmatpush1.msra.mxu0 0.0
    %751 = vmatprep.subr.mxu0 0.0
    %752 = vmatpush1.msra.mxu0 0.0
    %753 = vmatprep.subr.mxu0 0.0
    %754 = vmatpush1.msra.mxu0 0.0
    %755 = vmatprep.subr.mxu0 0.0
    %756 = vmatpush1.msra.mxu0 0.0
    %757 = vmatprep.subr.mxu0 0.0
    %758 = vmatpush1.msra.mxu0 0.0
    %759 = vmatprep.subr.mxu0 0.0
    %760 = vmatpush1.msra.mxu0 0.0
    %761 = vmatprep.subr.mxu0 0.0
    %762 = vmatpush1.msra.mxu0 0.0
    %763 = vmatprep.subr.mxu0 0.0
    %764 = vmatpush1.msra.mxu0 0.0
    %765 = vmatprep.subr.mxu0 0.0
    %766 = vmatpush1.msra.mxu0 0.0
    %767 = vmatprep.subr.mxu0 0.0
    %768 = vmatpush1.msra.mxu0 0.0
    %769 = vmatprep.subr.mxu0 0.0
    %770 = vmatpush1.msra.mxu0 0.0
    %771 = vmatprep.mubr.f32.mxu0 0.0
    %772 = vmatmul.mubr.f32.gmra.mrb[0].mxu0 %v705
    %v773 = vpop.f32.mrb[0].mxu0
    %v774 = vadd.f32 0.0, %v773
    %v775 = vpop.f32.mrb[0].mxu0
    %776 = vdwg.mxu0
    %v777 = vadd.f32 %v702, %v774
    %v778 = vxor.u32 %v777, 2147483648
    %v779 = vmul.f32 %v778, 1.442695
    %v780 = vpow.pop %v779
    %v781 = vadd.f32 %v780, 1.0
    %v782 = vrcp.pop %v781
    %v783 = vmul.f32 1.0, %v782
    %v785 = vlaneseq
    %v786 = vshrl.u32 %v785, 7
    %v787 = vsub.s32 0, %v786
    %v788 = vrot.slane %v700, %v787
    %789 = vrot.lane.b32.xlu0 %v788, 16
    %v790 = vpop.permute.xlu0 %789
    %v792 = vadd.f32 %v774, %v790
    %794 = vrot.lane.b32.xlu0 %v792, 112
    %v795 = vpop.permute.xlu0 %794
    %v797 = vmul.f32 %v783, %v795
    %799 = vrot.lane.b32.xlu0 %v797, 16
    %v800 = vpop.permute.xlu0 %799
    %v802 = vadd.f32 %v702, %v800
    %v803 = vtanh.pop %v802
    %805 = vrot.lane.b32.xlu0 %v803, 112
    %v806 = vpop.permute.xlu0 %805
    %v808 = vsub.f32 %v701, %v806
    %810 = vrot.lane.b32.xlu0 %v808, 8
    %v811 = vpop.permute.xlu0 %810
    %v813 = vmul.f32 %v783, %v811
    %815 = vrot.lane.b32.xlu0 %v813, 8
    %v816 = vpop.permute.xlu0 %815
    %v818 = vadd.f32 %v803, %v816
    %s819 = sld [smem:[#allocation5]]
    %v820 = vstv %s819
    %v821 = vmul.f32 %v818, %v820
    %v822 = vadd.f32 %v821, 0.0
    %s823 = scalar_lea.vmem [#allocation2], 8
    %v824 = vld [vmem:[%s823] sm:$0xff]
    %826 = vrot.lane.b32.xlu0 %v818, 112
    %v827 = vpop.permute.xlu0 %826
    %v828 = vsel %vm703, %v827, 0
    %830 = vmatprep.subr.mxu0 0.0
    %831 = vmatpush1.msra.mxu0 %v699
    %832 = vmatprep.subr.mxu0 0.0
    %833 = vmatpush1.msra.mxu0 0.0
    %834 = vmatprep.subr.mxu0 0.0
    %835 = vmatpush1.msra.mxu0 0.0
    %836 = vmatprep.subr.mxu0 0.0
    %837 = vmatpush1.msra.mxu0 0.0
    %838 = vmatprep.subr.mxu0 0.0
    %839 = vmatpush1.msra.mxu0 0.0
    %840 = vmatprep.subr.mxu0 0.0
    %841 = vmatpush1.msra.mxu0 0.0
    %842 = vmatprep.subr.mxu0 0.0
    %843 = vmatpush1.msra.mxu0 0.0
    %844 = vmatprep.subr.mxu0 0.0
    %845 = vmatpush1.msra.mxu0 0.0
    %846 = vmatprep.subr.mxu0 0.0
    %847 = vmatpush1.msra.mxu0 0.0
    %848 = vmatprep.subr.mxu0 0.0
    %849 = vmatpush1.msra.mxu0 0.0
    %850 = vmatprep.subr.mxu0 0.0
    %851 = vmatpush1.msra.mxu0 0.0
    %852 = vmatprep.subr.mxu0 0.0
    %853 = vmatpush1.msra.mxu0 0.0
    %854 = vmatprep.subr.mxu0 0.0
    %855 = vmatpush1.msra.mxu0 0.0
    %856 = vmatprep.subr.mxu0 0.0
    %857 = vmatpush1.msra.mxu0 0.0
    %858 = vmatprep.subr.mxu0 0.0
    %859 = vmatpush1.msra.mxu0 0.0
    %860 = vmatprep.subr.mxu0 0.0
    %861 = vmatpush1.msra.mxu0 0.0
    %862 = vmatprep.subr.mxu0 0.0
    %863 = vmatpush1.msra.mxu0 0.0
    %864 = vmatprep.subr.mxu0 0.0
    %865 = vmatpush1.msra.mxu0 0.0
    %866 = vmatprep.subr.mxu0 0.0
    %867 = vmatpush1.msra.mxu0 0.0
    %868 = vmatprep.subr.mxu0 0.0
    %869 = vmatpush1.msra.mxu0 0.0
    %870 = vmatprep.subr.mxu0 0.0
    %871 = vmatpush1.msra.mxu0 0.0
    %872 = vmatprep.subr.mxu0 0.0
    %873 = vmatpush1.msra.mxu0 0.0
    %874 = vmatprep.subr.mxu0 0.0
    %875 = vmatpush1.msra.mxu0 0.0
    %876 = vmatprep.subr.mxu0 0.0
    %877 = vmatpush1.msra.mxu0 0.0
    %878 = vmatprep.subr.mxu0 0.0
    %879 = vmatpush1.msra.mxu0 0.0
    %880 = vmatprep.subr.mxu0 0.0
    %881 = vmatpush1.msra.mxu0 0.0
    %882 = vmatprep.subr.mxu0 0.0
    %883 = vmatpush1.msra.mxu0 0.0
    %884 = vmatprep.subr.mxu0 0.0
    %885 = vmatpush1.msra.mxu0 0.0
    %886 = vmatprep.subr.mxu0 0.0
    %887 = vmatpush1.msra.mxu0 0.0
    %888 = vmatprep.subr.mxu0 0.0
    %889 = vmatpush1.msra.mxu0 0.0
    %890 = vmatprep.subr.mxu0 0.0
    %891 = vmatpush1.msra.mxu0 0.0
    %892 = vmatprep.subr.mxu0 0.0
    %893 = vmatpush1.msra.mxu0 0.0
    %894 = vmatprep.mubr.f32.mxu0 0.0
    %895 = vmatmul.mubr.f32.gmra.mrb[0].mxu0 %v828
    %v896 = vpop.f32.mrb[0].mxu0
    %v897 = vadd.f32 0.0, %v896
    %v898 = vpop.f32.mrb[0].mxu0
    %899 = vdwg.mxu0
    %v900 = vadd.f32 %v824, %v897
    %v901 = vxor.u32 %v900, 2147483648
    %v902 = vmul.f32 %v901, 1.442695
    %v903 = vpow.pop %v902
    %v904 = vadd.f32 %v903, 1.0
    %v905 = vrcp.pop %v904
    %v906 = vmul.f32 1.0, %v905
    %v907 = vadd.f32 %v897, %v790
    %909 = vrot.lane.b32.xlu0 %v907, 112
    %v910 = vpop.permute.xlu0 %909
    %v912 = vmul.f32 %v906, %v910
    %914 = vrot.lane.b32.xlu0 %v912, 16
    %v915 = vpop.permute.xlu0 %914
    %v917 = vadd.f32 %v824, %v915
    %v918 = vtanh.pop %v917
    %v919 = vsub.f32 %v818, %v918
    %921 = vrot.lane.b32.xlu0 %v919, 120
    %v922 = vpop.permute.xlu0 %921
    %v924 = vmul.f32 %v906, %v922
    %926 = vrot.lane.b32.xlu0 %v924, 8
    %v927 = vpop.permute.xlu0 %926
    %v929 = vadd.f32 %v918, %v927
    %s930 = sld [smem:[#allocation5 + $0x1]]
    %v931 = vstv %s930
    %v932 = vmul.f32 %v929, %v931
    %v933 = vadd.f32 %v822, %v932
    %s934 = scalar_lea.vmem [#allocation2], 16
    %v935 = vld [vmem:[%s934] sm:$0xff]
    %937 = vrot.lane.b32.xlu0 %v929, 112
    %v938 = vpop.permute.xlu0 %937
    %v939 = vsel %vm703, %v938, 0
    %941 = vmatprep.subr.mxu0 0.0
    %942 = vmatpush1.msra.mxu0 %v699
    %943 = vmatprep.subr.mxu0 0.0
    %944 = vmatpush1.msra.mxu0 0.0
    %945 = vmatprep.subr.mxu0 0.0
    %946 = vmatpush1.msra.mxu0 0.0
    %947 = vmatprep.subr.mxu0 0.0
    %948 = vmatpush1.msra.mxu0 0.0
    %949 = vmatprep.subr.mxu0 0.0
    %950 = vmatpush1.msra.mxu0 0.0
    %951 = vmatprep.subr.mxu0 0.0
    %952 = vmatpush1.msra.mxu0 0.0
    %953 = vmatprep.subr.mxu0 0.0
    %954 = vmatpush1.msra.mxu0 0.0
    %955 = vmatprep.subr.mxu0 0.0
    %956 = vmatpush1.msra.mxu0 0.0
    %957 = vmatprep.subr.mxu0 0.0
    %958 = vmatpush1.msra.mxu0 0.0
    %959 = vmatprep.subr.mxu0 0.0
    %960 = vmatpush1.msra.mxu0 0.0
    %961 = vmatprep.subr.mxu0 0.0
    %962 = vmatpush1.msra.mxu0 0.0
    %963 = vmatprep.subr.mxu0 0.0
    %964 = vmatpush1.msra.mxu0 0.0
    %965 = vmatprep.subr.mxu0 0.0
    %966 = vmatpush1.msra.mxu0 0.0
    %967 = vmatprep.subr.mxu0 0.0
    %968 = vmatpush1.msra.mxu0 0.0
    %969 = vmatprep.subr.mxu0 0.0
    %970 = vmatpush1.msra.mxu0 0.0
    %971 = vmatprep.subr.mxu0 0.0
    %972 = vmatpush1.msra.mxu0 0.0
    %973 = vmatprep.subr.mxu0 0.0
    %974 = vmatpush1.msra.mxu0 0.0
    %975 = vmatprep.subr.mxu0 0.0
    %976 = vmatpush1.msra.mxu0 0.0
    %977 = vmatprep.subr.mxu0 0.0
    %978 = vmatpush1.msra.mxu0 0.0
    %979 = vmatprep.subr.mxu0 0.0
    %980 = vmatpush1.msra.mxu0 0.0
    %981 = vmatprep.subr.mxu0 0.0
    %982 = vmatpush1.msra.mxu0 0.0
    %983 = vmatprep.subr.mxu0 0.0
    %984 = vmatpush1.msra.mxu0 0.0
    %985 = vmatprep.subr.mxu0 0.0
    %986 = vmatpush1.msra.mxu0 0.0
    %987 = vmatprep.subr.mxu0 0.0
    %988 = vmatpush1.msra.mxu0 0.0
    %989 = vmatprep.subr.mxu0 0.0
    %990 = vmatpush1.msra.mxu0 0.0
    %991 = vmatprep.subr.mxu0 0.0
    %992 = vmatpush1.msra.mxu0 0.0
    %993 = vmatprep.subr.mxu0 0.0
    %994 = vmatpush1.msra.mxu0 0.0
    %995 = vmatprep.subr.mxu0 0.0
    %996 = vmatpush1.msra.mxu0 0.0
    %997 = vmatprep.subr.mxu0 0.0
    %998 = vmatpush1.msra.mxu0 0.0
    %999 = vmatprep.subr.mxu0 0.0
    %1000 = vmatpush1.msra.mxu0 0.0
    %1001 = vmatprep.subr.mxu0 0.0
    %1002 = vmatpush1.msra.mxu0 0.0
    %1003 = vmatprep.subr.mxu0 0.0
    %1004 = vmatpush1.msra.mxu0 0.0
    %1005 = vmatprep.mubr.f32.mxu0 0.0
    %1006 = vmatmul.mubr.f32.gmra.mrb[0].mxu0 %v939
    %v1007 = vpop.f32.mrb[0].mxu0
    %v1008 = vadd.f32 0.0, %v1007
    %v1009 = vpop.f32.mrb[0].mxu0
    %1010 = vdwg.mxu0
    %v1011 = vadd.f32 %v935, %v1008
    %v1012 = vxor.u32 %v1011, 2147483648
    %v1013 = vmul.f32 %v1012, 1.442695
    %v1014 = vpow.pop %v1013
    %v1015 = vadd.f32 %v1014, 1.0
    %v1016 = vrcp.pop %v1015
    %v1017 = vmul.f32 1.0, %v1016
    %v1018 = vadd.f32 %v1008, %v790
    %1020 = vrot.lane.b32.xlu0 %v1018, 112
    %v1021 = vpop.permute.xlu0 %1020
    %v1023 = vmul.f32 %v1017, %v1021
    %1025 = vrot.lane.b32.xlu0 %v1023, 16
    %v1026 = vpop.permute.xlu0 %1025
    %v1028 = vadd.f32 %v935, %v1026
    %v1029 = vtanh.pop %v1028
    %v1030 = vsub.f32 %v929, %v1029
    %1032 = vrot.lane.b32.xlu0 %v1030, 120
    %v1033 = vpop.permute.xlu0 %1032
    %v1035 = vmul.f32 %v1017, %v1033
    %1037 = vrot.lane.b32.xlu0 %v1035, 8
    %v1038 = vpop.permute.xlu0 %1037
    %v1040 = vadd.f32 %v1029, %v1038
    %s1041 = sld [smem:[#allocation5 + $0x2]]
    %v1042 = vstv %s1041
    %v1043 = vmul.f32 %v1040, %v1042
    %v1044 = vadd.f32 %v933, %v1043
    %s1045 = scalar_lea.vmem [#allocation2], 24
    %v1046 = vld [vmem:[%s1045] sm:$0xff]
    %1048 = vrot.lane.b32.xlu0 %v1040, 112
    %v1049 = vpop.permute.xlu0 %1048
    %v1050 = vsel %vm703, %v1049, 0
    %1052 = vmatprep.subr.mxu0 0.0
    %1053 = vmatpush1.msra.mxu0 %v699
    %1054 = vmatprep.subr.mxu0 0.0
    %1055 = vmatpush1.msra.mxu0 0.0
    %1056 = vmatprep.subr.mxu0 0.0
    %1057 = vmatpush1.msra.mxu0 0.0
    %1058 = vmatprep.subr.mxu0 0.0
    %1059 = vmatpush1.msra.mxu0 0.0
    %1060 = vmatprep.subr.mxu0 0.0
    %1061 = vmatpush1.msra.mxu0 0.0
    %1062 = vmatprep.subr.mxu0 0.0
    %1063 = vmatpush1.msra.mxu0 0.0
    %1064 = vmatprep.subr.mxu0 0.0
    %1065 = vmatpush1.msra.mxu0 0.0
    %1066 = vmatprep.subr.mxu0 0.0
    %1067 = vmatpush1.msra.mxu0 0.0
    %1068 = vmatprep.subr.mxu0 0.0
    %1069 = vmatpush1.msra.mxu0 0.0
    %1070 = vmatprep.subr.mxu0 0.0
    %1071 = vmatpush1.msra.mxu0 0.0
    %1072 = vmatprep.subr.mxu0 0.0
    %1073 = vmatpush1.msra.mxu0 0.0
    %1074 = vmatprep.subr.mxu0 0.0
    %1075 = vmatpush1.msra.mxu0 0.0
    %1076 = vmatprep.subr.mxu0 0.0
    %1077 = vmatpush1.msra.mxu0 0.0
    %1078 = vmatprep.subr.mxu0 0.0
    %1079 = vmatpush1.msra.mxu0 0.0
    %1080 = vmatprep.subr.mxu0 0.0
    %1081 = vmatpush1.msra.mxu0 0.0
    %1082 = vmatprep.subr.mxu0 0.0
    %1083 = vmatpush1.msra.mxu0 0.0
    %1084 = vmatprep.subr.mxu0 0.0
    %1085 = vmatpush1.msra.mxu0 0.0
    %1086 = vmatprep.subr.mxu0 0.0
    %1087 = vmatpush1.msra.mxu0 0.0
    %1088 = vmatprep.subr.mxu0 0.0
    %1089 = vmatpush1.msra.mxu0 0.0
    %1090 = vmatprep.subr.mxu0 0.0
    %1091 = vmatpush1.msra.mxu0 0.0
    %1092 = vmatprep.subr.mxu0 0.0
    %1093 = vmatpush1.msra.mxu0 0.0
    %1094 = vmatprep.subr.mxu0 0.0
    %1095 = vmatpush1.msra.mxu0 0.0
    %1096 = vmatprep.subr.mxu0 0.0
    %1097 = vmatpush1.msra.mxu0 0.0
    %1098 = vmatprep.subr.mxu0 0.0
    %1099 = vmatpush1.msra.mxu0 0.0
    %1100 = vmatprep.subr.mxu0 0.0
    %1101 = vmatpush1.msra.mxu0 0.0
    %1102 = vmatprep.subr.mxu0 0.0
    %1103 = vmatpush1.msra.mxu0 0.0
    %1104 = vmatprep.subr.mxu0 0.0
    %1105 = vmatpush1.msra.mxu0 0.0
    %1106 = vmatprep.subr.mxu0 0.0
    %1107 = vmatpush1.msra.mxu0 0.0
    %1108 = vmatprep.subr.mxu0 0.0
    %1109 = vmatpush1.msra.mxu0 0.0
    %1110 = vmatprep.subr.mxu0 0.0
    %1111 = vmatpush1.msra.mxu0 0.0
    %1112 = vmatprep.subr.mxu0 0.0
    %1113 = vmatpush1.msra.mxu0 0.0
    %1114 = vmatprep.subr.mxu0 0.0
    %1115 = vmatpush1.msra.mxu0 0.0
    %1116 = vmatprep.mubr.f32.mxu0 0.0
    %1117 = vmatmul.mubr.f32.gmra.mrb[0].mxu0 %v1050
    %v1118 = vpop.f32.mrb[0].mxu0
    %v1119 = vadd.f32 0.0, %v1118
    %v1120 = vpop.f32.mrb[0].mxu0
    %1121 = vdwg.mxu0
    %v1122 = vadd.f32 %v1046, %v1119
    %v1123 = vxor.u32 %v1122, 2147483648
    %v1124 = vmul.f32 %v1123, 1.442695
    %v1125 = vpow.pop %v1124
    %v1126 = vadd.f32 %v1125, 1.0
    %v1127 = vrcp.pop %v1126
    %v1128 = vmul.f32 1.0, %v1127
    %v1129 = vadd.f32 %v1119, %v790
    %1131 = vrot.lane.b32.xlu0 %v1129, 112
    %v1132 = vpop.permute.xlu0 %1131
    %v1134 = vmul.f32 %v1128, %v1132
    %1136 = vrot.lane.b32.xlu0 %v1134, 16
    %v1137 = vpop.permute.xlu0 %1136
    %v1139 = vadd.f32 %v1046, %v1137
    %v1140 = vtanh.pop %v1139
    %v1141 = vsub.f32 %v1040, %v1140
    %1143 = vrot.lane.b32.xlu0 %v1141, 120
    %v1144 = vpop.permute.xlu0 %1143
    %v1146 = vmul.f32 %v1128, %v1144
    %1148 = vrot.lane.b32.xlu0 %v1146, 8
    %v1149 = vpop.permute.xlu0 %1148
    %v1151 = vadd.f32 %v1140, %v1149
    %s1152 = sld [smem:[#allocation5 + $0x3]]
    %v1153 = vstv %s1152
    %v1154 = vmul.f32 %v1151, %v1153
    %v1155 = vadd.f32 %v1044, %v1154
    %s1156 = scalar_lea.vmem [#allocation2], 32
    %v1157 = vld [vmem:[%s1156] sm:$0xff]
    %1159 = vrot.lane.b32.xlu0 %v1151, 112
    %v1160 = vpop.permute.xlu0 %1159
    %v1161 = vsel %vm703, %v1160, 0
    %1163 = vmatprep.subr.mxu0 0.0
    %1164 = vmatpush1.msra.mxu0 %v699
    %1165 = vmatprep.subr.mxu0 0.0
    %1166 = vmatpush1.msra.mxu0 0.0
    %1167 = vmatprep.subr.mxu0 0.0
    %1168 = vmatpush1.msra.mxu0 0.0
    %1169 = vmatprep.subr.mxu0 0.0
    %1170 = vmatpush1.msra.mxu0 0.0
    %1171 = vmatprep.subr.mxu0 0.0
    %1172 = vmatpush1.msra.mxu0 0.0
    %1173 = vmatprep.subr.mxu0 0.0
    %1174 = vmatpush1.msra.mxu0 0.0
    %1175 = vmatprep.subr.mxu0 0.0
    %1176 = vmatpush1.msra.mxu0 0.0
    %1177 = vmatprep.subr.mxu0 0.0
    %1178 = vmatpush1.msra.mxu0 0.0
    %1179 = vmatprep.subr.mxu0 0.0
    %1180 = vmatpush1.msra.mxu0 0.0
    %1181 = vmatprep.subr.mxu0 0.0
    %1182 = vmatpush1.msra.mxu0 0.0
    %1183 = vmatprep.subr.mxu0 0.0
    %1184 = vmatpush1.msra.mxu0 0.0
    %1185 = vmatprep.subr.mxu0 0.0
    %1186 = vmatpush1.msra.mxu0 0.0
    %1187 = vmatprep.subr.mxu0 0.0
    %1188 = vmatpush1.msra.mxu0 0.0
    %1189 = vmatprep.subr.mxu0 0.0
    %1190 = vmatpush1.msra.mxu0 0.0
    %1191 = vmatprep.subr.mxu0 0.0
    %1192 = vmatpush1.msra.mxu0 0.0
    %1193 = vmatprep.subr.mxu0 0.0
    %1194 = vmatpush1.msra.mxu0 0.0
    %1195 = vmatprep.subr.mxu0 0.0
    %1196 = vmatpush1.msra.mxu0 0.0
    %1197 = vmatprep.subr.mxu0 0.0
    %1198 = vmatpush1.msra.mxu0 0.0
    %1199 = vmatprep.subr.mxu0 0.0
    %1200 = vmatpush1.msra.mxu0 0.0
    %1201 = vmatprep.subr.mxu0 0.0
    %1202 = vmatpush1.msra.mxu0 0.0
    %1203 = vmatprep.subr.mxu0 0.0
    %1204 = vmatpush1.msra.mxu0 0.0
    %1205 = vmatprep.subr.mxu0 0.0
    %1206 = vmatpush1.msra.mxu0 0.0
    %1207 = vmatprep.subr.mxu0 0.0
    %1208 = vmatpush1.msra.mxu0 0.0
    %1209 = vmatprep.subr.mxu0 0.0
    %1210 = vmatpush1.msra.mxu0 0.0
    %1211 = vmatprep.subr.mxu0 0.0
    %1212 = vmatpush1.msra.mxu0 0.0
    %1213 = vmatprep.subr.mxu0 0.0
    %1214 = vmatpush1.msra.mxu0 0.0
    %1215 = vmatprep.subr.mxu0 0.0
    %1216 = vmatpush1.msra.mxu0 0.0
    %1217 = vmatprep.subr.mxu0 0.0
    %1218 = vmatpush1.msra.mxu0 0.0
    %1219 = vmatprep.subr.mxu0 0.0
    %1220 = vmatpush1.msra.mxu0 0.0
    %1221 = vmatprep.subr.mxu0 0.0
    %1222 = vmatpush1.msra.mxu0 0.0
    %1223 = vmatprep.subr.mxu0 0.0
    %1224 = vmatpush1.msra.mxu0 0.0
    %1225 = vmatprep.subr.mxu0 0.0
    %1226 = vmatpush1.msra.mxu0 0.0
    %1227 = vmatprep.mubr.f32.mxu0 0.0
    %1228 = vmatmul.mubr.f32.gmra.mrb[0].mxu0 %v1161
    %v1229 = vpop.f32.mrb[0].mxu0
    %v1230 = vadd.f32 0.0, %v1229
    %v1231 = vpop.f32.mrb[0].mxu0
    %1232 = vdwg.mxu0
    %v1233 = vadd.f32 %v1157, %v1230
    %v1234 = vxor.u32 %v1233, 2147483648
    %v1235 = vmul.f32 %v1234, 1.442695
    %v1236 = vpow.pop %v1235
    %v1237 = vadd.f32 %v1236, 1.0
    %v1238 = vrcp.pop %v1237
    %v1239 = vmul.f32 1.0, %v1238
    %v1240 = vadd.f32 %v1230, %v790
    %1242 = vrot.lane.b32.xlu0 %v1240, 112
    %v1243 = vpop.permute.xlu0 %1242
    %v1245 = vmul.f32 %v1239, %v1243
    %1247 = vrot.lane.b32.xlu0 %v1245, 16
    %v1248 = vpop.permute.xlu0 %1247
    %v1250 = vadd.f32 %v1157, %v1248
    %v1251 = vtanh.pop %v1250
    %v1252 = vsub.f32 %v1151, %v1251
    %1254 = vrot.lane.b32.xlu0 %v1252, 120
    %v1255 = vpop.permute.xlu0 %1254
    %v1257 = vmul.f32 %v1239, %v1255
    %1259 = vrot.lane.b32.xlu0 %v1257, 8
    %v1260 = vpop.permute.xlu0 %1259
    %v1262 = vadd.f32 %v1251, %v1260
    %s1263 = sld [smem:[#allocation5 + $0x4]]
    %v1264 = vstv %s1263
    %v1265 = vmul.f32 %v1262, %v1264
    %v1266 = vadd.f32 %v1155, %v1265
    %s1267 = scalar_lea.vmem [#allocation2], 40
    %v1268 = vld [vmem:[%s1267] sm:$0xff]
    %1270 = vrot.lane.b32.xlu0 %v1262, 112
    %v1271 = vpop.permute.xlu0 %1270
    %v1272 = vsel %vm703, %v1271, 0
    %1274 = vmatprep.subr.mxu0 0.0
    %1275 = vmatpush1.msra.mxu0 %v699
    %1276 = vmatprep.subr.mxu0 0.0
    %1277 = vmatpush1.msra.mxu0 0.0
    %1278 = vmatprep.subr.mxu0 0.0
    %1279 = vmatpush1.msra.mxu0 0.0
    %1280 = vmatprep.subr.mxu0 0.0
    %1281 = vmatpush1.msra.mxu0 0.0
    %1282 = vmatprep.subr.mxu0 0.0
    %1283 = vmatpush1.msra.mxu0 0.0
    %1284 = vmatprep.subr.mxu0 0.0
    %1285 = vmatpush1.msra.mxu0 0.0
    %1286 = vmatprep.subr.mxu0 0.0
    %1287 = vmatpush1.msra.mxu0 0.0
    %1288 = vmatprep.subr.mxu0 0.0
    %1289 = vmatpush1.msra.mxu0 0.0
    %1290 = vmatprep.subr.mxu0 0.0
    %1291 = vmatpush1.msra.mxu0 0.0
    %1292 = vmatprep.subr.mxu0 0.0
    %1293 = vmatpush1.msra.mxu0 0.0
    %1294 = vmatprep.subr.mxu0 0.0
    %1295 = vmatpush1.msra.mxu0 0.0
    %1296 = vmatprep.subr.mxu0 0.0
    %1297 = vmatpush1.msra.mxu0 0.0
    %1298 = vmatprep.subr.mxu0 0.0
    %1299 = vmatpush1.msra.mxu0 0.0
    %1300 = vmatprep.subr.mxu0 0.0
    %1301 = vmatpush1.msra.mxu0 0.0
    %1302 = vmatprep.subr.mxu0 0.0
    %1303 = vmatpush1.msra.mxu0 0.0
    %1304 = vmatprep.subr.mxu0 0.0
    %1305 = vmatpush1.msra.mxu0 0.0
    %1306 = vmatprep.subr.mxu0 0.0
    %1307 = vmatpush1.msra.mxu0 0.0
    %1308 = vmatprep.subr.mxu0 0.0
    %1309 = vmatpush1.msra.mxu0 0.0
    %1310 = vmatprep.subr.mxu0 0.0
    %1311 = vmatpush1.msra.mxu0 0.0
    %1312 = vmatprep.subr.mxu0 0.0
    %1313 = vmatpush1.msra.mxu0 0.0
    %1314 = vmatprep.subr.mxu0 0.0
    %1315 = vmatpush1.msra.mxu0 0.0
    %1316 = vmatprep.subr.mxu0 0.0
    %1317 = vmatpush1.msra.mxu0 0.0
    %1318 = vmatprep.subr.mxu0 0.0
    %1319 = vmatpush1.msra.mxu0 0.0
    %1320 = vmatprep.subr.mxu0 0.0
    %1321 = vmatpush1.msra.mxu0 0.0
    %1322 = vmatprep.subr.mxu0 0.0
    %1323 = vmatpush1.msra.mxu0 0.0
    %1324 = vmatprep.subr.mxu0 0.0
    %1325 = vmatpush1.msra.mxu0 0.0
    %1326 = vmatprep.subr.mxu0 0.0
    %1327 = vmatpush1.msra.mxu0 0.0
    %1328 = vmatprep.subr.mxu0 0.0
    %1329 = vmatpush1.msra.mxu0 0.0
    %1330 = vmatprep.subr.mxu0 0.0
    %1331 = vmatpush1.msra.mxu0 0.0
    %1332 = vmatprep.subr.mxu0 0.0
    %1333 = vmatpush1.msra.mxu0 0.0
    %1334 = vmatprep.subr.mxu0 0.0
    %1335 = vmatpush1.msra.mxu0 0.0
    %1336 = vmatprep.subr.mxu0 0.0
    %1337 = vmatpush1.msra.mxu0 0.0
    %1338 = vmatprep.mubr.f32.mxu0 0.0
    %1339 = vmatmul.mubr.f32.gmra.mrb[0].mxu0 %v1272
    %v1340 = vpop.f32.mrb[0].mxu0
    %v1341 = vadd.f32 0.0, %v1340
    %v1342 = vpop.f32.mrb[0].mxu0
    %1343 = vdwg.mxu0
    %v1344 = vadd.f32 %v1268, %v1341
    %v1345 = vxor.u32 %v1344, 2147483648
    %v1346 = vmul.f32 %v1345, 1.442695
    %v1347 = vpow.pop %v1346
    %v1348 = vadd.f32 %v1347, 1.0
    %v1349 = vrcp.pop %v1348
    %v1350 = vmul.f32 1.0, %v1349
    %v1351 = vadd.f32 %v1341, %v790
    %1353 = vrot.lane.b32.xlu0 %v1351, 112
    %v1354 = vpop.permute.xlu0 %1353
    %v1356 = vmul.f32 %v1350, %v1354
    %1358 = vrot.lane.b32.xlu0 %v1356, 16
    %v1359 = vpop.permute.xlu0 %1358
    %v1361 = vadd.f32 %v1268, %v1359
    %v1362 = vtanh.pop %v1361
    %v1363 = vsub.f32 %v1262, %v1362
    %1365 = vrot.lane.b32.xlu0 %v1363, 120
    %v1366 = vpop.permute.xlu0 %1365
    %v1368 = vmul.f32 %v1350, %v1366
    %1370 = vrot.lane.b32.xlu0 %v1368, 8
    %v1371 = vpop.permute.xlu0 %1370
    %v1373 = vadd.f32 %v1362, %v1371
    %s1374 = sld [smem:[#allocation5 + $0x5]]
    %v1375 = vstv %s1374
    %v1376 = vmul.f32 %v1373, %v1375
    %v1377 = vadd.f32 %v1266, %v1376
    %s1378 = scalar_lea.vmem [#allocation2], 48
    %v1379 = vld [vmem:[%s1378] sm:$0xff]
    %1381 = vrot.lane.b32.xlu0 %v1373, 112
    %v1382 = vpop.permute.xlu0 %1381
    %v1383 = vsel %vm703, %v1382, 0
    %1385 = vmatprep.subr.mxu0 0.0
    %1386 = vmatpush1.msra.mxu0 %v699
    %1387 = vmatprep.subr.mxu0 0.0
    %1388 = vmatpush1.msra.mxu0 0.0
    %1389 = vmatprep.subr.mxu0 0.0
    %1390 = vmatpush1.msra.mxu0 0.0
    %1391 = vmatprep.subr.mxu0 0.0
    %1392 = vmatpush1.msra.mxu0 0.0
    %1393 = vmatprep.subr.mxu0 0.0
    %1394 = vmatpush1.msra.mxu0 0.0
    %1395 = vmatprep.subr.mxu0 0.0
    %1396 = vmatpush1.msra.mxu0 0.0
    %1397 = vmatprep.subr.mxu0 0.0
    %1398 = vmatpush1.msra.mxu0 0.0
    %1399 = vmatprep.subr.mxu0 0.0
    %1400 = vmatpush1.msra.mxu0 0.0
    %1401 = vmatprep.subr.mxu0 0.0
    %1402 = vmatpush1.msra.mxu0 0.0
    %1403 = vmatprep.subr.mxu0 0.0
    %1404 = vmatpush1.msra.mxu0 0.0
    %1405 = vmatprep.subr.mxu0 0.0
    %1406 = vmatpush1.msra.mxu0 0.0
    %1407 = vmatprep.subr.mxu0 0.0
    %1408 = vmatpush1.msra.mxu0 0.0
    %1409 = vmatprep.subr.mxu0 0.0
    %1410 = vmatpush1.msra.mxu0 0.0
    %1411 = vmatprep.subr.mxu0 0.0
    %1412 = vmatpush1.msra.mxu0 0.0
    %1413 = vmatprep.subr.mxu0 0.0
    %1414 = vmatpush1.msra.mxu0 0.0
    %1415 = vmatprep.subr.mxu0 0.0
    %1416 = vmatpush1.msra.mxu0 0.0
    %1417 = vmatprep.subr.mxu0 0.0
    %1418 = vmatpush1.msra.mxu0 0.0
    %1419 = vmatprep.subr.mxu0 0.0
    %1420 = vmatpush1.msra.mxu0 0.0
    %1421 = vmatprep.subr.mxu0 0.0
    %1422 = vmatpush1.msra.mxu0 0.0
    %1423 = vmatprep.subr.mxu0 0.0
    %1424 = vmatpush1.msra.mxu0 0.0
    %1425 = vmatprep.subr.mxu0 0.0
    %1426 = vmatpush1.msra.mxu0 0.0
    %1427 = vmatprep.subr.mxu0 0.0
    %1428 = vmatpush1.msra.mxu0 0.0
    %1429 = vmatprep.subr.mxu0 0.0
    %1430 = vmatpush1.msra.mxu0 0.0
    %1431 = vmatprep.subr.mxu0 0.0
    %1432 = vmatpush1.msra.mxu0 0.0
    %1433 = vmatprep.subr.mxu0 0.0
    %1434 = vmatpush1.msra.mxu0 0.0
    %1435 = vmatprep.subr.mxu0 0.0
    %1436 = vmatpush1.msra.mxu0 0.0
    %1437 = vmatprep.subr.mxu0 0.0
    %1438 = vmatpush1.msra.mxu0 0.0
    %1439 = vmatprep.subr.mxu0 0.0
    %1440 = vmatpush1.msra.mxu0 0.0
    %1441 = vmatprep.subr.mxu0 0.0
    %1442 = vmatpush1.msra.mxu0 0.0
    %1443 = vmatprep.subr.mxu0 0.0
    %1444 = vmatpush1.msra.mxu0 0.0
    %1445 = vmatprep.subr.mxu0 0.0
    %1446 = vmatpush1.msra.mxu0 0.0
    %1447 = vmatprep.subr.mxu0 0.0
    %1448 = vmatpush1.msra.mxu0 0.0
    %1449 = vmatprep.mubr.f32.mxu0 0.0
    %1450 = vmatmul.mubr.f32.gmra.mrb[0].mxu0 %v1383
    %v1451 = vpop.f32.mrb[0].mxu0
    %v1452 = vadd.f32 0.0, %v1451
    %v1453 = vpop.f32.mrb[0].mxu0
    %1454 = vdwg.mxu0
    %v1455 = vadd.f32 %v1379, %v1452
    %v1456 = vxor.u32 %v1455, 2147483648
    %v1457 = vmul.f32 %v1456, 1.442695
    %v1458 = vpow.pop %v1457
    %v1459 = vadd.f32 %v1458, 1.0
    %v1460 = vrcp.pop %v1459
    %v1461 = vmul.f32 1.0, %v1460
    %v1462 = vadd.f32 %v1452, %v790
    %1464 = vrot.lane.b32.xlu0 %v1462, 112
    %v1465 = vpop.permute.xlu0 %1464
    %v1467 = vmul.f32 %v1461, %v1465
    %1469 = vrot.lane.b32.xlu0 %v1467, 16
    %v1470 = vpop.permute.xlu0 %1469
    %v1472 = vadd.f32 %v1379, %v1470
    %v1473 = vtanh.pop %v1472
    %v1474 = vsub.f32 %v1373, %v1473
    %1476 = vrot.lane.b32.xlu0 %v1474, 120
    %v1477 = vpop.permute.xlu0 %1476
    %v1479 = vmul.f32 %v1461, %v1477
    %1481 = vrot.lane.b32.xlu0 %v1479, 8
    %v1482 = vpop.permute.xlu0 %1481
    %v1484 = vadd.f32 %v1473, %v1482
    %s1485 = sld [smem:[#allocation5 + $0x6]]
    %v1486 = vstv %s1485
    %v1487 = vmul.f32 %v1484, %v1486
    %v1488 = vadd.f32 %v1377, %v1487
    %s1489 = scalar_lea.vmem [#allocation2], 56
    %v1490 = vld [vmem:[%s1489] sm:$0xff]
    %1492 = vrot.lane.b32.xlu0 %v1484, 112
    %v1493 = vpop.permute.xlu0 %1492
    %v1494 = vsel %vm703, %v1493, 0
    %1496 = vmatprep.subr.mxu0 0.0
    %1497 = vmatpush1.msra.mxu0 %v699
    %1498 = vmatprep.subr.mxu0 0.0
    %1499 = vmatpush1.msra.mxu0 0.0
    %1500 = vmatprep.subr.mxu0 0.0
    %1501 = vmatpush1.msra.mxu0 0.0
    %1502 = vmatprep.subr.mxu0 0.0
    %1503 = vmatpush1.msra.mxu0 0.0
    %1504 = vmatprep.subr.mxu0 0.0
    %1505 = vmatpush1.msra.mxu0 0.0
    %1506 = vmatprep.subr.mxu0 0.0
    %1507 = vmatpush1.msra.mxu0 0.0
    %1508 = vmatprep.subr.mxu0 0.0
    %1509 = vmatpush1.msra.mxu0 0.0
    %1510 = vmatprep.subr.mxu0 0.0
    %1511 = vmatpush1.msra.mxu0 0.0
    %1512 = vmatprep.subr.mxu0 0.0
    %1513 = vmatpush1.msra.mxu0 0.0
    %1514 = vmatprep.subr.mxu0 0.0
    %1515 = vmatpush1.msra.mxu0 0.0
    %1516 = vmatprep.subr.mxu0 0.0
    %1517 = vmatpush1.msra.mxu0 0.0
    %1518 = vmatprep.subr.mxu0 0.0
    %1519 = vmatpush1.msra.mxu0 0.0
    %1520 = vmatprep.subr.mxu0 0.0
    %1521 = vmatpush1.msra.mxu0 0.0
    %1522 = vmatprep.subr.mxu0 0.0
    %1523 = vmatpush1.msra.mxu0 0.0
    %1524 = vmatprep.subr.mxu0 0.0
    %1525 = vmatpush1.msra.mxu0 0.0
    %1526 = vmatprep.subr.mxu0 0.0
    %1527 = vmatpush1.msra.mxu0 0.0
    %1528 = vmatprep.subr.mxu0 0.0
    %1529 = vmatpush1.msra.mxu0 0.0
    %1530 = vmatprep.subr.mxu0 0.0
    %1531 = vmatpush1.msra.mxu0 0.0
    %1532 = vmatprep.subr.mxu0 0.0
    %1533 = vmatpush1.msra.mxu0 0.0
    %1534 = vmatprep.subr.mxu0 0.0
    %1535 = vmatpush1.msra.mxu0 0.0
    %1536 = vmatprep.subr.mxu0 0.0
    %1537 = vmatpush1.msra.mxu0 0.0
    %1538 = vmatprep.subr.mxu0 0.0
    %1539 = vmatpush1.msra.mxu0 0.0
    %1540 = vmatprep.subr.mxu0 0.0
    %1541 = vmatpush1.msra.mxu0 0.0
    %1542 = vmatprep.subr.mxu0 0.0
    %1543 = vmatpush1.msra.mxu0 0.0
    %1544 = vmatprep.subr.mxu0 0.0
    %1545 = vmatpush1.msra.mxu0 0.0
    %1546 = vmatprep.subr.mxu0 0.0
    %1547 = vmatpush1.msra.mxu0 0.0
    %1548 = vmatprep.subr.mxu0 0.0
    %1549 = vmatpush1.msra.mxu0 0.0
    %1550 = vmatprep.subr.mxu0 0.0
    %1551 = vmatpush1.msra.mxu0 0.0
    %1552 = vmatprep.subr.mxu0 0.0
    %1553 = vmatpush1.msra.mxu0 0.0
    %1554 = vmatprep.subr.mxu0 0.0
    %1555 = vmatpush1.msra.mxu0 0.0
    %1556 = vmatprep.subr.mxu0 0.0
    %1557 = vmatpush1.msra.mxu0 0.0
    %1558 = vmatprep.subr.mxu0 0.0
    %1559 = vmatpush1.msra.mxu0 0.0
    %1560 = vmatprep.mubr.f32.mxu0 0.0
    %1561 = vmatmul.mubr.f32.gmra.mrb[0].mxu0 %v1494
    %v1562 = vpop.f32.mrb[0].mxu0
    %v1563 = vadd.f32 0.0, %v1562
    %v1564 = vpop.f32.mrb[0].mxu0
    %1565 = vdwg.mxu0
    %v1566 = vadd.f32 %v1490, %v1563
    %v1567 = vxor.u32 %v1566, 2147483648
    %v1568 = vmul.f32 %v1567, 1.442695
    %v1569 = vpow.pop %v1568
    %v1570 = vadd.f32 %v1569, 1.0
    %v1571 = vrcp.pop %v1570
    %v1572 = vmul.f32 1.0, %v1571
    %v1573 = vadd.f32 %v1563, %v790
    %1575 = vrot.lane.b32.xlu0 %v1573, 112
    %v1576 = vpop.permute.xlu0 %1575
    %v1578 = vmul.f32 %v1572, %v1576
    %1580 = vrot.lane.b32.xlu0 %v1578, 16
    %v1581 = vpop.permute.xlu0 %1580
    %v1583 = vadd.f32 %v1490, %v1581
    %v1584 = vtanh.pop %v1583
    %v1585 = vsub.f32 %v1484, %v1584
    %1587 = vrot.lane.b32.xlu0 %v1585, 120
    %v1588 = vpop.permute.xlu0 %1587
    %v1590 = vmul.f32 %v1572, %v1588
    %1592 = vrot.lane.b32.xlu0 %v1590, 8
    %v1593 = vpop.permute.xlu0 %1592
    %v1595 = vadd.f32 %v1584, %v1593
    %s1596 = sld [smem:[#allocation5 + $0x7]]
    %v1597 = vstv %s1596
    %v1598 = vmul.f32 %v1595, %v1597
    %v1599 = vadd.f32 %v1488, %v1598
    %s1600 = scalar_lea.vmem [#allocation2], 64
    %v1601 = vld [vmem:[%s1600] sm:$0xff]
    %1603 = vrot.lane.b32.xlu0 %v1595, 112
    %v1604 = vpop.permute.xlu0 %1603
    %v1605 = vsel %vm703, %v1604, 0
    %1607 = vmatprep.subr.mxu0 0.0
    %1608 = vmatpush1.msra.mxu0 %v699
    %1609 = vmatprep.subr.mxu0 0.0
    %1610 = vmatpush1.msra.mxu0 0.0
    %1611 = vmatprep.subr.mxu0 0.0
    %1612 = vmatpush1.msra.mxu0 0.0
    %1613 = vmatprep.subr.mxu0 0.0
    %1614 = vmatpush1.msra.mxu0 0.0
    %1615 = vmatprep.subr.mxu0 0.0
    %1616 = vmatpush1.msra.mxu0 0.0
    %1617 = vmatprep.subr.mxu0 0.0
    %1618 = vmatpush1.msra.mxu0 0.0
    %1619 = vmatprep.subr.mxu0 0.0
    %1620 = vmatpush1.msra.mxu0 0.0
    %1621 = vmatprep.subr.mxu0 0.0
    %1622 = vmatpush1.msra.mxu0 0.0
    %1623 = vmatprep.subr.mxu0 0.0
    %1624 = vmatpush1.msra.mxu0 0.0
    %1625 = vmatprep.subr.mxu0 0.0
    %1626 = vmatpush1.msra.mxu0 0.0
    %1627 = vmatprep.subr.mxu0 0.0
    %1628 = vmatpush1.msra.mxu0 0.0
    %1629 = vmatprep.subr.mxu0 0.0
    %1630 = vmatpush1.msra.mxu0 0.0
    %1631 = vmatprep.subr.mxu0 0.0
    %1632 = vmatpush1.msra.mxu0 0.0
    %1633 = vmatprep.subr.mxu0 0.0
    %1634 = vmatpush1.msra.mxu0 0.0
    %1635 = vmatprep.subr.mxu0 0.0
    %1636 = vmatpush1.msra.mxu0 0.0
    %1637 = vmatprep.subr.mxu0 0.0
    %1638 = vmatpush1.msra.mxu0 0.0
    %1639 = vmatprep.subr.mxu0 0.0
    %1640 = vmatpush1.msra.mxu0 0.0
    %1641 = vmatprep.subr.mxu0 0.0
    %1642 = vmatpush1.msra.mxu0 0.0
    %1643 = vmatprep.subr.mxu0 0.0
    %1644 = vmatpush1.msra.mxu0 0.0
    %1645 = vmatprep.subr.mxu0 0.0
    %1646 = vmatpush1.msra.mxu0 0.0
    %1647 = vmatprep.subr.mxu0 0.0
    %1648 = vmatpush1.msra.mxu0 0.0
    %1649 = vmatprep.subr.mxu0 0.0
    %1650 = vmatpush1.msra.mxu0 0.0
    %1651 = vmatprep.subr.mxu0 0.0
    %1652 = vmatpush1.msra.mxu0 0.0
    %1653 = vmatprep.subr.mxu0 0.0
    %1654 = vmatpush1.msra.mxu0 0.0
    %1655 = vmatprep.subr.mxu0 0.0
    %1656 = vmatpush1.msra.mxu0 0.0
    %1657 = vmatprep.subr.mxu0 0.0
    %1658 = vmatpush1.msra.mxu0 0.0
    %1659 = vmatprep.subr.mxu0 0.0
    %1660 = vmatpush1.msra.mxu0 0.0
    %1661 = vmatprep.subr.mxu0 0.0
    %1662 = vmatpush1.msra.mxu0 0.0
    %1663 = vmatprep.subr.mxu0 0.0
    %1664 = vmatpush1.msra.mxu0 0.0
    %1665 = vmatprep.subr.mxu0 0.0
    %1666 = vmatpush1.msra.mxu0 0.0
    %1667 = vmatprep.subr.mxu0 0.0
    %1668 = vmatpush1.msra.mxu0 0.0
    %1669 = vmatprep.subr.mxu0 0.0
    %1670 = vmatpush1.msra.mxu0 0.0
    %1671 = vmatprep.mubr.f32.mxu0 0.0
    %1672 = vmatmul.mubr.f32.gmra.mrb[0].mxu0 %v1605
    %v1673 = vpop.f32.mrb[0].mxu0
    %v1674 = vadd.f32 0.0, %v1673
    %v1675 = vpop.f32.mrb[0].mxu0
    %1676 = vdwg.mxu0
    %v1677 = vadd.f32 %v1601, %v1674
    %v1678 = vxor.u32 %v1677, 2147483648
    %v1679 = vmul.f32 %v1678, 1.442695
    %v1680 = vpow.pop %v1679
    %v1681 = vadd.f32 %v1680, 1.0
    %v1682 = vrcp.pop %v1681
    %v1683 = vmul.f32 1.0, %v1682
    %v1684 = vadd.f32 %v1674, %v790
    %1686 = vrot.lane.b32.xlu0 %v1684, 112
    %v1687 = vpop.permute.xlu0 %1686
    %v1689 = vmul.f32 %v1683, %v1687
    %1691 = vrot.lane.b32.xlu0 %v1689, 16
    %v1692 = vpop.permute.xlu0 %1691
    %v1694 = vadd.f32 %v1601, %v1692
    %v1695 = vtanh.pop %v1694
    %v1696 = vsub.f32 %v1595, %v1695
    %1698 = vrot.lane.b32.xlu0 %v1696, 120
    %v1699 = vpop.permute.xlu0 %1698
    %v1701 = vmul.f32 %v1683, %v1699
    %1703 = vrot.lane.b32.xlu0 %v1701, 8
    %v1704 = vpop.permute.xlu0 %1703
    %v1706 = vadd.f32 %v1695, %v1704
    %s1707 = sld [smem:[#allocation5 + $0x8]]
    %v1708 = vstv %s1707
    %v1709 = vmul.f32 %v1706, %v1708
    %v1710 = vadd.f32 %v1599, %v1709
    %s1711 = scalar_lea.vmem [#allocation2], 72
    %v1712 = vld [vmem:[%s1711] sm:$0xff]
    %1714 = vrot.lane.b32.xlu0 %v1706, 112
    %v1715 = vpop.permute.xlu0 %1714
    %v1716 = vsel %vm703, %v1715, 0
    %1718 = vmatprep.subr.mxu0 0.0
    %1719 = vmatpush1.msra.mxu0 %v699
    %1720 = vmatprep.subr.mxu0 0.0
    %1721 = vmatpush1.msra.mxu0 0.0
    %1722 = vmatprep.subr.mxu0 0.0
    %1723 = vmatpush1.msra.mxu0 0.0
    %1724 = vmatprep.subr.mxu0 0.0
    %1725 = vmatpush1.msra.mxu0 0.0
    %1726 = vmatprep.subr.mxu0 0.0
    %1727 = vmatpush1.msra.mxu0 0.0
    %1728 = vmatprep.subr.mxu0 0.0
    %1729 = vmatpush1.msra.mxu0 0.0
    %1730 = vmatprep.subr.mxu0 0.0
    %1731 = vmatpush1.msra.mxu0 0.0
    %1732 = vmatprep.subr.mxu0 0.0
    %1733 = vmatpush1.msra.mxu0 0.0
    %1734 = vmatprep.subr.mxu0 0.0
    %1735 = vmatpush1.msra.mxu0 0.0
    %1736 = vmatprep.subr.mxu0 0.0
    %1737 = vmatpush1.msra.mxu0 0.0
    %1738 = vmatprep.subr.mxu0 0.0
    %1739 = vmatpush1.msra.mxu0 0.0
    %1740 = vmatprep.subr.mxu0 0.0
    %1741 = vmatpush1.msra.mxu0 0.0
    %1742 = vmatprep.subr.mxu0 0.0
    %1743 = vmatpush1.msra.mxu0 0.0
    %1744 = vmatprep.subr.mxu0 0.0
    %1745 = vmatpush1.msra.mxu0 0.0
    %1746 = vmatprep.subr.mxu0 0.0
    %1747 = vmatpush1.msra.mxu0 0.0
    %1748 = vmatprep.subr.mxu0 0.0
    %1749 = vmatpush1.msra.mxu0 0.0
    %1750 = vmatprep.subr.mxu0 0.0
    %1751 = vmatpush1.msra.mxu0 0.0
    %1752 = vmatprep.subr.mxu0 0.0
    %1753 = vmatpush1.msra.mxu0 0.0
    %1754 = vmatprep.subr.mxu0 0.0
    %1755 = vmatpush1.msra.mxu0 0.0
    %1756 = vmatprep.subr.mxu0 0.0
    %1757 = vmatpush1.msra.mxu0 0.0
    %1758 = vmatprep.subr.mxu0 0.0
    %1759 = vmatpush1.msra.mxu0 0.0
    %1760 = vmatprep.subr.mxu0 0.0
    %1761 = vmatpush1.msra.mxu0 0.0
    %1762 = vmatprep.subr.mxu0 0.0
    %1763 = vmatpush1.msra.mxu0 0.0
    %1764 = vmatprep.subr.mxu0 0.0
    %1765 = vmatpush1.msra.mxu0 0.0
    %1766 = vmatprep.subr.mxu0 0.0
    %1767 = vmatpush1.msra.mxu0 0.0
    %1768 = vmatprep.subr.mxu0 0.0
    %1769 = vmatpush1.msra.mxu0 0.0
    %1770 = vmatprep.subr.mxu0 0.0
    %1771 = vmatpush1.msra.mxu0 0.0
    %1772 = vmatprep.subr.mxu0 0.0
    %1773 = vmatpush1.msra.mxu0 0.0
    %1774 = vmatprep.subr.mxu0 0.0
    %1775 = vmatpush1.msra.mxu0 0.0
    %1776 = vmatprep.subr.mxu0 0.0
    %1777 = vmatpush1.msra.mxu0 0.0
    %1778 = vmatprep.subr.mxu0 0.0
    %1779 = vmatpush1.msra.mxu0 0.0
    %1780 = vmatprep.subr.mxu0 0.0
    %1781 = vmatpush1.msra.mxu0 0.0
    %1782 = vmatprep.mubr.f32.mxu0 0.0
    %1783 = vmatmul.mubr.f32.gmra.mrb[0].mxu0 %v1716
    %v1784 = vpop.f32.mrb[0].mxu0
    %v1785 = vadd.f32 0.0, %v1784
    %v1786 = vpop.f32.mrb[0].mxu0
    %1787 = vdwg.mxu0
    %v1788 = vadd.f32 %v1712, %v1785
    %v1789 = vxor.u32 %v1788, 2147483648
    %v1790 = vmul.f32 %v1789, 1.442695
    %v1791 = vpow.pop %v1790
    %v1792 = vadd.f32 %v1791, 1.0
    %v1793 = vrcp.pop %v1792
    %v1794 = vmul.f32 1.0, %v1793
    %v1795 = vadd.f32 %v1785, %v790
    %1797 = vrot.lane.b32.xlu0 %v1795, 112
    %v1798 = vpop.permute.xlu0 %1797
    %v1800 = vmul.f32 %v1794, %v1798
    %1802 = vrot.lane.b32.xlu0 %v1800, 16
    %v1803 = vpop.permute.xlu0 %1802
    %v1805 = vadd.f32 %v1712, %v1803
    %v1806 = vtanh.pop %v1805
    %v1807 = vsub.f32 %v1706, %v1806
    %1809 = vrot.lane.b32.xlu0 %v1807, 120
    %v1810 = vpop.permute.xlu0 %1809
    %v1812 = vmul.f32 %v1794, %v1810
    %1814 = vrot.lane.b32.xlu0 %v1812, 8
    %v1815 = vpop.permute.xlu0 %1814
    %v1817 = vadd.f32 %v1806, %v1815
    %s1818 = sld [smem:[#allocation5 + $0x9]]
    %v1819 = vstv %s1818
    %v1820 = vmul.f32 %v1817, %v1819
    %v1821 = vadd.f32 %v1710, %v1820
    %s1822 = scalar_lea.vmem [#allocation2], 80
    %v1823 = vld [vmem:[%s1822] sm:$0xff]
    %1825 = vrot.lane.b32.xlu0 %v1817, 112
    %v1826 = vpop.permute.xlu0 %1825
    %v1827 = vsel %vm703, %v1826, 0
    %1829 = vmatprep.subr.mxu0 0.0
    %1830 = vmatpush1.msra.mxu0 %v699
    %1831 = vmatprep.subr.mxu0 0.0
    %1832 = vmatpush1.msra.mxu0 0.0
    %1833 = vmatprep.subr.mxu0 0.0
    %1834 = vmatpush1.msra.mxu0 0.0
    %1835 = vmatprep.subr.mxu0 0.0
    %1836 = vmatpush1.msra.mxu0 0.0
    %1837 = vmatprep.subr.mxu0 0.0
    %1838 = vmatpush1.msra.mxu0 0.0
    %1839 = vmatprep.subr.mxu0 0.0
    %1840 = vmatpush1.msra.mxu0 0.0
    %1841 = vmatprep.subr.mxu0 0.0
    %1842 = vmatpush1.msra.mxu0 0.0
    %1843 = vmatprep.subr.mxu0 0.0
    %1844 = vmatpush1.msra.mxu0 0.0
    %1845 = vmatprep.subr.mxu0 0.0
    %1846 = vmatpush1.msra.mxu0 0.0
    %1847 = vmatprep.subr.mxu0 0.0
    %1848 = vmatpush1.msra.mxu0 0.0
    %1849 = vmatprep.subr.mxu0 0.0
    %1850 = vmatpush1.msra.mxu0 0.0
    %1851 = vmatprep.subr.mxu0 0.0
    %1852 = vmatpush1.msra.mxu0 0.0
    %1853 = vmatprep.subr.mxu0 0.0
    %1854 = vmatpush1.msra.mxu0 0.0
    %1855 = vmatprep.subr.mxu0 0.0
    %1856 = vmatpush1.msra.mxu0 0.0
    %1857 = vmatprep.subr.mxu0 0.0
    %1858 = vmatpush1.msra.mxu0 0.0
    %1859 = vmatprep.subr.mxu0 0.0
    %1860 = vmatpush1.msra.mxu0 0.0
    %1861 = vmatprep.subr.mxu0 0.0
    %1862 = vmatpush1.msra.mxu0 0.0
    %1863 = vmatprep.subr.mxu0 0.0
    %1864 = vmatpush1.msra.mxu0 0.0
    %1865 = vmatprep.subr.mxu0 0.0
    %1866 = vmatpush1.msra.mxu0 0.0
    %1867 = vmatprep.subr.mxu0 0.0
    %1868 = vmatpush1.msra.mxu0 0.0
    %1869 = vmatprep.subr.mxu0 0.0
    %1870 = vmatpush1.msra.mxu0 0.0
    %1871 = vmatprep.subr.mxu0 0.0
    %1872 = vmatpush1.msra.mxu0 0.0
    %1873 = vmatprep.subr.mxu0 0.0
    %1874 = vmatpush1.msra.mxu0 0.0
    %1875 = vmatprep.subr.mxu0 0.0
    %1876 = vmatpush1.msra.mxu0 0.0
    %1877 = vmatprep.subr.mxu0 0.0
    %1878 = vmatpush1.msra.mxu0 0.0
    %1879 = vmatprep.subr.mxu0 0.0
    %1880 = vmatpush1.msra.mxu0 0.0
    %1881 = vmatprep.subr.mxu0 0.0
    %1882 = vmatpush1.msra.mxu0 0.0
    %1883 = vmatprep.subr.mxu0 0.0
    %1884 = vmatpush1.msra.mxu0 0.0
    %1885 = vmatprep.subr.mxu0 0.0
    %1886 = vmatpush1.msra.mxu0 0.0
    %1887 = vmatprep.subr.mxu0 0.0
    %1888 = vmatpush1.msra.mxu0 0.0
    %1889 = vmatprep.subr.mxu0 0.0
    %1890 = vmatpush1.msra.mxu0 0.0
    %1891 = vmatprep.subr.mxu0 0.0
    %1892 = vmatpush1.msra.mxu0 0.0
    %1893 = vmatprep.mubr.f32.mxu0 0.0
    %1894 = vmatmul.mubr.f32.gmra.mrb[0].mxu0 %v1827
    %v1895 = vpop.f32.mrb[0].mxu0
    %v1896 = vadd.f32 0.0, %v1895
    %v1897 = vpop.f32.mrb[0].mxu0
    %1898 = vdwg.mxu0
    %v1899 = vadd.f32 %v1823, %v1896
    %v1900 = vxor.u32 %v1899, 2147483648
    %v1901 = vmul.f32 %v1900, 1.442695
    %v1902 = vpow.pop %v1901
    %v1903 = vadd.f32 %v1902, 1.0
    %v1904 = vrcp.pop %v1903
    %v1905 = vmul.f32 1.0, %v1904
    %v1906 = vadd.f32 %v1896, %v790
    %1908 = vrot.lane.b32.xlu0 %v1906, 112
    %v1909 = vpop.permute.xlu0 %1908
    %v1911 = vmul.f32 %v1905, %v1909
    %1913 = vrot.lane.b32.xlu0 %v1911, 16
    %v1914 = vpop.permute.xlu0 %1913
    %v1916 = vadd.f32 %v1823, %v1914
    %v1917 = vtanh.pop %v1916
    %v1918 = vsub.f32 %v1817, %v1917
    %1920 = vrot.lane.b32.xlu0 %v1918, 120
    %v1921 = vpop.permute.xlu0 %1920
    %v1923 = vmul.f32 %v1905, %v1921
    %1925 = vrot.lane.b32.xlu0 %v1923, 8
    %v1926 = vpop.permute.xlu0 %1925
    %v1928 = vadd.f32 %v1917, %v1926
    %s1929 = sld [smem:[#allocation5 + $0xa]]
    %v1930 = vstv %s1929
    %v1931 = vmul.f32 %v1928, %v1930
    %v1932 = vadd.f32 %v1821, %v1931
    %s1933 = scalar_lea.vmem [#allocation2], 88
    %v1934 = vld [vmem:[%s1933] sm:$0xff]
    %1936 = vrot.lane.b32.xlu0 %v1928, 112
    %v1937 = vpop.permute.xlu0 %1936
    %v1938 = vsel %vm703, %v1937, 0
    %1940 = vmatprep.subr.mxu0 0.0
    %1941 = vmatpush1.msra.mxu0 %v699
    %1942 = vmatprep.subr.mxu0 0.0
    %1943 = vmatpush1.msra.mxu0 0.0
    %1944 = vmatprep.subr.mxu0 0.0
    %1945 = vmatpush1.msra.mxu0 0.0
    %1946 = vmatprep.subr.mxu0 0.0
    %1947 = vmatpush1.msra.mxu0 0.0
    %1948 = vmatprep.subr.mxu0 0.0
    %1949 = vmatpush1.msra.mxu0 0.0
    %1950 = vmatprep.subr.mxu0 0.0
    %1951 = vmatpush1.msra.mxu0 0.0
    %1952 = vmatprep.subr.mxu0 0.0
    %1953 = vmatpush1.msra.mxu0 0.0
    %1954 = vmatprep.subr.mxu0 0.0
    %1955 = vmatpush1.msra.mxu0 0.0
    %1956 = vmatprep.subr.mxu0 0.0
    %1957 = vmatpush1.msra.mxu0 0.0
    %1958 = vmatprep.subr.mxu0 0.0
    %1959 = vmatpush1.msra.mxu0 0.0
    %1960 = vmatprep.subr.mxu0 0.0
    %1961 = vmatpush1.msra.mxu0 0.0
    %1962 = vmatprep.subr.mxu0 0.0
    %1963 = vmatpush1.msra.mxu0 0.0
    %1964 = vmatprep.subr.mxu0 0.0
    %1965 = vmatpush1.msra.mxu0 0.0
    %1966 = vmatprep.subr.mxu0 0.0
    %1967 = vmatpush1.msra.mxu0 0.0
    %1968 = vmatprep.subr.mxu0 0.0
    %1969 = vmatpush1.msra.mxu0 0.0
    %1970 = vmatprep.subr.mxu0 0.0
    %1971 = vmatpush1.msra.mxu0 0.0
    %1972 = vmatprep.subr.mxu0 0.0
    %1973 = vmatpush1.msra.mxu0 0.0
    %1974 = vmatprep.subr.mxu0 0.0
    %1975 = vmatpush1.msra.mxu0 0.0
    %1976 = vmatprep.subr.mxu0 0.0
    %1977 = vmatpush1.msra.mxu0 0.0
    %1978 = vmatprep.subr.mxu0 0.0
    %1979 = vmatpush1.msra.mxu0 0.0
    %1980 = vmatprep.subr.mxu0 0.0
    %1981 = vmatpush1.msra.mxu0 0.0
    %1982 = vmatprep.subr.mxu0 0.0
    %1983 = vmatpush1.msra.mxu0 0.0
    %1984 = vmatprep.subr.mxu0 0.0
    %1985 = vmatpush1.msra.mxu0 0.0
    %1986 = vmatprep.subr.mxu0 0.0
    %1987 = vmatpush1.msra.mxu0 0.0
    %1988 = vmatprep.subr.mxu0 0.0
    %1989 = vmatpush1.msra.mxu0 0.0
    %1990 = vmatprep.subr.mxu0 0.0
    %1991 = vmatpush1.msra.mxu0 0.0
    %1992 = vmatprep.subr.mxu0 0.0
    %1993 = vmatpush1.msra.mxu0 0.0
    %1994 = vmatprep.subr.mxu0 0.0
    %1995 = vmatpush1.msra.mxu0 0.0
    %1996 = vmatprep.subr.mxu0 0.0
    %1997 = vmatpush1.msra.mxu0 0.0
    %1998 = vmatprep.subr.mxu0 0.0
    %1999 = vmatpush1.msra.mxu0 0.0
    %2000 = vmatprep.subr.mxu0 0.0
    %2001 = vmatpush1.msra.mxu0 0.0
    %2002 = vmatprep.subr.mxu0 0.0
    %2003 = vmatpush1.msra.mxu0 0.0
    %2004 = vmatprep.mubr.f32.mxu0 0.0
    %2005 = vmatmul.mubr.f32.gmra.mrb[0].mxu0 %v1938
    %v2006 = vpop.f32.mrb[0].mxu0
    %v2007 = vadd.f32 0.0, %v2006
    %v2008 = vpop.f32.mrb[0].mxu0
    %2009 = vdwg.mxu0
    %v2010 = vadd.f32 %v1934, %v2007
    %v2011 = vxor.u32 %v2010, 2147483648
    %v2012 = vmul.f32 %v2011, 1.442695
    %v2013 = vpow.pop %v2012
    %v2014 = vadd.f32 %v2013, 1.0
    %v2015 = vrcp.pop %v2014
    %v2016 = vmul.f32 1.0, %v2015
    %v2017 = vadd.f32 %v2007, %v790
    %2019 = vrot.lane.b32.xlu0 %v2017, 112
    %v2020 = vpop.permute.xlu0 %2019
    %v2022 = vmul.f32 %v2016, %v2020
    %2024 = vrot.lane.b32.xlu0 %v2022, 16
    %v2025 = vpop.permute.xlu0 %2024
    %v2027 = vadd.f32 %v1934, %v2025
    %v2028 = vtanh.pop %v2027
    %v2029 = vsub.f32 %v1928, %v2028
    %2031 = vrot.lane.b32.xlu0 %v2029, 120
    %v2032 = vpop.permute.xlu0 %2031
    %v2034 = vmul.f32 %v2016, %v2032
    %2036 = vrot.lane.b32.xlu0 %v2034, 8
    %v2037 = vpop.permute.xlu0 %2036
    %v2039 = vadd.f32 %v2028, %v2037
    %s2040 = sld [smem:[#allocation5 + $0xb]]
    %v2041 = vstv %s2040
    %v2042 = vmul.f32 %v2039, %v2041
    %v2043 = vadd.f32 %v1932, %v2042
    %s2044 = scalar_lea.vmem [#allocation2], 96
    %v2045 = vld [vmem:[%s2044] sm:$0xff]
    %2047 = vrot.lane.b32.xlu0 %v2039, 112
    %v2048 = vpop.permute.xlu0 %2047
    %v2049 = vsel %vm703, %v2048, 0
    %2051 = vmatprep.subr.mxu0 0.0
    %2052 = vmatpush1.msra.mxu0 %v699
    %2053 = vmatprep.subr.mxu0 0.0
    %2054 = vmatpush1.msra.mxu0 0.0
    %2055 = vmatprep.subr.mxu0 0.0
    %2056 = vmatpush1.msra.mxu0 0.0
    %2057 = vmatprep.subr.mxu0 0.0
    %2058 = vmatpush1.msra.mxu0 0.0
    %2059 = vmatprep.subr.mxu0 0.0
    %2060 = vmatpush1.msra.mxu0 0.0
    %2061 = vmatprep.subr.mxu0 0.0
    %2062 = vmatpush1.msra.mxu0 0.0
    %2063 = vmatprep.subr.mxu0 0.0
    %2064 = vmatpush1.msra.mxu0 0.0
    %2065 = vmatprep.subr.mxu0 0.0
    %2066 = vmatpush1.msra.mxu0 0.0
    %2067 = vmatprep.subr.mxu0 0.0
    %2068 = vmatpush1.msra.mxu0 0.0
    %2069 = vmatprep.subr.mxu0 0.0
    %2070 = vmatpush1.msra.mxu0 0.0
    %2071 = vmatprep.subr.mxu0 0.0
    %2072 = vmatpush1.msra.mxu0 0.0
    %2073 = vmatprep.subr.mxu0 0.0
    %2074 = vmatpush1.msra.mxu0 0.0
    %2075 = vmatprep.subr.mxu0 0.0
    %2076 = vmatpush1.msra.mxu0 0.0
    %2077 = vmatprep.subr.mxu0 0.0
    %2078 = vmatpush1.msra.mxu0 0.0
    %2079 = vmatprep.subr.mxu0 0.0
    %2080 = vmatpush1.msra.mxu0 0.0
    %2081 = vmatprep.subr.mxu0 0.0
    %2082 = vmatpush1.msra.mxu0 0.0
    %2083 = vmatprep.subr.mxu0 0.0
    %2084 = vmatpush1.msra.mxu0 0.0
    %2085 = vmatprep.subr.mxu0 0.0
    %2086 = vmatpush1.msra.mxu0 0.0
    %2087 = vmatprep.subr.mxu0 0.0
    %2088 = vmatpush1.msra.mxu0 0.0
    %2089 = vmatprep.subr.mxu0 0.0
    %2090 = vmatpush1.msra.mxu0 0.0
    %2091 = vmatprep.subr.mxu0 0.0
    %2092 = vmatpush1.msra.mxu0 0.0
    %2093 = vmatprep.subr.mxu0 0.0
    %2094 = vmatpush1.msra.mxu0 0.0
    %2095 = vmatprep.subr.mxu0 0.0
    %2096 = vmatpush1.msra.mxu0 0.0
    %2097 = vmatprep.subr.mxu0 0.0
    %2098 = vmatpush1.msra.mxu0 0.0
    %2099 = vmatprep.subr.mxu0 0.0
    %2100 = vmatpush1.msra.mxu0 0.0
    %2101 = vmatprep.subr.mxu0 0.0
    %2102 = vmatpush1.msra.mxu0 0.0
    %2103 = vmatprep.subr.mxu0 0.0
    %2104 = vmatpush1.msra.mxu0 0.0
    %2105 = vmatprep.subr.mxu0 0.0
    %2106 = vmatpush1.msra.mxu0 0.0
    %2107 = vmatprep.subr.mxu0 0.0
    %2108 = vmatpush1.msra.mxu0 0.0
    %2109 = vmatprep.subr.mxu0 0.0
    %2110 = vmatpush1.msra.mxu0 0.0
    %2111 = vmatprep.subr.mxu0 0.0
    %2112 = vmatpush1.msra.mxu0 0.0
    %2113 = vmatprep.subr.mxu0 0.0
    %2114 = vmatpush1.msra.mxu0 0.0
    %2115 = vmatprep.mubr.f32.mxu0 0.0
    %2116 = vmatmul.mubr.f32.gmra.mrb[0].mxu0 %v2049
    %v2117 = vpop.f32.mrb[0].mxu0
    %v2118 = vadd.f32 0.0, %v2117
    %v2119 = vpop.f32.mrb[0].mxu0
    %2120 = vdwg.mxu0
    %v2121 = vadd.f32 %v2045, %v2118
    %v2122 = vxor.u32 %v2121, 2147483648
    %v2123 = vmul.f32 %v2122, 1.442695
    %v2124 = vpow.pop %v2123
    %v2125 = vadd.f32 %v2124, 1.0
    %v2126 = vrcp.pop %v2125
    %v2127 = vmul.f32 1.0, %v2126
    %v2128 = vadd.f32 %v2118, %v790
    %2130 = vrot.lane.b32.xlu0 %v2128, 112
    %v2131 = vpop.permute.xlu0 %2130
    %v2133 = vmul.f32 %v2127, %v2131
    %2135 = vrot.lane.b32.xlu0 %v2133, 16
    %v2136 = vpop.permute.xlu0 %2135
    %v2138 = vadd.f32 %v2045, %v2136
    %v2139 = vtanh.pop %v2138
    %v2140 = vsub.f32 %v2039, %v2139
    %2142 = vrot.lane.b32.xlu0 %v2140, 120
    %v2143 = vpop.permute.xlu0 %2142
    %v2145 = vmul.f32 %v2127, %v2143
    %2147 = vrot.lane.b32.xlu0 %v2145, 8
    %v2148 = vpop.permute.xlu0 %2147
    %v2150 = vadd.f32 %v2139, %v2148
    %s2151 = sld [smem:[#allocation5 + $0xc]]
    %v2152 = vstv %s2151
    %v2153 = vmul.f32 %v2150, %v2152
    %v2154 = vadd.f32 %v2043, %v2153
    %s2155 = scalar_lea.vmem [#allocation2], 104
    %v2156 = vld [vmem:[%s2155] sm:$0xff]
    %2158 = vrot.lane.b32.xlu0 %v2150, 112
    %v2159 = vpop.permute.xlu0 %2158
    %v2160 = vsel %vm703, %v2159, 0
    %2162 = vmatprep.subr.mxu0 0.0
    %2163 = vmatpush1.msra.mxu0 %v699
    %2164 = vmatprep.subr.mxu0 0.0
    %2165 = vmatpush1.msra.mxu0 0.0
    %2166 = vmatprep.subr.mxu0 0.0
    %2167 = vmatpush1.msra.mxu0 0.0
    %2168 = vmatprep.subr.mxu0 0.0
    %2169 = vmatpush1.msra.mxu0 0.0
    %2170 = vmatprep.subr.mxu0 0.0
    %2171 = vmatpush1.msra.mxu0 0.0
    %2172 = vmatprep.subr.mxu0 0.0
    %2173 = vmatpush1.msra.mxu0 0.0
    %2174 = vmatprep.subr.mxu0 0.0
    %2175 = vmatpush1.msra.mxu0 0.0
    %2176 = vmatprep.subr.mxu0 0.0
    %2177 = vmatpush1.msra.mxu0 0.0
    %2178 = vmatprep.subr.mxu0 0.0
    %2179 = vmatpush1.msra.mxu0 0.0
    %2180 = vmatprep.subr.mxu0 0.0
    %2181 = vmatpush1.msra.mxu0 0.0
    %2182 = vmatprep.subr.mxu0 0.0
    %2183 = vmatpush1.msra.mxu0 0.0
    %2184 = vmatprep.subr.mxu0 0.0
    %2185 = vmatpush1.msra.mxu0 0.0
    %2186 = vmatprep.subr.mxu0 0.0
    %2187 = vmatpush1.msra.mxu0 0.0
    %2188 = vmatprep.subr.mxu0 0.0
    %2189 = vmatpush1.msra.mxu0 0.0
    %2190 = vmatprep.subr.mxu0 0.0
    %2191 = vmatpush1.msra.mxu0 0.0
    %2192 = vmatprep.subr.mxu0 0.0
    %2193 = vmatpush1.msra.mxu0 0.0
    %2194 = vmatprep.subr.mxu0 0.0
    %2195 = vmatpush1.msra.mxu0 0.0
    %2196 = vmatprep.subr.mxu0 0.0
    %2197 = vmatpush1.msra.mxu0 0.0
    %2198 = vmatprep.subr.mxu0 0.0
    %2199 = vmatpush1.msra.mxu0 0.0
    %2200 = vmatprep.subr.mxu0 0.0
    %2201 = vmatpush1.msra.mxu0 0.0
    %2202 = vmatprep.subr.mxu0 0.0
    %2203 = vmatpush1.msra.mxu0 0.0
    %2204 = vmatprep.subr.mxu0 0.0
    %2205 = vmatpush1.msra.mxu0 0.0
    %2206 = vmatprep.subr.mxu0 0.0
    %2207 = vmatpush1.msra.mxu0 0.0
    %2208 = vmatprep.subr.mxu0 0.0
    %2209 = vmatpush1.msra.mxu0 0.0
    %2210 = vmatprep.subr.mxu0 0.0
    %2211 = vmatpush1.msra.mxu0 0.0
    %2212 = vmatprep.subr.mxu0 0.0
    %2213 = vmatpush1.msra.mxu0 0.0
    %2214 = vmatprep.subr.mxu0 0.0
    %2215 = vmatpush1.msra.mxu0 0.0
    %2216 = vmatprep.subr.mxu0 0.0
    %2217 = vmatpush1.msra.mxu0 0.0
    %2218 = vmatprep.subr.mxu0 0.0
    %2219 = vmatpush1.msra.mxu0 0.0
    %2220 = vmatprep.subr.mxu0 0.0
    %2221 = vmatpush1.msra.mxu0 0.0
    %2222 = vmatprep.subr.mxu0 0.0
    %2223 = vmatpush1.msra.mxu0 0.0
    %2224 = vmatprep.subr.mxu0 0.0
    %2225 = vmatpush1.msra.mxu0 0.0
    %2226 = vmatprep.mubr.f32.mxu0 0.0
    %2227 = vmatmul.mubr.f32.gmra.mrb[0].mxu0 %v2160
    %v2228 = vpop.f32.mrb[0].mxu0
    %v2229 = vadd.f32 0.0, %v2228
    %v2230 = vpop.f32.mrb[0].mxu0
    %2231 = vdwg.mxu0
    %v2232 = vadd.f32 %v2156, %v2229
    %v2233 = vxor.u32 %v2232, 2147483648
    %v2234 = vmul.f32 %v2233, 1.442695
    %v2235 = vpow.pop %v2234
    %v2236 = vadd.f32 %v2235, 1.0
    %v2237 = vrcp.pop %v2236
    %v2238 = vmul.f32 1.0, %v2237
    %v2239 = vadd.f32 %v2229, %v790
    %2241 = vrot.lane.b32.xlu0 %v2239, 112
    %v2242 = vpop.permute.xlu0 %2241
    %v2244 = vmul.f32 %v2238, %v2242
    %2246 = vrot.lane.b32.xlu0 %v2244, 16
    %v2247 = vpop.permute.xlu0 %2246
    %v2249 = vadd.f32 %v2156, %v2247
    %v2250 = vtanh.pop %v2249
    %v2251 = vsub.f32 %v2150, %v2250
    %2253 = vrot.lane.b32.xlu0 %v2251, 120
    %v2254 = vpop.permute.xlu0 %2253
    %v2256 = vmul.f32 %v2238, %v2254
    %2258 = vrot.lane.b32.xlu0 %v2256, 8
    %v2259 = vpop.permute.xlu0 %2258
    %v2261 = vadd.f32 %v2250, %v2259
    %s2262 = sld [smem:[#allocation5 + $0xd]]
    %v2263 = vstv %s2262
    %v2264 = vmul.f32 %v2261, %v2263
    %v2265 = vadd.f32 %v2154, %v2264
    %s2266 = scalar_lea.vmem [#allocation2], 112
    %v2267 = vld [vmem:[%s2266] sm:$0xff]
    %2269 = vrot.lane.b32.xlu0 %v2261, 112
    %v2270 = vpop.permute.xlu0 %2269
    %v2271 = vsel %vm703, %v2270, 0
    %2273 = vmatprep.subr.mxu0 0.0
    %2274 = vmatpush1.msra.mxu0 %v699
    %2275 = vmatprep.subr.mxu0 0.0
    %2276 = vmatpush1.msra.mxu0 0.0
    %2277 = vmatprep.subr.mxu0 0.0
    %2278 = vmatpush1.msra.mxu0 0.0
    %2279 = vmatprep.subr.mxu0 0.0
    %2280 = vmatpush1.msra.mxu0 0.0
    %2281 = vmatprep.subr.mxu0 0.0
    %2282 = vmatpush1.msra.mxu0 0.0
    %2283 = vmatprep.subr.mxu0 0.0
    %2284 = vmatpush1.msra.mxu0 0.0
    %2285 = vmatprep.subr.mxu0 0.0
    %2286 = vmatpush1.msra.mxu0 0.0
    %2287 = vmatprep.subr.mxu0 0.0
    %2288 = vmatpush1.msra.mxu0 0.0
    %2289 = vmatprep.subr.mxu0 0.0
    %2290 = vmatpush1.msra.mxu0 0.0
    %2291 = vmatprep.subr.mxu0 0.0
    %2292 = vmatpush1.msra.mxu0 0.0
    %2293 = vmatprep.subr.mxu0 0.0
    %2294 = vmatpush1.msra.mxu0 0.0
    %2295 = vmatprep.subr.mxu0 0.0
    %2296 = vmatpush1.msra.mxu0 0.0
    %2297 = vmatprep.subr.mxu0 0.0
    %2298 = vmatpush1.msra.mxu0 0.0
    %2299 = vmatprep.subr.mxu0 0.0
    %2300 = vmatpush1.msra.mxu0 0.0
    %2301 = vmatprep.subr.mxu0 0.0
    %2302 = vmatpush1.msra.mxu0 0.0
    %2303 = vmatprep.subr.mxu0 0.0
    %2304 = vmatpush1.msra.mxu0 0.0
    %2305 = vmatprep.subr.mxu0 0.0
    %2306 = vmatpush1.msra.mxu0 0.0
    %2307 = vmatprep.subr.mxu0 0.0
    %2308 = vmatpush1.msra.mxu0 0.0
    %2309 = vmatprep.subr.mxu0 0.0
    %2310 = vmatpush1.msra.mxu0 0.0
    %2311 = vmatprep.subr.mxu0 0.0
    %2312 = vmatpush1.msra.mxu0 0.0
    %2313 = vmatprep.subr.mxu0 0.0
    %2314 = vmatpush1.msra.mxu0 0.0
    %2315 = vmatprep.subr.mxu0 0.0
    %2316 = vmatpush1.msra.mxu0 0.0
    %2317 = vmatprep.subr.mxu0 0.0
    %2318 = vmatpush1.msra.mxu0 0.0
    %2319 = vmatprep.subr.mxu0 0.0
    %2320 = vmatpush1.msra.mxu0 0.0
    %2321 = vmatprep.subr.mxu0 0.0
    %2322 = vmatpush1.msra.mxu0 0.0
    %2323 = vmatprep.subr.mxu0 0.0
    %2324 = vmatpush1.msra.mxu0 0.0
    %2325 = vmatprep.subr.mxu0 0.0
    %2326 = vmatpush1.msra.mxu0 0.0
    %2327 = vmatprep.subr.mxu0 0.0
    %2328 = vmatpush1.msra.mxu0 0.0
    %2329 = vmatprep.subr.mxu0 0.0
    %2330 = vmatpush1.msra.mxu0 0.0
    %2331 = vmatprep.subr.mxu0 0.0
    %2332 = vmatpush1.msra.mxu0 0.0
    %2333 = vmatprep.subr.mxu0 0.0
    %2334 = vmatpush1.msra.mxu0 0.0
    %2335 = vmatprep.subr.mxu0 0.0
    %2336 = vmatpush1.msra.mxu0 0.0
    %2337 = vmatprep.mubr.f32.mxu0 0.0
    %2338 = vmatmul.mubr.f32.gmra.mrb[0].mxu0 %v2271
    %v2339 = vpop.f32.mrb[0].mxu0
    %v2340 = vadd.f32 0.0, %v2339
    %v2341 = vpop.f32.mrb[0].mxu0
    %2342 = vdwg.mxu0
    %v2343 = vadd.f32 %v2267, %v2340
    %v2344 = vxor.u32 %v2343, 2147483648
    %v2345 = vmul.f32 %v2344, 1.442695
    %v2346 = vpow.pop %v2345
    %v2347 = vadd.f32 %v2346, 1.0
    %v2348 = vrcp.pop %v2347
    %v2349 = vmul.f32 1.0, %v2348
    %v2350 = vadd.f32 %v2340, %v790
    %2352 = vrot.lane.b32.xlu0 %v2350, 112
    %v2353 = vpop.permute.xlu0 %2352
    %v2355 = vmul.f32 %v2349, %v2353
    %2357 = vrot.lane.b32.xlu0 %v2355, 16
    %v2358 = vpop.permute.xlu0 %2357
    %v2360 = vadd.f32 %v2267, %v2358
    %v2361 = vtanh.pop %v2360
    %v2362 = vsub.f32 %v2261, %v2361
    %2364 = vrot.lane.b32.xlu0 %v2362, 120
    %v2365 = vpop.permute.xlu0 %2364
    %v2367 = vmul.f32 %v2349, %v2365
    %2369 = vrot.lane.b32.xlu0 %v2367, 8
    %v2370 = vpop.permute.xlu0 %2369
    %v2372 = vadd.f32 %v2361, %v2370
    %s2373 = sld [smem:[#allocation5 + $0xe]]
    %v2374 = vstv %s2373
    %v2375 = vmul.f32 %v2372, %v2374
    %v2376 = vadd.f32 %v2265, %v2375
    %s2377 = scalar_lea.vmem [#allocation2], 120
    %v2378 = vld [vmem:[%s2377] sm:$0xff]
    %2380 = vrot.lane.b32.xlu0 %v2372, 112
    %v2381 = vpop.permute.xlu0 %2380
    %v2382 = vsel %vm703, %v2381, 0
    %2384 = vmatprep.subr.mxu0 0.0
    %2385 = vmatpush1.msra.mxu0 %v699
    %2386 = vmatprep.subr.mxu0 0.0
    %2387 = vmatpush1.msra.mxu0 0.0
    %2388 = vmatprep.subr.mxu0 0.0
    %2389 = vmatpush1.msra.mxu0 0.0
    %2390 = vmatprep.subr.mxu0 0.0
    %2391 = vmatpush1.msra.mxu0 0.0
    %2392 = vmatprep.subr.mxu0 0.0
    %2393 = vmatpush1.msra.mxu0 0.0
    %2394 = vmatprep.subr.mxu0 0.0
    %2395 = vmatpush1.msra.mxu0 0.0
    %2396 = vmatprep.subr.mxu0 0.0
    %2397 = vmatpush1.msra.mxu0 0.0
    %2398 = vmatprep.subr.mxu0 0.0
    %2399 = vmatpush1.msra.mxu0 0.0
    %2400 = vmatprep.subr.mxu0 0.0
    %2401 = vmatpush1.msra.mxu0 0.0
    %2402 = vmatprep.subr.mxu0 0.0
    %2403 = vmatpush1.msra.mxu0 0.0
    %2404 = vmatprep.subr.mxu0 0.0
    %2405 = vmatpush1.msra.mxu0 0.0
    %2406 = vmatprep.subr.mxu0 0.0
    %2407 = vmatpush1.msra.mxu0 0.0
    %2408 = vmatprep.subr.mxu0 0.0
    %2409 = vmatpush1.msra.mxu0 0.0
    %2410 = vmatprep.subr.mxu0 0.0
    %2411 = vmatpush1.msra.mxu0 0.0
    %2412 = vmatprep.subr.mxu0 0.0
    %2413 = vmatpush1.msra.mxu0 0.0
    %2414 = vmatprep.subr.mxu0 0.0
    %2415 = vmatpush1.msra.mxu0 0.0
    %2416 = vmatprep.subr.mxu0 0.0
    %2417 = vmatpush1.msra.mxu0 0.0
    %2418 = vmatprep.subr.mxu0 0.0
    %2419 = vmatpush1.msra.mxu0 0.0
    %2420 = vmatprep.subr.mxu0 0.0
    %2421 = vmatpush1.msra.mxu0 0.0
    %2422 = vmatprep.subr.mxu0 0.0
    %2423 = vmatpush1.msra.mxu0 0.0
    %2424 = vmatprep.subr.mxu0 0.0
    %2425 = vmatpush1.msra.mxu0 0.0
    %2426 = vmatprep.subr.mxu0 0.0
    %2427 = vmatpush1.msra.mxu0 0.0
    %2428 = vmatprep.subr.mxu0 0.0
    %2429 = vmatpush1.msra.mxu0 0.0
    %2430 = vmatprep.subr.mxu0 0.0
    %2431 = vmatpush1.msra.mxu0 0.0
    %2432 = vmatprep.subr.mxu0 0.0
    %2433 = vmatpush1.msra.mxu0 0.0
    %2434 = vmatprep.subr.mxu0 0.0
    %2435 = vmatpush1.msra.mxu0 0.0
    %2436 = vmatprep.subr.mxu0 0.0
    %2437 = vmatpush1.msra.mxu0 0.0
    %2438 = vmatprep.subr.mxu0 0.0
    %2439 = vmatpush1.msra.mxu0 0.0
    %2440 = vmatprep.subr.mxu0 0.0
    %2441 = vmatpush1.msra.mxu0 0.0
    %2442 = vmatprep.subr.mxu0 0.0
    %2443 = vmatpush1.msra.mxu0 0.0
    %2444 = vmatprep.subr.mxu0 0.0
    %2445 = vmatpush1.msra.mxu0 0.0
    %2446 = vmatprep.subr.mxu0 0.0
    %2447 = vmatpush1.msra.mxu0 0.0
    %2448 = vmatprep.mubr.f32.mxu0 0.0
    %2449 = vmatmul.mubr.f32.gmra.mrb[0].mxu0 %v2382
    %v2450 = vpop.f32.mrb[0].mxu0
    %v2451 = vadd.f32 0.0, %v2450
    %v2452 = vpop.f32.mrb[0].mxu0
    %2453 = vdwg.mxu0
    %v2454 = vadd.f32 %v2378, %v2451
    %v2455 = vxor.u32 %v2454, 2147483648
    %v2456 = vmul.f32 %v2455, 1.442695
    %v2457 = vpow.pop %v2456
    %v2458 = vadd.f32 %v2457, 1.0
    %v2459 = vrcp.pop %v2458
    %v2460 = vmul.f32 1.0, %v2459
    %v2461 = vadd.f32 %v2451, %v790
    %2463 = vrot.lane.b32.xlu0 %v2461, 112
    %v2464 = vpop.permute.xlu0 %2463
    %v2466 = vmul.f32 %v2460, %v2464
    %2468 = vrot.lane.b32.xlu0 %v2466, 16
    %v2469 = vpop.permute.xlu0 %2468
    %v2471 = vadd.f32 %v2378, %v2469
    %v2472 = vtanh.pop %v2471
    %v2473 = vsub.f32 %v2372, %v2472
    %2475 = vrot.lane.b32.xlu0 %v2473, 120
    %v2476 = vpop.permute.xlu0 %2475
    %v2478 = vmul.f32 %v2460, %v2476
    %2480 = vrot.lane.b32.xlu0 %v2478, 8
    %v2481 = vpop.permute.xlu0 %2480
    %v2483 = vadd.f32 %v2472, %v2481
    %s2484 = sld [smem:[#allocation5 + $0xf]]
    %v2485 = vstv %s2484
    %v2486 = vmul.f32 %v2483, %v2485
    %v2487 = vadd.f32 %v2376, %v2486
    %s2488 = scalar_lea.vmem [#allocation2], 128
    %v2489 = vld [vmem:[%s2488] sm:$0xff]
    %2491 = vrot.lane.b32.xlu0 %v2483, 112
    %v2492 = vpop.permute.xlu0 %2491
    %v2493 = vsel %vm703, %v2492, 0
    %2495 = vmatprep.subr.mxu0 0.0
    %2496 = vmatpush1.msra.mxu0 %v699
    %2497 = vmatprep.subr.mxu0 0.0
    %2498 = vmatpush1.msra.mxu0 0.0
    %2499 = vmatprep.subr.mxu0 0.0
    %2500 = vmatpush1.msra.mxu0 0.0
    %2501 = vmatprep.subr.mxu0 0.0
    %2502 = vmatpush1.msra.mxu0 0.0
    %2503 = vmatprep.subr.mxu0 0.0
    %2504 = vmatpush1.msra.mxu0 0.0
    %2505 = vmatprep.subr.mxu0 0.0
    %2506 = vmatpush1.msra.mxu0 0.0
    %2507 = vmatprep.subr.mxu0 0.0
    %2508 = vmatpush1.msra.mxu0 0.0
    %2509 = vmatprep.subr.mxu0 0.0
    %2510 = vmatpush1.msra.mxu0 0.0
    %2511 = vmatprep.subr.mxu0 0.0
    %2512 = vmatpush1.msra.mxu0 0.0
    %2513 = vmatprep.subr.mxu0 0.0
    %2514 = vmatpush1.msra.mxu0 0.0
    %2515 = vmatprep.subr.mxu0 0.0
    %2516 = vmatpush1.msra.mxu0 0.0
    %2517 = vmatprep.subr.mxu0 0.0
    %2518 = vmatpush1.msra.mxu0 0.0
    %2519 = vmatprep.subr.mxu0 0.0
    %2520 = vmatpush1.msra.mxu0 0.0
    %2521 = vmatprep.subr.mxu0 0.0
    %2522 = vmatpush1.msra.mxu0 0.0
    %2523 = vmatprep.subr.mxu0 0.0
    %2524 = vmatpush1.msra.mxu0 0.0
    %2525 = vmatprep.subr.mxu0 0.0
    %2526 = vmatpush1.msra.mxu0 0.0
    %2527 = vmatprep.subr.mxu0 0.0
    %2528 = vmatpush1.msra.mxu0 0.0
    %2529 = vmatprep.subr.mxu0 0.0
    %2530 = vmatpush1.msra.mxu0 0.0
    %2531 = vmatprep.subr.mxu0 0.0
    %2532 = vmatpush1.msra.mxu0 0.0
    %2533 = vmatprep.subr.mxu0 0.0
    %2534 = vmatpush1.msra.mxu0 0.0
    %2535 = vmatprep.subr.mxu0 0.0
    %2536 = vmatpush1.msra.mxu0 0.0
    %2537 = vmatprep.subr.mxu0 0.0
    %2538 = vmatpush1.msra.mxu0 0.0
    %2539 = vmatprep.subr.mxu0 0.0
    %2540 = vmatpush1.msra.mxu0 0.0
    %2541 = vmatprep.subr.mxu0 0.0
    %2542 = vmatpush1.msra.mxu0 0.0
    %2543 = vmatprep.subr.mxu0 0.0
    %2544 = vmatpush1.msra.mxu0 0.0
    %2545 = vmatprep.subr.mxu0 0.0
    %2546 = vmatpush1.msra.mxu0 0.0
    %2547 = vmatprep.subr.mxu0 0.0
    %2548 = vmatpush1.msra.mxu0 0.0
    %2549 = vmatprep.subr.mxu0 0.0
    %2550 = vmatpush1.msra.mxu0 0.0
    %2551 = vmatprep.subr.mxu0 0.0
    %2552 = vmatpush1.msra.mxu0 0.0
    %2553 = vmatprep.subr.mxu0 0.0
    %2554 = vmatpush1.msra.mxu0 0.0
    %2555 = vmatprep.subr.mxu0 0.0
    %2556 = vmatpush1.msra.mxu0 0.0
    %2557 = vmatprep.subr.mxu0 0.0
    %2558 = vmatpush1.msra.mxu0 0.0
    %2559 = vmatprep.mubr.f32.mxu0 0.0
    %2560 = vmatmul.mubr.f32.gmra.mrb[0].mxu0 %v2493
    %v2561 = vpop.f32.mrb[0].mxu0
    %v2562 = vadd.f32 0.0, %v2561
    %v2563 = vpop.f32.mrb[0].mxu0
    %2564 = vdwg.mxu0
    %v2565 = vadd.f32 %v2489, %v2562
    %v2566 = vxor.u32 %v2565, 2147483648
    %v2567 = vmul.f32 %v2566, 1.442695
    %v2568 = vpow.pop %v2567
    %v2569 = vadd.f32 %v2568, 1.0
    %v2570 = vrcp.pop %v2569
    %v2571 = vmul.f32 1.0, %v2570
    %v2572 = vadd.f32 %v2562, %v790
    %2574 = vrot.lane.b32.xlu0 %v2572, 112
    %v2575 = vpop.permute.xlu0 %2574
    %v2577 = vmul.f32 %v2571, %v2575
    %2579 = vrot.lane.b32.xlu0 %v2577, 16
    %v2580 = vpop.permute.xlu0 %2579
    %v2582 = vadd.f32 %v2489, %v2580
    %v2583 = vtanh.pop %v2582
    %v2584 = vsub.f32 %v2483, %v2583
    %2586 = vrot.lane.b32.xlu0 %v2584, 120
    %v2587 = vpop.permute.xlu0 %2586
    %v2589 = vmul.f32 %v2571, %v2587
    %2591 = vrot.lane.b32.xlu0 %v2589, 8
    %v2592 = vpop.permute.xlu0 %2591
    %v2594 = vadd.f32 %v2583, %v2592
    %s2595 = sld [smem:[#allocation5 + $0x10]]
    %v2596 = vstv %s2595
    %v2597 = vmul.f32 %v2594, %v2596
    %v2598 = vadd.f32 %v2487, %v2597
    %s2599 = scalar_lea.vmem [#allocation2], 136
    %v2600 = vld [vmem:[%s2599] sm:$0xff]
    %2602 = vrot.lane.b32.xlu0 %v2594, 112
    %v2603 = vpop.permute.xlu0 %2602
    %v2604 = vsel %vm703, %v2603, 0
    %2606 = vmatprep.subr.mxu0 0.0
    %2607 = vmatpush1.msra.mxu0 %v699
    %2608 = vmatprep.subr.mxu0 0.0
    %2609 = vmatpush1.msra.mxu0 0.0
    %2610 = vmatprep.subr.mxu0 0.0
    %2611 = vmatpush1.msra.mxu0 0.0
    %2612 = vmatprep.subr.mxu0 0.0
    %2613 = vmatpush1.msra.mxu0 0.0
    %2614 = vmatprep.subr.mxu0 0.0
    %2615 = vmatpush1.msra.mxu0 0.0
    %2616 = vmatprep.subr.mxu0 0.0
    %2617 = vmatpush1.msra.mxu0 0.0
    %2618 = vmatprep.subr.mxu0 0.0
    %2619 = vmatpush1.msra.mxu0 0.0
    %2620 = vmatprep.subr.mxu0 0.0
    %2621 = vmatpush1.msra.mxu0 0.0
    %2622 = vmatprep.subr.mxu0 0.0
    %2623 = vmatpush1.msra.mxu0 0.0
    %2624 = vmatprep.subr.mxu0 0.0
    %2625 = vmatpush1.msra.mxu0 0.0
    %2626 = vmatprep.subr.mxu0 0.0
    %2627 = vmatpush1.msra.mxu0 0.0
    %2628 = vmatprep.subr.mxu0 0.0
    %2629 = vmatpush1.msra.mxu0 0.0
    %2630 = vmatprep.subr.mxu0 0.0
    %2631 = vmatpush1.msra.mxu0 0.0
    %2632 = vmatprep.subr.mxu0 0.0
    %2633 = vmatpush1.msra.mxu0 0.0
    %2634 = vmatprep.subr.mxu0 0.0
    %2635 = vmatpush1.msra.mxu0 0.0
    %2636 = vmatprep.subr.mxu0 0.0
    %2637 = vmatpush1.msra.mxu0 0.0
    %2638 = vmatprep.subr.mxu0 0.0
    %2639 = vmatpush1.msra.mxu0 0.0
    %2640 = vmatprep.subr.mxu0 0.0
    %2641 = vmatpush1.msra.mxu0 0.0
    %2642 = vmatprep.subr.mxu0 0.0
    %2643 = vmatpush1.msra.mxu0 0.0
    %2644 = vmatprep.subr.mxu0 0.0
    %2645 = vmatpush1.msra.mxu0 0.0
    %2646 = vmatprep.subr.mxu0 0.0
    %2647 = vmatpush1.msra.mxu0 0.0
    %2648 = vmatprep.subr.mxu0 0.0
    %2649 = vmatpush1.msra.mxu0 0.0
    %2650 = vmatprep.subr.mxu0 0.0
    %2651 = vmatpush1.msra.mxu0 0.0
    %2652 = vmatprep.subr.mxu0 0.0
    %2653 = vmatpush1.msra.mxu0 0.0
    %2654 = vmatprep.subr.mxu0 0.0
    %2655 = vmatpush1.msra.mxu0 0.0
    %2656 = vmatprep.subr.mxu0 0.0
    %2657 = vmatpush1.msra.mxu0 0.0
    %2658 = vmatprep.subr.mxu0 0.0
    %2659 = vmatpush1.msra.mxu0 0.0
    %2660 = vmatprep.subr.mxu0 0.0
    %2661 = vmatpush1.msra.mxu0 0.0
    %2662 = vmatprep.subr.mxu0 0.0
    %2663 = vmatpush1.msra.mxu0 0.0
    %2664 = vmatprep.subr.mxu0 0.0
    %2665 = vmatpush1.msra.mxu0 0.0
    %2666 = vmatprep.subr.mxu0 0.0
    %2667 = vmatpush1.msra.mxu0 0.0
    %2668 = vmatprep.subr.mxu0 0.0
    %2669 = vmatpush1.msra.mxu0 0.0
    %2670 = vmatprep.mubr.f32.mxu0 0.0
    %2671 = vmatmul.mubr.f32.gmra.mrb[0].mxu0 %v2604
    %v2672 = vpop.f32.mrb[0].mxu0
    %v2673 = vadd.f32 0.0, %v2672
    %v2674 = vpop.f32.mrb[0].mxu0
    %2675 = vdwg.mxu0
    %v2676 = vadd.f32 %v2600, %v2673
    %v2677 = vxor.u32 %v2676, 2147483648
    %v2678 = vmul.f32 %v2677, 1.442695
    %v2679 = vpow.pop %v2678
    %v2680 = vadd.f32 %v2679, 1.0
    %v2681 = vrcp.pop %v2680
    %v2682 = vmul.f32 1.0, %v2681
    %v2683 = vadd.f32 %v2673, %v790
    %2685 = vrot.lane.b32.xlu0 %v2683, 112
    %v2686 = vpop.permute.xlu0 %2685
    %v2688 = vmul.f32 %v2682, %v2686
    %2690 = vrot.lane.b32.xlu0 %v2688, 16
    %v2691 = vpop.permute.xlu0 %2690
    %v2693 = vadd.f32 %v2600, %v2691
    %v2694 = vtanh.pop %v2693
    %v2695 = vsub.f32 %v2594, %v2694
    %2697 = vrot.lane.b32.xlu0 %v2695, 120
    %v2698 = vpop.permute.xlu0 %2697
    %v2700 = vmul.f32 %v2682, %v2698
    %2702 = vrot.lane.b32.xlu0 %v2700, 8
    %v2703 = vpop.permute.xlu0 %2702
    %v2705 = vadd.f32 %v2694, %v2703
    %s2706 = sld [smem:[#allocation5 + $0x11]]
    %v2707 = vstv %s2706
    %v2708 = vmul.f32 %v2705, %v2707
    %v2709 = vadd.f32 %v2598, %v2708
    %s2710 = scalar_lea.vmem [#allocation2], 144
    %v2711 = vld [vmem:[%s2710] sm:$0xff]
    %2713 = vrot.lane.b32.xlu0 %v2705, 112
    %v2714 = vpop.permute.xlu0 %2713
    %v2715 = vsel %vm703, %v2714, 0
    %2717 = vmatprep.subr.mxu0 0.0
    %2718 = vmatpush1.msra.mxu0 %v699
    %2719 = vmatprep.subr.mxu0 0.0
    %2720 = vmatpush1.msra.mxu0 0.0
    %2721 = vmatprep.subr.mxu0 0.0
    %2722 = vmatpush1.msra.mxu0 0.0
    %2723 = vmatprep.subr.mxu0 0.0
    %2724 = vmatpush1.msra.mxu0 0.0
    %2725 = vmatprep.subr.mxu0 0.0
    %2726 = vmatpush1.msra.mxu0 0.0
    %2727 = vmatprep.subr.mxu0 0.0
    %2728 = vmatpush1.msra.mxu0 0.0
    %2729 = vmatprep.subr.mxu0 0.0
    %2730 = vmatpush1.msra.mxu0 0.0
    %2731 = vmatprep.subr.mxu0 0.0
    %2732 = vmatpush1.msra.mxu0 0.0
    %2733 = vmatprep.subr.mxu0 0.0
    %2734 = vmatpush1.msra.mxu0 0.0
    %2735 = vmatprep.subr.mxu0 0.0
    %2736 = vmatpush1.msra.mxu0 0.0
    %2737 = vmatprep.subr.mxu0 0.0
    %2738 = vmatpush1.msra.mxu0 0.0
    %2739 = vmatprep.subr.mxu0 0.0
    %2740 = vmatpush1.msra.mxu0 0.0
    %2741 = vmatprep.subr.mxu0 0.0
    %2742 = vmatpush1.msra.mxu0 0.0
    %2743 = vmatprep.subr.mxu0 0.0
    %2744 = vmatpush1.msra.mxu0 0.0
    %2745 = vmatprep.subr.mxu0 0.0
    %2746 = vmatpush1.msra.mxu0 0.0
    %2747 = vmatprep.subr.mxu0 0.0
    %2748 = vmatpush1.msra.mxu0 0.0
    %2749 = vmatprep.subr.mxu0 0.0
    %2750 = vmatpush1.msra.mxu0 0.0
    %2751 = vmatprep.subr.mxu0 0.0
    %2752 = vmatpush1.msra.mxu0 0.0
    %2753 = vmatprep.subr.mxu0 0.0
    %2754 = vmatpush1.msra.mxu0 0.0
    %2755 = vmatprep.subr.mxu0 0.0
    %2756 = vmatpush1.msra.mxu0 0.0
    %2757 = vmatprep.subr.mxu0 0.0
    %2758 = vmatpush1.msra.mxu0 0.0
    %2759 = vmatprep.subr.mxu0 0.0
    %2760 = vmatpush1.msra.mxu0 0.0
    %2761 = vmatprep.subr.mxu0 0.0
    %2762 = vmatpush1.msra.mxu0 0.0
    %2763 = vmatprep.subr.mxu0 0.0
    %2764 = vmatpush1.msra.mxu0 0.0
    %2765 = vmatprep.subr.mxu0 0.0
    %2766 = vmatpush1.msra.mxu0 0.0
    %2767 = vmatprep.subr.mxu0 0.0
    %2768 = vmatpush1.msra.mxu0 0.0
    %2769 = vmatprep.subr.mxu0 0.0
    %2770 = vmatpush1.msra.mxu0 0.0
    %2771 = vmatprep.subr.mxu0 0.0
    %2772 = vmatpush1.msra.mxu0 0.0
    %2773 = vmatprep.subr.mxu0 0.0
    %2774 = vmatpush1.msra.mxu0 0.0
    %2775 = vmatprep.subr.mxu0 0.0
    %2776 = vmatpush1.msra.mxu0 0.0
    %2777 = vmatprep.subr.mxu0 0.0
    %2778 = vmatpush1.msra.mxu0 0.0
    %2779 = vmatprep.subr.mxu0 0.0
    %2780 = vmatpush1.msra.mxu0 0.0
    %2781 = vmatprep.mubr.f32.mxu0 0.0
    %2782 = vmatmul.mubr.f32.gmra.mrb[0].mxu0 %v2715
    %v2783 = vpop.f32.mrb[0].mxu0
    %v2784 = vadd.f32 0.0, %v2783
    %v2785 = vpop.f32.mrb[0].mxu0
    %2786 = vdwg.mxu0
    %v2787 = vadd.f32 %v2711, %v2784
    %v2788 = vxor.u32 %v2787, 2147483648
    %v2789 = vmul.f32 %v2788, 1.442695
    %v2790 = vpow.pop %v2789
    %v2791 = vadd.f32 %v2790, 1.0
    %v2792 = vrcp.pop %v2791
    %v2793 = vmul.f32 1.0, %v2792
    %v2794 = vadd.f32 %v2784, %v790
    %2796 = vrot.lane.b32.xlu0 %v2794, 112
    %v2797 = vpop.permute.xlu0 %2796
    %v2799 = vmul.f32 %v2793, %v2797
    %2801 = vrot.lane.b32.xlu0 %v2799, 16
    %v2802 = vpop.permute.xlu0 %2801
    %v2804 = vadd.f32 %v2711, %v2802
    %v2805 = vtanh.pop %v2804
    %v2806 = vsub.f32 %v2705, %v2805
    %2808 = vrot.lane.b32.xlu0 %v2806, 120
    %v2809 = vpop.permute.xlu0 %2808
    %v2811 = vmul.f32 %v2793, %v2809
    %2813 = vrot.lane.b32.xlu0 %v2811, 8
    %v2814 = vpop.permute.xlu0 %2813
    %v2816 = vadd.f32 %v2805, %v2814
    %s2817 = sld [smem:[#allocation5 + $0x12]]
    %v2818 = vstv %s2817
    %v2819 = vmul.f32 %v2816, %v2818
    %v2820 = vadd.f32 %v2709, %v2819
    %s2821 = scalar_lea.vmem [#allocation2], 152
    %v2822 = vld [vmem:[%s2821] sm:$0xff]
    %2824 = vrot.lane.b32.xlu0 %v2816, 112
    %v2825 = vpop.permute.xlu0 %2824
    %v2826 = vsel %vm703, %v2825, 0
    %2828 = vmatprep.subr.mxu0 0.0
    %2829 = vmatpush1.msra.mxu0 %v699
    %2830 = vmatprep.subr.mxu0 0.0
    %2831 = vmatpush1.msra.mxu0 0.0
    %2832 = vmatprep.subr.mxu0 0.0
    %2833 = vmatpush1.msra.mxu0 0.0
    %2834 = vmatprep.subr.mxu0 0.0
    %2835 = vmatpush1.msra.mxu0 0.0
    %2836 = vmatprep.subr.mxu0 0.0
    %2837 = vmatpush1.msra.mxu0 0.0
    %2838 = vmatprep.subr.mxu0 0.0
    %2839 = vmatpush1.msra.mxu0 0.0
    %2840 = vmatprep.subr.mxu0 0.0
    %2841 = vmatpush1.msra.mxu0 0.0
    %2842 = vmatprep.subr.mxu0 0.0
    %2843 = vmatpush1.msra.mxu0 0.0
    %2844 = vmatprep.subr.mxu0 0.0
    %2845 = vmatpush1.msra.mxu0 0.0
    %2846 = vmatprep.subr.mxu0 0.0
    %2847 = vmatpush1.msra.mxu0 0.0
    %2848 = vmatprep.subr.mxu0 0.0
    %2849 = vmatpush1.msra.mxu0 0.0
    %2850 = vmatprep.subr.mxu0 0.0
    %2851 = vmatpush1.msra.mxu0 0.0
    %2852 = vmatprep.subr.mxu0 0.0
    %2853 = vmatpush1.msra.mxu0 0.0
    %2854 = vmatprep.subr.mxu0 0.0
    %2855 = vmatpush1.msra.mxu0 0.0
    %2856 = vmatprep.subr.mxu0 0.0
    %2857 = vmatpush1.msra.mxu0 0.0
    %2858 = vmatprep.subr.mxu0 0.0
    %2859 = vmatpush1.msra.mxu0 0.0
    %2860 = vmatprep.subr.mxu0 0.0
    %2861 = vmatpush1.msra.mxu0 0.0
    %2862 = vmatprep.subr.mxu0 0.0
    %2863 = vmatpush1.msra.mxu0 0.0
    %2864 = vmatprep.subr.mxu0 0.0
    %2865 = vmatpush1.msra.mxu0 0.0
    %2866 = vmatprep.subr.mxu0 0.0
    %2867 = vmatpush1.msra.mxu0 0.0
    %2868 = vmatprep.subr.mxu0 0.0
    %2869 = vmatpush1.msra.mxu0 0.0
    %2870 = vmatprep.subr.mxu0 0.0
    %2871 = vmatpush1.msra.mxu0 0.0
    %2872 = vmatprep.subr.mxu0 0.0
    %2873 = vmatpush1.msra.mxu0 0.0
    %2874 = vmatprep.subr.mxu0 0.0
    %2875 = vmatpush1.msra.mxu0 0.0
    %2876 = vmatprep.subr.mxu0 0.0
    %2877 = vmatpush1.msra.mxu0 0.0
    %2878 = vmatprep.subr.mxu0 0.0
    %2879 = vmatpush1.msra.mxu0 0.0
    %2880 = vmatprep.subr.mxu0 0.0
    %2881 = vmatpush1.msra.mxu0 0.0
    %2882 = vmatprep.subr.mxu0 0.0
    %2883 = vmatpush1.msra.mxu0 0.0
    %2884 = vmatprep.subr.mxu0 0.0
    %2885 = vmatpush1.msra.mxu0 0.0
    %2886 = vmatprep.subr.mxu0 0.0
    %2887 = vmatpush1.msra.mxu0 0.0
    %2888 = vmatprep.subr.mxu0 0.0
    %2889 = vmatpush1.msra.mxu0 0.0
    %2890 = vmatprep.subr.mxu0 0.0
    %2891 = vmatpush1.msra.mxu0 0.0
    %2892 = vmatprep.mubr.f32.mxu0 0.0
    %2893 = vmatmul.mubr.f32.gmra.mrb[0].mxu0 %v2826
    %v2894 = vpop.f32.mrb[0].mxu0
    %v2895 = vadd.f32 0.0, %v2894
    %v2896 = vpop.f32.mrb[0].mxu0
    %2897 = vdwg.mxu0
    %v2898 = vadd.f32 %v2822, %v2895
    %v2899 = vxor.u32 %v2898, 2147483648
    %v2900 = vmul.f32 %v2899, 1.442695
    %v2901 = vpow.pop %v2900
    %v2902 = vadd.f32 %v2901, 1.0
    %v2903 = vrcp.pop %v2902
    %v2904 = vmul.f32 1.0, %v2903
    %v2905 = vadd.f32 %v2895, %v790
    %2907 = vrot.lane.b32.xlu0 %v2905, 112
    %v2908 = vpop.permute.xlu0 %2907
    %v2910 = vmul.f32 %v2904, %v2908
    %2912 = vrot.lane.b32.xlu0 %v2910, 16
    %v2913 = vpop.permute.xlu0 %2912
    %v2915 = vadd.f32 %v2822, %v2913
    %v2916 = vtanh.pop %v2915
    %v2917 = vsub.f32 %v2816, %v2916
    %2919 = vrot.lane.b32.xlu0 %v2917, 120
    %v2920 = vpop.permute.xlu0 %2919
    %v2922 = vmul.f32 %v2904, %v2920
    %2924 = vrot.lane.b32.xlu0 %v2922, 8
    %v2925 = vpop.permute.xlu0 %2924
    %v2927 = vadd.f32 %v2916, %v2925
    %s2928 = sld [smem:[#allocation5 + $0x13]]
    %v2929 = vstv %s2928
    %v2930 = vmul.f32 %v2927, %v2929
    %v2931 = vadd.f32 %v2820, %v2930
    %s2932 = scalar_lea.vmem [#allocation2], 160
    %v2933 = vld [vmem:[%s2932] sm:$0xff]
    %2935 = vrot.lane.b32.xlu0 %v2927, 112
    %v2936 = vpop.permute.xlu0 %2935
    %v2937 = vsel %vm703, %v2936, 0
    %2939 = vmatprep.subr.mxu0 0.0
    %2940 = vmatpush1.msra.mxu0 %v699
    %2941 = vmatprep.subr.mxu0 0.0
    %2942 = vmatpush1.msra.mxu0 0.0
    %2943 = vmatprep.subr.mxu0 0.0
    %2944 = vmatpush1.msra.mxu0 0.0
    %2945 = vmatprep.subr.mxu0 0.0
    %2946 = vmatpush1.msra.mxu0 0.0
    %2947 = vmatprep.subr.mxu0 0.0
    %2948 = vmatpush1.msra.mxu0 0.0
    %2949 = vmatprep.subr.mxu0 0.0
    %2950 = vmatpush1.msra.mxu0 0.0
    %2951 = vmatprep.subr.mxu0 0.0
    %2952 = vmatpush1.msra.mxu0 0.0
    %2953 = vmatprep.subr.mxu0 0.0
    %2954 = vmatpush1.msra.mxu0 0.0
    %2955 = vmatprep.subr.mxu0 0.0
    %2956 = vmatpush1.msra.mxu0 0.0
    %2957 = vmatprep.subr.mxu0 0.0
    %2958 = vmatpush1.msra.mxu0 0.0
    %2959 = vmatprep.subr.mxu0 0.0
    %2960 = vmatpush1.msra.mxu0 0.0
    %2961 = vmatprep.subr.mxu0 0.0
    %2962 = vmatpush1.msra.mxu0 0.0
    %2963 = vmatprep.subr.mxu0 0.0
    %2964 = vmatpush1.msra.mxu0 0.0
    %2965 = vmatprep.subr.mxu0 0.0
    %2966 = vmatpush1.msra.mxu0 0.0
    %2967 = vmatprep.subr.mxu0 0.0
    %2968 = vmatpush1.msra.mxu0 0.0
    %2969 = vmatprep.subr.mxu0 0.0
    %2970 = vmatpush1.msra.mxu0 0.0
    %2971 = vmatprep.subr.mxu0 0.0
    %2972 = vmatpush1.msra.mxu0 0.0
    %2973 = vmatprep.subr.mxu0 0.0
    %2974 = vmatpush1.msra.mxu0 0.0
    %2975 = vmatprep.subr.mxu0 0.0
    %2976 = vmatpush1.msra.mxu0 0.0
    %2977 = vmatprep.subr.mxu0 0.0
    %2978 = vmatpush1.msra.mxu0 0.0
    %2979 = vmatprep.subr.mxu0 0.0
    %2980 = vmatpush1.msra.mxu0 0.0
    %2981 = vmatprep.subr.mxu0 0.0
    %2982 = vmatpush1.msra.mxu0 0.0
    %2983 = vmatprep.subr.mxu0 0.0
    %2984 = vmatpush1.msra.mxu0 0.0
    %2985 = vmatprep.subr.mxu0 0.0
    %2986 = vmatpush1.msra.mxu0 0.0
    %2987 = vmatprep.subr.mxu0 0.0
    %2988 = vmatpush1.msra.mxu0 0.0
    %2989 = vmatprep.subr.mxu0 0.0
    %2990 = vmatpush1.msra.mxu0 0.0
    %2991 = vmatprep.subr.mxu0 0.0
    %2992 = vmatpush1.msra.mxu0 0.0
    %2993 = vmatprep.subr.mxu0 0.0
    %2994 = vmatpush1.msra.mxu0 0.0
    %2995 = vmatprep.subr.mxu0 0.0
    %2996 = vmatpush1.msra.mxu0 0.0
    %2997 = vmatprep.subr.mxu0 0.0
    %2998 = vmatpush1.msra.mxu0 0.0
    %2999 = vmatprep.subr.mxu0 0.0
    %3000 = vmatpush1.msra.mxu0 0.0
    %3001 = vmatprep.subr.mxu0 0.0
    %3002 = vmatpush1.msra.mxu0 0.0
    %3003 = vmatprep.mubr.f32.mxu0 0.0
    %3004 = vmatmul.mubr.f32.gmra.mrb[0].mxu0 %v2937
    %v3005 = vpop.f32.mrb[0].mxu0
    %v3006 = vadd.f32 0.0, %v3005
    %v3007 = vpop.f32.mrb[0].mxu0
    %3008 = vdwg.mxu0
    %v3009 = vadd.f32 %v2933, %v3006
    %v3010 = vxor.u32 %v3009, 2147483648
    %v3011 = vmul.f32 %v3010, 1.442695
    %v3012 = vpow.pop %v3011
    %v3013 = vadd.f32 %v3012, 1.0
    %v3014 = vrcp.pop %v3013
    %v3015 = vmul.f32 1.0, %v3014
    %v3016 = vadd.f32 %v3006, %v790
    %3018 = vrot.lane.b32.xlu0 %v3016, 112
    %v3019 = vpop.permute.xlu0 %3018
    %v3021 = vmul.f32 %v3015, %v3019
    %3023 = vrot.lane.b32.xlu0 %v3021, 16
    %v3024 = vpop.permute.xlu0 %3023
    %v3026 = vadd.f32 %v2933, %v3024
    %v3027 = vtanh.pop %v3026
    %v3028 = vsub.f32 %v2927, %v3027
    %3030 = vrot.lane.b32.xlu0 %v3028, 120
    %v3031 = vpop.permute.xlu0 %3030
    %v3033 = vmul.f32 %v3015, %v3031
    %3035 = vrot.lane.b32.xlu0 %v3033, 8
    %v3036 = vpop.permute.xlu0 %3035
    %v3038 = vadd.f32 %v3027, %v3036
    %s3039 = sld [smem:[#allocation5 + $0x14]]
    %v3040 = vstv %s3039
    %v3041 = vmul.f32 %v3038, %v3040
    %v3042 = vadd.f32 %v2931, %v3041
    %s3043 = scalar_lea.vmem [#allocation2], 168
    %v3044 = vld [vmem:[%s3043] sm:$0xff]
    %3046 = vrot.lane.b32.xlu0 %v3038, 112
    %v3047 = vpop.permute.xlu0 %3046
    %v3048 = vsel %vm703, %v3047, 0
    %3050 = vmatprep.subr.mxu0 0.0
    %3051 = vmatpush1.msra.mxu0 %v699
    %3052 = vmatprep.subr.mxu0 0.0
    %3053 = vmatpush1.msra.mxu0 0.0
    %3054 = vmatprep.subr.mxu0 0.0
    %3055 = vmatpush1.msra.mxu0 0.0
    %3056 = vmatprep.subr.mxu0 0.0
    %3057 = vmatpush1.msra.mxu0 0.0
    %3058 = vmatprep.subr.mxu0 0.0
    %3059 = vmatpush1.msra.mxu0 0.0
    %3060 = vmatprep.subr.mxu0 0.0
    %3061 = vmatpush1.msra.mxu0 0.0
    %3062 = vmatprep.subr.mxu0 0.0
    %3063 = vmatpush1.msra.mxu0 0.0
    %3064 = vmatprep.subr.mxu0 0.0
    %3065 = vmatpush1.msra.mxu0 0.0
    %3066 = vmatprep.subr.mxu0 0.0
    %3067 = vmatpush1.msra.mxu0 0.0
    %3068 = vmatprep.subr.mxu0 0.0
    %3069 = vmatpush1.msra.mxu0 0.0
    %3070 = vmatprep.subr.mxu0 0.0
    %3071 = vmatpush1.msra.mxu0 0.0
    %3072 = vmatprep.subr.mxu0 0.0
    %3073 = vmatpush1.msra.mxu0 0.0
    %3074 = vmatprep.subr.mxu0 0.0
    %3075 = vmatpush1.msra.mxu0 0.0
    %3076 = vmatprep.subr.mxu0 0.0
    %3077 = vmatpush1.msra.mxu0 0.0
    %3078 = vmatprep.subr.mxu0 0.0
    %3079 = vmatpush1.msra.mxu0 0.0
    %3080 = vmatprep.subr.mxu0 0.0
    %3081 = vmatpush1.msra.mxu0 0.0
    %3082 = vmatprep.subr.mxu0 0.0
    %3083 = vmatpush1.msra.mxu0 0.0
    %3084 = vmatprep.subr.mxu0 0.0
    %3085 = vmatpush1.msra.mxu0 0.0
    %3086 = vmatprep.subr.mxu0 0.0
    %3087 = vmatpush1.msra.mxu0 0.0
    %3088 = vmatprep.subr.mxu0 0.0
    %3089 = vmatpush1.msra.mxu0 0.0
    %3090 = vmatprep.subr.mxu0 0.0
    %3091 = vmatpush1.msra.mxu0 0.0
    %3092 = vmatprep.subr.mxu0 0.0
    %3093 = vmatpush1.msra.mxu0 0.0
    %3094 = vmatprep.subr.mxu0 0.0
    %3095 = vmatpush1.msra.mxu0 0.0
    %3096 = vmatprep.subr.mxu0 0.0
    %3097 = vmatpush1.msra.mxu0 0.0
    %3098 = vmatprep.subr.mxu0 0.0
    %3099 = vmatpush1.msra.mxu0 0.0
    %3100 = vmatprep.subr.mxu0 0.0
    %3101 = vmatpush1.msra.mxu0 0.0
    %3102 = vmatprep.subr.mxu0 0.0
    %3103 = vmatpush1.msra.mxu0 0.0
    %3104 = vmatprep.subr.mxu0 0.0
    %3105 = vmatpush1.msra.mxu0 0.0
    %3106 = vmatprep.subr.mxu0 0.0
    %3107 = vmatpush1.msra.mxu0 0.0
    %3108 = vmatprep.subr.mxu0 0.0
    %3109 = vmatpush1.msra.mxu0 0.0
    %3110 = vmatprep.subr.mxu0 0.0
    %3111 = vmatpush1.msra.mxu0 0.0
    %3112 = vmatprep.subr.mxu0 0.0
    %3113 = vmatpush1.msra.mxu0 0.0
    %3114 = vmatprep.mubr.f32.mxu0 0.0
    %3115 = vmatmul.mubr.f32.gmra.mrb[0].mxu0 %v3048
    %v3116 = vpop.f32.mrb[0].mxu0
    %v3117 = vadd.f32 0.0, %v3116
    %v3118 = vpop.f32.mrb[0].mxu0
    %3119 = vdwg.mxu0
    %v3120 = vadd.f32 %v3044, %v3117
    %v3121 = vxor.u32 %v3120, 2147483648
    %v3122 = vmul.f32 %v3121, 1.442695
    %v3123 = vpow.pop %v3122
    %v3124 = vadd.f32 %v3123, 1.0
    %v3125 = vrcp.pop %v3124
    %v3126 = vmul.f32 1.0, %v3125
    %v3127 = vadd.f32 %v3117, %v790
    %3129 = vrot.lane.b32.xlu0 %v3127, 112
    %v3130 = vpop.permute.xlu0 %3129
    %v3132 = vmul.f32 %v3126, %v3130
    %3134 = vrot.lane.b32.xlu0 %v3132, 16
    %v3135 = vpop.permute.xlu0 %3134
    %v3137 = vadd.f32 %v3044, %v3135
    %v3138 = vtanh.pop %v3137
    %v3139 = vsub.f32 %v3038, %v3138
    %3141 = vrot.lane.b32.xlu0 %v3139, 120
    %v3142 = vpop.permute.xlu0 %3141
    %v3144 = vmul.f32 %v3126, %v3142
    %3146 = vrot.lane.b32.xlu0 %v3144, 8
    %v3147 = vpop.permute.xlu0 %3146
    %v3149 = vadd.f32 %v3138, %v3147
    %s3150 = sld [smem:[#allocation5 + $0x15]]
    %v3151 = vstv %s3150
    %v3152 = vmul.f32 %v3149, %v3151
    %v3153 = vadd.f32 %v3042, %v3152
    %s3154 = scalar_lea.vmem [#allocation2], 176
    %v3155 = vld [vmem:[%s3154] sm:$0xff]
    %3157 = vrot.lane.b32.xlu0 %v3149, 112
    %v3158 = vpop.permute.xlu0 %3157
    %v3159 = vsel %vm703, %v3158, 0
    %3161 = vmatprep.subr.mxu0 0.0
    %3162 = vmatpush1.msra.mxu0 %v699
    %3163 = vmatprep.subr.mxu0 0.0
    %3164 = vmatpush1.msra.mxu0 0.0
    %3165 = vmatprep.subr.mxu0 0.0
    %3166 = vmatpush1.msra.mxu0 0.0
    %3167 = vmatprep.subr.mxu0 0.0
    %3168 = vmatpush1.msra.mxu0 0.0
    %3169 = vmatprep.subr.mxu0 0.0
    %3170 = vmatpush1.msra.mxu0 0.0
    %3171 = vmatprep.subr.mxu0 0.0
    %3172 = vmatpush1.msra.mxu0 0.0
    %3173 = vmatprep.subr.mxu0 0.0
    %3174 = vmatpush1.msra.mxu0 0.0
    %3175 = vmatprep.subr.mxu0 0.0
    %3176 = vmatpush1.msra.mxu0 0.0
    %3177 = vmatprep.subr.mxu0 0.0
    %3178 = vmatpush1.msra.mxu0 0.0
    %3179 = vmatprep.subr.mxu0 0.0
    %3180 = vmatpush1.msra.mxu0 0.0
    %3181 = vmatprep.subr.mxu0 0.0
    %3182 = vmatpush1.msra.mxu0 0.0
    %3183 = vmatprep.subr.mxu0 0.0
    %3184 = vmatpush1.msra.mxu0 0.0
    %3185 = vmatprep.subr.mxu0 0.0
    %3186 = vmatpush1.msra.mxu0 0.0
    %3187 = vmatprep.subr.mxu0 0.0
    %3188 = vmatpush1.msra.mxu0 0.0
    %3189 = vmatprep.subr.mxu0 0.0
    %3190 = vmatpush1.msra.mxu0 0.0
    %3191 = vmatprep.subr.mxu0 0.0
    %3192 = vmatpush1.msra.mxu0 0.0
    %3193 = vmatprep.subr.mxu0 0.0
    %3194 = vmatpush1.msra.mxu0 0.0
    %3195 = vmatprep.subr.mxu0 0.0
    %3196 = vmatpush1.msra.mxu0 0.0
    %3197 = vmatprep.subr.mxu0 0.0
    %3198 = vmatpush1.msra.mxu0 0.0
    %3199 = vmatprep.subr.mxu0 0.0
    %3200 = vmatpush1.msra.mxu0 0.0
    %3201 = vmatprep.subr.mxu0 0.0
    %3202 = vmatpush1.msra.mxu0 0.0
    %3203 = vmatprep.subr.mxu0 0.0
    %3204 = vmatpush1.msra.mxu0 0.0
    %3205 = vmatprep.subr.mxu0 0.0
    %3206 = vmatpush1.msra.mxu0 0.0
    %3207 = vmatprep.subr.mxu0 0.0
    %3208 = vmatpush1.msra.mxu0 0.0
    %3209 = vmatprep.subr.mxu0 0.0
    %3210 = vmatpush1.msra.mxu0 0.0
    %3211 = vmatprep.subr.mxu0 0.0
    %3212 = vmatpush1.msra.mxu0 0.0
    %3213 = vmatprep.subr.mxu0 0.0
    %3214 = vmatpush1.msra.mxu0 0.0
    %3215 = vmatprep.subr.mxu0 0.0
    %3216 = vmatpush1.msra.mxu0 0.0
    %3217 = vmatprep.subr.mxu0 0.0
    %3218 = vmatpush1.msra.mxu0 0.0
    %3219 = vmatprep.subr.mxu0 0.0
    %3220 = vmatpush1.msra.mxu0 0.0
    %3221 = vmatprep.subr.mxu0 0.0
    %3222 = vmatpush1.msra.mxu0 0.0
    %3223 = vmatprep.subr.mxu0 0.0
    %3224 = vmatpush1.msra.mxu0 0.0
    %3225 = vmatprep.mubr.f32.mxu0 0.0
    %3226 = vmatmul.mubr.f32.gmra.mrb[0].mxu0 %v3159
    %v3227 = vpop.f32.mrb[0].mxu0
    %v3228 = vadd.f32 0.0, %v3227
    %v3229 = vpop.f32.mrb[0].mxu0
    %3230 = vdwg.mxu0
    %v3231 = vadd.f32 %v3155, %v3228
    %v3232 = vxor.u32 %v3231, 2147483648
    %v3233 = vmul.f32 %v3232, 1.442695
    %v3234 = vpow.pop %v3233
    %v3235 = vadd.f32 %v3234, 1.0
    %v3236 = vrcp.pop %v3235
    %v3237 = vmul.f32 1.0, %v3236
    %v3238 = vadd.f32 %v3228, %v790
    %3240 = vrot.lane.b32.xlu0 %v3238, 112
    %v3241 = vpop.permute.xlu0 %3240
    %v3243 = vmul.f32 %v3237, %v3241
    %3245 = vrot.lane.b32.xlu0 %v3243, 16
    %v3246 = vpop.permute.xlu0 %3245
    %v3248 = vadd.f32 %v3155, %v3246
    %v3249 = vtanh.pop %v3248
    %v3250 = vsub.f32 %v3149, %v3249
    %3252 = vrot.lane.b32.xlu0 %v3250, 120
    %v3253 = vpop.permute.xlu0 %3252
    %v3255 = vmul.f32 %v3237, %v3253
    %3257 = vrot.lane.b32.xlu0 %v3255, 8
    %v3258 = vpop.permute.xlu0 %3257
    %v3260 = vadd.f32 %v3249, %v3258
    %s3261 = sld [smem:[#allocation5 + $0x16]]
    %v3262 = vstv %s3261
    %v3263 = vmul.f32 %v3260, %v3262
    %v3264 = vadd.f32 %v3153, %v3263
    %s3265 = scalar_lea.vmem [#allocation2], 184
    %v3266 = vld [vmem:[%s3265] sm:$0xff]
    %3268 = vrot.lane.b32.xlu0 %v3260, 112
    %v3269 = vpop.permute.xlu0 %3268
    %v3270 = vsel %vm703, %v3269, 0
    %3272 = vmatprep.subr.mxu0 0.0
    %3273 = vmatpush1.msra.mxu0 %v699
    %3274 = vmatprep.subr.mxu0 0.0
    %3275 = vmatpush1.msra.mxu0 0.0
    %3276 = vmatprep.subr.mxu0 0.0
    %3277 = vmatpush1.msra.mxu0 0.0
    %3278 = vmatprep.subr.mxu0 0.0
    %3279 = vmatpush1.msra.mxu0 0.0
    %3280 = vmatprep.subr.mxu0 0.0
    %3281 = vmatpush1.msra.mxu0 0.0
    %3282 = vmatprep.subr.mxu0 0.0
    %3283 = vmatpush1.msra.mxu0 0.0
    %3284 = vmatprep.subr.mxu0 0.0
    %3285 = vmatpush1.msra.mxu0 0.0
    %3286 = vmatprep.subr.mxu0 0.0
    %3287 = vmatpush1.msra.mxu0 0.0
    %3288 = vmatprep.subr.mxu0 0.0
    %3289 = vmatpush1.msra.mxu0 0.0
    %3290 = vmatprep.subr.mxu0 0.0
    %3291 = vmatpush1.msra.mxu0 0.0
    %3292 = vmatprep.subr.mxu0 0.0
    %3293 = vmatpush1.msra.mxu0 0.0
    %3294 = vmatprep.subr.mxu0 0.0
    %3295 = vmatpush1.msra.mxu0 0.0
    %3296 = vmatprep.subr.mxu0 0.0
    %3297 = vmatpush1.msra.mxu0 0.0
    %3298 = vmatprep.subr.mxu0 0.0
    %3299 = vmatpush1.msra.mxu0 0.0
    %3300 = vmatprep.subr.mxu0 0.0
    %3301 = vmatpush1.msra.mxu0 0.0
    %3302 = vmatprep.subr.mxu0 0.0
    %3303 = vmatpush1.msra.mxu0 0.0
    %3304 = vmatprep.subr.mxu0 0.0
    %3305 = vmatpush1.msra.mxu0 0.0
    %3306 = vmatprep.subr.mxu0 0.0
    %3307 = vmatpush1.msra.mxu0 0.0
    %3308 = vmatprep.subr.mxu0 0.0
    %3309 = vmatpush1.msra.mxu0 0.0
    %3310 = vmatprep.subr.mxu0 0.0
    %3311 = vmatpush1.msra.mxu0 0.0
    %3312 = vmatprep.subr.mxu0 0.0
    %3313 = vmatpush1.msra.mxu0 0.0
    %3314 = vmatprep.subr.mxu0 0.0
    %3315 = vmatpush1.msra.mxu0 0.0
    %3316 = vmatprep.subr.mxu0 0.0
    %3317 = vmatpush1.msra.mxu0 0.0
    %3318 = vmatprep.subr.mxu0 0.0
    %3319 = vmatpush1.msra.mxu0 0.0
    %3320 = vmatprep.subr.mxu0 0.0
    %3321 = vmatpush1.msra.mxu0 0.0
    %3322 = vmatprep.subr.mxu0 0.0
    %3323 = vmatpush1.msra.mxu0 0.0
    %3324 = vmatprep.subr.mxu0 0.0
    %3325 = vmatpush1.msra.mxu0 0.0
    %3326 = vmatprep.subr.mxu0 0.0
    %3327 = vmatpush1.msra.mxu0 0.0
    %3328 = vmatprep.subr.mxu0 0.0
    %3329 = vmatpush1.msra.mxu0 0.0
    %3330 = vmatprep.subr.mxu0 0.0
    %3331 = vmatpush1.msra.mxu0 0.0
    %3332 = vmatprep.subr.mxu0 0.0
    %3333 = vmatpush1.msra.mxu0 0.0
    %3334 = vmatprep.subr.mxu0 0.0
    %3335 = vmatpush1.msra.mxu0 0.0
    %3336 = vmatprep.mubr.f32.mxu0 0.0
    %3337 = vmatmul.mubr.f32.gmra.mrb[0].mxu0 %v3270
    %v3338 = vpop.f32.mrb[0].mxu0
    %v3339 = vadd.f32 0.0, %v3338
    %v3340 = vpop.f32.mrb[0].mxu0
    %3341 = vdwg.mxu0
    %v3342 = vadd.f32 %v3266, %v3339
    %v3343 = vxor.u32 %v3342, 2147483648
    %v3344 = vmul.f32 %v3343, 1.442695
    %v3345 = vpow.pop %v3344
    %v3346 = vadd.f32 %v3345, 1.0
    %v3347 = vrcp.pop %v3346
    %v3348 = vmul.f32 1.0, %v3347
    %v3349 = vadd.f32 %v3339, %v790
    %3351 = vrot.lane.b32.xlu0 %v3349, 112
    %v3352 = vpop.permute.xlu0 %3351
    %v3354 = vmul.f32 %v3348, %v3352
    %3356 = vrot.lane.b32.xlu0 %v3354, 16
    %v3357 = vpop.permute.xlu0 %3356
    %v3359 = vadd.f32 %v3266, %v3357
    %v3360 = vtanh.pop %v3359
    %v3361 = vsub.f32 %v3260, %v3360
    %3363 = vrot.lane.b32.xlu0 %v3361, 120
    %v3364 = vpop.permute.xlu0 %3363
    %v3366 = vmul.f32 %v3348, %v3364
    %3368 = vrot.lane.b32.xlu0 %v3366, 8
    %v3369 = vpop.permute.xlu0 %3368
    %v3371 = vadd.f32 %v3360, %v3369
    %s3372 = sld [smem:[#allocation5 + $0x17]]
    %v3373 = vstv %s3372
    %v3374 = vmul.f32 %v3371, %v3373
    %v3375 = vadd.f32 %v3264, %v3374
    %s3376 = scalar_lea.vmem [#allocation2], 192
    %v3377 = vld [vmem:[%s3376] sm:$0xff]
    %3379 = vrot.lane.b32.xlu0 %v3371, 112
    %v3380 = vpop.permute.xlu0 %3379
    %v3381 = vsel %vm703, %v3380, 0
    %3383 = vmatprep.subr.mxu0 0.0
    %3384 = vmatpush1.msra.mxu0 %v699
    %3385 = vmatprep.subr.mxu0 0.0
    %3386 = vmatpush1.msra.mxu0 0.0
    %3387 = vmatprep.subr.mxu0 0.0
    %3388 = vmatpush1.msra.mxu0 0.0
    %3389 = vmatprep.subr.mxu0 0.0
    %3390 = vmatpush1.msra.mxu0 0.0
    %3391 = vmatprep.subr.mxu0 0.0
    %3392 = vmatpush1.msra.mxu0 0.0
    %3393 = vmatprep.subr.mxu0 0.0
    %3394 = vmatpush1.msra.mxu0 0.0
    %3395 = vmatprep.subr.mxu0 0.0
    %3396 = vmatpush1.msra.mxu0 0.0
    %3397 = vmatprep.subr.mxu0 0.0
    %3398 = vmatpush1.msra.mxu0 0.0
    %3399 = vmatprep.subr.mxu0 0.0
    %3400 = vmatpush1.msra.mxu0 0.0
    %3401 = vmatprep.subr.mxu0 0.0
    %3402 = vmatpush1.msra.mxu0 0.0
    %3403 = vmatprep.subr.mxu0 0.0
    %3404 = vmatpush1.msra.mxu0 0.0
    %3405 = vmatprep.subr.mxu0 0.0
    %3406 = vmatpush1.msra.mxu0 0.0
    %3407 = vmatprep.subr.mxu0 0.0
    %3408 = vmatpush1.msra.mxu0 0.0
    %3409 = vmatprep.subr.mxu0 0.0
    %3410 = vmatpush1.msra.mxu0 0.0
    %3411 = vmatprep.subr.mxu0 0.0
    %3412 = vmatpush1.msra.mxu0 0.0
    %3413 = vmatprep.subr.mxu0 0.0
    %3414 = vmatpush1.msra.mxu0 0.0
    %3415 = vmatprep.subr.mxu0 0.0
    %3416 = vmatpush1.msra.mxu0 0.0
    %3417 = vmatprep.subr.mxu0 0.0
    %3418 = vmatpush1.msra.mxu0 0.0
    %3419 = vmatprep.subr.mxu0 0.0
    %3420 = vmatpush1.msra.mxu0 0.0
    %3421 = vmatprep.subr.mxu0 0.0
    %3422 = vmatpush1.msra.mxu0 0.0
    %3423 = vmatprep.subr.mxu0 0.0
    %3424 = vmatpush1.msra.mxu0 0.0
    %3425 = vmatprep.subr.mxu0 0.0
    %3426 = vmatpush1.msra.mxu0 0.0
    %3427 = vmatprep.subr.mxu0 0.0
    %3428 = vmatpush1.msra.mxu0 0.0
    %3429 = vmatprep.subr.mxu0 0.0
    %3430 = vmatpush1.msra.mxu0 0.0
    %3431 = vmatprep.subr.mxu0 0.0
    %3432 = vmatpush1.msra.mxu0 0.0
    %3433 = vmatprep.subr.mxu0 0.0
    %3434 = vmatpush1.msra.mxu0 0.0
    %3435 = vmatprep.subr.mxu0 0.0
    %3436 = vmatpush1.msra.mxu0 0.0
    %3437 = vmatprep.subr.mxu0 0.0
    %3438 = vmatpush1.msra.mxu0 0.0
    %3439 = vmatprep.subr.mxu0 0.0
    %3440 = vmatpush1.msra.mxu0 0.0
    %3441 = vmatprep.subr.mxu0 0.0
    %3442 = vmatpush1.msra.mxu0 0.0
    %3443 = vmatprep.subr.mxu0 0.0
    %3444 = vmatpush1.msra.mxu0 0.0
    %3445 = vmatprep.subr.mxu0 0.0
    %3446 = vmatpush1.msra.mxu0 0.0
    %3447 = vmatprep.mubr.f32.mxu0 0.0
    %3448 = vmatmul.mubr.f32.gmra.mrb[0].mxu0 %v3381
    %v3449 = vpop.f32.mrb[0].mxu0
    %v3450 = vadd.f32 0.0, %v3449
    %v3451 = vpop.f32.mrb[0].mxu0
    %3452 = vdwg.mxu0
    %v3453 = vadd.f32 %v3377, %v3450
    %v3454 = vxor.u32 %v3453, 2147483648
    %v3455 = vmul.f32 %v3454, 1.442695
    %v3456 = vpow.pop %v3455
    %v3457 = vadd.f32 %v3456, 1.0
    %v3458 = vrcp.pop %v3457
    %v3459 = vmul.f32 1.0, %v3458
    %v3460 = vadd.f32 %v3450, %v790
    %3462 = vrot.lane.b32.xlu0 %v3460, 112
    %v3463 = vpop.permute.xlu0 %3462
    %v3465 = vmul.f32 %v3459, %v3463
    %3467 = vrot.lane.b32.xlu0 %v3465, 16
    %v3468 = vpop.permute.xlu0 %3467
    %v3470 = vadd.f32 %v3377, %v3468
    %v3471 = vtanh.pop %v3470
    %v3472 = vsub.f32 %v3371, %v3471
    %3474 = vrot.lane.b32.xlu0 %v3472, 120
    %v3475 = vpop.permute.xlu0 %3474
    %v3477 = vmul.f32 %v3459, %v3475
    %3479 = vrot.lane.b32.xlu0 %v3477, 8
    %v3480 = vpop.permute.xlu0 %3479
    %v3482 = vadd.f32 %v3471, %v3480
    %s3483 = sld [smem:[#allocation5 + $0x18]]
    %v3484 = vstv %s3483
    %v3485 = vmul.f32 %v3482, %v3484
    %v3486 = vadd.f32 %v3375, %v3485
    %s3487 = scalar_lea.vmem [#allocation2], 200
    %v3488 = vld [vmem:[%s3487] sm:$0xff]
    %3490 = vrot.lane.b32.xlu0 %v3482, 112
    %v3491 = vpop.permute.xlu0 %3490
    %v3492 = vsel %vm703, %v3491, 0
    %3494 = vmatprep.subr.mxu0 0.0
    %3495 = vmatpush1.msra.mxu0 %v699
    %3496 = vmatprep.subr.mxu0 0.0
    %3497 = vmatpush1.msra.mxu0 0.0
    %3498 = vmatprep.subr.mxu0 0.0
    %3499 = vmatpush1.msra.mxu0 0.0
    %3500 = vmatprep.subr.mxu0 0.0
    %3501 = vmatpush1.msra.mxu0 0.0
    %3502 = vmatprep.subr.mxu0 0.0
    %3503 = vmatpush1.msra.mxu0 0.0
    %3504 = vmatprep.subr.mxu0 0.0
    %3505 = vmatpush1.msra.mxu0 0.0
    %3506 = vmatprep.subr.mxu0 0.0
    %3507 = vmatpush1.msra.mxu0 0.0
    %3508 = vmatprep.subr.mxu0 0.0
    %3509 = vmatpush1.msra.mxu0 0.0
    %3510 = vmatprep.subr.mxu0 0.0
    %3511 = vmatpush1.msra.mxu0 0.0
    %3512 = vmatprep.subr.mxu0 0.0
    %3513 = vmatpush1.msra.mxu0 0.0
    %3514 = vmatprep.subr.mxu0 0.0
    %3515 = vmatpush1.msra.mxu0 0.0
    %3516 = vmatprep.subr.mxu0 0.0
    %3517 = vmatpush1.msra.mxu0 0.0
    %3518 = vmatprep.subr.mxu0 0.0
    %3519 = vmatpush1.msra.mxu0 0.0
    %3520 = vmatprep.subr.mxu0 0.0
    %3521 = vmatpush1.msra.mxu0 0.0
    %3522 = vmatprep.subr.mxu0 0.0
    %3523 = vmatpush1.msra.mxu0 0.0
    %3524 = vmatprep.subr.mxu0 0.0
    %3525 = vmatpush1.msra.mxu0 0.0
    %3526 = vmatprep.subr.mxu0 0.0
    %3527 = vmatpush1.msra.mxu0 0.0
    %3528 = vmatprep.subr.mxu0 0.0
    %3529 = vmatpush1.msra.mxu0 0.0
    %3530 = vmatprep.subr.mxu0 0.0
    %3531 = vmatpush1.msra.mxu0 0.0
    %3532 = vmatprep.subr.mxu0 0.0
    %3533 = vmatpush1.msra.mxu0 0.0
    %3534 = vmatprep.subr.mxu0 0.0
    %3535 = vmatpush1.msra.mxu0 0.0
    %3536 = vmatprep.subr.mxu0 0.0
    %3537 = vmatpush1.msra.mxu0 0.0
    %3538 = vmatprep.subr.mxu0 0.0
    %3539 = vmatpush1.msra.mxu0 0.0
    %3540 = vmatprep.subr.mxu0 0.0
    %3541 = vmatpush1.msra.mxu0 0.0
    %3542 = vmatprep.subr.mxu0 0.0
    %3543 = vmatpush1.msra.mxu0 0.0
    %3544 = vmatprep.subr.mxu0 0.0
    %3545 = vmatpush1.msra.mxu0 0.0
    %3546 = vmatprep.subr.mxu0 0.0
    %3547 = vmatpush1.msra.mxu0 0.0
    %3548 = vmatprep.subr.mxu0 0.0
    %3549 = vmatpush1.msra.mxu0 0.0
    %3550 = vmatprep.subr.mxu0 0.0
    %3551 = vmatpush1.msra.mxu0 0.0
    %3552 = vmatprep.subr.mxu0 0.0
    %3553 = vmatpush1.msra.mxu0 0.0
    %3554 = vmatprep.subr.mxu0 0.0
    %3555 = vmatpush1.msra.mxu0 0.0
    %3556 = vmatprep.subr.mxu0 0.0
    %3557 = vmatpush1.msra.mxu0 0.0
    %3558 = vmatprep.mubr.f32.mxu0 0.0
    %3559 = vmatmul.mubr.f32.gmra.mrb[0].mxu0 %v3492
    %v3560 = vpop.f32.mrb[0].mxu0
    %v3561 = vadd.f32 0.0, %v3560
    %v3562 = vpop.f32.mrb[0].mxu0
    %3563 = vdwg.mxu0
    %v3564 = vadd.f32 %v3488, %v3561
    %v3565 = vxor.u32 %v3564, 2147483648
    %v3566 = vmul.f32 %v3565, 1.442695
    %v3567 = vpow.pop %v3566
    %v3568 = vadd.f32 %v3567, 1.0
    %v3569 = vrcp.pop %v3568
    %v3570 = vmul.f32 1.0, %v3569
    %v3571 = vadd.f32 %v3561, %v790
    %3573 = vrot.lane.b32.xlu0 %v3571, 112
    %v3574 = vpop.permute.xlu0 %3573
    %v3576 = vmul.f32 %v3570, %v3574
    %3578 = vrot.lane.b32.xlu0 %v3576, 16
    %v3579 = vpop.permute.xlu0 %3578
    %v3581 = vadd.f32 %v3488, %v3579
    %v3582 = vtanh.pop %v3581
    %v3583 = vsub.f32 %v3482, %v3582
    %3585 = vrot.lane.b32.xlu0 %v3583, 120
    %v3586 = vpop.permute.xlu0 %3585
    %v3588 = vmul.f32 %v3570, %v3586
    %3590 = vrot.lane.b32.xlu0 %v3588, 8
    %v3591 = vpop.permute.xlu0 %3590
    %v3593 = vadd.f32 %v3582, %v3591
    %s3594 = sld [smem:[#allocation5 + $0x19]]
    %v3595 = vstv %s3594
    %v3596 = vmul.f32 %v3593, %v3595
    %v3597 = vadd.f32 %v3486, %v3596
    %s3598 = scalar_lea.vmem [#allocation2], 208
    %v3599 = vld [vmem:[%s3598] sm:$0xff]
    %3601 = vrot.lane.b32.xlu0 %v3593, 112
    %v3602 = vpop.permute.xlu0 %3601
    %v3603 = vsel %vm703, %v3602, 0
    %3605 = vmatprep.subr.mxu0 0.0
    %3606 = vmatpush1.msra.mxu0 %v699
    %3607 = vmatprep.subr.mxu0 0.0
    %3608 = vmatpush1.msra.mxu0 0.0
    %3609 = vmatprep.subr.mxu0 0.0
    %3610 = vmatpush1.msra.mxu0 0.0
    %3611 = vmatprep.subr.mxu0 0.0
    %3612 = vmatpush1.msra.mxu0 0.0
    %3613 = vmatprep.subr.mxu0 0.0
    %3614 = vmatpush1.msra.mxu0 0.0
    %3615 = vmatprep.subr.mxu0 0.0
    %3616 = vmatpush1.msra.mxu0 0.0
    %3617 = vmatprep.subr.mxu0 0.0
    %3618 = vmatpush1.msra.mxu0 0.0
    %3619 = vmatprep.subr.mxu0 0.0
    %3620 = vmatpush1.msra.mxu0 0.0
    %3621 = vmatprep.subr.mxu0 0.0
    %3622 = vmatpush1.msra.mxu0 0.0
    %3623 = vmatprep.subr.mxu0 0.0
    %3624 = vmatpush1.msra.mxu0 0.0
    %3625 = vmatprep.subr.mxu0 0.0
    %3626 = vmatpush1.msra.mxu0 0.0
    %3627 = vmatprep.subr.mxu0 0.0
    %3628 = vmatpush1.msra.mxu0 0.0
    %3629 = vmatprep.subr.mxu0 0.0
    %3630 = vmatpush1.msra.mxu0 0.0
    %3631 = vmatprep.subr.mxu0 0.0
    %3632 = vmatpush1.msra.mxu0 0.0
    %3633 = vmatprep.subr.mxu0 0.0
    %3634 = vmatpush1.msra.mxu0 0.0
    %3635 = vmatprep.subr.mxu0 0.0
    %3636 = vmatpush1.msra.mxu0 0.0
    %3637 = vmatprep.subr.mxu0 0.0
    %3638 = vmatpush1.msra.mxu0 0.0
    %3639 = vmatprep.subr.mxu0 0.0
    %3640 = vmatpush1.msra.mxu0 0.0
    %3641 = vmatprep.subr.mxu0 0.0
    %3642 = vmatpush1.msra.mxu0 0.0
    %3643 = vmatprep.subr.mxu0 0.0
    %3644 = vmatpush1.msra.mxu0 0.0
    %3645 = vmatprep.subr.mxu0 0.0
    %3646 = vmatpush1.msra.mxu0 0.0
    %3647 = vmatprep.subr.mxu0 0.0
    %3648 = vmatpush1.msra.mxu0 0.0
    %3649 = vmatprep.subr.mxu0 0.0
    %3650 = vmatpush1.msra.mxu0 0.0
    %3651 = vmatprep.subr.mxu0 0.0
    %3652 = vmatpush1.msra.mxu0 0.0
    %3653 = vmatprep.subr.mxu0 0.0
    %3654 = vmatpush1.msra.mxu0 0.0
    %3655 = vmatprep.subr.mxu0 0.0
    %3656 = vmatpush1.msra.mxu0 0.0
    %3657 = vmatprep.subr.mxu0 0.0
    %3658 = vmatpush1.msra.mxu0 0.0
    %3659 = vmatprep.subr.mxu0 0.0
    %3660 = vmatpush1.msra.mxu0 0.0
    %3661 = vmatprep.subr.mxu0 0.0
    %3662 = vmatpush1.msra.mxu0 0.0
    %3663 = vmatprep.subr.mxu0 0.0
    %3664 = vmatpush1.msra.mxu0 0.0
    %3665 = vmatprep.subr.mxu0 0.0
    %3666 = vmatpush1.msra.mxu0 0.0
    %3667 = vmatprep.subr.mxu0 0.0
    %3668 = vmatpush1.msra.mxu0 0.0
    %3669 = vmatprep.mubr.f32.mxu0 0.0
    %3670 = vmatmul.mubr.f32.gmra.mrb[0].mxu0 %v3603
    %v3671 = vpop.f32.mrb[0].mxu0
    %v3672 = vadd.f32 0.0, %v3671
    %v3673 = vpop.f32.mrb[0].mxu0
    %3674 = vdwg.mxu0
    %v3675 = vadd.f32 %v3599, %v3672
    %v3676 = vxor.u32 %v3675, 2147483648
    %v3677 = vmul.f32 %v3676, 1.442695
    %v3678 = vpow.pop %v3677
    %v3679 = vadd.f32 %v3678, 1.0
    %v3680 = vrcp.pop %v3679
    %v3681 = vmul.f32 1.0, %v3680
    %v3682 = vadd.f32 %v3672, %v790
    %3684 = vrot.lane.b32.xlu0 %v3682, 112
    %v3685 = vpop.permute.xlu0 %3684
    %v3687 = vmul.f32 %v3681, %v3685
    %3689 = vrot.lane.b32.xlu0 %v3687, 16
    %v3690 = vpop.permute.xlu0 %3689
    %v3692 = vadd.f32 %v3599, %v3690
    %v3693 = vtanh.pop %v3692
    %v3694 = vsub.f32 %v3593, %v3693
    %3696 = vrot.lane.b32.xlu0 %v3694, 120
    %v3697 = vpop.permute.xlu0 %3696
    %v3699 = vmul.f32 %v3681, %v3697
    %3701 = vrot.lane.b32.xlu0 %v3699, 8
    %v3702 = vpop.permute.xlu0 %3701
    %v3704 = vadd.f32 %v3693, %v3702
    %s3705 = sld [smem:[#allocation5 + $0x1a]]
    %v3706 = vstv %s3705
    %v3707 = vmul.f32 %v3704, %v3706
    %v3708 = vadd.f32 %v3597, %v3707
    %s3709 = scalar_lea.vmem [#allocation2], 216
    %v3710 = vld [vmem:[%s3709] sm:$0xff]
    %3712 = vrot.lane.b32.xlu0 %v3704, 112
    %v3713 = vpop.permute.xlu0 %3712
    %v3714 = vsel %vm703, %v3713, 0
    %3716 = vmatprep.subr.mxu0 0.0
    %3717 = vmatpush1.msra.mxu0 %v699
    %3718 = vmatprep.subr.mxu0 0.0
    %3719 = vmatpush1.msra.mxu0 0.0
    %3720 = vmatprep.subr.mxu0 0.0
    %3721 = vmatpush1.msra.mxu0 0.0
    %3722 = vmatprep.subr.mxu0 0.0
    %3723 = vmatpush1.msra.mxu0 0.0
    %3724 = vmatprep.subr.mxu0 0.0
    %3725 = vmatpush1.msra.mxu0 0.0
    %3726 = vmatprep.subr.mxu0 0.0
    %3727 = vmatpush1.msra.mxu0 0.0
    %3728 = vmatprep.subr.mxu0 0.0
    %3729 = vmatpush1.msra.mxu0 0.0
    %3730 = vmatprep.subr.mxu0 0.0
    %3731 = vmatpush1.msra.mxu0 0.0
    %3732 = vmatprep.subr.mxu0 0.0
    %3733 = vmatpush1.msra.mxu0 0.0
    %3734 = vmatprep.subr.mxu0 0.0
    %3735 = vmatpush1.msra.mxu0 0.0
    %3736 = vmatprep.subr.mxu0 0.0
    %3737 = vmatpush1.msra.mxu0 0.0
    %3738 = vmatprep.subr.mxu0 0.0
    %3739 = vmatpush1.msra.mxu0 0.0
    %3740 = vmatprep.subr.mxu0 0.0
    %3741 = vmatpush1.msra.mxu0 0.0
    %3742 = vmatprep.subr.mxu0 0.0
    %3743 = vmatpush1.msra.mxu0 0.0
    %3744 = vmatprep.subr.mxu0 0.0
    %3745 = vmatpush1.msra.mxu0 0.0
    %3746 = vmatprep.subr.mxu0 0.0
    %3747 = vmatpush1.msra.mxu0 0.0
    %3748 = vmatprep.subr.mxu0 0.0
    %3749 = vmatpush1.msra.mxu0 0.0
    %3750 = vmatprep.subr.mxu0 0.0
    %3751 = vmatpush1.msra.mxu0 0.0
    %3752 = vmatprep.subr.mxu0 0.0
    %3753 = vmatpush1.msra.mxu0 0.0
    %3754 = vmatprep.subr.mxu0 0.0
    %3755 = vmatpush1.msra.mxu0 0.0
    %3756 = vmatprep.subr.mxu0 0.0
    %3757 = vmatpush1.msra.mxu0 0.0
    %3758 = vmatprep.subr.mxu0 0.0
    %3759 = vmatpush1.msra.mxu0 0.0
    %3760 = vmatprep.subr.mxu0 0.0
    %3761 = vmatpush1.msra.mxu0 0.0
    %3762 = vmatprep.subr.mxu0 0.0
    %3763 = vmatpush1.msra.mxu0 0.0
    %3764 = vmatprep.subr.mxu0 0.0
    %3765 = vmatpush1.msra.mxu0 0.0
    %3766 = vmatprep.subr.mxu0 0.0
    %3767 = vmatpush1.msra.mxu0 0.0
    %3768 = vmatprep.subr.mxu0 0.0
    %3769 = vmatpush1.msra.mxu0 0.0
    %3770 = vmatprep.subr.mxu0 0.0
    %3771 = vmatpush1.msra.mxu0 0.0
    %3772 = vmatprep.subr.mxu0 0.0
    %3773 = vmatpush1.msra.mxu0 0.0
    %3774 = vmatprep.subr.mxu0 0.0
    %3775 = vmatpush1.msra.mxu0 0.0
    %3776 = vmatprep.subr.mxu0 0.0
    %3777 = vmatpush1.msra.mxu0 0.0
    %3778 = vmatprep.subr.mxu0 0.0
    %3779 = vmatpush1.msra.mxu0 0.0
    %3780 = vmatprep.mubr.f32.mxu0 0.0
    %3781 = vmatmul.mubr.f32.gmra.mrb[0].mxu0 %v3714
    %v3782 = vpop.f32.mrb[0].mxu0
    %v3783 = vadd.f32 0.0, %v3782
    %v3784 = vpop.f32.mrb[0].mxu0
    %3785 = vdwg.mxu0
    %v3786 = vadd.f32 %v3710, %v3783
    %v3787 = vxor.u32 %v3786, 2147483648
    %v3788 = vmul.f32 %v3787, 1.442695
    %v3789 = vpow.pop %v3788
    %v3790 = vadd.f32 %v3789, 1.0
    %v3791 = vrcp.pop %v3790
    %v3792 = vmul.f32 1.0, %v3791
    %v3793 = vadd.f32 %v3783, %v790
    %3795 = vrot.lane.b32.xlu0 %v3793, 112
    %v3796 = vpop.permute.xlu0 %3795
    %v3798 = vmul.f32 %v3792, %v3796
    %3800 = vrot.lane.b32.xlu0 %v3798, 16
    %v3801 = vpop.permute.xlu0 %3800
    %v3803 = vadd.f32 %v3710, %v3801
    %v3804 = vtanh.pop %v3803
    %v3805 = vsub.f32 %v3704, %v3804
    %3807 = vrot.lane.b32.xlu0 %v3805, 120
    %v3808 = vpop.permute.xlu0 %3807
    %v3810 = vmul.f32 %v3792, %v3808
    %3812 = vrot.lane.b32.xlu0 %v3810, 8
    %v3813 = vpop.permute.xlu0 %3812
    %v3815 = vadd.f32 %v3804, %v3813
    %s3816 = sld [smem:[#allocation5 + $0x1b]]
    %v3817 = vstv %s3816
    %v3818 = vmul.f32 %v3815, %v3817
    %v3819 = vadd.f32 %v3708, %v3818
    %s3820 = scalar_lea.vmem [#allocation2], 224
    %v3821 = vld [vmem:[%s3820] sm:$0xff]
    %3823 = vrot.lane.b32.xlu0 %v3815, 112
    %v3824 = vpop.permute.xlu0 %3823
    %v3825 = vsel %vm703, %v3824, 0
    %3827 = vmatprep.subr.mxu0 0.0
    %3828 = vmatpush1.msra.mxu0 %v699
    %3829 = vmatprep.subr.mxu0 0.0
    %3830 = vmatpush1.msra.mxu0 0.0
    %3831 = vmatprep.subr.mxu0 0.0
    %3832 = vmatpush1.msra.mxu0 0.0
    %3833 = vmatprep.subr.mxu0 0.0
    %3834 = vmatpush1.msra.mxu0 0.0
    %3835 = vmatprep.subr.mxu0 0.0
    %3836 = vmatpush1.msra.mxu0 0.0
    %3837 = vmatprep.subr.mxu0 0.0
    %3838 = vmatpush1.msra.mxu0 0.0
    %3839 = vmatprep.subr.mxu0 0.0
    %3840 = vmatpush1.msra.mxu0 0.0
    %3841 = vmatprep.subr.mxu0 0.0
    %3842 = vmatpush1.msra.mxu0 0.0
    %3843 = vmatprep.subr.mxu0 0.0
    %3844 = vmatpush1.msra.mxu0 0.0
    %3845 = vmatprep.subr.mxu0 0.0
    %3846 = vmatpush1.msra.mxu0 0.0
    %3847 = vmatprep.subr.mxu0 0.0
    %3848 = vmatpush1.msra.mxu0 0.0
    %3849 = vmatprep.subr.mxu0 0.0
    %3850 = vmatpush1.msra.mxu0 0.0
    %3851 = vmatprep.subr.mxu0 0.0
    %3852 = vmatpush1.msra.mxu0 0.0
    %3853 = vmatprep.subr.mxu0 0.0
    %3854 = vmatpush1.msra.mxu0 0.0
    %3855 = vmatprep.subr.mxu0 0.0
    %3856 = vmatpush1.msra.mxu0 0.0
    %3857 = vmatprep.subr.mxu0 0.0
    %3858 = vmatpush1.msra.mxu0 0.0
    %3859 = vmatprep.subr.mxu0 0.0
    %3860 = vmatpush1.msra.mxu0 0.0
    %3861 = vmatprep.subr.mxu0 0.0
    %3862 = vmatpush1.msra.mxu0 0.0
    %3863 = vmatprep.subr.mxu0 0.0
    %3864 = vmatpush1.msra.mxu0 0.0
    %3865 = vmatprep.subr.mxu0 0.0
    %3866 = vmatpush1.msra.mxu0 0.0
    %3867 = vmatprep.subr.mxu0 0.0
    %3868 = vmatpush1.msra.mxu0 0.0
    %3869 = vmatprep.subr.mxu0 0.0
    %3870 = vmatpush1.msra.mxu0 0.0
    %3871 = vmatprep.subr.mxu0 0.0
    %3872 = vmatpush1.msra.mxu0 0.0
    %3873 = vmatprep.subr.mxu0 0.0
    %3874 = vmatpush1.msra.mxu0 0.0
    %3875 = vmatprep.subr.mxu0 0.0
    %3876 = vmatpush1.msra.mxu0 0.0
    %3877 = vmatprep.subr.mxu0 0.0
    %3878 = vmatpush1.msra.mxu0 0.0
    %3879 = vmatprep.subr.mxu0 0.0
    %3880 = vmatpush1.msra.mxu0 0.0
    %3881 = vmatprep.subr.mxu0 0.0
    %3882 = vmatpush1.msra.mxu0 0.0
    %3883 = vmatprep.subr.mxu0 0.0
    %3884 = vmatpush1.msra.mxu0 0.0
    %3885 = vmatprep.subr.mxu0 0.0
    %3886 = vmatpush1.msra.mxu0 0.0
    %3887 = vmatprep.subr.mxu0 0.0
    %3888 = vmatpush1.msra.mxu0 0.0
    %3889 = vmatprep.subr.mxu0 0.0
    %3890 = vmatpush1.msra.mxu0 0.0
    %3891 = vmatprep.mubr.f32.mxu0 0.0
    %3892 = vmatmul.mubr.f32.gmra.mrb[0].mxu0 %v3825
    %v3893 = vpop.f32.mrb[0].mxu0
    %v3894 = vadd.f32 0.0, %v3893
    %v3895 = vpop.f32.mrb[0].mxu0
    %3896 = vdwg.mxu0
    %v3897 = vadd.f32 %v3821, %v3894
    %v3898 = vxor.u32 %v3897, 2147483648
    %v3899 = vmul.f32 %v3898, 1.442695
    %v3900 = vpow.pop %v3899
    %v3901 = vadd.f32 %v3900, 1.0
    %v3902 = vrcp.pop %v3901
    %v3903 = vmul.f32 1.0, %v3902
    %v3904 = vadd.f32 %v3894, %v790
    %3906 = vrot.lane.b32.xlu0 %v3904, 112
    %v3907 = vpop.permute.xlu0 %3906
    %v3909 = vmul.f32 %v3903, %v3907
    %3911 = vrot.lane.b32.xlu0 %v3909, 16
    %v3912 = vpop.permute.xlu0 %3911
    %v3914 = vadd.f32 %v3821, %v3912
    %v3915 = vtanh.pop %v3914
    %v3916 = vsub.f32 %v3815, %v3915
    %3918 = vrot.lane.b32.xlu0 %v3916, 120
    %v3919 = vpop.permute.xlu0 %3918
    %v3921 = vmul.f32 %v3903, %v3919
    %3923 = vrot.lane.b32.xlu0 %v3921, 8
    %v3924 = vpop.permute.xlu0 %3923
    %v3926 = vadd.f32 %v3915, %v3924
    %s3927 = sld [smem:[#allocation5 + $0x1c]]
    %v3928 = vstv %s3927
    %v3929 = vmul.f32 %v3926, %v3928
    %v3930 = vadd.f32 %v3819, %v3929
    %s3931 = scalar_lea.vmem [#allocation2], 232
    %v3932 = vld [vmem:[%s3931] sm:$0xff]
    %3934 = vrot.lane.b32.xlu0 %v3926, 112
    %v3935 = vpop.permute.xlu0 %3934
    %v3936 = vsel %vm703, %v3935, 0
    %3938 = vmatprep.subr.mxu0 0.0
    %3939 = vmatpush1.msra.mxu0 %v699
    %3940 = vmatprep.subr.mxu0 0.0
    %3941 = vmatpush1.msra.mxu0 0.0
    %3942 = vmatprep.subr.mxu0 0.0
    %3943 = vmatpush1.msra.mxu0 0.0
    %3944 = vmatprep.subr.mxu0 0.0
    %3945 = vmatpush1.msra.mxu0 0.0
    %3946 = vmatprep.subr.mxu0 0.0
    %3947 = vmatpush1.msra.mxu0 0.0
    %3948 = vmatprep.subr.mxu0 0.0
    %3949 = vmatpush1.msra.mxu0 0.0
    %3950 = vmatprep.subr.mxu0 0.0
    %3951 = vmatpush1.msra.mxu0 0.0
    %3952 = vmatprep.subr.mxu0 0.0
    %3953 = vmatpush1.msra.mxu0 0.0
    %3954 = vmatprep.subr.mxu0 0.0
    %3955 = vmatpush1.msra.mxu0 0.0
    %3956 = vmatprep.subr.mxu0 0.0
    %3957 = vmatpush1.msra.mxu0 0.0
    %3958 = vmatprep.subr.mxu0 0.0
    %3959 = vmatpush1.msra.mxu0 0.0
    %3960 = vmatprep.subr.mxu0 0.0
    %3961 = vmatpush1.msra.mxu0 0.0
    %3962 = vmatprep.subr.mxu0 0.0
    %3963 = vmatpush1.msra.mxu0 0.0
    %3964 = vmatprep.subr.mxu0 0.0
    %3965 = vmatpush1.msra.mxu0 0.0
    %3966 = vmatprep.subr.mxu0 0.0
    %3967 = vmatpush1.msra.mxu0 0.0
    %3968 = vmatprep.subr.mxu0 0.0
    %3969 = vmatpush1.msra.mxu0 0.0
    %3970 = vmatprep.subr.mxu0 0.0
    %3971 = vmatpush1.msra.mxu0 0.0
    %3972 = vmatprep.subr.mxu0 0.0
    %3973 = vmatpush1.msra.mxu0 0.0
    %3974 = vmatprep.subr.mxu0 0.0
    %3975 = vmatpush1.msra.mxu0 0.0
    %3976 = vmatprep.subr.mxu0 0.0
    %3977 = vmatpush1.msra.mxu0 0.0
    %3978 = vmatprep.subr.mxu0 0.0
    %3979 = vmatpush1.msra.mxu0 0.0
    %3980 = vmatprep.subr.mxu0 0.0
    %3981 = vmatpush1.msra.mxu0 0.0
    %3982 = vmatprep.subr.mxu0 0.0
    %3983 = vmatpush1.msra.mxu0 0.0
    %3984 = vmatprep.subr.mxu0 0.0
    %3985 = vmatpush1.msra.mxu0 0.0
    %3986 = vmatprep.subr.mxu0 0.0
    %3987 = vmatpush1.msra.mxu0 0.0
    %3988 = vmatprep.subr.mxu0 0.0
    %3989 = vmatpush1.msra.mxu0 0.0
    %3990 = vmatprep.subr.mxu0 0.0
    %3991 = vmatpush1.msra.mxu0 0.0
    %3992 = vmatprep.subr.mxu0 0.0
    %3993 = vmatpush1.msra.mxu0 0.0
    %3994 = vmatprep.subr.mxu0 0.0
    %3995 = vmatpush1.msra.mxu0 0.0
    %3996 = vmatprep.subr.mxu0 0.0
    %3997 = vmatpush1.msra.mxu0 0.0
    %3998 = vmatprep.subr.mxu0 0.0
    %3999 = vmatpush1.msra.mxu0 0.0
    %4000 = vmatprep.subr.mxu0 0.0
    %4001 = vmatpush1.msra.mxu0 0.0
    %4002 = vmatprep.mubr.f32.mxu0 0.0
    %4003 = vmatmul.mubr.f32.gmra.mrb[0].mxu0 %v3936
    %v4004 = vpop.f32.mrb[0].mxu0
    %v4005 = vadd.f32 0.0, %v4004
    %v4006 = vpop.f32.mrb[0].mxu0
    %4007 = vdwg.mxu0
    %v4008 = vadd.f32 %v3932, %v4005
    %v4009 = vxor.u32 %v4008, 2147483648
    %v4010 = vmul.f32 %v4009, 1.442695
    %v4011 = vpow.pop %v4010
    %v4012 = vadd.f32 %v4011, 1.0
    %v4013 = vrcp.pop %v4012
    %v4014 = vmul.f32 1.0, %v4013
    %v4015 = vadd.f32 %v4005, %v790
    %4017 = vrot.lane.b32.xlu0 %v4015, 112
    %v4018 = vpop.permute.xlu0 %4017
    %v4020 = vmul.f32 %v4014, %v4018
    %4022 = vrot.lane.b32.xlu0 %v4020, 16
    %v4023 = vpop.permute.xlu0 %4022
    %v4025 = vadd.f32 %v3932, %v4023
    %v4026 = vtanh.pop %v4025
    %v4027 = vsub.f32 %v3926, %v4026
    %4029 = vrot.lane.b32.xlu0 %v4027, 120
    %v4030 = vpop.permute.xlu0 %4029
    %v4032 = vmul.f32 %v4014, %v4030
    %4034 = vrot.lane.b32.xlu0 %v4032, 8
    %v4035 = vpop.permute.xlu0 %4034
    %v4037 = vadd.f32 %v4026, %v4035
    %s4038 = sld [smem:[#allocation5 + $0x1d]]
    %v4039 = vstv %s4038
    %v4040 = vmul.f32 %v4037, %v4039
    %v4041 = vadd.f32 %v3930, %v4040
    %s4042 = scalar_lea.vmem [#allocation2], 240
    %v4043 = vld [vmem:[%s4042] sm:$0xff]
    %4045 = vrot.lane.b32.xlu0 %v4037, 112
    %v4046 = vpop.permute.xlu0 %4045
    %v4047 = vsel %vm703, %v4046, 0
    %4049 = vmatprep.subr.mxu0 0.0
    %4050 = vmatpush1.msra.mxu0 %v699
    %4051 = vmatprep.subr.mxu0 0.0
    %4052 = vmatpush1.msra.mxu0 0.0
    %4053 = vmatprep.subr.mxu0 0.0
    %4054 = vmatpush1.msra.mxu0 0.0
    %4055 = vmatprep.subr.mxu0 0.0
    %4056 = vmatpush1.msra.mxu0 0.0
    %4057 = vmatprep.subr.mxu0 0.0
    %4058 = vmatpush1.msra.mxu0 0.0
    %4059 = vmatprep.subr.mxu0 0.0
    %4060 = vmatpush1.msra.mxu0 0.0
    %4061 = vmatprep.subr.mxu0 0.0
    %4062 = vmatpush1.msra.mxu0 0.0
    %4063 = vmatprep.subr.mxu0 0.0
    %4064 = vmatpush1.msra.mxu0 0.0
    %4065 = vmatprep.subr.mxu0 0.0
    %4066 = vmatpush1.msra.mxu0 0.0
    %4067 = vmatprep.subr.mxu0 0.0
    %4068 = vmatpush1.msra.mxu0 0.0
    %4069 = vmatprep.subr.mxu0 0.0
    %4070 = vmatpush1.msra.mxu0 0.0
    %4071 = vmatprep.subr.mxu0 0.0
    %4072 = vmatpush1.msra.mxu0 0.0
    %4073 = vmatprep.subr.mxu0 0.0
    %4074 = vmatpush1.msra.mxu0 0.0
    %4075 = vmatprep.subr.mxu0 0.0
    %4076 = vmatpush1.msra.mxu0 0.0
    %4077 = vmatprep.subr.mxu0 0.0
    %4078 = vmatpush1.msra.mxu0 0.0
    %4079 = vmatprep.subr.mxu0 0.0
    %4080 = vmatpush1.msra.mxu0 0.0
    %4081 = vmatprep.subr.mxu0 0.0
    %4082 = vmatpush1.msra.mxu0 0.0
    %4083 = vmatprep.subr.mxu0 0.0
    %4084 = vmatpush1.msra.mxu0 0.0
    %4085 = vmatprep.subr.mxu0 0.0
    %4086 = vmatpush1.msra.mxu0 0.0
    %4087 = vmatprep.subr.mxu0 0.0
    %4088 = vmatpush1.msra.mxu0 0.0
    %4089 = vmatprep.subr.mxu0 0.0
    %4090 = vmatpush1.msra.mxu0 0.0
    %4091 = vmatprep.subr.mxu0 0.0
    %4092 = vmatpush1.msra.mxu0 0.0
    %4093 = vmatprep.subr.mxu0 0.0
    %4094 = vmatpush1.msra.mxu0 0.0
    %4095 = vmatprep.subr.mxu0 0.0
    %4096 = vmatpush1.msra.mxu0 0.0
    %4097 = vmatprep.subr.mxu0 0.0
    %4098 = vmatpush1.msra.mxu0 0.0
    %4099 = vmatprep.subr.mxu0 0.0
    %4100 = vmatpush1.msra.mxu0 0.0
    %4101 = vmatprep.subr.mxu0 0.0
    %4102 = vmatpush1.msra.mxu0 0.0
    %4103 = vmatprep.subr.mxu0 0.0
    %4104 = vmatpush1.msra.mxu0 0.0
    %4105 = vmatprep.subr.mxu0 0.0
    %4106 = vmatpush1.msra.mxu0 0.0
    %4107 = vmatprep.subr.mxu0 0.0
    %4108 = vmatpush1.msra.mxu0 0.0
    %4109 = vmatprep.subr.mxu0 0.0
    %4110 = vmatpush1.msra.mxu0 0.0
    %4111 = vmatprep.subr.mxu0 0.0
    %4112 = vmatpush1.msra.mxu0 0.0
    %4113 = vmatprep.mubr.f32.mxu0 0.0
    %4114 = vmatmul.mubr.f32.gmra.mrb[0].mxu0 %v4047
    %v4115 = vpop.f32.mrb[0].mxu0
    %v4116 = vadd.f32 0.0, %v4115
    %v4117 = vpop.f32.mrb[0].mxu0
    %4118 = vdwg.mxu0
    %v4119 = vadd.f32 %v4043, %v4116
    %v4120 = vxor.u32 %v4119, 2147483648
    %v4121 = vmul.f32 %v4120, 1.442695
    %v4122 = vpow.pop %v4121
    %v4123 = vadd.f32 %v4122, 1.0
    %v4124 = vrcp.pop %v4123
    %v4125 = vmul.f32 1.0, %v4124
    %v4126 = vadd.f32 %v4116, %v790
    %4128 = vrot.lane.b32.xlu0 %v4126, 112
    %v4129 = vpop.permute.xlu0 %4128
    %v4131 = vmul.f32 %v4125, %v4129
    %4133 = vrot.lane.b32.xlu0 %v4131, 16
    %v4134 = vpop.permute.xlu0 %4133
    %v4136 = vadd.f32 %v4043, %v4134
    %v4137 = vtanh.pop %v4136
    %v4138 = vsub.f32 %v4037, %v4137
    %4140 = vrot.lane.b32.xlu0 %v4138, 120
    %v4141 = vpop.permute.xlu0 %4140
    %v4143 = vmul.f32 %v4125, %v4141
    %4145 = vrot.lane.b32.xlu0 %v4143, 8
    %v4146 = vpop.permute.xlu0 %4145
    %v4148 = vadd.f32 %v4137, %v4146
    %s4149 = sld [smem:[#allocation5 + $0x1e]]
    %v4150 = vstv %s4149
    %v4151 = vmul.f32 %v4148, %v4150
    %v4152 = vadd.f32 %v4041, %v4151
    %s4153 = scalar_lea.vmem [#allocation2], 248
    %v4154 = vld [vmem:[%s4153] sm:$0xff]
    %4156 = vrot.lane.b32.xlu0 %v4148, 112
    %v4157 = vpop.permute.xlu0 %4156
    %v4158 = vsel %vm703, %v4157, 0
    %4160 = vmatprep.subr.mxu0 0.0
    %4161 = vmatpush1.msra.mxu0 %v699
    %4162 = vmatprep.subr.mxu0 0.0
    %4163 = vmatpush1.msra.mxu0 0.0
    %4164 = vmatprep.subr.mxu0 0.0
    %4165 = vmatpush1.msra.mxu0 0.0
    %4166 = vmatprep.subr.mxu0 0.0
    %4167 = vmatpush1.msra.mxu0 0.0
    %4168 = vmatprep.subr.mxu0 0.0
    %4169 = vmatpush1.msra.mxu0 0.0
    %4170 = vmatprep.subr.mxu0 0.0
    %4171 = vmatpush1.msra.mxu0 0.0
    %4172 = vmatprep.subr.mxu0 0.0
    %4173 = vmatpush1.msra.mxu0 0.0
    %4174 = vmatprep.subr.mxu0 0.0
    %4175 = vmatpush1.msra.mxu0 0.0
    %4176 = vmatprep.subr.mxu0 0.0
    %4177 = vmatpush1.msra.mxu0 0.0
    %4178 = vmatprep.subr.mxu0 0.0
    %4179 = vmatpush1.msra.mxu0 0.0
    %4180 = vmatprep.subr.mxu0 0.0
    %4181 = vmatpush1.msra.mxu0 0.0
    %4182 = vmatprep.subr.mxu0 0.0
    %4183 = vmatpush1.msra.mxu0 0.0
    %4184 = vmatprep.subr.mxu0 0.0
    %4185 = vmatpush1.msra.mxu0 0.0
    %4186 = vmatprep.subr.mxu0 0.0
    %4187 = vmatpush1.msra.mxu0 0.0
    %4188 = vmatprep.subr.mxu0 0.0
    %4189 = vmatpush1.msra.mxu0 0.0
    %4190 = vmatprep.subr.mxu0 0.0
    %4191 = vmatpush1.msra.mxu0 0.0
    %4192 = vmatprep.subr.mxu0 0.0
    %4193 = vmatpush1.msra.mxu0 0.0
    %4194 = vmatprep.subr.mxu0 0.0
    %4195 = vmatpush1.msra.mxu0 0.0
    %4196 = vmatprep.subr.mxu0 0.0
    %4197 = vmatpush1.msra.mxu0 0.0
    %4198 = vmatprep.subr.mxu0 0.0
    %4199 = vmatpush1.msra.mxu0 0.0
    %4200 = vmatprep.subr.mxu0 0.0
    %4201 = vmatpush1.msra.mxu0 0.0
    %4202 = vmatprep.subr.mxu0 0.0
    %4203 = vmatpush1.msra.mxu0 0.0
    %4204 = vmatprep.subr.mxu0 0.0
    %4205 = vmatpush1.msra.mxu0 0.0
    %4206 = vmatprep.subr.mxu0 0.0
    %4207 = vmatpush1.msra.mxu0 0.0
    %4208 = vmatprep.subr.mxu0 0.0
    %4209 = vmatpush1.msra.mxu0 0.0
    %4210 = vmatprep.subr.mxu0 0.0
    %4211 = vmatpush1.msra.mxu0 0.0
    %4212 = vmatprep.subr.mxu0 0.0
    %4213 = vmatpush1.msra.mxu0 0.0
    %4214 = vmatprep.subr.mxu0 0.0
    %4215 = vmatpush1.msra.mxu0 0.0
    %4216 = vmatprep.subr.mxu0 0.0
    %4217 = vmatpush1.msra.mxu0 0.0
    %4218 = vmatprep.subr.mxu0 0.0
    %4219 = vmatpush1.msra.mxu0 0.0
    %4220 = vmatprep.subr.mxu0 0.0
    %4221 = vmatpush1.msra.mxu0 0.0
    %4222 = vmatprep.subr.mxu0 0.0
    %4223 = vmatpush1.msra.mxu0 0.0
    %4224 = vmatprep.mubr.f32.mxu0 0.0
    %4225 = vmatmul.mubr.f32.gmra.mrb[0].mxu0 %v4158
    %v4226 = vpop.f32.mrb[0].mxu0
    %v4227 = vadd.f32 0.0, %v4226
    %v4228 = vpop.f32.mrb[0].mxu0
    %4229 = vdwg.mxu0
    %v4230 = vadd.f32 %v4154, %v4227
    %v4231 = vxor.u32 %v4230, 2147483648
    %v4232 = vmul.f32 %v4231, 1.442695
    %v4233 = vpow.pop %v4232
    %v4234 = vadd.f32 %v4233, 1.0
    %v4235 = vrcp.pop %v4234
    %v4236 = vmul.f32 1.0, %v4235
    %v4237 = vadd.f32 %v4227, %v790
    %4239 = vrot.lane.b32.xlu0 %v4237, 112
    %v4240 = vpop.permute.xlu0 %4239
    %v4242 = vmul.f32 %v4236, %v4240
    %4244 = vrot.lane.b32.xlu0 %v4242, 16
    %v4245 = vpop.permute.xlu0 %4244
    %v4247 = vadd.f32 %v4154, %v4245
    %v4248 = vtanh.pop %v4247
    %v4249 = vsub.f32 %v4148, %v4248
    %4251 = vrot.lane.b32.xlu0 %v4249, 120
    %v4252 = vpop.permute.xlu0 %4251
    %v4254 = vmul.f32 %v4236, %v4252
    %4256 = vrot.lane.b32.xlu0 %v4254, 8
    %v4257 = vpop.permute.xlu0 %4256
    %v4259 = vadd.f32 %v4248, %v4257
    %s4260 = sld [smem:[#allocation5 + $0x1f]]
    %v4261 = vstv %s4260
    %v4262 = vmul.f32 %v4259, %v4261
    %v4263 = vadd.f32 %v4152, %v4262
    %s4264 = scalar_lea.vmem [#allocation2], 256
    %v4265 = vld [vmem:[%s4264] sm:$0xff]
    %4267 = vrot.lane.b32.xlu0 %v4259, 112
    %v4268 = vpop.permute.xlu0 %4267
    %v4269 = vsel %vm703, %v4268, 0
    %4271 = vmatprep.subr.mxu0 0.0
    %4272 = vmatpush1.msra.mxu0 %v699
    %4273 = vmatprep.subr.mxu0 0.0
    %4274 = vmatpush1.msra.mxu0 0.0
    %4275 = vmatprep.subr.mxu0 0.0
    %4276 = vmatpush1.msra.mxu0 0.0
    %4277 = vmatprep.subr.mxu0 0.0
    %4278 = vmatpush1.msra.mxu0 0.0
    %4279 = vmatprep.subr.mxu0 0.0
    %4280 = vmatpush1.msra.mxu0 0.0
    %4281 = vmatprep.subr.mxu0 0.0
    %4282 = vmatpush1.msra.mxu0 0.0
    %4283 = vmatprep.subr.mxu0 0.0
    %4284 = vmatpush1.msra.mxu0 0.0
    %4285 = vmatprep.subr.mxu0 0.0
    %4286 = vmatpush1.msra.mxu0 0.0
    %4287 = vmatprep.subr.mxu0 0.0
    %4288 = vmatpush1.msra.mxu0 0.0
    %4289 = vmatprep.subr.mxu0 0.0
    %4290 = vmatpush1.msra.mxu0 0.0
    %4291 = vmatprep.subr.mxu0 0.0
    %4292 = vmatpush1.msra.mxu0 0.0
    %4293 = vmatprep.subr.mxu0 0.0
    %4294 = vmatpush1.msra.mxu0 0.0
    %4295 = vmatprep.subr.mxu0 0.0
    %4296 = vmatpush1.msra.mxu0 0.0
    %4297 = vmatprep.subr.mxu0 0.0
    %4298 = vmatpush1.msra.mxu0 0.0
    %4299 = vmatprep.subr.mxu0 0.0
    %4300 = vmatpush1.msra.mxu0 0.0
    %4301 = vmatprep.subr.mxu0 0.0
    %4302 = vmatpush1.msra.mxu0 0.0
    %4303 = vmatprep.subr.mxu0 0.0
    %4304 = vmatpush1.msra.mxu0 0.0
    %4305 = vmatprep.subr.mxu0 0.0
    %4306 = vmatpush1.msra.mxu0 0.0
    %4307 = vmatprep.subr.mxu0 0.0
    %4308 = vmatpush1.msra.mxu0 0.0
    %4309 = vmatprep.subr.mxu0 0.0
    %4310 = vmatpush1.msra.mxu0 0.0
    %4311 = vmatprep.subr.mxu0 0.0
    %4312 = vmatpush1.msra.mxu0 0.0
    %4313 = vmatprep.subr.mxu0 0.0
    %4314 = vmatpush1.msra.mxu0 0.0
    %4315 = vmatprep.subr.mxu0 0.0
    %4316 = vmatpush1.msra.mxu0 0.0
    %4317 = vmatprep.subr.mxu0 0.0
    %4318 = vmatpush1.msra.mxu0 0.0
    %4319 = vmatprep.subr.mxu0 0.0
    %4320 = vmatpush1.msra.mxu0 0.0
    %4321 = vmatprep.subr.mxu0 0.0
    %4322 = vmatpush1.msra.mxu0 0.0
    %4323 = vmatprep.subr.mxu0 0.0
    %4324 = vmatpush1.msra.mxu0 0.0
    %4325 = vmatprep.subr.mxu0 0.0
    %4326 = vmatpush1.msra.mxu0 0.0
    %4327 = vmatprep.subr.mxu0 0.0
    %4328 = vmatpush1.msra.mxu0 0.0
    %4329 = vmatprep.subr.mxu0 0.0
    %4330 = vmatpush1.msra.mxu0 0.0
    %4331 = vmatprep.subr.mxu0 0.0
    %4332 = vmatpush1.msra.mxu0 0.0
    %4333 = vmatprep.subr.mxu0 0.0
    %4334 = vmatpush1.msra.mxu0 0.0
    %4335 = vmatprep.mubr.f32.mxu0 0.0
    %4336 = vmatmul.mubr.f32.gmra.mrb[0].mxu0 %v4269
    %v4337 = vpop.f32.mrb[0].mxu0
    %v4338 = vadd.f32 0.0, %v4337
    %v4339 = vpop.f32.mrb[0].mxu0
    %4340 = vdwg.mxu0
    %v4341 = vadd.f32 %v4265, %v4338
    %v4342 = vxor.u32 %v4341, 2147483648
    %v4343 = vmul.f32 %v4342, 1.442695
    %v4344 = vpow.pop %v4343
    %v4345 = vadd.f32 %v4344, 1.0
    %v4346 = vrcp.pop %v4345
    %v4347 = vmul.f32 1.0, %v4346
    %v4348 = vadd.f32 %v4338, %v790
    %4350 = vrot.lane.b32.xlu0 %v4348, 112
    %v4351 = vpop.permute.xlu0 %4350
    %v4353 = vmul.f32 %v4347, %v4351
    %4355 = vrot.lane.b32.xlu0 %v4353, 16
    %v4356 = vpop.permute.xlu0 %4355
    %v4358 = vadd.f32 %v4265, %v4356
    %v4359 = vtanh.pop %v4358
    %v4360 = vsub.f32 %v4259, %v4359
    %4362 = vrot.lane.b32.xlu0 %v4360, 120
    %v4363 = vpop.permute.xlu0 %4362
    %v4365 = vmul.f32 %v4347, %v4363
    %4367 = vrot.lane.b32.xlu0 %v4365, 8
    %v4368 = vpop.permute.xlu0 %4367
    %v4370 = vadd.f32 %v4359, %v4368
    %s4371 = sld [smem:[#allocation5 + $0x20]]
    %v4372 = vstv %s4371
    %v4373 = vmul.f32 %v4370, %v4372
    %v4374 = vadd.f32 %v4263, %v4373
    %s4375 = scalar_lea.vmem [#allocation2], 264
    %v4376 = vld [vmem:[%s4375] sm:$0xff]
    %4378 = vrot.lane.b32.xlu0 %v4370, 112
    %v4379 = vpop.permute.xlu0 %4378
    %v4380 = vsel %vm703, %v4379, 0
    %4382 = vmatprep.subr.mxu0 0.0
    %4383 = vmatpush1.msra.mxu0 %v699
    %4384 = vmatprep.subr.mxu0 0.0
    %4385 = vmatpush1.msra.mxu0 0.0
    %4386 = vmatprep.subr.mxu0 0.0
    %4387 = vmatpush1.msra.mxu0 0.0
    %4388 = vmatprep.subr.mxu0 0.0
    %4389 = vmatpush1.msra.mxu0 0.0
    %4390 = vmatprep.subr.mxu0 0.0
    %4391 = vmatpush1.msra.mxu0 0.0
    %4392 = vmatprep.subr.mxu0 0.0
    %4393 = vmatpush1.msra.mxu0 0.0
    %4394 = vmatprep.subr.mxu0 0.0
    %4395 = vmatpush1.msra.mxu0 0.0
    %4396 = vmatprep.subr.mxu0 0.0
    %4397 = vmatpush1.msra.mxu0 0.0
    %4398 = vmatprep.subr.mxu0 0.0
    %4399 = vmatpush1.msra.mxu0 0.0
    %4400 = vmatprep.subr.mxu0 0.0
    %4401 = vmatpush1.msra.mxu0 0.0
    %4402 = vmatprep.subr.mxu0 0.0
    %4403 = vmatpush1.msra.mxu0 0.0
    %4404 = vmatprep.subr.mxu0 0.0
    %4405 = vmatpush1.msra.mxu0 0.0
    %4406 = vmatprep.subr.mxu0 0.0
    %4407 = vmatpush1.msra.mxu0 0.0
    %4408 = vmatprep.subr.mxu0 0.0
    %4409 = vmatpush1.msra.mxu0 0.0
    %4410 = vmatprep.subr.mxu0 0.0
    %4411 = vmatpush1.msra.mxu0 0.0
    %4412 = vmatprep.subr.mxu0 0.0
    %4413 = vmatpush1.msra.mxu0 0.0
    %4414 = vmatprep.subr.mxu0 0.0
    %4415 = vmatpush1.msra.mxu0 0.0
    %4416 = vmatprep.subr.mxu0 0.0
    %4417 = vmatpush1.msra.mxu0 0.0
    %4418 = vmatprep.subr.mxu0 0.0
    %4419 = vmatpush1.msra.mxu0 0.0
    %4420 = vmatprep.subr.mxu0 0.0
    %4421 = vmatpush1.msra.mxu0 0.0
    %4422 = vmatprep.subr.mxu0 0.0
    %4423 = vmatpush1.msra.mxu0 0.0
    %4424 = vmatprep.subr.mxu0 0.0
    %4425 = vmatpush1.msra.mxu0 0.0
    %4426 = vmatprep.subr.mxu0 0.0
    %4427 = vmatpush1.msra.mxu0 0.0
    %4428 = vmatprep.subr.mxu0 0.0
    %4429 = vmatpush1.msra.mxu0 0.0
    %4430 = vmatprep.subr.mxu0 0.0
    %4431 = vmatpush1.msra.mxu0 0.0
    %4432 = vmatprep.subr.mxu0 0.0
    %4433 = vmatpush1.msra.mxu0 0.0
    %4434 = vmatprep.subr.mxu0 0.0
    %4435 = vmatpush1.msra.mxu0 0.0
    %4436 = vmatprep.subr.mxu0 0.0
    %4437 = vmatpush1.msra.mxu0 0.0
    %4438 = vmatprep.subr.mxu0 0.0
    %4439 = vmatpush1.msra.mxu0 0.0
    %4440 = vmatprep.subr.mxu0 0.0
    %4441 = vmatpush1.msra.mxu0 0.0
    %4442 = vmatprep.subr.mxu0 0.0
    %4443 = vmatpush1.msra.mxu0 0.0
    %4444 = vmatprep.subr.mxu0 0.0
    %4445 = vmatpush1.msra.mxu0 0.0
    %4446 = vmatprep.mubr.f32.mxu0 0.0
    %4447 = vmatmul.mubr.f32.gmra.mrb[0].mxu0 %v4380
    %v4448 = vpop.f32.mrb[0].mxu0
    %v4449 = vadd.f32 0.0, %v4448
    %v4450 = vpop.f32.mrb[0].mxu0
    %4451 = vdwg.mxu0
    %v4452 = vadd.f32 %v4376, %v4449
    %v4453 = vxor.u32 %v4452, 2147483648
    %v4454 = vmul.f32 %v4453, 1.442695
    %v4455 = vpow.pop %v4454
    %v4456 = vadd.f32 %v4455, 1.0
    %v4457 = vrcp.pop %v4456
    %v4458 = vmul.f32 1.0, %v4457
    %v4459 = vadd.f32 %v4449, %v790
    %4461 = vrot.lane.b32.xlu0 %v4459, 112
    %v4462 = vpop.permute.xlu0 %4461
    %v4464 = vmul.f32 %v4458, %v4462
    %4466 = vrot.lane.b32.xlu0 %v4464, 16
    %v4467 = vpop.permute.xlu0 %4466
    %v4469 = vadd.f32 %v4376, %v4467
    %v4470 = vtanh.pop %v4469
    %v4471 = vsub.f32 %v4370, %v4470
    %4473 = vrot.lane.b32.xlu0 %v4471, 120
    %v4474 = vpop.permute.xlu0 %4473
    %v4476 = vmul.f32 %v4458, %v4474
    %4478 = vrot.lane.b32.xlu0 %v4476, 8
    %v4479 = vpop.permute.xlu0 %4478
    %v4481 = vadd.f32 %v4470, %v4479
    %s4482 = sld [smem:[#allocation5 + $0x21]]
    %v4483 = vstv %s4482
    %v4484 = vmul.f32 %v4481, %v4483
    %v4485 = vadd.f32 %v4374, %v4484
    %s4486 = scalar_lea.vmem [#allocation2], 272
    %v4487 = vld [vmem:[%s4486] sm:$0xff]
    %4489 = vrot.lane.b32.xlu0 %v4481, 112
    %v4490 = vpop.permute.xlu0 %4489
    %v4491 = vsel %vm703, %v4490, 0
    %4493 = vmatprep.subr.mxu0 0.0
    %4494 = vmatpush1.msra.mxu0 %v699
    %4495 = vmatprep.subr.mxu0 0.0
    %4496 = vmatpush1.msra.mxu0 0.0
    %4497 = vmatprep.subr.mxu0 0.0
    %4498 = vmatpush1.msra.mxu0 0.0
    %4499 = vmatprep.subr.mxu0 0.0
    %4500 = vmatpush1.msra.mxu0 0.0
    %4501 = vmatprep.subr.mxu0 0.0
    %4502 = vmatpush1.msra.mxu0 0.0
    %4503 = vmatprep.subr.mxu0 0.0
    %4504 = vmatpush1.msra.mxu0 0.0
    %4505 = vmatprep.subr.mxu0 0.0
    %4506 = vmatpush1.msra.mxu0 0.0
    %4507 = vmatprep.subr.mxu0 0.0
    %4508 = vmatpush1.msra.mxu0 0.0
    %4509 = vmatprep.subr.mxu0 0.0
    %4510 = vmatpush1.msra.mxu0 0.0
    %4511 = vmatprep.subr.mxu0 0.0
    %4512 = vmatpush1.msra.mxu0 0.0
    %4513 = vmatprep.subr.mxu0 0.0
    %4514 = vmatpush1.msra.mxu0 0.0
    %4515 = vmatprep.subr.mxu0 0.0
    %4516 = vmatpush1.msra.mxu0 0.0
    %4517 = vmatprep.subr.mxu0 0.0
    %4518 = vmatpush1.msra.mxu0 0.0
    %4519 = vmatprep.subr.mxu0 0.0
    %4520 = vmatpush1.msra.mxu0 0.0
    %4521 = vmatprep.subr.mxu0 0.0
    %4522 = vmatpush1.msra.mxu0 0.0
    %4523 = vmatprep.subr.mxu0 0.0
    %4524 = vmatpush1.msra.mxu0 0.0
    %4525 = vmatprep.subr.mxu0 0.0
    %4526 = vmatpush1.msra.mxu0 0.0
    %4527 = vmatprep.subr.mxu0 0.0
    %4528 = vmatpush1.msra.mxu0 0.0
    %4529 = vmatprep.subr.mxu0 0.0
    %4530 = vmatpush1.msra.mxu0 0.0
    %4531 = vmatprep.subr.mxu0 0.0
    %4532 = vmatpush1.msra.mxu0 0.0
    %4533 = vmatprep.subr.mxu0 0.0
    %4534 = vmatpush1.msra.mxu0 0.0
    %4535 = vmatprep.subr.mxu0 0.0
    %4536 = vmatpush1.msra.mxu0 0.0
    %4537 = vmatprep.subr.mxu0 0.0
    %4538 = vmatpush1.msra.mxu0 0.0
    %4539 = vmatprep.subr.mxu0 0.0
    %4540 = vmatpush1.msra.mxu0 0.0
    %4541 = vmatprep.subr.mxu0 0.0
    %4542 = vmatpush1.msra.mxu0 0.0
    %4543 = vmatprep.subr.mxu0 0.0
    %4544 = vmatpush1.msra.mxu0 0.0
    %4545 = vmatprep.subr.mxu0 0.0
    %4546 = vmatpush1.msra.mxu0 0.0
    %4547 = vmatprep.subr.mxu0 0.0
    %4548 = vmatpush1.msra.mxu0 0.0
    %4549 = vmatprep.subr.mxu0 0.0
    %4550 = vmatpush1.msra.mxu0 0.0
    %4551 = vmatprep.subr.mxu0 0.0
    %4552 = vmatpush1.msra.mxu0 0.0
    %4553 = vmatprep.subr.mxu0 0.0
    %4554 = vmatpush1.msra.mxu0 0.0
    %4555 = vmatprep.subr.mxu0 0.0
    %4556 = vmatpush1.msra.mxu0 0.0
    %4557 = vmatprep.mubr.f32.mxu0 0.0
    %4558 = vmatmul.mubr.f32.gmra.mrb[0].mxu0 %v4491
    %v4559 = vpop.f32.mrb[0].mxu0
    %v4560 = vadd.f32 0.0, %v4559
    %v4561 = vpop.f32.mrb[0].mxu0
    %4562 = vdwg.mxu0
    %v4563 = vadd.f32 %v4487, %v4560
    %v4564 = vxor.u32 %v4563, 2147483648
    %v4565 = vmul.f32 %v4564, 1.442695
    %v4566 = vpow.pop %v4565
    %v4567 = vadd.f32 %v4566, 1.0
    %v4568 = vrcp.pop %v4567
    %v4569 = vmul.f32 1.0, %v4568
    %v4570 = vadd.f32 %v4560, %v790
    %4572 = vrot.lane.b32.xlu0 %v4570, 112
    %v4573 = vpop.permute.xlu0 %4572
    %v4575 = vmul.f32 %v4569, %v4573
    %4577 = vrot.lane.b32.xlu0 %v4575, 16
    %v4578 = vpop.permute.xlu0 %4577
    %v4580 = vadd.f32 %v4487, %v4578
    %v4581 = vtanh.pop %v4580
    %v4582 = vsub.f32 %v4481, %v4581
    %4584 = vrot.lane.b32.xlu0 %v4582, 120
    %v4585 = vpop.permute.xlu0 %4584
    %v4587 = vmul.f32 %v4569, %v4585
    %4589 = vrot.lane.b32.xlu0 %v4587, 8
    %v4590 = vpop.permute.xlu0 %4589
    %v4592 = vadd.f32 %v4581, %v4590
    %s4593 = sld [smem:[#allocation5 + $0x22]]
    %v4594 = vstv %s4593
    %v4595 = vmul.f32 %v4592, %v4594
    %v4596 = vadd.f32 %v4485, %v4595
    %s4597 = scalar_lea.vmem [#allocation2], 280
    %v4598 = vld [vmem:[%s4597] sm:$0xff]
    %4600 = vrot.lane.b32.xlu0 %v4592, 112
    %v4601 = vpop.permute.xlu0 %4600
    %v4602 = vsel %vm703, %v4601, 0
    %4604 = vmatprep.subr.mxu0 0.0
    %4605 = vmatpush1.msra.mxu0 %v699
    %4606 = vmatprep.subr.mxu0 0.0
    %4607 = vmatpush1.msra.mxu0 0.0
    %4608 = vmatprep.subr.mxu0 0.0
    %4609 = vmatpush1.msra.mxu0 0.0
    %4610 = vmatprep.subr.mxu0 0.0
    %4611 = vmatpush1.msra.mxu0 0.0
    %4612 = vmatprep.subr.mxu0 0.0
    %4613 = vmatpush1.msra.mxu0 0.0
    %4614 = vmatprep.subr.mxu0 0.0
    %4615 = vmatpush1.msra.mxu0 0.0
    %4616 = vmatprep.subr.mxu0 0.0
    %4617 = vmatpush1.msra.mxu0 0.0
    %4618 = vmatprep.subr.mxu0 0.0
    %4619 = vmatpush1.msra.mxu0 0.0
    %4620 = vmatprep.subr.mxu0 0.0
    %4621 = vmatpush1.msra.mxu0 0.0
    %4622 = vmatprep.subr.mxu0 0.0
    %4623 = vmatpush1.msra.mxu0 0.0
    %4624 = vmatprep.subr.mxu0 0.0
    %4625 = vmatpush1.msra.mxu0 0.0
    %4626 = vmatprep.subr.mxu0 0.0
    %4627 = vmatpush1.msra.mxu0 0.0
    %4628 = vmatprep.subr.mxu0 0.0
    %4629 = vmatpush1.msra.mxu0 0.0
    %4630 = vmatprep.subr.mxu0 0.0
    %4631 = vmatpush1.msra.mxu0 0.0
    %4632 = vmatprep.subr.mxu0 0.0
    %4633 = vmatpush1.msra.mxu0 0.0
    %4634 = vmatprep.subr.mxu0 0.0
    %4635 = vmatpush1.msra.mxu0 0.0
    %4636 = vmatprep.subr.mxu0 0.0
    %4637 = vmatpush1.msra.mxu0 0.0
    %4638 = vmatprep.subr.mxu0 0.0
    %4639 = vmatpush1.msra.mxu0 0.0
    %4640 = vmatprep.subr.mxu0 0.0
    %4641 = vmatpush1.msra.mxu0 0.0
    %4642 = vmatprep.subr.mxu0 0.0
    %4643 = vmatpush1.msra.mxu0 0.0
    %4644 = vmatprep.subr.mxu0 0.0
    %4645 = vmatpush1.msra.mxu0 0.0
    %4646 = vmatprep.subr.mxu0 0.0
    %4647 = vmatpush1.msra.mxu0 0.0
    %4648 = vmatprep.subr.mxu0 0.0
    %4649 = vmatpush1.msra.mxu0 0.0
    %4650 = vmatprep.subr.mxu0 0.0
    %4651 = vmatpush1.msra.mxu0 0.0
    %4652 = vmatprep.subr.mxu0 0.0
    %4653 = vmatpush1.msra.mxu0 0.0
    %4654 = vmatprep.subr.mxu0 0.0
    %4655 = vmatpush1.msra.mxu0 0.0
    %4656 = vmatprep.subr.mxu0 0.0
    %4657 = vmatpush1.msra.mxu0 0.0
    %4658 = vmatprep.subr.mxu0 0.0
    %4659 = vmatpush1.msra.mxu0 0.0
    %4660 = vmatprep.subr.mxu0 0.0
    %4661 = vmatpush1.msra.mxu0 0.0
    %4662 = vmatprep.subr.mxu0 0.0
    %4663 = vmatpush1.msra.mxu0 0.0
    %4664 = vmatprep.subr.mxu0 0.0
    %4665 = vmatpush1.msra.mxu0 0.0
    %4666 = vmatprep.subr.mxu0 0.0
    %4667 = vmatpush1.msra.mxu0 0.0
    %4668 = vmatprep.mubr.f32.mxu0 0.0
    %4669 = vmatmul.mubr.f32.gmra.mrb[0].mxu0 %v4602
    %v4670 = vpop.f32.mrb[0].mxu0
    %v4671 = vadd.f32 0.0, %v4670
    %v4672 = vpop.f32.mrb[0].mxu0
    %4673 = vdwg.mxu0
    %v4674 = vadd.f32 %v4598, %v4671
    %v4675 = vxor.u32 %v4674, 2147483648
    %v4676 = vmul.f32 %v4675, 1.442695
    %v4677 = vpow.pop %v4676
    %v4678 = vadd.f32 %v4677, 1.0
    %v4679 = vrcp.pop %v4678
    %v4680 = vmul.f32 1.0, %v4679
    %v4681 = vadd.f32 %v4671, %v790
    %4683 = vrot.lane.b32.xlu0 %v4681, 112
    %v4684 = vpop.permute.xlu0 %4683
    %v4686 = vmul.f32 %v4680, %v4684
    %4688 = vrot.lane.b32.xlu0 %v4686, 16
    %v4689 = vpop.permute.xlu0 %4688
    %v4691 = vadd.f32 %v4598, %v4689
    %v4692 = vtanh.pop %v4691
    %v4693 = vsub.f32 %v4592, %v4692
    %4695 = vrot.lane.b32.xlu0 %v4693, 120
    %v4696 = vpop.permute.xlu0 %4695
    %v4698 = vmul.f32 %v4680, %v4696
    %4700 = vrot.lane.b32.xlu0 %v4698, 8
    %v4701 = vpop.permute.xlu0 %4700
    %v4703 = vadd.f32 %v4692, %v4701
    %s4704 = sld [smem:[#allocation5 + $0x23]]
    %v4705 = vstv %s4704
    %v4706 = vmul.f32 %v4703, %v4705
    %v4707 = vadd.f32 %v4596, %v4706
    %s4708 = scalar_lea.vmem [#allocation2], 288
    %v4709 = vld [vmem:[%s4708] sm:$0xff]
    %4711 = vrot.lane.b32.xlu0 %v4703, 112
    %v4712 = vpop.permute.xlu0 %4711
    %v4713 = vsel %vm703, %v4712, 0
    %4715 = vmatprep.subr.mxu0 0.0
    %4716 = vmatpush1.msra.mxu0 %v699
    %4717 = vmatprep.subr.mxu0 0.0
    %4718 = vmatpush1.msra.mxu0 0.0
    %4719 = vmatprep.subr.mxu0 0.0
    %4720 = vmatpush1.msra.mxu0 0.0
    %4721 = vmatprep.subr.mxu0 0.0
    %4722 = vmatpush1.msra.mxu0 0.0
    %4723 = vmatprep.subr.mxu0 0.0
    %4724 = vmatpush1.msra.mxu0 0.0
    %4725 = vmatprep.subr.mxu0 0.0
    %4726 = vmatpush1.msra.mxu0 0.0
    %4727 = vmatprep.subr.mxu0 0.0
    %4728 = vmatpush1.msra.mxu0 0.0
    %4729 = vmatprep.subr.mxu0 0.0
    %4730 = vmatpush1.msra.mxu0 0.0
    %4731 = vmatprep.subr.mxu0 0.0
    %4732 = vmatpush1.msra.mxu0 0.0
    %4733 = vmatprep.subr.mxu0 0.0
    %4734 = vmatpush1.msra.mxu0 0.0
    %4735 = vmatprep.subr.mxu0 0.0
    %4736 = vmatpush1.msra.mxu0 0.0
    %4737 = vmatprep.subr.mxu0 0.0
    %4738 = vmatpush1.msra.mxu0 0.0
    %4739 = vmatprep.subr.mxu0 0.0
    %4740 = vmatpush1.msra.mxu0 0.0
    %4741 = vmatprep.subr.mxu0 0.0
    %4742 = vmatpush1.msra.mxu0 0.0
    %4743 = vmatprep.subr.mxu0 0.0
    %4744 = vmatpush1.msra.mxu0 0.0
    %4745 = vmatprep.subr.mxu0 0.0
    %4746 = vmatpush1.msra.mxu0 0.0
    %4747 = vmatprep.subr.mxu0 0.0
    %4748 = vmatpush1.msra.mxu0 0.0
    %4749 = vmatprep.subr.mxu0 0.0
    %4750 = vmatpush1.msra.mxu0 0.0
    %4751 = vmatprep.subr.mxu0 0.0
    %4752 = vmatpush1.msra.mxu0 0.0
    %4753 = vmatprep.subr.mxu0 0.0
    %4754 = vmatpush1.msra.mxu0 0.0
    %4755 = vmatprep.subr.mxu0 0.0
    %4756 = vmatpush1.msra.mxu0 0.0
    %4757 = vmatprep.subr.mxu0 0.0
    %4758 = vmatpush1.msra.mxu0 0.0
    %4759 = vmatprep.subr.mxu0 0.0
    %4760 = vmatpush1.msra.mxu0 0.0
    %4761 = vmatprep.subr.mxu0 0.0
    %4762 = vmatpush1.msra.mxu0 0.0
    %4763 = vmatprep.subr.mxu0 0.0
    %4764 = vmatpush1.msra.mxu0 0.0
    %4765 = vmatprep.subr.mxu0 0.0
    %4766 = vmatpush1.msra.mxu0 0.0
    %4767 = vmatprep.subr.mxu0 0.0
    %4768 = vmatpush1.msra.mxu0 0.0
    %4769 = vmatprep.subr.mxu0 0.0
    %4770 = vmatpush1.msra.mxu0 0.0
    %4771 = vmatprep.subr.mxu0 0.0
    %4772 = vmatpush1.msra.mxu0 0.0
    %4773 = vmatprep.subr.mxu0 0.0
    %4774 = vmatpush1.msra.mxu0 0.0
    %4775 = vmatprep.subr.mxu0 0.0
    %4776 = vmatpush1.msra.mxu0 0.0
    %4777 = vmatprep.subr.mxu0 0.0
    %4778 = vmatpush1.msra.mxu0 0.0
    %4779 = vmatprep.mubr.f32.mxu0 0.0
    %4780 = vmatmul.mubr.f32.gmra.mrb[0].mxu0 %v4713
    %v4781 = vpop.f32.mrb[0].mxu0
    %v4782 = vadd.f32 0.0, %v4781
    %v4783 = vpop.f32.mrb[0].mxu0
    %4784 = vdwg.mxu0
    %v4785 = vadd.f32 %v4709, %v4782
    %v4786 = vxor.u32 %v4785, 2147483648
    %v4787 = vmul.f32 %v4786, 1.442695
    %v4788 = vpow.pop %v4787
    %v4789 = vadd.f32 %v4788, 1.0
    %v4790 = vrcp.pop %v4789
    %v4791 = vmul.f32 1.0, %v4790
    %v4792 = vadd.f32 %v4782, %v790
    %4794 = vrot.lane.b32.xlu0 %v4792, 112
    %v4795 = vpop.permute.xlu0 %4794
    %v4797 = vmul.f32 %v4791, %v4795
    %4799 = vrot.lane.b32.xlu0 %v4797, 16
    %v4800 = vpop.permute.xlu0 %4799
    %v4802 = vadd.f32 %v4709, %v4800
    %v4803 = vtanh.pop %v4802
    %v4804 = vsub.f32 %v4703, %v4803
    %4806 = vrot.lane.b32.xlu0 %v4804, 120
    %v4807 = vpop.permute.xlu0 %4806
    %v4809 = vmul.f32 %v4791, %v4807
    %4811 = vrot.lane.b32.xlu0 %v4809, 8
    %v4812 = vpop.permute.xlu0 %4811
    %v4814 = vadd.f32 %v4803, %v4812
    %s4815 = sld [smem:[#allocation5 + $0x24]]
    %v4816 = vstv %s4815
    %v4817 = vmul.f32 %v4814, %v4816
    %v4818 = vadd.f32 %v4707, %v4817
    %s4819 = scalar_lea.vmem [#allocation2], 296
    %v4820 = vld [vmem:[%s4819] sm:$0xff]
    %4822 = vrot.lane.b32.xlu0 %v4814, 112
    %v4823 = vpop.permute.xlu0 %4822
    %v4824 = vsel %vm703, %v4823, 0
    %4826 = vmatprep.subr.mxu0 0.0
    %4827 = vmatpush1.msra.mxu0 %v699
    %4828 = vmatprep.subr.mxu0 0.0
    %4829 = vmatpush1.msra.mxu0 0.0
    %4830 = vmatprep.subr.mxu0 0.0
    %4831 = vmatpush1.msra.mxu0 0.0
    %4832 = vmatprep.subr.mxu0 0.0
    %4833 = vmatpush1.msra.mxu0 0.0
    %4834 = vmatprep.subr.mxu0 0.0
    %4835 = vmatpush1.msra.mxu0 0.0
    %4836 = vmatprep.subr.mxu0 0.0
    %4837 = vmatpush1.msra.mxu0 0.0
    %4838 = vmatprep.subr.mxu0 0.0
    %4839 = vmatpush1.msra.mxu0 0.0
    %4840 = vmatprep.subr.mxu0 0.0
    %4841 = vmatpush1.msra.mxu0 0.0
    %4842 = vmatprep.subr.mxu0 0.0
    %4843 = vmatpush1.msra.mxu0 0.0
    %4844 = vmatprep.subr.mxu0 0.0
    %4845 = vmatpush1.msra.mxu0 0.0
    %4846 = vmatprep.subr.mxu0 0.0
    %4847 = vmatpush1.msra.mxu0 0.0
    %4848 = vmatprep.subr.mxu0 0.0
    %4849 = vmatpush1.msra.mxu0 0.0
    %4850 = vmatprep.subr.mxu0 0.0
    %4851 = vmatpush1.msra.mxu0 0.0
    %4852 = vmatprep.subr.mxu0 0.0
    %4853 = vmatpush1.msra.mxu0 0.0
    %4854 = vmatprep.subr.mxu0 0.0
    %4855 = vmatpush1.msra.mxu0 0.0
    %4856 = vmatprep.subr.mxu0 0.0
    %4857 = vmatpush1.msra.mxu0 0.0
    %4858 = vmatprep.subr.mxu0 0.0
    %4859 = vmatpush1.msra.mxu0 0.0
    %4860 = vmatprep.subr.mxu0 0.0
    %4861 = vmatpush1.msra.mxu0 0.0
    %4862 = vmatprep.subr.mxu0 0.0
    %4863 = vmatpush1.msra.mxu0 0.0
    %4864 = vmatprep.subr.mxu0 0.0
    %4865 = vmatpush1.msra.mxu0 0.0
    %4866 = vmatprep.subr.mxu0 0.0
    %4867 = vmatpush1.msra.mxu0 0.0
    %4868 = vmatprep.subr.mxu0 0.0
    %4869 = vmatpush1.msra.mxu0 0.0
    %4870 = vmatprep.subr.mxu0 0.0
    %4871 = vmatpush1.msra.mxu0 0.0
    %4872 = vmatprep.subr.mxu0 0.0
    %4873 = vmatpush1.msra.mxu0 0.0
    %4874 = vmatprep.subr.mxu0 0.0
    %4875 = vmatpush1.msra.mxu0 0.0
    %4876 = vmatprep.subr.mxu0 0.0
    %4877 = vmatpush1.msra.mxu0 0.0
    %4878 = vmatprep.subr.mxu0 0.0
    %4879 = vmatpush1.msra.mxu0 0.0
    %4880 = vmatprep.subr.mxu0 0.0
    %4881 = vmatpush1.msra.mxu0 0.0
    %4882 = vmatprep.subr.mxu0 0.0
    %4883 = vmatpush1.msra.mxu0 0.0
    %4884 = vmatprep.subr.mxu0 0.0
    %4885 = vmatpush1.msra.mxu0 0.0
    %4886 = vmatprep.subr.mxu0 0.0
    %4887 = vmatpush1.msra.mxu0 0.0
    %4888 = vmatprep.subr.mxu0 0.0
    %4889 = vmatpush1.msra.mxu0 0.0
    %4890 = vmatprep.mubr.f32.mxu0 0.0
    %4891 = vmatmul.mubr.f32.gmra.mrb[0].mxu0 %v4824
    %v4892 = vpop.f32.mrb[0].mxu0
    %v4893 = vadd.f32 0.0, %v4892
    %v4894 = vpop.f32.mrb[0].mxu0
    %4895 = vdwg.mxu0
    %v4896 = vadd.f32 %v4820, %v4893
    %v4897 = vxor.u32 %v4896, 2147483648
    %v4898 = vmul.f32 %v4897, 1.442695
    %v4899 = vpow.pop %v4898
    %v4900 = vadd.f32 %v4899, 1.0
    %v4901 = vrcp.pop %v4900
    %v4902 = vmul.f32 1.0, %v4901
    %v4903 = vadd.f32 %v4893, %v790
    %4905 = vrot.lane.b32.xlu0 %v4903, 112
    %v4906 = vpop.permute.xlu0 %4905
    %v4908 = vmul.f32 %v4902, %v4906
    %4910 = vrot.lane.b32.xlu0 %v4908, 16
    %v4911 = vpop.permute.xlu0 %4910
    %v4913 = vadd.f32 %v4820, %v4911
    %v4914 = vtanh.pop %v4913
    %v4915 = vsub.f32 %v4814, %v4914
    %4917 = vrot.lane.b32.xlu0 %v4915, 120
    %v4918 = vpop.permute.xlu0 %4917
    %v4920 = vmul.f32 %v4902, %v4918
    %4922 = vrot.lane.b32.xlu0 %v4920, 8
    %v4923 = vpop.permute.xlu0 %4922
    %v4925 = vadd.f32 %v4914, %v4923
    %s4926 = sld [smem:[#allocation5 + $0x25]]
    %v4927 = vstv %s4926
    %v4928 = vmul.f32 %v4925, %v4927
    %v4929 = vadd.f32 %v4818, %v4928
    %s4930 = scalar_lea.vmem [#allocation2], 304
    %v4931 = vld [vmem:[%s4930] sm:$0xff]
    %4933 = vrot.lane.b32.xlu0 %v4925, 112
    %v4934 = vpop.permute.xlu0 %4933
    %v4935 = vsel %vm703, %v4934, 0
    %4937 = vmatprep.subr.mxu0 0.0
    %4938 = vmatpush1.msra.mxu0 %v699
    %4939 = vmatprep.subr.mxu0 0.0
    %4940 = vmatpush1.msra.mxu0 0.0
    %4941 = vmatprep.subr.mxu0 0.0
    %4942 = vmatpush1.msra.mxu0 0.0
    %4943 = vmatprep.subr.mxu0 0.0
    %4944 = vmatpush1.msra.mxu0 0.0
    %4945 = vmatprep.subr.mxu0 0.0
    %4946 = vmatpush1.msra.mxu0 0.0
    %4947 = vmatprep.subr.mxu0 0.0
    %4948 = vmatpush1.msra.mxu0 0.0
    %4949 = vmatprep.subr.mxu0 0.0
    %4950 = vmatpush1.msra.mxu0 0.0
    %4951 = vmatprep.subr.mxu0 0.0
    %4952 = vmatpush1.msra.mxu0 0.0
    %4953 = vmatprep.subr.mxu0 0.0
    %4954 = vmatpush1.msra.mxu0 0.0
    %4955 = vmatprep.subr.mxu0 0.0
    %4956 = vmatpush1.msra.mxu0 0.0
    %4957 = vmatprep.subr.mxu0 0.0
    %4958 = vmatpush1.msra.mxu0 0.0
    %4959 = vmatprep.subr.mxu0 0.0
    %4960 = vmatpush1.msra.mxu0 0.0
    %4961 = vmatprep.subr.mxu0 0.0
    %4962 = vmatpush1.msra.mxu0 0.0
    %4963 = vmatprep.subr.mxu0 0.0
    %4964 = vmatpush1.msra.mxu0 0.0
    %4965 = vmatprep.subr.mxu0 0.0
    %4966 = vmatpush1.msra.mxu0 0.0
    %4967 = vmatprep.subr.mxu0 0.0
    %4968 = vmatpush1.msra.mxu0 0.0
    %4969 = vmatprep.subr.mxu0 0.0
    %4970 = vmatpush1.msra.mxu0 0.0
    %4971 = vmatprep.subr.mxu0 0.0
    %4972 = vmatpush1.msra.mxu0 0.0
    %4973 = vmatprep.subr.mxu0 0.0
    %4974 = vmatpush1.msra.mxu0 0.0
    %4975 = vmatprep.subr.mxu0 0.0
    %4976 = vmatpush1.msra.mxu0 0.0
    %4977 = vmatprep.subr.mxu0 0.0
    %4978 = vmatpush1.msra.mxu0 0.0
    %4979 = vmatprep.subr.mxu0 0.0
    %4980 = vmatpush1.msra.mxu0 0.0
    %4981 = vmatprep.subr.mxu0 0.0
    %4982 = vmatpush1.msra.mxu0 0.0
    %4983 = vmatprep.subr.mxu0 0.0
    %4984 = vmatpush1.msra.mxu0 0.0
    %4985 = vmatprep.subr.mxu0 0.0
    %4986 = vmatpush1.msra.mxu0 0.0
    %4987 = vmatprep.subr.mxu0 0.0
    %4988 = vmatpush1.msra.mxu0 0.0
    %4989 = vmatprep.subr.mxu0 0.0
    %4990 = vmatpush1.msra.mxu0 0.0
    %4991 = vmatprep.subr.mxu0 0.0
    %4992 = vmatpush1.msra.mxu0 0.0
    %4993 = vmatprep.subr.mxu0 0.0
    %4994 = vmatpush1.msra.mxu0 0.0
    %4995 = vmatprep.subr.mxu0 0.0
    %4996 = vmatpush1.msra.mxu0 0.0
    %4997 = vmatprep.subr.mxu0 0.0
    %4998 = vmatpush1.msra.mxu0 0.0
    %4999 = vmatprep.subr.mxu0 0.0
    %5000 = vmatpush1.msra.mxu0 0.0
    %5001 = vmatprep.mubr.f32.mxu0 0.0
    %5002 = vmatmul.mubr.f32.gmra.mrb[0].mxu0 %v4935
    %v5003 = vpop.f32.mrb[0].mxu0
    %v5004 = vadd.f32 0.0, %v5003
    %v5005 = vpop.f32.mrb[0].mxu0
    %5006 = vdwg.mxu0
    %v5007 = vadd.f32 %v4931, %v5004
    %v5008 = vxor.u32 %v5007, 2147483648
    %v5009 = vmul.f32 %v5008, 1.442695
    %v5010 = vpow.pop %v5009
    %v5011 = vadd.f32 %v5010, 1.0
    %v5012 = vrcp.pop %v5011
    %v5013 = vmul.f32 1.0, %v5012
    %v5014 = vadd.f32 %v5004, %v790
    %5016 = vrot.lane.b32.xlu0 %v5014, 112
    %v5017 = vpop.permute.xlu0 %5016
    %v5019 = vmul.f32 %v5013, %v5017
    %5021 = vrot.lane.b32.xlu0 %v5019, 16
    %v5022 = vpop.permute.xlu0 %5021
    %v5024 = vadd.f32 %v4931, %v5022
    %v5025 = vtanh.pop %v5024
    %v5026 = vsub.f32 %v4925, %v5025
    %5028 = vrot.lane.b32.xlu0 %v5026, 120
    %v5029 = vpop.permute.xlu0 %5028
    %v5031 = vmul.f32 %v5013, %v5029
    %5033 = vrot.lane.b32.xlu0 %v5031, 8
    %v5034 = vpop.permute.xlu0 %5033
    %v5036 = vadd.f32 %v5025, %v5034
    %s5037 = sld [smem:[#allocation5 + $0x26]]
    %v5038 = vstv %s5037
    %v5039 = vmul.f32 %v5036, %v5038
    %v5040 = vadd.f32 %v4929, %v5039
    %s5041 = scalar_lea.vmem [#allocation2], 312
    %v5042 = vld [vmem:[%s5041] sm:$0xff]
    %5044 = vrot.lane.b32.xlu0 %v5036, 112
    %v5045 = vpop.permute.xlu0 %5044
    %v5046 = vsel %vm703, %v5045, 0
    %5048 = vmatprep.subr.mxu0 0.0
    %5049 = vmatpush1.msra.mxu0 %v699
    %5050 = vmatprep.subr.mxu0 0.0
    %5051 = vmatpush1.msra.mxu0 0.0
    %5052 = vmatprep.subr.mxu0 0.0
    %5053 = vmatpush1.msra.mxu0 0.0
    %5054 = vmatprep.subr.mxu0 0.0
    %5055 = vmatpush1.msra.mxu0 0.0
    %5056 = vmatprep.subr.mxu0 0.0
    %5057 = vmatpush1.msra.mxu0 0.0
    %5058 = vmatprep.subr.mxu0 0.0
    %5059 = vmatpush1.msra.mxu0 0.0
    %5060 = vmatprep.subr.mxu0 0.0
    %5061 = vmatpush1.msra.mxu0 0.0
    %5062 = vmatprep.subr.mxu0 0.0
    %5063 = vmatpush1.msra.mxu0 0.0
    %5064 = vmatprep.subr.mxu0 0.0
    %5065 = vmatpush1.msra.mxu0 0.0
    %5066 = vmatprep.subr.mxu0 0.0
    %5067 = vmatpush1.msra.mxu0 0.0
    %5068 = vmatprep.subr.mxu0 0.0
    %5069 = vmatpush1.msra.mxu0 0.0
    %5070 = vmatprep.subr.mxu0 0.0
    %5071 = vmatpush1.msra.mxu0 0.0
    %5072 = vmatprep.subr.mxu0 0.0
    %5073 = vmatpush1.msra.mxu0 0.0
    %5074 = vmatprep.subr.mxu0 0.0
    %5075 = vmatpush1.msra.mxu0 0.0
    %5076 = vmatprep.subr.mxu0 0.0
    %5077 = vmatpush1.msra.mxu0 0.0
    %5078 = vmatprep.subr.mxu0 0.0
    %5079 = vmatpush1.msra.mxu0 0.0
    %5080 = vmatprep.subr.mxu0 0.0
    %5081 = vmatpush1.msra.mxu0 0.0
    %5082 = vmatprep.subr.mxu0 0.0
    %5083 = vmatpush1.msra.mxu0 0.0
    %5084 = vmatprep.subr.mxu0 0.0
    %5085 = vmatpush1.msra.mxu0 0.0
    %5086 = vmatprep.subr.mxu0 0.0
    %5087 = vmatpush1.msra.mxu0 0.0
    %5088 = vmatprep.subr.mxu0 0.0
    %5089 = vmatpush1.msra.mxu0 0.0
    %5090 = vmatprep.subr.mxu0 0.0
    %5091 = vmatpush1.msra.mxu0 0.0
    %5092 = vmatprep.subr.mxu0 0.0
    %5093 = vmatpush1.msra.mxu0 0.0
    %5094 = vmatprep.subr.mxu0 0.0
    %5095 = vmatpush1.msra.mxu0 0.0
    %5096 = vmatprep.subr.mxu0 0.0
    %5097 = vmatpush1.msra.mxu0 0.0
    %5098 = vmatprep.subr.mxu0 0.0
    %5099 = vmatpush1.msra.mxu0 0.0
    %5100 = vmatprep.subr.mxu0 0.0
    %5101 = vmatpush1.msra.mxu0 0.0
    %5102 = vmatprep.subr.mxu0 0.0
    %5103 = vmatpush1.msra.mxu0 0.0
    %5104 = vmatprep.subr.mxu0 0.0
    %5105 = vmatpush1.msra.mxu0 0.0
    %5106 = vmatprep.subr.mxu0 0.0
    %5107 = vmatpush1.msra.mxu0 0.0
    %5108 = vmatprep.subr.mxu0 0.0
    %5109 = vmatpush1.msra.mxu0 0.0
    %5110 = vmatprep.subr.mxu0 0.0
    %5111 = vmatpush1.msra.mxu0 0.0
    %5112 = vmatprep.mubr.f32.mxu0 0.0
    %5113 = vmatmul.mubr.f32.gmra.mrb[0].mxu0 %v5046
    %v5114 = vpop.f32.mrb[0].mxu0
    %v5115 = vadd.f32 0.0, %v5114
    %v5116 = vpop.f32.mrb[0].mxu0
    %5117 = vdwg.mxu0
    %v5118 = vadd.f32 %v5042, %v5115
    %v5119 = vxor.u32 %v5118, 2147483648
    %v5120 = vmul.f32 %v5119, 1.442695
    %v5121 = vpow.pop %v5120
    %v5122 = vadd.f32 %v5121, 1.0
    %v5123 = vrcp.pop %v5122
    %v5124 = vmul.f32 1.0, %v5123
    %v5125 = vadd.f32 %v5115, %v790
    %5127 = vrot.lane.b32.xlu0 %v5125, 112
    %v5128 = vpop.permute.xlu0 %5127
    %v5130 = vmul.f32 %v5124, %v5128
    %5132 = vrot.lane.b32.xlu0 %v5130, 16
    %v5133 = vpop.permute.xlu0 %5132
    %v5135 = vadd.f32 %v5042, %v5133
    %v5136 = vtanh.pop %v5135
    %v5137 = vsub.f32 %v5036, %v5136
    %5139 = vrot.lane.b32.xlu0 %v5137, 120
    %v5140 = vpop.permute.xlu0 %5139
    %v5142 = vmul.f32 %v5124, %v5140
    %5144 = vrot.lane.b32.xlu0 %v5142, 8
    %v5145 = vpop.permute.xlu0 %5144
    %v5147 = vadd.f32 %v5136, %v5145
    %s5148 = sld [smem:[#allocation5 + $0x27]]
    %v5149 = vstv %s5148
    %v5150 = vmul.f32 %v5147, %v5149
    %v5151 = vadd.f32 %v5040, %v5150
    %s5152 = scalar_lea.vmem [#allocation2], 320
    %v5153 = vld [vmem:[%s5152] sm:$0xff]
    %5155 = vrot.lane.b32.xlu0 %v5147, 112
    %v5156 = vpop.permute.xlu0 %5155
    %v5157 = vsel %vm703, %v5156, 0
    %5159 = vmatprep.subr.mxu0 0.0
    %5160 = vmatpush1.msra.mxu0 %v699
    %5161 = vmatprep.subr.mxu0 0.0
    %5162 = vmatpush1.msra.mxu0 0.0
    %5163 = vmatprep.subr.mxu0 0.0
    %5164 = vmatpush1.msra.mxu0 0.0
    %5165 = vmatprep.subr.mxu0 0.0
    %5166 = vmatpush1.msra.mxu0 0.0
    %5167 = vmatprep.subr.mxu0 0.0
    %5168 = vmatpush1.msra.mxu0 0.0
    %5169 = vmatprep.subr.mxu0 0.0
    %5170 = vmatpush1.msra.mxu0 0.0
    %5171 = vmatprep.subr.mxu0 0.0
    %5172 = vmatpush1.msra.mxu0 0.0
    %5173 = vmatprep.subr.mxu0 0.0
    %5174 = vmatpush1.msra.mxu0 0.0
    %5175 = vmatprep.subr.mxu0 0.0
    %5176 = vmatpush1.msra.mxu0 0.0
    %5177 = vmatprep.subr.mxu0 0.0
    %5178 = vmatpush1.msra.mxu0 0.0
    %5179 = vmatprep.subr.mxu0 0.0
    %5180 = vmatpush1.msra.mxu0 0.0
    %5181 = vmatprep.subr.mxu0 0.0
    %5182 = vmatpush1.msra.mxu0 0.0
    %5183 = vmatprep.subr.mxu0 0.0
    %5184 = vmatpush1.msra.mxu0 0.0
    %5185 = vmatprep.subr.mxu0 0.0
    %5186 = vmatpush1.msra.mxu0 0.0
    %5187 = vmatprep.subr.mxu0 0.0
    %5188 = vmatpush1.msra.mxu0 0.0
    %5189 = vmatprep.subr.mxu0 0.0
    %5190 = vmatpush1.msra.mxu0 0.0
    %5191 = vmatprep.subr.mxu0 0.0
    %5192 = vmatpush1.msra.mxu0 0.0
    %5193 = vmatprep.subr.mxu0 0.0
    %5194 = vmatpush1.msra.mxu0 0.0
    %5195 = vmatprep.subr.mxu0 0.0
    %5196 = vmatpush1.msra.mxu0 0.0
    %5197 = vmatprep.subr.mxu0 0.0
    %5198 = vmatpush1.msra.mxu0 0.0
    %5199 = vmatprep.subr.mxu0 0.0
    %5200 = vmatpush1.msra.mxu0 0.0
    %5201 = vmatprep.subr.mxu0 0.0
    %5202 = vmatpush1.msra.mxu0 0.0
    %5203 = vmatprep.subr.mxu0 0.0
    %5204 = vmatpush1.msra.mxu0 0.0
    %5205 = vmatprep.subr.mxu0 0.0
    %5206 = vmatpush1.msra.mxu0 0.0
    %5207 = vmatprep.subr.mxu0 0.0
    %5208 = vmatpush1.msra.mxu0 0.0
    %5209 = vmatprep.subr.mxu0 0.0
    %5210 = vmatpush1.msra.mxu0 0.0
    %5211 = vmatprep.subr.mxu0 0.0
    %5212 = vmatpush1.msra.mxu0 0.0
    %5213 = vmatprep.subr.mxu0 0.0
    %5214 = vmatpush1.msra.mxu0 0.0
    %5215 = vmatprep.subr.mxu0 0.0
    %5216 = vmatpush1.msra.mxu0 0.0
    %5217 = vmatprep.subr.mxu0 0.0
    %5218 = vmatpush1.msra.mxu0 0.0
    %5219 = vmatprep.subr.mxu0 0.0
    %5220 = vmatpush1.msra.mxu0 0.0
    %5221 = vmatprep.subr.mxu0 0.0
    %5222 = vmatpush1.msra.mxu0 0.0
    %5223 = vmatprep.mubr.f32.mxu0 0.0
    %5224 = vmatmul.mubr.f32.gmra.mrb[0].mxu0 %v5157
    %v5225 = vpop.f32.mrb[0].mxu0
    %v5226 = vadd.f32 0.0, %v5225
    %v5227 = vpop.f32.mrb[0].mxu0
    %5228 = vdwg.mxu0
    %v5229 = vadd.f32 %v5153, %v5226
    %v5230 = vxor.u32 %v5229, 2147483648
    %v5231 = vmul.f32 %v5230, 1.442695
    %v5232 = vpow.pop %v5231
    %v5233 = vadd.f32 %v5232, 1.0
    %v5234 = vrcp.pop %v5233
    %v5235 = vmul.f32 1.0, %v5234
    %v5236 = vadd.f32 %v5226, %v790
    %5238 = vrot.lane.b32.xlu0 %v5236, 112
    %v5239 = vpop.permute.xlu0 %5238
    %v5241 = vmul.f32 %v5235, %v5239
    %5243 = vrot.lane.b32.xlu0 %v5241, 16
    %v5244 = vpop.permute.xlu0 %5243
    %v5246 = vadd.f32 %v5153, %v5244
    %v5247 = vtanh.pop %v5246
    %v5248 = vsub.f32 %v5147, %v5247
    %5250 = vrot.lane.b32.xlu0 %v5248, 120
    %v5251 = vpop.permute.xlu0 %5250
    %v5253 = vmul.f32 %v5235, %v5251
    %5255 = vrot.lane.b32.xlu0 %v5253, 8
    %v5256 = vpop.permute.xlu0 %5255
    %v5258 = vadd.f32 %v5247, %v5256
    %s5259 = sld [smem:[#allocation5 + $0x28]]
    %v5260 = vstv %s5259
    %v5261 = vmul.f32 %v5258, %v5260
    %v5262 = vadd.f32 %v5151, %v5261
    %s5263 = scalar_lea.vmem [#allocation2], 328
    %v5264 = vld [vmem:[%s5263] sm:$0xff]
    %5266 = vrot.lane.b32.xlu0 %v5258, 112
    %v5267 = vpop.permute.xlu0 %5266
    %v5268 = vsel %vm703, %v5267, 0
    %5270 = vmatprep.subr.mxu0 0.0
    %5271 = vmatpush1.msra.mxu0 %v699
    %5272 = vmatprep.subr.mxu0 0.0
    %5273 = vmatpush1.msra.mxu0 0.0
    %5274 = vmatprep.subr.mxu0 0.0
    %5275 = vmatpush1.msra.mxu0 0.0
    %5276 = vmatprep.subr.mxu0 0.0
    %5277 = vmatpush1.msra.mxu0 0.0
    %5278 = vmatprep.subr.mxu0 0.0
    %5279 = vmatpush1.msra.mxu0 0.0
    %5280 = vmatprep.subr.mxu0 0.0
    %5281 = vmatpush1.msra.mxu0 0.0
    %5282 = vmatprep.subr.mxu0 0.0
    %5283 = vmatpush1.msra.mxu0 0.0
    %5284 = vmatprep.subr.mxu0 0.0
    %5285 = vmatpush1.msra.mxu0 0.0
    %5286 = vmatprep.subr.mxu0 0.0
    %5287 = vmatpush1.msra.mxu0 0.0
    %5288 = vmatprep.subr.mxu0 0.0
    %5289 = vmatpush1.msra.mxu0 0.0
    %5290 = vmatprep.subr.mxu0 0.0
    %5291 = vmatpush1.msra.mxu0 0.0
    %5292 = vmatprep.subr.mxu0 0.0
    %5293 = vmatpush1.msra.mxu0 0.0
    %5294 = vmatprep.subr.mxu0 0.0
    %5295 = vmatpush1.msra.mxu0 0.0
    %5296 = vmatprep.subr.mxu0 0.0
    %5297 = vmatpush1.msra.mxu0 0.0
    %5298 = vmatprep.subr.mxu0 0.0
    %5299 = vmatpush1.msra.mxu0 0.0
    %5300 = vmatprep.subr.mxu0 0.0
    %5301 = vmatpush1.msra.mxu0 0.0
    %5302 = vmatprep.subr.mxu0 0.0
    %5303 = vmatpush1.msra.mxu0 0.0
    %5304 = vmatprep.subr.mxu0 0.0
    %5305 = vmatpush1.msra.mxu0 0.0
    %5306 = vmatprep.subr.mxu0 0.0
    %5307 = vmatpush1.msra.mxu0 0.0
    %5308 = vmatprep.subr.mxu0 0.0
    %5309 = vmatpush1.msra.mxu0 0.0
    %5310 = vmatprep.subr.mxu0 0.0
    %5311 = vmatpush1.msra.mxu0 0.0
    %5312 = vmatprep.subr.mxu0 0.0
    %5313 = vmatpush1.msra.mxu0 0.0
    %5314 = vmatprep.subr.mxu0 0.0
    %5315 = vmatpush1.msra.mxu0 0.0
    %5316 = vmatprep.subr.mxu0 0.0
    %5317 = vmatpush1.msra.mxu0 0.0
    %5318 = vmatprep.subr.mxu0 0.0
    %5319 = vmatpush1.msra.mxu0 0.0
    %5320 = vmatprep.subr.mxu0 0.0
    %5321 = vmatpush1.msra.mxu0 0.0
    %5322 = vmatprep.subr.mxu0 0.0
    %5323 = vmatpush1.msra.mxu0 0.0
    %5324 = vmatprep.subr.mxu0 0.0
    %5325 = vmatpush1.msra.mxu0 0.0
    %5326 = vmatprep.subr.mxu0 0.0
    %5327 = vmatpush1.msra.mxu0 0.0
    %5328 = vmatprep.subr.mxu0 0.0
    %5329 = vmatpush1.msra.mxu0 0.0
    %5330 = vmatprep.subr.mxu0 0.0
    %5331 = vmatpush1.msra.mxu0 0.0
    %5332 = vmatprep.subr.mxu0 0.0
    %5333 = vmatpush1.msra.mxu0 0.0
    %5334 = vmatprep.mubr.f32.mxu0 0.0
    %5335 = vmatmul.mubr.f32.gmra.mrb[0].mxu0 %v5268
    %v5336 = vpop.f32.mrb[0].mxu0
    %v5337 = vadd.f32 0.0, %v5336
    %v5338 = vpop.f32.mrb[0].mxu0
    %5339 = vdwg.mxu0
    %v5340 = vadd.f32 %v5264, %v5337
    %v5341 = vxor.u32 %v5340, 2147483648
    %v5342 = vmul.f32 %v5341, 1.442695
    %v5343 = vpow.pop %v5342
    %v5344 = vadd.f32 %v5343, 1.0
    %v5345 = vrcp.pop %v5344
    %v5346 = vmul.f32 1.0, %v5345
    %v5347 = vadd.f32 %v5337, %v790
    %5349 = vrot.lane.b32.xlu0 %v5347, 112
    %v5350 = vpop.permute.xlu0 %5349
    %v5352 = vmul.f32 %v5346, %v5350
    %5354 = vrot.lane.b32.xlu0 %v5352, 16
    %v5355 = vpop.permute.xlu0 %5354
    %v5357 = vadd.f32 %v5264, %v5355
    %v5358 = vtanh.pop %v5357
    %v5359 = vsub.f32 %v5258, %v5358
    %5361 = vrot.lane.b32.xlu0 %v5359, 120
    %v5362 = vpop.permute.xlu0 %5361
    %v5364 = vmul.f32 %v5346, %v5362
    %5366 = vrot.lane.b32.xlu0 %v5364, 8
    %v5367 = vpop.permute.xlu0 %5366
    %v5369 = vadd.f32 %v5358, %v5367
    %s5370 = sld [smem:[#allocation5 + $0x29]]
    %v5371 = vstv %s5370
    %v5372 = vmul.f32 %v5369, %v5371
    %v5373 = vadd.f32 %v5262, %v5372
    %s5374 = scalar_lea.vmem [#allocation2], 336
    %v5375 = vld [vmem:[%s5374] sm:$0xff]
    %5377 = vrot.lane.b32.xlu0 %v5369, 112
    %v5378 = vpop.permute.xlu0 %5377
    %v5379 = vsel %vm703, %v5378, 0
    %5381 = vmatprep.subr.mxu0 0.0
    %5382 = vmatpush1.msra.mxu0 %v699
    %5383 = vmatprep.subr.mxu0 0.0
    %5384 = vmatpush1.msra.mxu0 0.0
    %5385 = vmatprep.subr.mxu0 0.0
    %5386 = vmatpush1.msra.mxu0 0.0
    %5387 = vmatprep.subr.mxu0 0.0
    %5388 = vmatpush1.msra.mxu0 0.0
    %5389 = vmatprep.subr.mxu0 0.0
    %5390 = vmatpush1.msra.mxu0 0.0
    %5391 = vmatprep.subr.mxu0 0.0
    %5392 = vmatpush1.msra.mxu0 0.0
    %5393 = vmatprep.subr.mxu0 0.0
    %5394 = vmatpush1.msra.mxu0 0.0
    %5395 = vmatprep.subr.mxu0 0.0
    %5396 = vmatpush1.msra.mxu0 0.0
    %5397 = vmatprep.subr.mxu0 0.0
    %5398 = vmatpush1.msra.mxu0 0.0
    %5399 = vmatprep.subr.mxu0 0.0
    %5400 = vmatpush1.msra.mxu0 0.0
    %5401 = vmatprep.subr.mxu0 0.0
    %5402 = vmatpush1.msra.mxu0 0.0
    %5403 = vmatprep.subr.mxu0 0.0
    %5404 = vmatpush1.msra.mxu0 0.0
    %5405 = vmatprep.subr.mxu0 0.0
    %5406 = vmatpush1.msra.mxu0 0.0
    %5407 = vmatprep.subr.mxu0 0.0
    %5408 = vmatpush1.msra.mxu0 0.0
    %5409 = vmatprep.subr.mxu0 0.0
    %5410 = vmatpush1.msra.mxu0 0.0
    %5411 = vmatprep.subr.mxu0 0.0
    %5412 = vmatpush1.msra.mxu0 0.0
    %5413 = vmatprep.subr.mxu0 0.0
    %5414 = vmatpush1.msra.mxu0 0.0
    %5415 = vmatprep.subr.mxu0 0.0
    %5416 = vmatpush1.msra.mxu0 0.0
    %5417 = vmatprep.subr.mxu0 0.0
    %5418 = vmatpush1.msra.mxu0 0.0
    %5419 = vmatprep.subr.mxu0 0.0
    %5420 = vmatpush1.msra.mxu0 0.0
    %5421 = vmatprep.subr.mxu0 0.0
    %5422 = vmatpush1.msra.mxu0 0.0
    %5423 = vmatprep.subr.mxu0 0.0
    %5424 = vmatpush1.msra.mxu0 0.0
    %5425 = vmatprep.subr.mxu0 0.0
    %5426 = vmatpush1.msra.mxu0 0.0
    %5427 = vmatprep.subr.mxu0 0.0
    %5428 = vmatpush1.msra.mxu0 0.0
    %5429 = vmatprep.subr.mxu0 0.0
    %5430 = vmatpush1.msra.mxu0 0.0
    %5431 = vmatprep.subr.mxu0 0.0
    %5432 = vmatpush1.msra.mxu0 0.0
    %5433 = vmatprep.subr.mxu0 0.0
    %5434 = vmatpush1.msra.mxu0 0.0
    %5435 = vmatprep.subr.mxu0 0.0
    %5436 = vmatpush1.msra.mxu0 0.0
    %5437 = vmatprep.subr.mxu0 0.0
    %5438 = vmatpush1.msra.mxu0 0.0
    %5439 = vmatprep.subr.mxu0 0.0
    %5440 = vmatpush1.msra.mxu0 0.0
    %5441 = vmatprep.subr.mxu0 0.0
    %5442 = vmatpush1.msra.mxu0 0.0
    %5443 = vmatprep.subr.mxu0 0.0
    %5444 = vmatpush1.msra.mxu0 0.0
    %5445 = vmatprep.mubr.f32.mxu0 0.0
    %5446 = vmatmul.mubr.f32.gmra.mrb[0].mxu0 %v5379
    %v5447 = vpop.f32.mrb[0].mxu0
    %v5448 = vadd.f32 0.0, %v5447
    %v5449 = vpop.f32.mrb[0].mxu0
    %5450 = vdwg.mxu0
    %v5451 = vadd.f32 %v5375, %v5448
    %v5452 = vxor.u32 %v5451, 2147483648
    %v5453 = vmul.f32 %v5452, 1.442695
    %v5454 = vpow.pop %v5453
    %v5455 = vadd.f32 %v5454, 1.0
    %v5456 = vrcp.pop %v5455
    %v5457 = vmul.f32 1.0, %v5456
    %v5458 = vadd.f32 %v5448, %v790
    %5460 = vrot.lane.b32.xlu0 %v5458, 112
    %v5461 = vpop.permute.xlu0 %5460
    %v5463 = vmul.f32 %v5457, %v5461
    %5465 = vrot.lane.b32.xlu0 %v5463, 16
    %v5466 = vpop.permute.xlu0 %5465
    %v5468 = vadd.f32 %v5375, %v5466
    %v5469 = vtanh.pop %v5468
    %v5470 = vsub.f32 %v5369, %v5469
    %5472 = vrot.lane.b32.xlu0 %v5470, 120
    %v5473 = vpop.permute.xlu0 %5472
    %v5475 = vmul.f32 %v5457, %v5473
    %5477 = vrot.lane.b32.xlu0 %v5475, 8
    %v5478 = vpop.permute.xlu0 %5477
    %v5480 = vadd.f32 %v5469, %v5478
    %s5481 = sld [smem:[#allocation5 + $0x2a]]
    %v5482 = vstv %s5481
    %v5483 = vmul.f32 %v5480, %v5482
    %v5484 = vadd.f32 %v5373, %v5483
    %s5485 = scalar_lea.vmem [#allocation2], 344
    %v5486 = vld [vmem:[%s5485] sm:$0xff]
    %5488 = vrot.lane.b32.xlu0 %v5480, 112
    %v5489 = vpop.permute.xlu0 %5488
    %v5490 = vsel %vm703, %v5489, 0
    %5492 = vmatprep.subr.mxu0 0.0
    %5493 = vmatpush1.msra.mxu0 %v699
    %5494 = vmatprep.subr.mxu0 0.0
    %5495 = vmatpush1.msra.mxu0 0.0
    %5496 = vmatprep.subr.mxu0 0.0
    %5497 = vmatpush1.msra.mxu0 0.0
    %5498 = vmatprep.subr.mxu0 0.0
    %5499 = vmatpush1.msra.mxu0 0.0
    %5500 = vmatprep.subr.mxu0 0.0
    %5501 = vmatpush1.msra.mxu0 0.0
    %5502 = vmatprep.subr.mxu0 0.0
    %5503 = vmatpush1.msra.mxu0 0.0
    %5504 = vmatprep.subr.mxu0 0.0
    %5505 = vmatpush1.msra.mxu0 0.0
    %5506 = vmatprep.subr.mxu0 0.0
    %5507 = vmatpush1.msra.mxu0 0.0
    %5508 = vmatprep.subr.mxu0 0.0
    %5509 = vmatpush1.msra.mxu0 0.0
    %5510 = vmatprep.subr.mxu0 0.0
    %5511 = vmatpush1.msra.mxu0 0.0
    %5512 = vmatprep.subr.mxu0 0.0
    %5513 = vmatpush1.msra.mxu0 0.0
    %5514 = vmatprep.subr.mxu0 0.0
    %5515 = vmatpush1.msra.mxu0 0.0
    %5516 = vmatprep.subr.mxu0 0.0
    %5517 = vmatpush1.msra.mxu0 0.0
    %5518 = vmatprep.subr.mxu0 0.0
    %5519 = vmatpush1.msra.mxu0 0.0
    %5520 = vmatprep.subr.mxu0 0.0
    %5521 = vmatpush1.msra.mxu0 0.0
    %5522 = vmatprep.subr.mxu0 0.0
    %5523 = vmatpush1.msra.mxu0 0.0
    %5524 = vmatprep.subr.mxu0 0.0
    %5525 = vmatpush1.msra.mxu0 0.0
    %5526 = vmatprep.subr.mxu0 0.0
    %5527 = vmatpush1.msra.mxu0 0.0
    %5528 = vmatprep.subr.mxu0 0.0
    %5529 = vmatpush1.msra.mxu0 0.0
    %5530 = vmatprep.subr.mxu0 0.0
    %5531 = vmatpush1.msra.mxu0 0.0
    %5532 = vmatprep.subr.mxu0 0.0
    %5533 = vmatpush1.msra.mxu0 0.0
    %5534 = vmatprep.subr.mxu0 0.0
    %5535 = vmatpush1.msra.mxu0 0.0
    %5536 = vmatprep.subr.mxu0 0.0
    %5537 = vmatpush1.msra.mxu0 0.0
    %5538 = vmatprep.subr.mxu0 0.0
    %5539 = vmatpush1.msra.mxu0 0.0
    %5540 = vmatprep.subr.mxu0 0.0
    %5541 = vmatpush1.msra.mxu0 0.0
    %5542 = vmatprep.subr.mxu0 0.0
    %5543 = vmatpush1.msra.mxu0 0.0
    %5544 = vmatprep.subr.mxu0 0.0
    %5545 = vmatpush1.msra.mxu0 0.0
    %5546 = vmatprep.subr.mxu0 0.0
    %5547 = vmatpush1.msra.mxu0 0.0
    %5548 = vmatprep.subr.mxu0 0.0
    %5549 = vmatpush1.msra.mxu0 0.0
    %5550 = vmatprep.subr.mxu0 0.0
    %5551 = vmatpush1.msra.mxu0 0.0
    %5552 = vmatprep.subr.mxu0 0.0
    %5553 = vmatpush1.msra.mxu0 0.0
    %5554 = vmatprep.subr.mxu0 0.0
    %5555 = vmatpush1.msra.mxu0 0.0
    %5556 = vmatprep.mubr.f32.mxu0 0.0
    %5557 = vmatmul.mubr.f32.gmra.mrb[0].mxu0 %v5490
    %v5558 = vpop.f32.mrb[0].mxu0
    %v5559 = vadd.f32 0.0, %v5558
    %v5560 = vpop.f32.mrb[0].mxu0
    %5561 = vdwg.mxu0
    %v5562 = vadd.f32 %v5486, %v5559
    %v5563 = vxor.u32 %v5562, 2147483648
    %v5564 = vmul.f32 %v5563, 1.442695
    %v5565 = vpow.pop %v5564
    %v5566 = vadd.f32 %v5565, 1.0
    %v5567 = vrcp.pop %v5566
    %v5568 = vmul.f32 1.0, %v5567
    %v5569 = vadd.f32 %v5559, %v790
    %5571 = vrot.lane.b32.xlu0 %v5569, 112
    %v5572 = vpop.permute.xlu0 %5571
    %v5574 = vmul.f32 %v5568, %v5572
    %5576 = vrot.lane.b32.xlu0 %v5574, 16
    %v5577 = vpop.permute.xlu0 %5576
    %v5579 = vadd.f32 %v5486, %v5577
    %v5580 = vtanh.pop %v5579
    %v5581 = vsub.f32 %v5480, %v5580
    %5583 = vrot.lane.b32.xlu0 %v5581, 120
    %v5584 = vpop.permute.xlu0 %5583
    %v5586 = vmul.f32 %v5568, %v5584
    %5588 = vrot.lane.b32.xlu0 %v5586, 8
    %v5589 = vpop.permute.xlu0 %5588
    %v5591 = vadd.f32 %v5580, %v5589
    %s5592 = sld [smem:[#allocation5 + $0x2b]]
    %v5593 = vstv %s5592
    %v5594 = vmul.f32 %v5591, %v5593
    %v5595 = vadd.f32 %v5484, %v5594
    %s5596 = scalar_lea.vmem [#allocation2], 352
    %v5597 = vld [vmem:[%s5596] sm:$0xff]
    %5599 = vrot.lane.b32.xlu0 %v5591, 112
    %v5600 = vpop.permute.xlu0 %5599
    %v5601 = vsel %vm703, %v5600, 0
    %5603 = vmatprep.subr.mxu0 0.0
    %5604 = vmatpush1.msra.mxu0 %v699
    %5605 = vmatprep.subr.mxu0 0.0
    %5606 = vmatpush1.msra.mxu0 0.0
    %5607 = vmatprep.subr.mxu0 0.0
    %5608 = vmatpush1.msra.mxu0 0.0
    %5609 = vmatprep.subr.mxu0 0.0
    %5610 = vmatpush1.msra.mxu0 0.0
    %5611 = vmatprep.subr.mxu0 0.0
    %5612 = vmatpush1.msra.mxu0 0.0
    %5613 = vmatprep.subr.mxu0 0.0
    %5614 = vmatpush1.msra.mxu0 0.0
    %5615 = vmatprep.subr.mxu0 0.0
    %5616 = vmatpush1.msra.mxu0 0.0
    %5617 = vmatprep.subr.mxu0 0.0
    %5618 = vmatpush1.msra.mxu0 0.0
    %5619 = vmatprep.subr.mxu0 0.0
    %5620 = vmatpush1.msra.mxu0 0.0
    %5621 = vmatprep.subr.mxu0 0.0
    %5622 = vmatpush1.msra.mxu0 0.0
    %5623 = vmatprep.subr.mxu0 0.0
    %5624 = vmatpush1.msra.mxu0 0.0
    %5625 = vmatprep.subr.mxu0 0.0
    %5626 = vmatpush1.msra.mxu0 0.0
    %5627 = vmatprep.subr.mxu0 0.0
    %5628 = vmatpush1.msra.mxu0 0.0
    %5629 = vmatprep.subr.mxu0 0.0
    %5630 = vmatpush1.msra.mxu0 0.0
    %5631 = vmatprep.subr.mxu0 0.0
    %5632 = vmatpush1.msra.mxu0 0.0
    %5633 = vmatprep.subr.mxu0 0.0
    %5634 = vmatpush1.msra.mxu0 0.0
    %5635 = vmatprep.subr.mxu0 0.0
    %5636 = vmatpush1.msra.mxu0 0.0
    %5637 = vmatprep.subr.mxu0 0.0
    %5638 = vmatpush1.msra.mxu0 0.0
    %5639 = vmatprep.subr.mxu0 0.0
    %5640 = vmatpush1.msra.mxu0 0.0
    %5641 = vmatprep.subr.mxu0 0.0
    %5642 = vmatpush1.msra.mxu0 0.0
    %5643 = vmatprep.subr.mxu0 0.0
    %5644 = vmatpush1.msra.mxu0 0.0
    %5645 = vmatprep.subr.mxu0 0.0
    %5646 = vmatpush1.msra.mxu0 0.0
    %5647 = vmatprep.subr.mxu0 0.0
    %5648 = vmatpush1.msra.mxu0 0.0
    %5649 = vmatprep.subr.mxu0 0.0
    %5650 = vmatpush1.msra.mxu0 0.0
    %5651 = vmatprep.subr.mxu0 0.0
    %5652 = vmatpush1.msra.mxu0 0.0
    %5653 = vmatprep.subr.mxu0 0.0
    %5654 = vmatpush1.msra.mxu0 0.0
    %5655 = vmatprep.subr.mxu0 0.0
    %5656 = vmatpush1.msra.mxu0 0.0
    %5657 = vmatprep.subr.mxu0 0.0
    %5658 = vmatpush1.msra.mxu0 0.0
    %5659 = vmatprep.subr.mxu0 0.0
    %5660 = vmatpush1.msra.mxu0 0.0
    %5661 = vmatprep.subr.mxu0 0.0
    %5662 = vmatpush1.msra.mxu0 0.0
    %5663 = vmatprep.subr.mxu0 0.0
    %5664 = vmatpush1.msra.mxu0 0.0
    %5665 = vmatprep.subr.mxu0 0.0
    %5666 = vmatpush1.msra.mxu0 0.0
    %5667 = vmatprep.mubr.f32.mxu0 0.0
    %5668 = vmatmul.mubr.f32.gmra.mrb[0].mxu0 %v5601
    %v5669 = vpop.f32.mrb[0].mxu0
    %v5670 = vadd.f32 0.0, %v5669
    %v5671 = vpop.f32.mrb[0].mxu0
    %5672 = vdwg.mxu0
    %v5673 = vadd.f32 %v5597, %v5670
    %v5674 = vxor.u32 %v5673, 2147483648
    %v5675 = vmul.f32 %v5674, 1.442695
    %v5676 = vpow.pop %v5675
    %v5677 = vadd.f32 %v5676, 1.0
    %v5678 = vrcp.pop %v5677
    %v5679 = vmul.f32 1.0, %v5678
    %v5680 = vadd.f32 %v5670, %v790
    %5682 = vrot.lane.b32.xlu0 %v5680, 112
    %v5683 = vpop.permute.xlu0 %5682
    %v5685 = vmul.f32 %v5679, %v5683
    %5687 = vrot.lane.b32.xlu0 %v5685, 16
    %v5688 = vpop.permute.xlu0 %5687
    %v5690 = vadd.f32 %v5597, %v5688
    %v5691 = vtanh.pop %v5690
    %v5692 = vsub.f32 %v5591, %v5691
    %5694 = vrot.lane.b32.xlu0 %v5692, 120
    %v5695 = vpop.permute.xlu0 %5694
    %v5697 = vmul.f32 %v5679, %v5695
    %5699 = vrot.lane.b32.xlu0 %v5697, 8
    %v5700 = vpop.permute.xlu0 %5699
    %v5702 = vadd.f32 %v5691, %v5700
    %s5703 = sld [smem:[#allocation5 + $0x2c]]
    %v5704 = vstv %s5703
    %v5705 = vmul.f32 %v5702, %v5704
    %v5706 = vadd.f32 %v5595, %v5705
    %s5707 = scalar_lea.vmem [#allocation2], 360
    %v5708 = vld [vmem:[%s5707] sm:$0xff]
    %5710 = vrot.lane.b32.xlu0 %v5702, 112
    %v5711 = vpop.permute.xlu0 %5710
    %v5712 = vsel %vm703, %v5711, 0
    %5714 = vmatprep.subr.mxu0 0.0
    %5715 = vmatpush1.msra.mxu0 %v699
    %5716 = vmatprep.subr.mxu0 0.0
    %5717 = vmatpush1.msra.mxu0 0.0
    %5718 = vmatprep.subr.mxu0 0.0
    %5719 = vmatpush1.msra.mxu0 0.0
    %5720 = vmatprep.subr.mxu0 0.0
    %5721 = vmatpush1.msra.mxu0 0.0
    %5722 = vmatprep.subr.mxu0 0.0
    %5723 = vmatpush1.msra.mxu0 0.0
    %5724 = vmatprep.subr.mxu0 0.0
    %5725 = vmatpush1.msra.mxu0 0.0
    %5726 = vmatprep.subr.mxu0 0.0
    %5727 = vmatpush1.msra.mxu0 0.0
    %5728 = vmatprep.subr.mxu0 0.0
    %5729 = vmatpush1.msra.mxu0 0.0
    %5730 = vmatprep.subr.mxu0 0.0
    %5731 = vmatpush1.msra.mxu0 0.0
    %5732 = vmatprep.subr.mxu0 0.0
    %5733 = vmatpush1.msra.mxu0 0.0
    %5734 = vmatprep.subr.mxu0 0.0
    %5735 = vmatpush1.msra.mxu0 0.0
    %5736 = vmatprep.subr.mxu0 0.0
    %5737 = vmatpush1.msra.mxu0 0.0
    %5738 = vmatprep.subr.mxu0 0.0
    %5739 = vmatpush1.msra.mxu0 0.0
    %5740 = vmatprep.subr.mxu0 0.0
    %5741 = vmatpush1.msra.mxu0 0.0
    %5742 = vmatprep.subr.mxu0 0.0
    %5743 = vmatpush1.msra.mxu0 0.0
    %5744 = vmatprep.subr.mxu0 0.0
    %5745 = vmatpush1.msra.mxu0 0.0
    %5746 = vmatprep.subr.mxu0 0.0
    %5747 = vmatpush1.msra.mxu0 0.0
    %5748 = vmatprep.subr.mxu0 0.0
    %5749 = vmatpush1.msra.mxu0 0.0
    %5750 = vmatprep.subr.mxu0 0.0
    %5751 = vmatpush1.msra.mxu0 0.0
    %5752 = vmatprep.subr.mxu0 0.0
    %5753 = vmatpush1.msra.mxu0 0.0
    %5754 = vmatprep.subr.mxu0 0.0
    %5755 = vmatpush1.msra.mxu0 0.0
    %5756 = vmatprep.subr.mxu0 0.0
    %5757 = vmatpush1.msra.mxu0 0.0
    %5758 = vmatprep.subr.mxu0 0.0
    %5759 = vmatpush1.msra.mxu0 0.0
    %5760 = vmatprep.subr.mxu0 0.0
    %5761 = vmatpush1.msra.mxu0 0.0
    %5762 = vmatprep.subr.mxu0 0.0
    %5763 = vmatpush1.msra.mxu0 0.0
    %5764 = vmatprep.subr.mxu0 0.0
    %5765 = vmatpush1.msra.mxu0 0.0
    %5766 = vmatprep.subr.mxu0 0.0
    %5767 = vmatpush1.msra.mxu0 0.0
    %5768 = vmatprep.subr.mxu0 0.0
    %5769 = vmatpush1.msra.mxu0 0.0
    %5770 = vmatprep.subr.mxu0 0.0
    %5771 = vmatpush1.msra.mxu0 0.0
    %5772 = vmatprep.subr.mxu0 0.0
    %5773 = vmatpush1.msra.mxu0 0.0
    %5774 = vmatprep.subr.mxu0 0.0
    %5775 = vmatpush1.msra.mxu0 0.0
    %5776 = vmatprep.subr.mxu0 0.0
    %5777 = vmatpush1.msra.mxu0 0.0
    %5778 = vmatprep.mubr.f32.mxu0 0.0
    %5779 = vmatmul.mubr.f32.gmra.mrb[0].mxu0 %v5712
    %v5780 = vpop.f32.mrb[0].mxu0
    %v5781 = vadd.f32 0.0, %v5780
    %v5782 = vpop.f32.mrb[0].mxu0
    %5783 = vdwg.mxu0
    %v5784 = vadd.f32 %v5708, %v5781
    %v5785 = vxor.u32 %v5784, 2147483648
    %v5786 = vmul.f32 %v5785, 1.442695
    %v5787 = vpow.pop %v5786
    %v5788 = vadd.f32 %v5787, 1.0
    %v5789 = vrcp.pop %v5788
    %v5790 = vmul.f32 1.0, %v5789
    %v5791 = vadd.f32 %v5781, %v790
    %5793 = vrot.lane.b32.xlu0 %v5791, 112
    %v5794 = vpop.permute.xlu0 %5793
    %v5796 = vmul.f32 %v5790, %v5794
    %5798 = vrot.lane.b32.xlu0 %v5796, 16
    %v5799 = vpop.permute.xlu0 %5798
    %v5801 = vadd.f32 %v5708, %v5799
    %v5802 = vtanh.pop %v5801
    %v5803 = vsub.f32 %v5702, %v5802
    %5805 = vrot.lane.b32.xlu0 %v5803, 120
    %v5806 = vpop.permute.xlu0 %5805
    %v5808 = vmul.f32 %v5790, %v5806
    %5810 = vrot.lane.b32.xlu0 %v5808, 8
    %v5811 = vpop.permute.xlu0 %5810
    %v5813 = vadd.f32 %v5802, %v5811
    %s5814 = sld [smem:[#allocation5 + $0x2d]]
    %v5815 = vstv %s5814
    %v5816 = vmul.f32 %v5813, %v5815
    %v5817 = vadd.f32 %v5706, %v5816
    %s5818 = scalar_lea.vmem [#allocation2], 368
    %v5819 = vld [vmem:[%s5818] sm:$0xff]
    %5821 = vrot.lane.b32.xlu0 %v5813, 112
    %v5822 = vpop.permute.xlu0 %5821
    %v5823 = vsel %vm703, %v5822, 0
    %5825 = vmatprep.subr.mxu0 0.0
    %5826 = vmatpush1.msra.mxu0 %v699
    %5827 = vmatprep.subr.mxu0 0.0
    %5828 = vmatpush1.msra.mxu0 0.0
    %5829 = vmatprep.subr.mxu0 0.0
    %5830 = vmatpush1.msra.mxu0 0.0
    %5831 = vmatprep.subr.mxu0 0.0
    %5832 = vmatpush1.msra.mxu0 0.0
    %5833 = vmatprep.subr.mxu0 0.0
    %5834 = vmatpush1.msra.mxu0 0.0
    %5835 = vmatprep.subr.mxu0 0.0
    %5836 = vmatpush1.msra.mxu0 0.0
    %5837 = vmatprep.subr.mxu0 0.0
    %5838 = vmatpush1.msra.mxu0 0.0
    %5839 = vmatprep.subr.mxu0 0.0
    %5840 = vmatpush1.msra.mxu0 0.0
    %5841 = vmatprep.subr.mxu0 0.0
    %5842 = vmatpush1.msra.mxu0 0.0
    %5843 = vmatprep.subr.mxu0 0.0
    %5844 = vmatpush1.msra.mxu0 0.0
    %5845 = vmatprep.subr.mxu0 0.0
    %5846 = vmatpush1.msra.mxu0 0.0
    %5847 = vmatprep.subr.mxu0 0.0
    %5848 = vmatpush1.msra.mxu0 0.0
    %5849 = vmatprep.subr.mxu0 0.0
    %5850 = vmatpush1.msra.mxu0 0.0
    %5851 = vmatprep.subr.mxu0 0.0
    %5852 = vmatpush1.msra.mxu0 0.0
    %5853 = vmatprep.subr.mxu0 0.0
    %5854 = vmatpush1.msra.mxu0 0.0
    %5855 = vmatprep.subr.mxu0 0.0
    %5856 = vmatpush1.msra.mxu0 0.0
    %5857 = vmatprep.subr.mxu0 0.0
    %5858 = vmatpush1.msra.mxu0 0.0
    %5859 = vmatprep.subr.mxu0 0.0
    %5860 = vmatpush1.msra.mxu0 0.0
    %5861 = vmatprep.subr.mxu0 0.0
    %5862 = vmatpush1.msra.mxu0 0.0
    %5863 = vmatprep.subr.mxu0 0.0
    %5864 = vmatpush1.msra.mxu0 0.0
    %5865 = vmatprep.subr.mxu0 0.0
    %5866 = vmatpush1.msra.mxu0 0.0
    %5867 = vmatprep.subr.mxu0 0.0
    %5868 = vmatpush1.msra.mxu0 0.0
    %5869 = vmatprep.subr.mxu0 0.0
    %5870 = vmatpush1.msra.mxu0 0.0
    %5871 = vmatprep.subr.mxu0 0.0
    %5872 = vmatpush1.msra.mxu0 0.0
    %5873 = vmatprep.subr.mxu0 0.0
    %5874 = vmatpush1.msra.mxu0 0.0
    %5875 = vmatprep.subr.mxu0 0.0
    %5876 = vmatpush1.msra.mxu0 0.0
    %5877 = vmatprep.subr.mxu0 0.0
    %5878 = vmatpush1.msra.mxu0 0.0
    %5879 = vmatprep.subr.mxu0 0.0
    %5880 = vmatpush1.msra.mxu0 0.0
    %5881 = vmatprep.subr.mxu0 0.0
    %5882 = vmatpush1.msra.mxu0 0.0
    %5883 = vmatprep.subr.mxu0 0.0
    %5884 = vmatpush1.msra.mxu0 0.0
    %5885 = vmatprep.subr.mxu0 0.0
    %5886 = vmatpush1.msra.mxu0 0.0
    %5887 = vmatprep.subr.mxu0 0.0
    %5888 = vmatpush1.msra.mxu0 0.0
    %5889 = vmatprep.mubr.f32.mxu0 0.0
    %5890 = vmatmul.mubr.f32.gmra.mrb[0].mxu0 %v5823
    %v5891 = vpop.f32.mrb[0].mxu0
    %v5892 = vadd.f32 0.0, %v5891
    %v5893 = vpop.f32.mrb[0].mxu0
    %5894 = vdwg.mxu0
    %v5895 = vadd.f32 %v5819, %v5892
    %v5896 = vxor.u32 %v5895, 2147483648
    %v5897 = vmul.f32 %v5896, 1.442695
    %v5898 = vpow.pop %v5897
    %v5899 = vadd.f32 %v5898, 1.0
    %v5900 = vrcp.pop %v5899
    %v5901 = vmul.f32 1.0, %v5900
    %v5902 = vadd.f32 %v5892, %v790
    %5904 = vrot.lane.b32.xlu0 %v5902, 112
    %v5905 = vpop.permute.xlu0 %5904
    %v5907 = vmul.f32 %v5901, %v5905
    %5909 = vrot.lane.b32.xlu0 %v5907, 16
    %v5910 = vpop.permute.xlu0 %5909
    %v5912 = vadd.f32 %v5819, %v5910
    %v5913 = vtanh.pop %v5912
    %v5914 = vsub.f32 %v5813, %v5913
    %5916 = vrot.lane.b32.xlu0 %v5914, 120
    %v5917 = vpop.permute.xlu0 %5916
    %v5919 = vmul.f32 %v5901, %v5917
    %5921 = vrot.lane.b32.xlu0 %v5919, 8
    %v5922 = vpop.permute.xlu0 %5921
    %v5924 = vadd.f32 %v5913, %v5922
    %s5925 = sld [smem:[#allocation5 + $0x2e]]
    %v5926 = vstv %s5925
    %v5927 = vmul.f32 %v5924, %v5926
    %v5928 = vadd.f32 %v5817, %v5927
    %s5929 = scalar_lea.vmem [#allocation2], 376
    %v5930 = vld [vmem:[%s5929] sm:$0xff]
    %5932 = vrot.lane.b32.xlu0 %v5924, 112
    %v5933 = vpop.permute.xlu0 %5932
    %v5934 = vsel %vm703, %v5933, 0
    %5936 = vmatprep.subr.mxu0 0.0
    %5937 = vmatpush1.msra.mxu0 %v699
    %5938 = vmatprep.subr.mxu0 0.0
    %5939 = vmatpush1.msra.mxu0 0.0
    %5940 = vmatprep.subr.mxu0 0.0
    %5941 = vmatpush1.msra.mxu0 0.0
    %5942 = vmatprep.subr.mxu0 0.0
    %5943 = vmatpush1.msra.mxu0 0.0
    %5944 = vmatprep.subr.mxu0 0.0
    %5945 = vmatpush1.msra.mxu0 0.0
    %5946 = vmatprep.subr.mxu0 0.0
    %5947 = vmatpush1.msra.mxu0 0.0
    %5948 = vmatprep.subr.mxu0 0.0
    %5949 = vmatpush1.msra.mxu0 0.0
    %5950 = vmatprep.subr.mxu0 0.0
    %5951 = vmatpush1.msra.mxu0 0.0
    %5952 = vmatprep.subr.mxu0 0.0
    %5953 = vmatpush1.msra.mxu0 0.0
    %5954 = vmatprep.subr.mxu0 0.0
    %5955 = vmatpush1.msra.mxu0 0.0
    %5956 = vmatprep.subr.mxu0 0.0
    %5957 = vmatpush1.msra.mxu0 0.0
    %5958 = vmatprep.subr.mxu0 0.0
    %5959 = vmatpush1.msra.mxu0 0.0
    %5960 = vmatprep.subr.mxu0 0.0
    %5961 = vmatpush1.msra.mxu0 0.0
    %5962 = vmatprep.subr.mxu0 0.0
    %5963 = vmatpush1.msra.mxu0 0.0
    %5964 = vmatprep.subr.mxu0 0.0
    %5965 = vmatpush1.msra.mxu0 0.0
    %5966 = vmatprep.subr.mxu0 0.0
    %5967 = vmatpush1.msra.mxu0 0.0
    %5968 = vmatprep.subr.mxu0 0.0
    %5969 = vmatpush1.msra.mxu0 0.0
    %5970 = vmatprep.subr.mxu0 0.0
    %5971 = vmatpush1.msra.mxu0 0.0
    %5972 = vmatprep.subr.mxu0 0.0
    %5973 = vmatpush1.msra.mxu0 0.0
    %5974 = vmatprep.subr.mxu0 0.0
    %5975 = vmatpush1.msra.mxu0 0.0
    %5976 = vmatprep.subr.mxu0 0.0
    %5977 = vmatpush1.msra.mxu0 0.0
    %5978 = vmatprep.subr.mxu0 0.0
    %5979 = vmatpush1.msra.mxu0 0.0
    %5980 = vmatprep.subr.mxu0 0.0
    %5981 = vmatpush1.msra.mxu0 0.0
    %5982 = vmatprep.subr.mxu0 0.0
    %5983 = vmatpush1.msra.mxu0 0.0
    %5984 = vmatprep.subr.mxu0 0.0
    %5985 = vmatpush1.msra.mxu0 0.0
    %5986 = vmatprep.subr.mxu0 0.0
    %5987 = vmatpush1.msra.mxu0 0.0
    %5988 = vmatprep.subr.mxu0 0.0
    %5989 = vmatpush1.msra.mxu0 0.0
    %5990 = vmatprep.subr.mxu0 0.0
    %5991 = vmatpush1.msra.mxu0 0.0
    %5992 = vmatprep.subr.mxu0 0.0
    %5993 = vmatpush1.msra.mxu0 0.0
    %5994 = vmatprep.subr.mxu0 0.0
    %5995 = vmatpush1.msra.mxu0 0.0
    %5996 = vmatprep.subr.mxu0 0.0
    %5997 = vmatpush1.msra.mxu0 0.0
    %5998 = vmatprep.subr.mxu0 0.0
    %5999 = vmatpush1.msra.mxu0 0.0
    %6000 = vmatprep.mubr.f32.mxu0 0.0
    %6001 = vmatmul.mubr.f32.gmra.mrb[0].mxu0 %v5934
    %v6002 = vpop.f32.mrb[0].mxu0
    %v6003 = vadd.f32 0.0, %v6002
    %v6004 = vpop.f32.mrb[0].mxu0
    %6005 = vdwg.mxu0
    %v6006 = vadd.f32 %v5930, %v6003
    %v6007 = vxor.u32 %v6006, 2147483648
    %v6008 = vmul.f32 %v6007, 1.442695
    %v6009 = vpow.pop %v6008
    %v6010 = vadd.f32 %v6009, 1.0
    %v6011 = vrcp.pop %v6010
    %v6012 = vmul.f32 1.0, %v6011
    %v6013 = vadd.f32 %v6003, %v790
    %6015 = vrot.lane.b32.xlu0 %v6013, 112
    %v6016 = vpop.permute.xlu0 %6015
    %v6018 = vmul.f32 %v6012, %v6016
    %6020 = vrot.lane.b32.xlu0 %v6018, 16
    %v6021 = vpop.permute.xlu0 %6020
    %v6023 = vadd.f32 %v5930, %v6021
    %v6024 = vtanh.pop %v6023
    %v6025 = vsub.f32 %v5924, %v6024
    %6027 = vrot.lane.b32.xlu0 %v6025, 120
    %v6028 = vpop.permute.xlu0 %6027
    %v6030 = vmul.f32 %v6012, %v6028
    %6032 = vrot.lane.b32.xlu0 %v6030, 8
    %v6033 = vpop.permute.xlu0 %6032
    %v6035 = vadd.f32 %v6024, %v6033
    %s6036 = sld [smem:[#allocation5 + $0x2f]]
    %v6037 = vstv %s6036
    %v6038 = vmul.f32 %v6035, %v6037
    %v6039 = vadd.f32 %v5928, %v6038
    %s6040 = scalar_lea.vmem [#allocation2], 384
    %v6041 = vld [vmem:[%s6040] sm:$0xff]
    %6043 = vrot.lane.b32.xlu0 %v6035, 112
    %v6044 = vpop.permute.xlu0 %6043
    %v6045 = vsel %vm703, %v6044, 0
    %6047 = vmatprep.subr.mxu0 0.0
    %6048 = vmatpush1.msra.mxu0 %v699
    %6049 = vmatprep.subr.mxu0 0.0
    %6050 = vmatpush1.msra.mxu0 0.0
    %6051 = vmatprep.subr.mxu0 0.0
    %6052 = vmatpush1.msra.mxu0 0.0
    %6053 = vmatprep.subr.mxu0 0.0
    %6054 = vmatpush1.msra.mxu0 0.0
    %6055 = vmatprep.subr.mxu0 0.0
    %6056 = vmatpush1.msra.mxu0 0.0
    %6057 = vmatprep.subr.mxu0 0.0
    %6058 = vmatpush1.msra.mxu0 0.0
    %6059 = vmatprep.subr.mxu0 0.0
    %6060 = vmatpush1.msra.mxu0 0.0
    %6061 = vmatprep.subr.mxu0 0.0
    %6062 = vmatpush1.msra.mxu0 0.0
    %6063 = vmatprep.subr.mxu0 0.0
    %6064 = vmatpush1.msra.mxu0 0.0
    %6065 = vmatprep.subr.mxu0 0.0
    %6066 = vmatpush1.msra.mxu0 0.0
    %6067 = vmatprep.subr.mxu0 0.0
    %6068 = vmatpush1.msra.mxu0 0.0
    %6069 = vmatprep.subr.mxu0 0.0
    %6070 = vmatpush1.msra.mxu0 0.0
    %6071 = vmatprep.subr.mxu0 0.0
    %6072 = vmatpush1.msra.mxu0 0.0
    %6073 = vmatprep.subr.mxu0 0.0
    %6074 = vmatpush1.msra.mxu0 0.0
    %6075 = vmatprep.subr.mxu0 0.0
    %6076 = vmatpush1.msra.mxu0 0.0
    %6077 = vmatprep.subr.mxu0 0.0
    %6078 = vmatpush1.msra.mxu0 0.0
    %6079 = vmatprep.subr.mxu0 0.0
    %6080 = vmatpush1.msra.mxu0 0.0
    %6081 = vmatprep.subr.mxu0 0.0
    %6082 = vmatpush1.msra.mxu0 0.0
    %6083 = vmatprep.subr.mxu0 0.0
    %6084 = vmatpush1.msra.mxu0 0.0
    %6085 = vmatprep.subr.mxu0 0.0
    %6086 = vmatpush1.msra.mxu0 0.0
    %6087 = vmatprep.subr.mxu0 0.0
    %6088 = vmatpush1.msra.mxu0 0.0
    %6089 = vmatprep.subr.mxu0 0.0
    %6090 = vmatpush1.msra.mxu0 0.0
    %6091 = vmatprep.subr.mxu0 0.0
    %6092 = vmatpush1.msra.mxu0 0.0
    %6093 = vmatprep.subr.mxu0 0.0
    %6094 = vmatpush1.msra.mxu0 0.0
    %6095 = vmatprep.subr.mxu0 0.0
    %6096 = vmatpush1.msra.mxu0 0.0
    %6097 = vmatprep.subr.mxu0 0.0
    %6098 = vmatpush1.msra.mxu0 0.0
    %6099 = vmatprep.subr.mxu0 0.0
    %6100 = vmatpush1.msra.mxu0 0.0
    %6101 = vmatprep.subr.mxu0 0.0
    %6102 = vmatpush1.msra.mxu0 0.0
    %6103 = vmatprep.subr.mxu0 0.0
    %6104 = vmatpush1.msra.mxu0 0.0
    %6105 = vmatprep.subr.mxu0 0.0
    %6106 = vmatpush1.msra.mxu0 0.0
    %6107 = vmatprep.subr.mxu0 0.0
    %6108 = vmatpush1.msra.mxu0 0.0
    %6109 = vmatprep.subr.mxu0 0.0
    %6110 = vmatpush1.msra.mxu0 0.0
    %6111 = vmatprep.mubr.f32.mxu0 0.0
    %6112 = vmatmul.mubr.f32.gmra.mrb[0].mxu0 %v6045
    %v6113 = vpop.f32.mrb[0].mxu0
    %v6114 = vadd.f32 0.0, %v6113
    %v6115 = vpop.f32.mrb[0].mxu0
    %6116 = vdwg.mxu0
    %v6117 = vadd.f32 %v6041, %v6114
    %v6118 = vxor.u32 %v6117, 2147483648
    %v6119 = vmul.f32 %v6118, 1.442695
    %v6120 = vpow.pop %v6119
    %v6121 = vadd.f32 %v6120, 1.0
    %v6122 = vrcp.pop %v6121
    %v6123 = vmul.f32 1.0, %v6122
    %v6124 = vadd.f32 %v6114, %v790
    %6126 = vrot.lane.b32.xlu0 %v6124, 112
    %v6127 = vpop.permute.xlu0 %6126
    %v6129 = vmul.f32 %v6123, %v6127
    %6131 = vrot.lane.b32.xlu0 %v6129, 16
    %v6132 = vpop.permute.xlu0 %6131
    %v6134 = vadd.f32 %v6041, %v6132
    %v6135 = vtanh.pop %v6134
    %v6136 = vsub.f32 %v6035, %v6135
    %6138 = vrot.lane.b32.xlu0 %v6136, 120
    %v6139 = vpop.permute.xlu0 %6138
    %v6141 = vmul.f32 %v6123, %v6139
    %6143 = vrot.lane.b32.xlu0 %v6141, 8
    %v6144 = vpop.permute.xlu0 %6143
    %v6146 = vadd.f32 %v6135, %v6144
    %s6147 = sld [smem:[#allocation5 + $0x30]]
    %v6148 = vstv %s6147
    %v6149 = vmul.f32 %v6146, %v6148
    %v6150 = vadd.f32 %v6039, %v6149
    %s6151 = scalar_lea.vmem [#allocation2], 392
    %v6152 = vld [vmem:[%s6151] sm:$0xff]
    %6154 = vrot.lane.b32.xlu0 %v6146, 112
    %v6155 = vpop.permute.xlu0 %6154
    %v6156 = vsel %vm703, %v6155, 0
    %6158 = vmatprep.subr.mxu0 0.0
    %6159 = vmatpush1.msra.mxu0 %v699
    %6160 = vmatprep.subr.mxu0 0.0
    %6161 = vmatpush1.msra.mxu0 0.0
    %6162 = vmatprep.subr.mxu0 0.0
    %6163 = vmatpush1.msra.mxu0 0.0
    %6164 = vmatprep.subr.mxu0 0.0
    %6165 = vmatpush1.msra.mxu0 0.0
    %6166 = vmatprep.subr.mxu0 0.0
    %6167 = vmatpush1.msra.mxu0 0.0
    %6168 = vmatprep.subr.mxu0 0.0
    %6169 = vmatpush1.msra.mxu0 0.0
    %6170 = vmatprep.subr.mxu0 0.0
    %6171 = vmatpush1.msra.mxu0 0.0
    %6172 = vmatprep.subr.mxu0 0.0
    %6173 = vmatpush1.msra.mxu0 0.0
    %6174 = vmatprep.subr.mxu0 0.0
    %6175 = vmatpush1.msra.mxu0 0.0
    %6176 = vmatprep.subr.mxu0 0.0
    %6177 = vmatpush1.msra.mxu0 0.0
    %6178 = vmatprep.subr.mxu0 0.0
    %6179 = vmatpush1.msra.mxu0 0.0
    %6180 = vmatprep.subr.mxu0 0.0
    %6181 = vmatpush1.msra.mxu0 0.0
    %6182 = vmatprep.subr.mxu0 0.0
    %6183 = vmatpush1.msra.mxu0 0.0
    %6184 = vmatprep.subr.mxu0 0.0
    %6185 = vmatpush1.msra.mxu0 0.0
    %6186 = vmatprep.subr.mxu0 0.0
    %6187 = vmatpush1.msra.mxu0 0.0
    %6188 = vmatprep.subr.mxu0 0.0
    %6189 = vmatpush1.msra.mxu0 0.0
    %6190 = vmatprep.subr.mxu0 0.0
    %6191 = vmatpush1.msra.mxu0 0.0
    %6192 = vmatprep.subr.mxu0 0.0
    %6193 = vmatpush1.msra.mxu0 0.0
    %6194 = vmatprep.subr.mxu0 0.0
    %6195 = vmatpush1.msra.mxu0 0.0
    %6196 = vmatprep.subr.mxu0 0.0
    %6197 = vmatpush1.msra.mxu0 0.0
    %6198 = vmatprep.subr.mxu0 0.0
    %6199 = vmatpush1.msra.mxu0 0.0
    %6200 = vmatprep.subr.mxu0 0.0
    %6201 = vmatpush1.msra.mxu0 0.0
    %6202 = vmatprep.subr.mxu0 0.0
    %6203 = vmatpush1.msra.mxu0 0.0
    %6204 = vmatprep.subr.mxu0 0.0
    %6205 = vmatpush1.msra.mxu0 0.0
    %6206 = vmatprep.subr.mxu0 0.0
    %6207 = vmatpush1.msra.mxu0 0.0
    %6208 = vmatprep.subr.mxu0 0.0
    %6209 = vmatpush1.msra.mxu0 0.0
    %6210 = vmatprep.subr.mxu0 0.0
    %6211 = vmatpush1.msra.mxu0 0.0
    %6212 = vmatprep.subr.mxu0 0.0
    %6213 = vmatpush1.msra.mxu0 0.0
    %6214 = vmatprep.subr.mxu0 0.0
    %6215 = vmatpush1.msra.mxu0 0.0
    %6216 = vmatprep.subr.mxu0 0.0
    %6217 = vmatpush1.msra.mxu0 0.0
    %6218 = vmatprep.subr.mxu0 0.0
    %6219 = vmatpush1.msra.mxu0 0.0
    %6220 = vmatprep.subr.mxu0 0.0
    %6221 = vmatpush1.msra.mxu0 0.0
    %6222 = vmatprep.mubr.f32.mxu0 0.0
    %6223 = vmatmul.mubr.f32.gmra.mrb[0].mxu0 %v6156
    %v6224 = vpop.f32.mrb[0].mxu0
    %v6225 = vadd.f32 0.0, %v6224
    %v6226 = vpop.f32.mrb[0].mxu0
    %6227 = vdwg.mxu0
    %v6228 = vadd.f32 %v6152, %v6225
    %v6229 = vxor.u32 %v6228, 2147483648
    %v6230 = vmul.f32 %v6229, 1.442695
    %v6231 = vpow.pop %v6230
    %v6232 = vadd.f32 %v6231, 1.0
    %v6233 = vrcp.pop %v6232
    %v6234 = vmul.f32 1.0, %v6233
    %v6235 = vadd.f32 %v6225, %v790
    %6237 = vrot.lane.b32.xlu0 %v6235, 112
    %v6238 = vpop.permute.xlu0 %6237
    %v6240 = vmul.f32 %v6234, %v6238
    %6242 = vrot.lane.b32.xlu0 %v6240, 16
    %v6243 = vpop.permute.xlu0 %6242
    %v6245 = vadd.f32 %v6152, %v6243
    %v6246 = vtanh.pop %v6245
    %v6247 = vsub.f32 %v6146, %v6246
    %6249 = vrot.lane.b32.xlu0 %v6247, 120
    %v6250 = vpop.permute.xlu0 %6249
    %v6252 = vmul.f32 %v6234, %v6250
    %6254 = vrot.lane.b32.xlu0 %v6252, 8
    %v6255 = vpop.permute.xlu0 %6254
    %v6257 = vadd.f32 %v6246, %v6255
    %s6258 = sld [smem:[#allocation5 + $0x31]]
    %v6259 = vstv %s6258
    %v6260 = vmul.f32 %v6257, %v6259
    %v6261 = vadd.f32 %v6150, %v6260
    %s6262 = scalar_lea.vmem [#allocation2], 400
    %v6263 = vld [vmem:[%s6262] sm:$0xff]
    %6265 = vrot.lane.b32.xlu0 %v6257, 112
    %v6266 = vpop.permute.xlu0 %6265
    %v6267 = vsel %vm703, %v6266, 0
    %6269 = vmatprep.subr.mxu0 0.0
    %6270 = vmatpush1.msra.mxu0 %v699
    %6271 = vmatprep.subr.mxu0 0.0
    %6272 = vmatpush1.msra.mxu0 0.0
    %6273 = vmatprep.subr.mxu0 0.0
    %6274 = vmatpush1.msra.mxu0 0.0
    %6275 = vmatprep.subr.mxu0 0.0
    %6276 = vmatpush1.msra.mxu0 0.0
    %6277 = vmatprep.subr.mxu0 0.0
    %6278 = vmatpush1.msra.mxu0 0.0
    %6279 = vmatprep.subr.mxu0 0.0
    %6280 = vmatpush1.msra.mxu0 0.0
    %6281 = vmatprep.subr.mxu0 0.0
    %6282 = vmatpush1.msra.mxu0 0.0
    %6283 = vmatprep.subr.mxu0 0.0
    %6284 = vmatpush1.msra.mxu0 0.0
    %6285 = vmatprep.subr.mxu0 0.0
    %6286 = vmatpush1.msra.mxu0 0.0
    %6287 = vmatprep.subr.mxu0 0.0
    %6288 = vmatpush1.msra.mxu0 0.0
    %6289 = vmatprep.subr.mxu0 0.0
    %6290 = vmatpush1.msra.mxu0 0.0
    %6291 = vmatprep.subr.mxu0 0.0
    %6292 = vmatpush1.msra.mxu0 0.0
    %6293 = vmatprep.subr.mxu0 0.0
    %6294 = vmatpush1.msra.mxu0 0.0
    %6295 = vmatprep.subr.mxu0 0.0
    %6296 = vmatpush1.msra.mxu0 0.0
    %6297 = vmatprep.subr.mxu0 0.0
    %6298 = vmatpush1.msra.mxu0 0.0
    %6299 = vmatprep.subr.mxu0 0.0
    %6300 = vmatpush1.msra.mxu0 0.0
    %6301 = vmatprep.subr.mxu0 0.0
    %6302 = vmatpush1.msra.mxu0 0.0
    %6303 = vmatprep.subr.mxu0 0.0
    %6304 = vmatpush1.msra.mxu0 0.0
    %6305 = vmatprep.subr.mxu0 0.0
    %6306 = vmatpush1.msra.mxu0 0.0
    %6307 = vmatprep.subr.mxu0 0.0
    %6308 = vmatpush1.msra.mxu0 0.0
    %6309 = vmatprep.subr.mxu0 0.0
    %6310 = vmatpush1.msra.mxu0 0.0
    %6311 = vmatprep.subr.mxu0 0.0
    %6312 = vmatpush1.msra.mxu0 0.0
    %6313 = vmatprep.subr.mxu0 0.0
    %6314 = vmatpush1.msra.mxu0 0.0
    %6315 = vmatprep.subr.mxu0 0.0
    %6316 = vmatpush1.msra.mxu0 0.0
    %6317 = vmatprep.subr.mxu0 0.0
    %6318 = vmatpush1.msra.mxu0 0.0
    %6319 = vmatprep.subr.mxu0 0.0
    %6320 = vmatpush1.msra.mxu0 0.0
    %6321 = vmatprep.subr.mxu0 0.0
    %6322 = vmatpush1.msra.mxu0 0.0
    %6323 = vmatprep.subr.mxu0 0.0
    %6324 = vmatpush1.msra.mxu0 0.0
    %6325 = vmatprep.subr.mxu0 0.0
    %6326 = vmatpush1.msra.mxu0 0.0
    %6327 = vmatprep.subr.mxu0 0.0
    %6328 = vmatpush1.msra.mxu0 0.0
    %6329 = vmatprep.subr.mxu0 0.0
    %6330 = vmatpush1.msra.mxu0 0.0
    %6331 = vmatprep.subr.mxu0 0.0
    %6332 = vmatpush1.msra.mxu0 0.0
    %6333 = vmatprep.mubr.f32.mxu0 0.0
    %6334 = vmatmul.mubr.f32.gmra.mrb[0].mxu0 %v6267
    %v6335 = vpop.f32.mrb[0].mxu0
    %v6336 = vadd.f32 0.0, %v6335
    %v6337 = vpop.f32.mrb[0].mxu0
    %6338 = vdwg.mxu0
    %v6339 = vadd.f32 %v6263, %v6336
    %v6340 = vxor.u32 %v6339, 2147483648
    %v6341 = vmul.f32 %v6340, 1.442695
    %v6342 = vpow.pop %v6341
    %v6343 = vadd.f32 %v6342, 1.0
    %v6344 = vrcp.pop %v6343
    %v6345 = vmul.f32 1.0, %v6344
    %v6346 = vadd.f32 %v6336, %v790
    %6348 = vrot.lane.b32.xlu0 %v6346, 112
    %v6349 = vpop.permute.xlu0 %6348
    %v6351 = vmul.f32 %v6345, %v6349
    %6353 = vrot.lane.b32.xlu0 %v6351, 16
    %v6354 = vpop.permute.xlu0 %6353
    %v6356 = vadd.f32 %v6263, %v6354
    %v6357 = vtanh.pop %v6356
    %v6358 = vsub.f32 %v6257, %v6357
    %6360 = vrot.lane.b32.xlu0 %v6358, 120
    %v6361 = vpop.permute.xlu0 %6360
    %v6363 = vmul.f32 %v6345, %v6361
    %6365 = vrot.lane.b32.xlu0 %v6363, 8
    %v6366 = vpop.permute.xlu0 %6365
    %v6368 = vadd.f32 %v6357, %v6366
    %s6369 = sld [smem:[#allocation5 + $0x32]]
    %v6370 = vstv %s6369
    %v6371 = vmul.f32 %v6368, %v6370
    %v6372 = vadd.f32 %v6261, %v6371
    %s6373 = scalar_lea.vmem [#allocation2], 408
    %v6374 = vld [vmem:[%s6373] sm:$0xff]
    %6376 = vrot.lane.b32.xlu0 %v6368, 112
    %v6377 = vpop.permute.xlu0 %6376
    %v6378 = vsel %vm703, %v6377, 0
    %6380 = vmatprep.subr.mxu0 0.0
    %6381 = vmatpush1.msra.mxu0 %v699
    %6382 = vmatprep.subr.mxu0 0.0
    %6383 = vmatpush1.msra.mxu0 0.0
    %6384 = vmatprep.subr.mxu0 0.0
    %6385 = vmatpush1.msra.mxu0 0.0
    %6386 = vmatprep.subr.mxu0 0.0
    %6387 = vmatpush1.msra.mxu0 0.0
    %6388 = vmatprep.subr.mxu0 0.0
    %6389 = vmatpush1.msra.mxu0 0.0
    %6390 = vmatprep.subr.mxu0 0.0
    %6391 = vmatpush1.msra.mxu0 0.0
    %6392 = vmatprep.subr.mxu0 0.0
    %6393 = vmatpush1.msra.mxu0 0.0
    %6394 = vmatprep.subr.mxu0 0.0
    %6395 = vmatpush1.msra.mxu0 0.0
    %6396 = vmatprep.subr.mxu0 0.0
    %6397 = vmatpush1.msra.mxu0 0.0
    %6398 = vmatprep.subr.mxu0 0.0
    %6399 = vmatpush1.msra.mxu0 0.0
    %6400 = vmatprep.subr.mxu0 0.0
    %6401 = vmatpush1.msra.mxu0 0.0
    %6402 = vmatprep.subr.mxu0 0.0
    %6403 = vmatpush1.msra.mxu0 0.0
    %6404 = vmatprep.subr.mxu0 0.0
    %6405 = vmatpush1.msra.mxu0 0.0
    %6406 = vmatprep.subr.mxu0 0.0
    %6407 = vmatpush1.msra.mxu0 0.0
    %6408 = vmatprep.subr.mxu0 0.0
    %6409 = vmatpush1.msra.mxu0 0.0
    %6410 = vmatprep.subr.mxu0 0.0
    %6411 = vmatpush1.msra.mxu0 0.0
    %6412 = vmatprep.subr.mxu0 0.0
    %6413 = vmatpush1.msra.mxu0 0.0
    %6414 = vmatprep.subr.mxu0 0.0
    %6415 = vmatpush1.msra.mxu0 0.0
    %6416 = vmatprep.subr.mxu0 0.0
    %6417 = vmatpush1.msra.mxu0 0.0
    %6418 = vmatprep.subr.mxu0 0.0
    %6419 = vmatpush1.msra.mxu0 0.0
    %6420 = vmatprep.subr.mxu0 0.0
    %6421 = vmatpush1.msra.mxu0 0.0
    %6422 = vmatprep.subr.mxu0 0.0
    %6423 = vmatpush1.msra.mxu0 0.0
    %6424 = vmatprep.subr.mxu0 0.0
    %6425 = vmatpush1.msra.mxu0 0.0
    %6426 = vmatprep.subr.mxu0 0.0
    %6427 = vmatpush1.msra.mxu0 0.0
    %6428 = vmatprep.subr.mxu0 0.0
    %6429 = vmatpush1.msra.mxu0 0.0
    %6430 = vmatprep.subr.mxu0 0.0
    %6431 = vmatpush1.msra.mxu0 0.0
    %6432 = vmatprep.subr.mxu0 0.0
    %6433 = vmatpush1.msra.mxu0 0.0
    %6434 = vmatprep.subr.mxu0 0.0
    %6435 = vmatpush1.msra.mxu0 0.0
    %6436 = vmatprep.subr.mxu0 0.0
    %6437 = vmatpush1.msra.mxu0 0.0
    %6438 = vmatprep.subr.mxu0 0.0
    %6439 = vmatpush1.msra.mxu0 0.0
    %6440 = vmatprep.subr.mxu0 0.0
    %6441 = vmatpush1.msra.mxu0 0.0
    %6442 = vmatprep.subr.mxu0 0.0
    %6443 = vmatpush1.msra.mxu0 0.0
    %6444 = vmatprep.mubr.f32.mxu0 0.0
    %6445 = vmatmul.mubr.f32.gmra.mrb[0].mxu0 %v6378
    %v6446 = vpop.f32.mrb[0].mxu0
    %v6447 = vadd.f32 0.0, %v6446
    %v6448 = vpop.f32.mrb[0].mxu0
    %6449 = vdwg.mxu0
    %v6450 = vadd.f32 %v6374, %v6447
    %v6451 = vxor.u32 %v6450, 2147483648
    %v6452 = vmul.f32 %v6451, 1.442695
    %v6453 = vpow.pop %v6452
    %v6454 = vadd.f32 %v6453, 1.0
    %v6455 = vrcp.pop %v6454
    %v6456 = vmul.f32 1.0, %v6455
    %v6457 = vadd.f32 %v6447, %v790
    %6459 = vrot.lane.b32.xlu0 %v6457, 112
    %v6460 = vpop.permute.xlu0 %6459
    %v6462 = vmul.f32 %v6456, %v6460
    %6464 = vrot.lane.b32.xlu0 %v6462, 16
    %v6465 = vpop.permute.xlu0 %6464
    %v6467 = vadd.f32 %v6374, %v6465
    %v6468 = vtanh.pop %v6467
    %v6469 = vsub.f32 %v6368, %v6468
    %6471 = vrot.lane.b32.xlu0 %v6469, 120
    %v6472 = vpop.permute.xlu0 %6471
    %v6474 = vmul.f32 %v6456, %v6472
    %6476 = vrot.lane.b32.xlu0 %v6474, 8
    %v6477 = vpop.permute.xlu0 %6476
    %v6479 = vadd.f32 %v6468, %v6477
    %s6480 = sld [smem:[#allocation5 + $0x33]]
    %v6481 = vstv %s6480
    %v6482 = vmul.f32 %v6479, %v6481
    %v6483 = vadd.f32 %v6372, %v6482
    %s6484 = scalar_lea.vmem [#allocation2], 416
    %v6485 = vld [vmem:[%s6484] sm:$0xff]
    %6487 = vrot.lane.b32.xlu0 %v6479, 112
    %v6488 = vpop.permute.xlu0 %6487
    %v6489 = vsel %vm703, %v6488, 0
    %6491 = vmatprep.subr.mxu0 0.0
    %6492 = vmatpush1.msra.mxu0 %v699
    %6493 = vmatprep.subr.mxu0 0.0
    %6494 = vmatpush1.msra.mxu0 0.0
    %6495 = vmatprep.subr.mxu0 0.0
    %6496 = vmatpush1.msra.mxu0 0.0
    %6497 = vmatprep.subr.mxu0 0.0
    %6498 = vmatpush1.msra.mxu0 0.0
    %6499 = vmatprep.subr.mxu0 0.0
    %6500 = vmatpush1.msra.mxu0 0.0
    %6501 = vmatprep.subr.mxu0 0.0
    %6502 = vmatpush1.msra.mxu0 0.0
    %6503 = vmatprep.subr.mxu0 0.0
    %6504 = vmatpush1.msra.mxu0 0.0
    %6505 = vmatprep.subr.mxu0 0.0
    %6506 = vmatpush1.msra.mxu0 0.0
    %6507 = vmatprep.subr.mxu0 0.0
    %6508 = vmatpush1.msra.mxu0 0.0
    %6509 = vmatprep.subr.mxu0 0.0
    %6510 = vmatpush1.msra.mxu0 0.0
    %6511 = vmatprep.subr.mxu0 0.0
    %6512 = vmatpush1.msra.mxu0 0.0
    %6513 = vmatprep.subr.mxu0 0.0
    %6514 = vmatpush1.msra.mxu0 0.0
    %6515 = vmatprep.subr.mxu0 0.0
    %6516 = vmatpush1.msra.mxu0 0.0
    %6517 = vmatprep.subr.mxu0 0.0
    %6518 = vmatpush1.msra.mxu0 0.0
    %6519 = vmatprep.subr.mxu0 0.0
    %6520 = vmatpush1.msra.mxu0 0.0
    %6521 = vmatprep.subr.mxu0 0.0
    %6522 = vmatpush1.msra.mxu0 0.0
    %6523 = vmatprep.subr.mxu0 0.0
    %6524 = vmatpush1.msra.mxu0 0.0
    %6525 = vmatprep.subr.mxu0 0.0
    %6526 = vmatpush1.msra.mxu0 0.0
    %6527 = vmatprep.subr.mxu0 0.0
    %6528 = vmatpush1.msra.mxu0 0.0
    %6529 = vmatprep.subr.mxu0 0.0
    %6530 = vmatpush1.msra.mxu0 0.0
    %6531 = vmatprep.subr.mxu0 0.0
    %6532 = vmatpush1.msra.mxu0 0.0
    %6533 = vmatprep.subr.mxu0 0.0
    %6534 = vmatpush1.msra.mxu0 0.0
    %6535 = vmatprep.subr.mxu0 0.0
    %6536 = vmatpush1.msra.mxu0 0.0
    %6537 = vmatprep.subr.mxu0 0.0
    %6538 = vmatpush1.msra.mxu0 0.0
    %6539 = vmatprep.subr.mxu0 0.0
    %6540 = vmatpush1.msra.mxu0 0.0
    %6541 = vmatprep.subr.mxu0 0.0
    %6542 = vmatpush1.msra.mxu0 0.0
    %6543 = vmatprep.subr.mxu0 0.0
    %6544 = vmatpush1.msra.mxu0 0.0
    %6545 = vmatprep.subr.mxu0 0.0
    %6546 = vmatpush1.msra.mxu0 0.0
    %6547 = vmatprep.subr.mxu0 0.0
    %6548 = vmatpush1.msra.mxu0 0.0
    %6549 = vmatprep.subr.mxu0 0.0
    %6550 = vmatpush1.msra.mxu0 0.0
    %6551 = vmatprep.subr.mxu0 0.0
    %6552 = vmatpush1.msra.mxu0 0.0
    %6553 = vmatprep.subr.mxu0 0.0
    %6554 = vmatpush1.msra.mxu0 0.0
    %6555 = vmatprep.mubr.f32.mxu0 0.0
    %6556 = vmatmul.mubr.f32.gmra.mrb[0].mxu0 %v6489
    %v6557 = vpop.f32.mrb[0].mxu0
    %v6558 = vadd.f32 0.0, %v6557
    %v6559 = vpop.f32.mrb[0].mxu0
    %6560 = vdwg.mxu0
    %v6561 = vadd.f32 %v6485, %v6558
    %v6562 = vxor.u32 %v6561, 2147483648
    %v6563 = vmul.f32 %v6562, 1.442695
    %v6564 = vpow.pop %v6563
    %v6565 = vadd.f32 %v6564, 1.0
    %v6566 = vrcp.pop %v6565
    %v6567 = vmul.f32 1.0, %v6566
    %v6568 = vadd.f32 %v6558, %v790
    %6570 = vrot.lane.b32.xlu0 %v6568, 112
    %v6571 = vpop.permute.xlu0 %6570
    %v6573 = vmul.f32 %v6567, %v6571
    %6575 = vrot.lane.b32.xlu0 %v6573, 16
    %v6576 = vpop.permute.xlu0 %6575
    %v6578 = vadd.f32 %v6485, %v6576
    %v6579 = vtanh.pop %v6578
    %v6580 = vsub.f32 %v6479, %v6579
    %6582 = vrot.lane.b32.xlu0 %v6580, 120
    %v6583 = vpop.permute.xlu0 %6582
    %v6585 = vmul.f32 %v6567, %v6583
    %6587 = vrot.lane.b32.xlu0 %v6585, 8
    %v6588 = vpop.permute.xlu0 %6587
    %v6590 = vadd.f32 %v6579, %v6588
    %s6591 = sld [smem:[#allocation5 + $0x34]]
    %v6592 = vstv %s6591
    %v6593 = vmul.f32 %v6590, %v6592
    %v6594 = vadd.f32 %v6483, %v6593
    %s6595 = scalar_lea.vmem [#allocation2], 424
    %v6596 = vld [vmem:[%s6595] sm:$0xff]
    %6598 = vrot.lane.b32.xlu0 %v6590, 112
    %v6599 = vpop.permute.xlu0 %6598
    %v6600 = vsel %vm703, %v6599, 0
    %6602 = vmatprep.subr.mxu0 0.0
    %6603 = vmatpush1.msra.mxu0 %v699
    %6604 = vmatprep.subr.mxu0 0.0
    %6605 = vmatpush1.msra.mxu0 0.0
    %6606 = vmatprep.subr.mxu0 0.0
    %6607 = vmatpush1.msra.mxu0 0.0
    %6608 = vmatprep.subr.mxu0 0.0
    %6609 = vmatpush1.msra.mxu0 0.0
    %6610 = vmatprep.subr.mxu0 0.0
    %6611 = vmatpush1.msra.mxu0 0.0
    %6612 = vmatprep.subr.mxu0 0.0
    %6613 = vmatpush1.msra.mxu0 0.0
    %6614 = vmatprep.subr.mxu0 0.0
    %6615 = vmatpush1.msra.mxu0 0.0
    %6616 = vmatprep.subr.mxu0 0.0
    %6617 = vmatpush1.msra.mxu0 0.0
    %6618 = vmatprep.subr.mxu0 0.0
    %6619 = vmatpush1.msra.mxu0 0.0
    %6620 = vmatprep.subr.mxu0 0.0
    %6621 = vmatpush1.msra.mxu0 0.0
    %6622 = vmatprep.subr.mxu0 0.0
    %6623 = vmatpush1.msra.mxu0 0.0
    %6624 = vmatprep.subr.mxu0 0.0
    %6625 = vmatpush1.msra.mxu0 0.0
    %6626 = vmatprep.subr.mxu0 0.0
    %6627 = vmatpush1.msra.mxu0 0.0
    %6628 = vmatprep.subr.mxu0 0.0
    %6629 = vmatpush1.msra.mxu0 0.0
    %6630 = vmatprep.subr.mxu0 0.0
    %6631 = vmatpush1.msra.mxu0 0.0
    %6632 = vmatprep.subr.mxu0 0.0
    %6633 = vmatpush1.msra.mxu0 0.0
    %6634 = vmatprep.subr.mxu0 0.0
    %6635 = vmatpush1.msra.mxu0 0.0
    %6636 = vmatprep.subr.mxu0 0.0
    %6637 = vmatpush1.msra.mxu0 0.0
    %6638 = vmatprep.subr.mxu0 0.0
    %6639 = vmatpush1.msra.mxu0 0.0
    %6640 = vmatprep.subr.mxu0 0.0
    %6641 = vmatpush1.msra.mxu0 0.0
    %6642 = vmatprep.subr.mxu0 0.0
    %6643 = vmatpush1.msra.mxu0 0.0
    %6644 = vmatprep.subr.mxu0 0.0
    %6645 = vmatpush1.msra.mxu0 0.0
    %6646 = vmatprep.subr.mxu0 0.0
    %6647 = vmatpush1.msra.mxu0 0.0
    %6648 = vmatprep.subr.mxu0 0.0
    %6649 = vmatpush1.msra.mxu0 0.0
    %6650 = vmatprep.subr.mxu0 0.0
    %6651 = vmatpush1.msra.mxu0 0.0
    %6652 = vmatprep.subr.mxu0 0.0
    %6653 = vmatpush1.msra.mxu0 0.0
    %6654 = vmatprep.subr.mxu0 0.0
    %6655 = vmatpush1.msra.mxu0 0.0
    %6656 = vmatprep.subr.mxu0 0.0
    %6657 = vmatpush1.msra.mxu0 0.0
    %6658 = vmatprep.subr.mxu0 0.0
    %6659 = vmatpush1.msra.mxu0 0.0
    %6660 = vmatprep.subr.mxu0 0.0
    %6661 = vmatpush1.msra.mxu0 0.0
    %6662 = vmatprep.subr.mxu0 0.0
    %6663 = vmatpush1.msra.mxu0 0.0
    %6664 = vmatprep.subr.mxu0 0.0
    %6665 = vmatpush1.msra.mxu0 0.0
    %6666 = vmatprep.mubr.f32.mxu0 0.0
    %6667 = vmatmul.mubr.f32.gmra.mrb[0].mxu0 %v6600
    %v6668 = vpop.f32.mrb[0].mxu0
    %v6669 = vadd.f32 0.0, %v6668
    %v6670 = vpop.f32.mrb[0].mxu0
    %6671 = vdwg.mxu0
    %v6672 = vadd.f32 %v6596, %v6669
    %v6673 = vxor.u32 %v6672, 2147483648
    %v6674 = vmul.f32 %v6673, 1.442695
    %v6675 = vpow.pop %v6674
    %v6676 = vadd.f32 %v6675, 1.0
    %v6677 = vrcp.pop %v6676
    %v6678 = vmul.f32 1.0, %v6677
    %v6679 = vadd.f32 %v6669, %v790
    %6681 = vrot.lane.b32.xlu0 %v6679, 112
    %v6682 = vpop.permute.xlu0 %6681
    %v6684 = vmul.f32 %v6678, %v6682
    %6686 = vrot.lane.b32.xlu0 %v6684, 16
    %v6687 = vpop.permute.xlu0 %6686
    %v6689 = vadd.f32 %v6596, %v6687
    %v6690 = vtanh.pop %v6689
    %v6691 = vsub.f32 %v6590, %v6690
    %6693 = vrot.lane.b32.xlu0 %v6691, 120
    %v6694 = vpop.permute.xlu0 %6693
    %v6696 = vmul.f32 %v6678, %v6694
    %6698 = vrot.lane.b32.xlu0 %v6696, 8
    %v6699 = vpop.permute.xlu0 %6698
    %v6701 = vadd.f32 %v6690, %v6699
    %s6702 = sld [smem:[#allocation5 + $0x35]]
    %v6703 = vstv %s6702
    %v6704 = vmul.f32 %v6701, %v6703
    %v6705 = vadd.f32 %v6594, %v6704
    %s6706 = scalar_lea.vmem [#allocation2], 432
    %v6707 = vld [vmem:[%s6706] sm:$0xff]
    %6709 = vrot.lane.b32.xlu0 %v6701, 112
    %v6710 = vpop.permute.xlu0 %6709
    %v6711 = vsel %vm703, %v6710, 0
    %6713 = vmatprep.subr.mxu0 0.0
    %6714 = vmatpush1.msra.mxu0 %v699
    %6715 = vmatprep.subr.mxu0 0.0
    %6716 = vmatpush1.msra.mxu0 0.0
    %6717 = vmatprep.subr.mxu0 0.0
    %6718 = vmatpush1.msra.mxu0 0.0
    %6719 = vmatprep.subr.mxu0 0.0
    %6720 = vmatpush1.msra.mxu0 0.0
    %6721 = vmatprep.subr.mxu0 0.0
    %6722 = vmatpush1.msra.mxu0 0.0
    %6723 = vmatprep.subr.mxu0 0.0
    %6724 = vmatpush1.msra.mxu0 0.0
    %6725 = vmatprep.subr.mxu0 0.0
    %6726 = vmatpush1.msra.mxu0 0.0
    %6727 = vmatprep.subr.mxu0 0.0
    %6728 = vmatpush1.msra.mxu0 0.0
    %6729 = vmatprep.subr.mxu0 0.0
    %6730 = vmatpush1.msra.mxu0 0.0
    %6731 = vmatprep.subr.mxu0 0.0
    %6732 = vmatpush1.msra.mxu0 0.0
    %6733 = vmatprep.subr.mxu0 0.0
    %6734 = vmatpush1.msra.mxu0 0.0
    %6735 = vmatprep.subr.mxu0 0.0
    %6736 = vmatpush1.msra.mxu0 0.0
    %6737 = vmatprep.subr.mxu0 0.0
    %6738 = vmatpush1.msra.mxu0 0.0
    %6739 = vmatprep.subr.mxu0 0.0
    %6740 = vmatpush1.msra.mxu0 0.0
    %6741 = vmatprep.subr.mxu0 0.0
    %6742 = vmatpush1.msra.mxu0 0.0
    %6743 = vmatprep.subr.mxu0 0.0
    %6744 = vmatpush1.msra.mxu0 0.0
    %6745 = vmatprep.subr.mxu0 0.0
    %6746 = vmatpush1.msra.mxu0 0.0
    %6747 = vmatprep.subr.mxu0 0.0
    %6748 = vmatpush1.msra.mxu0 0.0
    %6749 = vmatprep.subr.mxu0 0.0
    %6750 = vmatpush1.msra.mxu0 0.0
    %6751 = vmatprep.subr.mxu0 0.0
    %6752 = vmatpush1.msra.mxu0 0.0
    %6753 = vmatprep.subr.mxu0 0.0
    %6754 = vmatpush1.msra.mxu0 0.0
    %6755 = vmatprep.subr.mxu0 0.0
    %6756 = vmatpush1.msra.mxu0 0.0
    %6757 = vmatprep.subr.mxu0 0.0
    %6758 = vmatpush1.msra.mxu0 0.0
    %6759 = vmatprep.subr.mxu0 0.0
    %6760 = vmatpush1.msra.mxu0 0.0
    %6761 = vmatprep.subr.mxu0 0.0
    %6762 = vmatpush1.msra.mxu0 0.0
    %6763 = vmatprep.subr.mxu0 0.0
    %6764 = vmatpush1.msra.mxu0 0.0
    %6765 = vmatprep.subr.mxu0 0.0
    %6766 = vmatpush1.msra.mxu0 0.0
    %6767 = vmatprep.subr.mxu0 0.0
    %6768 = vmatpush1.msra.mxu0 0.0
    %6769 = vmatprep.subr.mxu0 0.0
    %6770 = vmatpush1.msra.mxu0 0.0
    %6771 = vmatprep.subr.mxu0 0.0
    %6772 = vmatpush1.msra.mxu0 0.0
    %6773 = vmatprep.subr.mxu0 0.0
    %6774 = vmatpush1.msra.mxu0 0.0
    %6775 = vmatprep.subr.mxu0 0.0
    %6776 = vmatpush1.msra.mxu0 0.0
    %6777 = vmatprep.mubr.f32.mxu0 0.0
    %6778 = vmatmul.mubr.f32.gmra.mrb[0].mxu0 %v6711
    %v6779 = vpop.f32.mrb[0].mxu0
    %v6780 = vadd.f32 0.0, %v6779
    %v6781 = vpop.f32.mrb[0].mxu0
    %6782 = vdwg.mxu0
    %v6783 = vadd.f32 %v6707, %v6780
    %v6784 = vxor.u32 %v6783, 2147483648
    %v6785 = vmul.f32 %v6784, 1.442695
    %v6786 = vpow.pop %v6785
    %v6787 = vadd.f32 %v6786, 1.0
    %v6788 = vrcp.pop %v6787
    %v6789 = vmul.f32 1.0, %v6788
    %v6790 = vadd.f32 %v6780, %v790
    %6792 = vrot.lane.b32.xlu0 %v6790, 112
    %v6793 = vpop.permute.xlu0 %6792
    %v6795 = vmul.f32 %v6789, %v6793
    %6797 = vrot.lane.b32.xlu0 %v6795, 16
    %v6798 = vpop.permute.xlu0 %6797
    %v6800 = vadd.f32 %v6707, %v6798
    %v6801 = vtanh.pop %v6800
    %v6802 = vsub.f32 %v6701, %v6801
    %6804 = vrot.lane.b32.xlu0 %v6802, 120
    %v6805 = vpop.permute.xlu0 %6804
    %v6807 = vmul.f32 %v6789, %v6805
    %6809 = vrot.lane.b32.xlu0 %v6807, 8
    %v6810 = vpop.permute.xlu0 %6809
    %v6812 = vadd.f32 %v6801, %v6810
    %s6813 = sld [smem:[#allocation5 + $0x36]]
    %v6814 = vstv %s6813
    %v6815 = vmul.f32 %v6812, %v6814
    %v6816 = vadd.f32 %v6705, %v6815
    %s6817 = scalar_lea.vmem [#allocation2], 440
    %v6818 = vld [vmem:[%s6817] sm:$0xff]
    %6820 = vrot.lane.b32.xlu0 %v6812, 112
    %v6821 = vpop.permute.xlu0 %6820
    %v6822 = vsel %vm703, %v6821, 0
    %6824 = vmatprep.subr.mxu0 0.0
    %6825 = vmatpush1.msra.mxu0 %v699
    %6826 = vmatprep.subr.mxu0 0.0
    %6827 = vmatpush1.msra.mxu0 0.0
    %6828 = vmatprep.subr.mxu0 0.0
    %6829 = vmatpush1.msra.mxu0 0.0
    %6830 = vmatprep.subr.mxu0 0.0
    %6831 = vmatpush1.msra.mxu0 0.0
    %6832 = vmatprep.subr.mxu0 0.0
    %6833 = vmatpush1.msra.mxu0 0.0
    %6834 = vmatprep.subr.mxu0 0.0
    %6835 = vmatpush1.msra.mxu0 0.0
    %6836 = vmatprep.subr.mxu0 0.0
    %6837 = vmatpush1.msra.mxu0 0.0
    %6838 = vmatprep.subr.mxu0 0.0
    %6839 = vmatpush1.msra.mxu0 0.0
    %6840 = vmatprep.subr.mxu0 0.0
    %6841 = vmatpush1.msra.mxu0 0.0
    %6842 = vmatprep.subr.mxu0 0.0
    %6843 = vmatpush1.msra.mxu0 0.0
    %6844 = vmatprep.subr.mxu0 0.0
    %6845 = vmatpush1.msra.mxu0 0.0
    %6846 = vmatprep.subr.mxu0 0.0
    %6847 = vmatpush1.msra.mxu0 0.0
    %6848 = vmatprep.subr.mxu0 0.0
    %6849 = vmatpush1.msra.mxu0 0.0
    %6850 = vmatprep.subr.mxu0 0.0
    %6851 = vmatpush1.msra.mxu0 0.0
    %6852 = vmatprep.subr.mxu0 0.0
    %6853 = vmatpush1.msra.mxu0 0.0
    %6854 = vmatprep.subr.mxu0 0.0
    %6855 = vmatpush1.msra.mxu0 0.0
    %6856 = vmatprep.subr.mxu0 0.0
    %6857 = vmatpush1.msra.mxu0 0.0
    %6858 = vmatprep.subr.mxu0 0.0
    %6859 = vmatpush1.msra.mxu0 0.0
    %6860 = vmatprep.subr.mxu0 0.0
    %6861 = vmatpush1.msra.mxu0 0.0
    %6862 = vmatprep.subr.mxu0 0.0
    %6863 = vmatpush1.msra.mxu0 0.0
    %6864 = vmatprep.subr.mxu0 0.0
    %6865 = vmatpush1.msra.mxu0 0.0
    %6866 = vmatprep.subr.mxu0 0.0
    %6867 = vmatpush1.msra.mxu0 0.0
    %6868 = vmatprep.subr.mxu0 0.0
    %6869 = vmatpush1.msra.mxu0 0.0
    %6870 = vmatprep.subr.mxu0 0.0
    %6871 = vmatpush1.msra.mxu0 0.0
    %6872 = vmatprep.subr.mxu0 0.0
    %6873 = vmatpush1.msra.mxu0 0.0
    %6874 = vmatprep.subr.mxu0 0.0
    %6875 = vmatpush1.msra.mxu0 0.0
    %6876 = vmatprep.subr.mxu0 0.0
    %6877 = vmatpush1.msra.mxu0 0.0
    %6878 = vmatprep.subr.mxu0 0.0
    %6879 = vmatpush1.msra.mxu0 0.0
    %6880 = vmatprep.subr.mxu0 0.0
    %6881 = vmatpush1.msra.mxu0 0.0
    %6882 = vmatprep.subr.mxu0 0.0
    %6883 = vmatpush1.msra.mxu0 0.0
    %6884 = vmatprep.subr.mxu0 0.0
    %6885 = vmatpush1.msra.mxu0 0.0
    %6886 = vmatprep.subr.mxu0 0.0
    %6887 = vmatpush1.msra.mxu0 0.0
    %6888 = vmatprep.mubr.f32.mxu0 0.0
    %6889 = vmatmul.mubr.f32.gmra.mrb[0].mxu0 %v6822
    %v6890 = vpop.f32.mrb[0].mxu0
    %v6891 = vadd.f32 0.0, %v6890
    %v6892 = vpop.f32.mrb[0].mxu0
    %6893 = vdwg.mxu0
    %v6894 = vadd.f32 %v6818, %v6891
    %v6895 = vxor.u32 %v6894, 2147483648
    %v6896 = vmul.f32 %v6895, 1.442695
    %v6897 = vpow.pop %v6896
    %v6898 = vadd.f32 %v6897, 1.0
    %v6899 = vrcp.pop %v6898
    %v6900 = vmul.f32 1.0, %v6899
    %v6901 = vadd.f32 %v6891, %v790
    %6903 = vrot.lane.b32.xlu0 %v6901, 112
    %v6904 = vpop.permute.xlu0 %6903
    %v6906 = vmul.f32 %v6900, %v6904
    %6908 = vrot.lane.b32.xlu0 %v6906, 16
    %v6909 = vpop.permute.xlu0 %6908
    %v6911 = vadd.f32 %v6818, %v6909
    %v6912 = vtanh.pop %v6911
    %v6913 = vsub.f32 %v6812, %v6912
    %6915 = vrot.lane.b32.xlu0 %v6913, 120
    %v6916 = vpop.permute.xlu0 %6915
    %v6918 = vmul.f32 %v6900, %v6916
    %6920 = vrot.lane.b32.xlu0 %v6918, 8
    %v6921 = vpop.permute.xlu0 %6920
    %v6923 = vadd.f32 %v6912, %v6921
    %s6924 = sld [smem:[#allocation5 + $0x37]]
    %v6925 = vstv %s6924
    %v6926 = vmul.f32 %v6923, %v6925
    %v6927 = vadd.f32 %v6816, %v6926
    %s6928 = scalar_lea.vmem [#allocation2], 448
    %v6929 = vld [vmem:[%s6928] sm:$0xff]
    %6931 = vrot.lane.b32.xlu0 %v6923, 112
    %v6932 = vpop.permute.xlu0 %6931
    %v6933 = vsel %vm703, %v6932, 0
    %6935 = vmatprep.subr.mxu0 0.0
    %6936 = vmatpush1.msra.mxu0 %v699
    %6937 = vmatprep.subr.mxu0 0.0
    %6938 = vmatpush1.msra.mxu0 0.0
    %6939 = vmatprep.subr.mxu0 0.0
    %6940 = vmatpush1.msra.mxu0 0.0
    %6941 = vmatprep.subr.mxu0 0.0
    %6942 = vmatpush1.msra.mxu0 0.0
    %6943 = vmatprep.subr.mxu0 0.0
    %6944 = vmatpush1.msra.mxu0 0.0
    %6945 = vmatprep.subr.mxu0 0.0
    %6946 = vmatpush1.msra.mxu0 0.0
    %6947 = vmatprep.subr.mxu0 0.0
    %6948 = vmatpush1.msra.mxu0 0.0
    %6949 = vmatprep.subr.mxu0 0.0
    %6950 = vmatpush1.msra.mxu0 0.0
    %6951 = vmatprep.subr.mxu0 0.0
    %6952 = vmatpush1.msra.mxu0 0.0
    %6953 = vmatprep.subr.mxu0 0.0
    %6954 = vmatpush1.msra.mxu0 0.0
    %6955 = vmatprep.subr.mxu0 0.0
    %6956 = vmatpush1.msra.mxu0 0.0
    %6957 = vmatprep.subr.mxu0 0.0
    %6958 = vmatpush1.msra.mxu0 0.0
    %6959 = vmatprep.subr.mxu0 0.0
    %6960 = vmatpush1.msra.mxu0 0.0
    %6961 = vmatprep.subr.mxu0 0.0
    %6962 = vmatpush1.msra.mxu0 0.0
    %6963 = vmatprep.subr.mxu0 0.0
    %6964 = vmatpush1.msra.mxu0 0.0
    %6965 = vmatprep.subr.mxu0 0.0
    %6966 = vmatpush1.msra.mxu0 0.0
    %6967 = vmatprep.subr.mxu0 0.0
    %6968 = vmatpush1.msra.mxu0 0.0
    %6969 = vmatprep.subr.mxu0 0.0
    %6970 = vmatpush1.msra.mxu0 0.0
    %6971 = vmatprep.subr.mxu0 0.0
    %6972 = vmatpush1.msra.mxu0 0.0
    %6973 = vmatprep.subr.mxu0 0.0
    %6974 = vmatpush1.msra.mxu0 0.0
    %6975 = vmatprep.subr.mxu0 0.0
    %6976 = vmatpush1.msra.mxu0 0.0
    %6977 = vmatprep.subr.mxu0 0.0
    %6978 = vmatpush1.msra.mxu0 0.0
    %6979 = vmatprep.subr.mxu0 0.0
    %6980 = vmatpush1.msra.mxu0 0.0
    %6981 = vmatprep.subr.mxu0 0.0
    %6982 = vmatpush1.msra.mxu0 0.0
    %6983 = vmatprep.subr.mxu0 0.0
    %6984 = vmatpush1.msra.mxu0 0.0
    %6985 = vmatprep.subr.mxu0 0.0
    %6986 = vmatpush1.msra.mxu0 0.0
    %6987 = vmatprep.subr.mxu0 0.0
    %6988 = vmatpush1.msra.mxu0 0.0
    %6989 = vmatprep.subr.mxu0 0.0
    %6990 = vmatpush1.msra.mxu0 0.0
    %6991 = vmatprep.subr.mxu0 0.0
    %6992 = vmatpush1.msra.mxu0 0.0
    %6993 = vmatprep.subr.mxu0 0.0
    %6994 = vmatpush1.msra.mxu0 0.0
    %6995 = vmatprep.subr.mxu0 0.0
    %6996 = vmatpush1.msra.mxu0 0.0
    %6997 = vmatprep.subr.mxu0 0.0
    %6998 = vmatpush1.msra.mxu0 0.0
    %6999 = vmatprep.mubr.f32.mxu0 0.0
    %7000 = vmatmul.mubr.f32.gmra.mrb[0].mxu0 %v6933
    %v7001 = vpop.f32.mrb[0].mxu0
    %v7002 = vadd.f32 0.0, %v7001
    %v7003 = vpop.f32.mrb[0].mxu0
    %7004 = vdwg.mxu0
    %v7005 = vadd.f32 %v6929, %v7002
    %v7006 = vxor.u32 %v7005, 2147483648
    %v7007 = vmul.f32 %v7006, 1.442695
    %v7008 = vpow.pop %v7007
    %v7009 = vadd.f32 %v7008, 1.0
    %v7010 = vrcp.pop %v7009
    %v7011 = vmul.f32 1.0, %v7010
    %v7012 = vadd.f32 %v7002, %v790
    %7014 = vrot.lane.b32.xlu0 %v7012, 112
    %v7015 = vpop.permute.xlu0 %7014
    %v7017 = vmul.f32 %v7011, %v7015
    %7019 = vrot.lane.b32.xlu0 %v7017, 16
    %v7020 = vpop.permute.xlu0 %7019
    %v7022 = vadd.f32 %v6929, %v7020
    %v7023 = vtanh.pop %v7022
    %v7024 = vsub.f32 %v6923, %v7023
    %7026 = vrot.lane.b32.xlu0 %v7024, 120
    %v7027 = vpop.permute.xlu0 %7026
    %v7029 = vmul.f32 %v7011, %v7027
    %7031 = vrot.lane.b32.xlu0 %v7029, 8
    %v7032 = vpop.permute.xlu0 %7031
    %v7034 = vadd.f32 %v7023, %v7032
    %s7035 = sld [smem:[#allocation5 + $0x38]]
    %v7036 = vstv %s7035
    %v7037 = vmul.f32 %v7034, %v7036
    %v7038 = vadd.f32 %v6927, %v7037
    %s7039 = scalar_lea.vmem [#allocation2], 456
    %v7040 = vld [vmem:[%s7039] sm:$0xff]
    %7042 = vrot.lane.b32.xlu0 %v7034, 112
    %v7043 = vpop.permute.xlu0 %7042
    %v7044 = vsel %vm703, %v7043, 0
    %7046 = vmatprep.subr.mxu0 0.0
    %7047 = vmatpush1.msra.mxu0 %v699
    %7048 = vmatprep.subr.mxu0 0.0
    %7049 = vmatpush1.msra.mxu0 0.0
    %7050 = vmatprep.subr.mxu0 0.0
    %7051 = vmatpush1.msra.mxu0 0.0
    %7052 = vmatprep.subr.mxu0 0.0
    %7053 = vmatpush1.msra.mxu0 0.0
    %7054 = vmatprep.subr.mxu0 0.0
    %7055 = vmatpush1.msra.mxu0 0.0
    %7056 = vmatprep.subr.mxu0 0.0
    %7057 = vmatpush1.msra.mxu0 0.0
    %7058 = vmatprep.subr.mxu0 0.0
    %7059 = vmatpush1.msra.mxu0 0.0
    %7060 = vmatprep.subr.mxu0 0.0
    %7061 = vmatpush1.msra.mxu0 0.0
    %7062 = vmatprep.subr.mxu0 0.0
    %7063 = vmatpush1.msra.mxu0 0.0
    %7064 = vmatprep.subr.mxu0 0.0
    %7065 = vmatpush1.msra.mxu0 0.0
    %7066 = vmatprep.subr.mxu0 0.0
    %7067 = vmatpush1.msra.mxu0 0.0
    %7068 = vmatprep.subr.mxu0 0.0
    %7069 = vmatpush1.msra.mxu0 0.0
    %7070 = vmatprep.subr.mxu0 0.0
    %7071 = vmatpush1.msra.mxu0 0.0
    %7072 = vmatprep.subr.mxu0 0.0
    %7073 = vmatpush1.msra.mxu0 0.0
    %7074 = vmatprep.subr.mxu0 0.0
    %7075 = vmatpush1.msra.mxu0 0.0
    %7076 = vmatprep.subr.mxu0 0.0
    %7077 = vmatpush1.msra.mxu0 0.0
    %7078 = vmatprep.subr.mxu0 0.0
    %7079 = vmatpush1.msra.mxu0 0.0
    %7080 = vmatprep.subr.mxu0 0.0
    %7081 = vmatpush1.msra.mxu0 0.0
    %7082 = vmatprep.subr.mxu0 0.0
    %7083 = vmatpush1.msra.mxu0 0.0
    %7084 = vmatprep.subr.mxu0 0.0
    %7085 = vmatpush1.msra.mxu0 0.0
    %7086 = vmatprep.subr.mxu0 0.0
    %7087 = vmatpush1.msra.mxu0 0.0
    %7088 = vmatprep.subr.mxu0 0.0
    %7089 = vmatpush1.msra.mxu0 0.0
    %7090 = vmatprep.subr.mxu0 0.0
    %7091 = vmatpush1.msra.mxu0 0.0
    %7092 = vmatprep.subr.mxu0 0.0
    %7093 = vmatpush1.msra.mxu0 0.0
    %7094 = vmatprep.subr.mxu0 0.0
    %7095 = vmatpush1.msra.mxu0 0.0
    %7096 = vmatprep.subr.mxu0 0.0
    %7097 = vmatpush1.msra.mxu0 0.0
    %7098 = vmatprep.subr.mxu0 0.0
    %7099 = vmatpush1.msra.mxu0 0.0
    %7100 = vmatprep.subr.mxu0 0.0
    %7101 = vmatpush1.msra.mxu0 0.0
    %7102 = vmatprep.subr.mxu0 0.0
    %7103 = vmatpush1.msra.mxu0 0.0
    %7104 = vmatprep.subr.mxu0 0.0
    %7105 = vmatpush1.msra.mxu0 0.0
    %7106 = vmatprep.subr.mxu0 0.0
    %7107 = vmatpush1.msra.mxu0 0.0
    %7108 = vmatprep.subr.mxu0 0.0
    %7109 = vmatpush1.msra.mxu0 0.0
    %7110 = vmatprep.mubr.f32.mxu0 0.0
    %7111 = vmatmul.mubr.f32.gmra.mrb[0].mxu0 %v7044
    %v7112 = vpop.f32.mrb[0].mxu0
    %v7113 = vadd.f32 0.0, %v7112
    %v7114 = vpop.f32.mrb[0].mxu0
    %7115 = vdwg.mxu0
    %v7116 = vadd.f32 %v7040, %v7113
    %v7117 = vxor.u32 %v7116, 2147483648
    %v7118 = vmul.f32 %v7117, 1.442695
    %v7119 = vpow.pop %v7118
    %v7120 = vadd.f32 %v7119, 1.0
    %v7121 = vrcp.pop %v7120
    %v7122 = vmul.f32 1.0, %v7121
    %v7123 = vadd.f32 %v7113, %v790
    %7125 = vrot.lane.b32.xlu0 %v7123, 112
    %v7126 = vpop.permute.xlu0 %7125
    %v7128 = vmul.f32 %v7122, %v7126
    %7130 = vrot.lane.b32.xlu0 %v7128, 16
    %v7131 = vpop.permute.xlu0 %7130
    %v7133 = vadd.f32 %v7040, %v7131
    %v7134 = vtanh.pop %v7133
    %v7135 = vsub.f32 %v7034, %v7134
    %7137 = vrot.lane.b32.xlu0 %v7135, 120
    %v7138 = vpop.permute.xlu0 %7137
    %v7140 = vmul.f32 %v7122, %v7138
    %7142 = vrot.lane.b32.xlu0 %v7140, 8
    %v7143 = vpop.permute.xlu0 %7142
    %v7145 = vadd.f32 %v7134, %v7143
    %s7146 = sld [smem:[#allocation5 + $0x39]]
    %v7147 = vstv %s7146
    %v7148 = vmul.f32 %v7145, %v7147
    %v7149 = vadd.f32 %v7038, %v7148
    %s7150 = scalar_lea.vmem [#allocation2], 464
    %v7151 = vld [vmem:[%s7150] sm:$0xff]
    %7153 = vrot.lane.b32.xlu0 %v7145, 112
    %v7154 = vpop.permute.xlu0 %7153
    %v7155 = vsel %vm703, %v7154, 0
    %7157 = vmatprep.subr.mxu0 0.0
    %7158 = vmatpush1.msra.mxu0 %v699
    %7159 = vmatprep.subr.mxu0 0.0
    %7160 = vmatpush1.msra.mxu0 0.0
    %7161 = vmatprep.subr.mxu0 0.0
    %7162 = vmatpush1.msra.mxu0 0.0
    %7163 = vmatprep.subr.mxu0 0.0
    %7164 = vmatpush1.msra.mxu0 0.0
    %7165 = vmatprep.subr.mxu0 0.0
    %7166 = vmatpush1.msra.mxu0 0.0
    %7167 = vmatprep.subr.mxu0 0.0
    %7168 = vmatpush1.msra.mxu0 0.0
    %7169 = vmatprep.subr.mxu0 0.0
    %7170 = vmatpush1.msra.mxu0 0.0
    %7171 = vmatprep.subr.mxu0 0.0
    %7172 = vmatpush1.msra.mxu0 0.0
    %7173 = vmatprep.subr.mxu0 0.0
    %7174 = vmatpush1.msra.mxu0 0.0
    %7175 = vmatprep.subr.mxu0 0.0
    %7176 = vmatpush1.msra.mxu0 0.0
    %7177 = vmatprep.subr.mxu0 0.0
    %7178 = vmatpush1.msra.mxu0 0.0
    %7179 = vmatprep.subr.mxu0 0.0
    %7180 = vmatpush1.msra.mxu0 0.0
    %7181 = vmatprep.subr.mxu0 0.0
    %7182 = vmatpush1.msra.mxu0 0.0
    %7183 = vmatprep.subr.mxu0 0.0
    %7184 = vmatpush1.msra.mxu0 0.0
    %7185 = vmatprep.subr.mxu0 0.0
    %7186 = vmatpush1.msra.mxu0 0.0
    %7187 = vmatprep.subr.mxu0 0.0
    %7188 = vmatpush1.msra.mxu0 0.0
    %7189 = vmatprep.subr.mxu0 0.0
    %7190 = vmatpush1.msra.mxu0 0.0
    %7191 = vmatprep.subr.mxu0 0.0
    %7192 = vmatpush1.msra.mxu0 0.0
    %7193 = vmatprep.subr.mxu0 0.0
    %7194 = vmatpush1.msra.mxu0 0.0
    %7195 = vmatprep.subr.mxu0 0.0
    %7196 = vmatpush1.msra.mxu0 0.0
    %7197 = vmatprep.subr.mxu0 0.0
    %7198 = vmatpush1.msra.mxu0 0.0
    %7199 = vmatprep.subr.mxu0 0.0
    %7200 = vmatpush1.msra.mxu0 0.0
    %7201 = vmatprep.subr.mxu0 0.0
    %7202 = vmatpush1.msra.mxu0 0.0
    %7203 = vmatprep.subr.mxu0 0.0
    %7204 = vmatpush1.msra.mxu0 0.0
    %7205 = vmatprep.subr.mxu0 0.0
    %7206 = vmatpush1.msra.mxu0 0.0
    %7207 = vmatprep.subr.mxu0 0.0
    %7208 = vmatpush1.msra.mxu0 0.0
    %7209 = vmatprep.subr.mxu0 0.0
    %7210 = vmatpush1.msra.mxu0 0.0
    %7211 = vmatprep.subr.mxu0 0.0
    %7212 = vmatpush1.msra.mxu0 0.0
    %7213 = vmatprep.subr.mxu0 0.0
    %7214 = vmatpush1.msra.mxu0 0.0
    %7215 = vmatprep.subr.mxu0 0.0
    %7216 = vmatpush1.msra.mxu0 0.0
    %7217 = vmatprep.subr.mxu0 0.0
    %7218 = vmatpush1.msra.mxu0 0.0
    %7219 = vmatprep.subr.mxu0 0.0
    %7220 = vmatpush1.msra.mxu0 0.0
    %7221 = vmatprep.mubr.f32.mxu0 0.0
    %7222 = vmatmul.mubr.f32.gmra.mrb[0].mxu0 %v7155
    %v7223 = vpop.f32.mrb[0].mxu0
    %v7224 = vadd.f32 0.0, %v7223
    %v7225 = vpop.f32.mrb[0].mxu0
    %7226 = vdwg.mxu0
    %v7227 = vadd.f32 %v7151, %v7224
    %v7228 = vxor.u32 %v7227, 2147483648
    %v7229 = vmul.f32 %v7228, 1.442695
    %v7230 = vpow.pop %v7229
    %v7231 = vadd.f32 %v7230, 1.0
    %v7232 = vrcp.pop %v7231
    %v7233 = vmul.f32 1.0, %v7232
    %v7234 = vadd.f32 %v7224, %v790
    %7236 = vrot.lane.b32.xlu0 %v7234, 112
    %v7237 = vpop.permute.xlu0 %7236
    %v7239 = vmul.f32 %v7233, %v7237
    %7241 = vrot.lane.b32.xlu0 %v7239, 16
    %v7242 = vpop.permute.xlu0 %7241
    %v7244 = vadd.f32 %v7151, %v7242
    %v7245 = vtanh.pop %v7244
    %v7246 = vsub.f32 %v7145, %v7245
    %7248 = vrot.lane.b32.xlu0 %v7246, 120
    %v7249 = vpop.permute.xlu0 %7248
    %v7251 = vmul.f32 %v7233, %v7249
    %7253 = vrot.lane.b32.xlu0 %v7251, 8
    %v7254 = vpop.permute.xlu0 %7253
    %v7256 = vadd.f32 %v7245, %v7254
    %s7257 = sld [smem:[#allocation5 + $0x3a]]
    %v7258 = vstv %s7257
    %v7259 = vmul.f32 %v7256, %v7258
    %v7260 = vadd.f32 %v7149, %v7259
    %s7261 = scalar_lea.vmem [#allocation2], 472
    %v7262 = vld [vmem:[%s7261] sm:$0xff]
    %7264 = vrot.lane.b32.xlu0 %v7256, 112
    %v7265 = vpop.permute.xlu0 %7264
    %v7266 = vsel %vm703, %v7265, 0
    %7268 = vmatprep.subr.mxu0 0.0
    %7269 = vmatpush1.msra.mxu0 %v699
    %7270 = vmatprep.subr.mxu0 0.0
    %7271 = vmatpush1.msra.mxu0 0.0
    %7272 = vmatprep.subr.mxu0 0.0
    %7273 = vmatpush1.msra.mxu0 0.0
    %7274 = vmatprep.subr.mxu0 0.0
    %7275 = vmatpush1.msra.mxu0 0.0
    %7276 = vmatprep.subr.mxu0 0.0
    %7277 = vmatpush1.msra.mxu0 0.0
    %7278 = vmatprep.subr.mxu0 0.0
    %7279 = vmatpush1.msra.mxu0 0.0
    %7280 = vmatprep.subr.mxu0 0.0
    %7281 = vmatpush1.msra.mxu0 0.0
    %7282 = vmatprep.subr.mxu0 0.0
    %7283 = vmatpush1.msra.mxu0 0.0
    %7284 = vmatprep.subr.mxu0 0.0
    %7285 = vmatpush1.msra.mxu0 0.0
    %7286 = vmatprep.subr.mxu0 0.0
    %7287 = vmatpush1.msra.mxu0 0.0
    %7288 = vmatprep.subr.mxu0 0.0
    %7289 = vmatpush1.msra.mxu0 0.0
    %7290 = vmatprep.subr.mxu0 0.0
    %7291 = vmatpush1.msra.mxu0 0.0
    %7292 = vmatprep.subr.mxu0 0.0
    %7293 = vmatpush1.msra.mxu0 0.0
    %7294 = vmatprep.subr.mxu0 0.0
    %7295 = vmatpush1.msra.mxu0 0.0
    %7296 = vmatprep.subr.mxu0 0.0
    %7297 = vmatpush1.msra.mxu0 0.0
    %7298 = vmatprep.subr.mxu0 0.0
    %7299 = vmatpush1.msra.mxu0 0.0
    %7300 = vmatprep.subr.mxu0 0.0
    %7301 = vmatpush1.msra.mxu0 0.0
    %7302 = vmatprep.subr.mxu0 0.0
    %7303 = vmatpush1.msra.mxu0 0.0
    %7304 = vmatprep.subr.mxu0 0.0
    %7305 = vmatpush1.msra.mxu0 0.0
    %7306 = vmatprep.subr.mxu0 0.0
    %7307 = vmatpush1.msra.mxu0 0.0
    %7308 = vmatprep.subr.mxu0 0.0
    %7309 = vmatpush1.msra.mxu0 0.0
    %7310 = vmatprep.subr.mxu0 0.0
    %7311 = vmatpush1.msra.mxu0 0.0
    %7312 = vmatprep.subr.mxu0 0.0
    %7313 = vmatpush1.msra.mxu0 0.0
    %7314 = vmatprep.subr.mxu0 0.0
    %7315 = vmatpush1.msra.mxu0 0.0
    %7316 = vmatprep.subr.mxu0 0.0
    %7317 = vmatpush1.msra.mxu0 0.0
    %7318 = vmatprep.subr.mxu0 0.0
    %7319 = vmatpush1.msra.mxu0 0.0
    %7320 = vmatprep.subr.mxu0 0.0
    %7321 = vmatpush1.msra.mxu0 0.0
    %7322 = vmatprep.subr.mxu0 0.0
    %7323 = vmatpush1.msra.mxu0 0.0
    %7324 = vmatprep.subr.mxu0 0.0
    %7325 = vmatpush1.msra.mxu0 0.0
    %7326 = vmatprep.subr.mxu0 0.0
    %7327 = vmatpush1.msra.mxu0 0.0
    %7328 = vmatprep.subr.mxu0 0.0
    %7329 = vmatpush1.msra.mxu0 0.0
    %7330 = vmatprep.subr.mxu0 0.0
    %7331 = vmatpush1.msra.mxu0 0.0
    %7332 = vmatprep.mubr.f32.mxu0 0.0
    %7333 = vmatmul.mubr.f32.gmra.mrb[0].mxu0 %v7266
    %v7334 = vpop.f32.mrb[0].mxu0
    %v7335 = vadd.f32 0.0, %v7334
    %v7336 = vpop.f32.mrb[0].mxu0
    %7337 = vdwg.mxu0
    %v7338 = vadd.f32 %v7262, %v7335
    %v7339 = vxor.u32 %v7338, 2147483648
    %v7340 = vmul.f32 %v7339, 1.442695
    %v7341 = vpow.pop %v7340
    %v7342 = vadd.f32 %v7341, 1.0
    %v7343 = vrcp.pop %v7342
    %v7344 = vmul.f32 1.0, %v7343
    %v7345 = vadd.f32 %v7335, %v790
    %7347 = vrot.lane.b32.xlu0 %v7345, 112
    %v7348 = vpop.permute.xlu0 %7347
    %v7350 = vmul.f32 %v7344, %v7348
    %7352 = vrot.lane.b32.xlu0 %v7350, 16
    %v7353 = vpop.permute.xlu0 %7352
    %v7355 = vadd.f32 %v7262, %v7353
    %v7356 = vtanh.pop %v7355
    %v7357 = vsub.f32 %v7256, %v7356
    %7359 = vrot.lane.b32.xlu0 %v7357, 120
    %v7360 = vpop.permute.xlu0 %7359
    %v7362 = vmul.f32 %v7344, %v7360
    %7364 = vrot.lane.b32.xlu0 %v7362, 8
    %v7365 = vpop.permute.xlu0 %7364
    %v7367 = vadd.f32 %v7356, %v7365
    %s7368 = sld [smem:[#allocation5 + $0x3b]]
    %v7369 = vstv %s7368
    %v7370 = vmul.f32 %v7367, %v7369
    %v7371 = vadd.f32 %v7260, %v7370
    %s7372 = scalar_lea.vmem [#allocation2], 480
    %v7373 = vld [vmem:[%s7372] sm:$0xff]
    %7375 = vrot.lane.b32.xlu0 %v7367, 112
    %v7376 = vpop.permute.xlu0 %7375
    %v7377 = vsel %vm703, %v7376, 0
    %7379 = vmatprep.subr.mxu0 0.0
    %7380 = vmatpush1.msra.mxu0 %v699
    %7381 = vmatprep.subr.mxu0 0.0
    %7382 = vmatpush1.msra.mxu0 0.0
    %7383 = vmatprep.subr.mxu0 0.0
    %7384 = vmatpush1.msra.mxu0 0.0
    %7385 = vmatprep.subr.mxu0 0.0
    %7386 = vmatpush1.msra.mxu0 0.0
    %7387 = vmatprep.subr.mxu0 0.0
    %7388 = vmatpush1.msra.mxu0 0.0
    %7389 = vmatprep.subr.mxu0 0.0
    %7390 = vmatpush1.msra.mxu0 0.0
    %7391 = vmatprep.subr.mxu0 0.0
    %7392 = vmatpush1.msra.mxu0 0.0
    %7393 = vmatprep.subr.mxu0 0.0
    %7394 = vmatpush1.msra.mxu0 0.0
    %7395 = vmatprep.subr.mxu0 0.0
    %7396 = vmatpush1.msra.mxu0 0.0
    %7397 = vmatprep.subr.mxu0 0.0
    %7398 = vmatpush1.msra.mxu0 0.0
    %7399 = vmatprep.subr.mxu0 0.0
    %7400 = vmatpush1.msra.mxu0 0.0
    %7401 = vmatprep.subr.mxu0 0.0
    %7402 = vmatpush1.msra.mxu0 0.0
    %7403 = vmatprep.subr.mxu0 0.0
    %7404 = vmatpush1.msra.mxu0 0.0
    %7405 = vmatprep.subr.mxu0 0.0
    %7406 = vmatpush1.msra.mxu0 0.0
    %7407 = vmatprep.subr.mxu0 0.0
    %7408 = vmatpush1.msra.mxu0 0.0
    %7409 = vmatprep.subr.mxu0 0.0
    %7410 = vmatpush1.msra.mxu0 0.0
    %7411 = vmatprep.subr.mxu0 0.0
    %7412 = vmatpush1.msra.mxu0 0.0
    %7413 = vmatprep.subr.mxu0 0.0
    %7414 = vmatpush1.msra.mxu0 0.0
    %7415 = vmatprep.subr.mxu0 0.0
    %7416 = vmatpush1.msra.mxu0 0.0
    %7417 = vmatprep.subr.mxu0 0.0
    %7418 = vmatpush1.msra.mxu0 0.0
    %7419 = vmatprep.subr.mxu0 0.0
    %7420 = vmatpush1.msra.mxu0 0.0
    %7421 = vmatprep.subr.mxu0 0.0
    %7422 = vmatpush1.msra.mxu0 0.0
    %7423 = vmatprep.subr.mxu0 0.0
    %7424 = vmatpush1.msra.mxu0 0.0
    %7425 = vmatprep.subr.mxu0 0.0
    %7426 = vmatpush1.msra.mxu0 0.0
    %7427 = vmatprep.subr.mxu0 0.0
    %7428 = vmatpush1.msra.mxu0 0.0
    %7429 = vmatprep.subr.mxu0 0.0
    %7430 = vmatpush1.msra.mxu0 0.0
    %7431 = vmatprep.subr.mxu0 0.0
    %7432 = vmatpush1.msra.mxu0 0.0
    %7433 = vmatprep.subr.mxu0 0.0
    %7434 = vmatpush1.msra.mxu0 0.0
    %7435 = vmatprep.subr.mxu0 0.0
    %7436 = vmatpush1.msra.mxu0 0.0
    %7437 = vmatprep.subr.mxu0 0.0
    %7438 = vmatpush1.msra.mxu0 0.0
    %7439 = vmatprep.subr.mxu0 0.0
    %7440 = vmatpush1.msra.mxu0 0.0
    %7441 = vmatprep.subr.mxu0 0.0
    %7442 = vmatpush1.msra.mxu0 0.0
    %7443 = vmatprep.mubr.f32.mxu0 0.0
    %7444 = vmatmul.mubr.f32.gmra.mrb[0].mxu0 %v7377
    %v7445 = vpop.f32.mrb[0].mxu0
    %v7446 = vadd.f32 0.0, %v7445
    %v7447 = vpop.f32.mrb[0].mxu0
    %7448 = vdwg.mxu0
    %v7449 = vadd.f32 %v7373, %v7446
    %v7450 = vxor.u32 %v7449, 2147483648
    %v7451 = vmul.f32 %v7450, 1.442695
    %v7452 = vpow.pop %v7451
    %v7453 = vadd.f32 %v7452, 1.0
    %v7454 = vrcp.pop %v7453
    %v7455 = vmul.f32 1.0, %v7454
    %v7456 = vadd.f32 %v7446, %v790
    %7458 = vrot.lane.b32.xlu0 %v7456, 112
    %v7459 = vpop.permute.xlu0 %7458
    %v7461 = vmul.f32 %v7455, %v7459
    %7463 = vrot.lane.b32.xlu0 %v7461, 16
    %v7464 = vpop.permute.xlu0 %7463
    %v7466 = vadd.f32 %v7373, %v7464
    %v7467 = vtanh.pop %v7466
    %v7468 = vsub.f32 %v7367, %v7467
    %7470 = vrot.lane.b32.xlu0 %v7468, 120
    %v7471 = vpop.permute.xlu0 %7470
    %v7473 = vmul.f32 %v7455, %v7471
    %7475 = vrot.lane.b32.xlu0 %v7473, 8
    %v7476 = vpop.permute.xlu0 %7475
    %v7478 = vadd.f32 %v7467, %v7476
    %s7479 = sld [smem:[#allocation5 + $0x3c]]
    %v7480 = vstv %s7479
    %v7481 = vmul.f32 %v7478, %v7480
    %v7482 = vadd.f32 %v7371, %v7481
    %s7483 = scalar_lea.vmem [#allocation2], 488
    %v7484 = vld [vmem:[%s7483] sm:$0xff]
    %7486 = vrot.lane.b32.xlu0 %v7478, 112
    %v7487 = vpop.permute.xlu0 %7486
    %v7488 = vsel %vm703, %v7487, 0
    %7490 = vmatprep.subr.mxu0 0.0
    %7491 = vmatpush1.msra.mxu0 %v699
    %7492 = vmatprep.subr.mxu0 0.0
    %7493 = vmatpush1.msra.mxu0 0.0
    %7494 = vmatprep.subr.mxu0 0.0
    %7495 = vmatpush1.msra.mxu0 0.0
    %7496 = vmatprep.subr.mxu0 0.0
    %7497 = vmatpush1.msra.mxu0 0.0
    %7498 = vmatprep.subr.mxu0 0.0
    %7499 = vmatpush1.msra.mxu0 0.0
    %7500 = vmatprep.subr.mxu0 0.0
    %7501 = vmatpush1.msra.mxu0 0.0
    %7502 = vmatprep.subr.mxu0 0.0
    %7503 = vmatpush1.msra.mxu0 0.0
    %7504 = vmatprep.subr.mxu0 0.0
    %7505 = vmatpush1.msra.mxu0 0.0
    %7506 = vmatprep.subr.mxu0 0.0
    %7507 = vmatpush1.msra.mxu0 0.0
    %7508 = vmatprep.subr.mxu0 0.0
    %7509 = vmatpush1.msra.mxu0 0.0
    %7510 = vmatprep.subr.mxu0 0.0
    %7511 = vmatpush1.msra.mxu0 0.0
    %7512 = vmatprep.subr.mxu0 0.0
    %7513 = vmatpush1.msra.mxu0 0.0
    %7514 = vmatprep.subr.mxu0 0.0
    %7515 = vmatpush1.msra.mxu0 0.0
    %7516 = vmatprep.subr.mxu0 0.0
    %7517 = vmatpush1.msra.mxu0 0.0
    %7518 = vmatprep.subr.mxu0 0.0
    %7519 = vmatpush1.msra.mxu0 0.0
    %7520 = vmatprep.subr.mxu0 0.0
    %7521 = vmatpush1.msra.mxu0 0.0
    %7522 = vmatprep.subr.mxu0 0.0
    %7523 = vmatpush1.msra.mxu0 0.0
    %7524 = vmatprep.subr.mxu0 0.0
    %7525 = vmatpush1.msra.mxu0 0.0
    %7526 = vmatprep.subr.mxu0 0.0
    %7527 = vmatpush1.msra.mxu0 0.0
    %7528 = vmatprep.subr.mxu0 0.0
    %7529 = vmatpush1.msra.mxu0 0.0
    %7530 = vmatprep.subr.mxu0 0.0
    %7531 = vmatpush1.msra.mxu0 0.0
    %7532 = vmatprep.subr.mxu0 0.0
    %7533 = vmatpush1.msra.mxu0 0.0
    %7534 = vmatprep.subr.mxu0 0.0
    %7535 = vmatpush1.msra.mxu0 0.0
    %7536 = vmatprep.subr.mxu0 0.0
    %7537 = vmatpush1.msra.mxu0 0.0
    %7538 = vmatprep.subr.mxu0 0.0
    %7539 = vmatpush1.msra.mxu0 0.0
    %7540 = vmatprep.subr.mxu0 0.0
    %7541 = vmatpush1.msra.mxu0 0.0
    %7542 = vmatprep.subr.mxu0 0.0
    %7543 = vmatpush1.msra.mxu0 0.0
    %7544 = vmatprep.subr.mxu0 0.0
    %7545 = vmatpush1.msra.mxu0 0.0
    %7546 = vmatprep.subr.mxu0 0.0
    %7547 = vmatpush1.msra.mxu0 0.0
    %7548 = vmatprep.subr.mxu0 0.0
    %7549 = vmatpush1.msra.mxu0 0.0
    %7550 = vmatprep.subr.mxu0 0.0
    %7551 = vmatpush1.msra.mxu0 0.0
    %7552 = vmatprep.subr.mxu0 0.0
    %7553 = vmatpush1.msra.mxu0 0.0
    %7554 = vmatprep.mubr.f32.mxu0 0.0
    %7555 = vmatmul.mubr.f32.gmra.mrb[0].mxu0 %v7488
    %v7556 = vpop.f32.mrb[0].mxu0
    %v7557 = vadd.f32 0.0, %v7556
    %v7558 = vpop.f32.mrb[0].mxu0
    %7559 = vdwg.mxu0
    %v7560 = vadd.f32 %v7484, %v7557
    %v7561 = vxor.u32 %v7560, 2147483648
    %v7562 = vmul.f32 %v7561, 1.442695
    %v7563 = vpow.pop %v7562
    %v7564 = vadd.f32 %v7563, 1.0
    %v7565 = vrcp.pop %v7564
    %v7566 = vmul.f32 1.0, %v7565
    %v7567 = vadd.f32 %v7557, %v790
    %7569 = vrot.lane.b32.xlu0 %v7567, 112
    %v7570 = vpop.permute.xlu0 %7569
    %v7572 = vmul.f32 %v7566, %v7570
    %7574 = vrot.lane.b32.xlu0 %v7572, 16
    %v7575 = vpop.permute.xlu0 %7574
    %v7577 = vadd.f32 %v7484, %v7575
    %v7578 = vtanh.pop %v7577
    %v7579 = vsub.f32 %v7478, %v7578
    %7581 = vrot.lane.b32.xlu0 %v7579, 120
    %v7582 = vpop.permute.xlu0 %7581
    %v7584 = vmul.f32 %v7566, %v7582
    %7586 = vrot.lane.b32.xlu0 %v7584, 8
    %v7587 = vpop.permute.xlu0 %7586
    %v7589 = vadd.f32 %v7578, %v7587
    %s7590 = sld [smem:[#allocation5 + $0x3d]]
    %v7591 = vstv %s7590
    %v7592 = vmul.f32 %v7589, %v7591
    %v7593 = vadd.f32 %v7482, %v7592
    %s7594 = scalar_lea.vmem [#allocation2], 496
    %v7595 = vld [vmem:[%s7594] sm:$0xff]
    %7597 = vrot.lane.b32.xlu0 %v7589, 112
    %v7598 = vpop.permute.xlu0 %7597
    %v7599 = vsel %vm703, %v7598, 0
    %7601 = vmatprep.subr.mxu0 0.0
    %7602 = vmatpush1.msra.mxu0 %v699
    %7603 = vmatprep.subr.mxu0 0.0
    %7604 = vmatpush1.msra.mxu0 0.0
    %7605 = vmatprep.subr.mxu0 0.0
    %7606 = vmatpush1.msra.mxu0 0.0
    %7607 = vmatprep.subr.mxu0 0.0
    %7608 = vmatpush1.msra.mxu0 0.0
    %7609 = vmatprep.subr.mxu0 0.0
    %7610 = vmatpush1.msra.mxu0 0.0
    %7611 = vmatprep.subr.mxu0 0.0
    %7612 = vmatpush1.msra.mxu0 0.0
    %7613 = vmatprep.subr.mxu0 0.0
    %7614 = vmatpush1.msra.mxu0 0.0
    %7615 = vmatprep.subr.mxu0 0.0
    %7616 = vmatpush1.msra.mxu0 0.0
    %7617 = vmatprep.subr.mxu0 0.0
    %7618 = vmatpush1.msra.mxu0 0.0
    %7619 = vmatprep.subr.mxu0 0.0
    %7620 = vmatpush1.msra.mxu0 0.0
    %7621 = vmatprep.subr.mxu0 0.0
    %7622 = vmatpush1.msra.mxu0 0.0
    %7623 = vmatprep.subr.mxu0 0.0
    %7624 = vmatpush1.msra.mxu0 0.0
    %7625 = vmatprep.subr.mxu0 0.0
    %7626 = vmatpush1.msra.mxu0 0.0
    %7627 = vmatprep.subr.mxu0 0.0
    %7628 = vmatpush1.msra.mxu0 0.0
    %7629 = vmatprep.subr.mxu0 0.0
    %7630 = vmatpush1.msra.mxu0 0.0
    %7631 = vmatprep.subr.mxu0 0.0
    %7632 = vmatpush1.msra.mxu0 0.0
    %7633 = vmatprep.subr.mxu0 0.0
    %7634 = vmatpush1.msra.mxu0 0.0
    %7635 = vmatprep.subr.mxu0 0.0
    %7636 = vmatpush1.msra.mxu0 0.0
    %7637 = vmatprep.subr.mxu0 0.0
    %7638 = vmatpush1.msra.mxu0 0.0
    %7639 = vmatprep.subr.mxu0 0.0
    %7640 = vmatpush1.msra.mxu0 0.0
    %7641 = vmatprep.subr.mxu0 0.0
    %7642 = vmatpush1.msra.mxu0 0.0
    %7643 = vmatprep.subr.mxu0 0.0
    %7644 = vmatpush1.msra.mxu0 0.0
    %7645 = vmatprep.subr.mxu0 0.0
    %7646 = vmatpush1.msra.mxu0 0.0
    %7647 = vmatprep.subr.mxu0 0.0
    %7648 = vmatpush1.msra.mxu0 0.0
    %7649 = vmatprep.subr.mxu0 0.0
    %7650 = vmatpush1.msra.mxu0 0.0
    %7651 = vmatprep.subr.mxu0 0.0
    %7652 = vmatpush1.msra.mxu0 0.0
    %7653 = vmatprep.subr.mxu0 0.0
    %7654 = vmatpush1.msra.mxu0 0.0
    %7655 = vmatprep.subr.mxu0 0.0
    %7656 = vmatpush1.msra.mxu0 0.0
    %7657 = vmatprep.subr.mxu0 0.0
    %7658 = vmatpush1.msra.mxu0 0.0
    %7659 = vmatprep.subr.mxu0 0.0
    %7660 = vmatpush1.msra.mxu0 0.0
    %7661 = vmatprep.subr.mxu0 0.0
    %7662 = vmatpush1.msra.mxu0 0.0
    %7663 = vmatprep.subr.mxu0 0.0
    %7664 = vmatpush1.msra.mxu0 0.0
    %7665 = vmatprep.mubr.f32.mxu0 0.0
    %7666 = vmatmul.mubr.f32.gmra.mrb[0].mxu0 %v7599
    %v7667 = vpop.f32.mrb[0].mxu0
    %v7668 = vadd.f32 0.0, %v7667
    %v7669 = vpop.f32.mrb[0].mxu0
    %7670 = vdwg.mxu0
    %v7671 = vadd.f32 %v7595, %v7668
    %v7672 = vxor.u32 %v7671, 2147483648
    %v7673 = vmul.f32 %v7672, 1.442695
    %v7674 = vpow.pop %v7673
    %v7675 = vadd.f32 %v7674, 1.0
    %v7676 = vrcp.pop %v7675
    %v7677 = vmul.f32 1.0, %v7676
    %v7678 = vadd.f32 %v7668, %v790
    %7680 = vrot.lane.b32.xlu0 %v7678, 112
    %v7681 = vpop.permute.xlu0 %7680
    %v7683 = vmul.f32 %v7677, %v7681
    %7685 = vrot.lane.b32.xlu0 %v7683, 16
    %v7686 = vpop.permute.xlu0 %7685
    %v7688 = vadd.f32 %v7595, %v7686
    %v7689 = vtanh.pop %v7688
    %v7690 = vsub.f32 %v7589, %v7689
    %7692 = vrot.lane.b32.xlu0 %v7690, 120
    %v7693 = vpop.permute.xlu0 %7692
    %v7695 = vmul.f32 %v7677, %v7693
    %7697 = vrot.lane.b32.xlu0 %v7695, 8
    %v7698 = vpop.permute.xlu0 %7697
    %v7700 = vadd.f32 %v7689, %v7698
    %s7701 = sld [smem:[#allocation5 + $0x3e]]
    %v7702 = vstv %s7701
    %v7703 = vmul.f32 %v7700, %v7702
    %v7704 = vadd.f32 %v7593, %v7703
    %s7705 = scalar_lea.vmem [#allocation2], 504
    %v7706 = vld [vmem:[%s7705] sm:$0xff]
    %7708 = vrot.lane.b32.xlu0 %v7700, 112
    %v7709 = vpop.permute.xlu0 %7708
    %v7710 = vsel %vm703, %v7709, 0
    %7712 = vmatprep.subr.mxu0 0.0
    %7713 = vmatpush1.msra.mxu0 %v699
    %7714 = vmatprep.subr.mxu0 0.0
    %7715 = vmatpush1.msra.mxu0 0.0
    %7716 = vmatprep.subr.mxu0 0.0
    %7717 = vmatpush1.msra.mxu0 0.0
    %7718 = vmatprep.subr.mxu0 0.0
    %7719 = vmatpush1.msra.mxu0 0.0
    %7720 = vmatprep.subr.mxu0 0.0
    %7721 = vmatpush1.msra.mxu0 0.0
    %7722 = vmatprep.subr.mxu0 0.0
    %7723 = vmatpush1.msra.mxu0 0.0
    %7724 = vmatprep.subr.mxu0 0.0
    %7725 = vmatpush1.msra.mxu0 0.0
    %7726 = vmatprep.subr.mxu0 0.0
    %7727 = vmatpush1.msra.mxu0 0.0
    %7728 = vmatprep.subr.mxu0 0.0
    %7729 = vmatpush1.msra.mxu0 0.0
    %7730 = vmatprep.subr.mxu0 0.0
    %7731 = vmatpush1.msra.mxu0 0.0
    %7732 = vmatprep.subr.mxu0 0.0
    %7733 = vmatpush1.msra.mxu0 0.0
    %7734 = vmatprep.subr.mxu0 0.0
    %7735 = vmatpush1.msra.mxu0 0.0
    %7736 = vmatprep.subr.mxu0 0.0
    %7737 = vmatpush1.msra.mxu0 0.0
    %7738 = vmatprep.subr.mxu0 0.0
    %7739 = vmatpush1.msra.mxu0 0.0
    %7740 = vmatprep.subr.mxu0 0.0
    %7741 = vmatpush1.msra.mxu0 0.0
    %7742 = vmatprep.subr.mxu0 0.0
    %7743 = vmatpush1.msra.mxu0 0.0
    %7744 = vmatprep.subr.mxu0 0.0
    %7745 = vmatpush1.msra.mxu0 0.0
    %7746 = vmatprep.subr.mxu0 0.0
    %7747 = vmatpush1.msra.mxu0 0.0
    %7748 = vmatprep.subr.mxu0 0.0
    %7749 = vmatpush1.msra.mxu0 0.0
    %7750 = vmatprep.subr.mxu0 0.0
    %7751 = vmatpush1.msra.mxu0 0.0
    %7752 = vmatprep.subr.mxu0 0.0
    %7753 = vmatpush1.msra.mxu0 0.0
    %7754 = vmatprep.subr.mxu0 0.0
    %7755 = vmatpush1.msra.mxu0 0.0
    %7756 = vmatprep.subr.mxu0 0.0
    %7757 = vmatpush1.msra.mxu0 0.0
    %7758 = vmatprep.subr.mxu0 0.0
    %7759 = vmatpush1.msra.mxu0 0.0
    %7760 = vmatprep.subr.mxu0 0.0
    %7761 = vmatpush1.msra.mxu0 0.0
    %7762 = vmatprep.subr.mxu0 0.0
    %7763 = vmatpush1.msra.mxu0 0.0
    %7764 = vmatprep.subr.mxu0 0.0
    %7765 = vmatpush1.msra.mxu0 0.0
    %7766 = vmatprep.subr.mxu0 0.0
    %7767 = vmatpush1.msra.mxu0 0.0
    %7768 = vmatprep.subr.mxu0 0.0
    %7769 = vmatpush1.msra.mxu0 0.0
    %7770 = vmatprep.subr.mxu0 0.0
    %7771 = vmatpush1.msra.mxu0 0.0
    %7772 = vmatprep.subr.mxu0 0.0
    %7773 = vmatpush1.msra.mxu0 0.0
    %7774 = vmatprep.subr.mxu0 0.0
    %7775 = vmatpush1.msra.mxu0 0.0
    %7776 = vmatprep.mubr.f32.mxu0 0.0
    %7777 = vmatmul.mubr.f32.gmra.mrb[0].mxu0 %v7710
    %v7778 = vpop.f32.mrb[0].mxu0
    %v7779 = vadd.f32 0.0, %v7778
    %v7780 = vpop.f32.mrb[0].mxu0
    %7781 = vdwg.mxu0
    %v7782 = vadd.f32 %v7706, %v7779
    %v7783 = vxor.u32 %v7782, 2147483648
    %v7784 = vmul.f32 %v7783, 1.442695
    %v7785 = vpow.pop %v7784
    %v7786 = vadd.f32 %v7785, 1.0
    %v7787 = vrcp.pop %v7786
    %v7788 = vmul.f32 1.0, %v7787
    %v7789 = vadd.f32 %v7779, %v790
    %7791 = vrot.lane.b32.xlu0 %v7789, 112
    %v7792 = vpop.permute.xlu0 %7791
    %v7794 = vmul.f32 %v7788, %v7792
    %7796 = vrot.lane.b32.xlu0 %v7794, 16
    %v7797 = vpop.permute.xlu0 %7796
    %v7799 = vadd.f32 %v7706, %v7797
    %v7800 = vtanh.pop %v7799
    %v7801 = vsub.f32 %v7700, %v7800
    %7803 = vrot.lane.b32.xlu0 %v7801, 120
    %v7804 = vpop.permute.xlu0 %7803
    %v7806 = vmul.f32 %v7788, %v7804
    %7808 = vrot.lane.b32.xlu0 %v7806, 8
    %v7809 = vpop.permute.xlu0 %7808
    %v7811 = vadd.f32 %v7800, %v7809
    %s7812 = sld [smem:[#allocation5 + $0x3f]]
    %v7813 = vstv %s7812
    %v7814 = vmul.f32 %v7811, %v7813
    %v7815 = vadd.f32 %v7704, %v7814
    %s7816 = scalar_lea.vmem [#allocation2], 512
    %v7817 = vld [vmem:[%s7816] sm:$0xff]
    %7819 = vrot.lane.b32.xlu0 %v7811, 112
    %v7820 = vpop.permute.xlu0 %7819
    %v7821 = vsel %vm703, %v7820, 0
    %7823 = vmatprep.subr.mxu0 0.0
    %7824 = vmatpush1.msra.mxu0 %v699
    %7825 = vmatprep.subr.mxu0 0.0
    %7826 = vmatpush1.msra.mxu0 0.0
    %7827 = vmatprep.subr.mxu0 0.0
    %7828 = vmatpush1.msra.mxu0 0.0
    %7829 = vmatprep.subr.mxu0 0.0
    %7830 = vmatpush1.msra.mxu0 0.0
    %7831 = vmatprep.subr.mxu0 0.0
    %7832 = vmatpush1.msra.mxu0 0.0
    %7833 = vmatprep.subr.mxu0 0.0
    %7834 = vmatpush1.msra.mxu0 0.0
    %7835 = vmatprep.subr.mxu0 0.0
    %7836 = vmatpush1.msra.mxu0 0.0
    %7837 = vmatprep.subr.mxu0 0.0
    %7838 = vmatpush1.msra.mxu0 0.0
    %7839 = vmatprep.subr.mxu0 0.0
    %7840 = vmatpush1.msra.mxu0 0.0
    %7841 = vmatprep.subr.mxu0 0.0
    %7842 = vmatpush1.msra.mxu0 0.0
    %7843 = vmatprep.subr.mxu0 0.0
    %7844 = vmatpush1.msra.mxu0 0.0
    %7845 = vmatprep.subr.mxu0 0.0
    %7846 = vmatpush1.msra.mxu0 0.0
    %7847 = vmatprep.subr.mxu0 0.0
    %7848 = vmatpush1.msra.mxu0 0.0
    %7849 = vmatprep.subr.mxu0 0.0
    %7850 = vmatpush1.msra.mxu0 0.0
    %7851 = vmatprep.subr.mxu0 0.0
    %7852 = vmatpush1.msra.mxu0 0.0
    %7853 = vmatprep.subr.mxu0 0.0
    %7854 = vmatpush1.msra.mxu0 0.0
    %7855 = vmatprep.subr.mxu0 0.0
    %7856 = vmatpush1.msra.mxu0 0.0
    %7857 = vmatprep.subr.mxu0 0.0
    %7858 = vmatpush1.msra.mxu0 0.0
    %7859 = vmatprep.subr.mxu0 0.0
    %7860 = vmatpush1.msra.mxu0 0.0
    %7861 = vmatprep.subr.mxu0 0.0
    %7862 = vmatpush1.msra.mxu0 0.0
    %7863 = vmatprep.subr.mxu0 0.0
    %7864 = vmatpush1.msra.mxu0 0.0
    %7865 = vmatprep.subr.mxu0 0.0
    %7866 = vmatpush1.msra.mxu0 0.0
    %7867 = vmatprep.subr.mxu0 0.0
    %7868 = vmatpush1.msra.mxu0 0.0
    %7869 = vmatprep.subr.mxu0 0.0
    %7870 = vmatpush1.msra.mxu0 0.0
    %7871 = vmatprep.subr.mxu0 0.0
    %7872 = vmatpush1.msra.mxu0 0.0
    %7873 = vmatprep.subr.mxu0 0.0
    %7874 = vmatpush1.msra.mxu0 0.0
    %7875 = vmatprep.subr.mxu0 0.0
    %7876 = vmatpush1.msra.mxu0 0.0
    %7877 = vmatprep.subr.mxu0 0.0
    %7878 = vmatpush1.msra.mxu0 0.0
    %7879 = vmatprep.subr.mxu0 0.0
    %7880 = vmatpush1.msra.mxu0 0.0
    %7881 = vmatprep.subr.mxu0 0.0
    %7882 = vmatpush1.msra.mxu0 0.0
    %7883 = vmatprep.subr.mxu0 0.0
    %7884 = vmatpush1.msra.mxu0 0.0
    %7885 = vmatprep.subr.mxu0 0.0
    %7886 = vmatpush1.msra.mxu0 0.0
    %7887 = vmatprep.mubr.f32.mxu0 0.0
    %7888 = vmatmul.mubr.f32.gmra.mrb[0].mxu0 %v7821
    %v7889 = vpop.f32.mrb[0].mxu0
    %v7890 = vadd.f32 0.0, %v7889
    %v7891 = vpop.f32.mrb[0].mxu0
    %7892 = vdwg.mxu0
    %v7893 = vadd.f32 %v7817, %v7890
    %v7894 = vxor.u32 %v7893, 2147483648
    %v7895 = vmul.f32 %v7894, 1.442695
    %v7896 = vpow.pop %v7895
    %v7897 = vadd.f32 %v7896, 1.0
    %v7898 = vrcp.pop %v7897
    %v7899 = vmul.f32 1.0, %v7898
    %v7900 = vadd.f32 %v7890, %v790
    %7902 = vrot.lane.b32.xlu0 %v7900, 112
    %v7903 = vpop.permute.xlu0 %7902
    %v7905 = vmul.f32 %v7899, %v7903
    %7907 = vrot.lane.b32.xlu0 %v7905, 16
    %v7908 = vpop.permute.xlu0 %7907
    %v7910 = vadd.f32 %v7817, %v7908
    %v7911 = vtanh.pop %v7910
    %v7912 = vsub.f32 %v7811, %v7911
    %7914 = vrot.lane.b32.xlu0 %v7912, 120
    %v7915 = vpop.permute.xlu0 %7914
    %v7917 = vmul.f32 %v7899, %v7915
    %7919 = vrot.lane.b32.xlu0 %v7917, 8
    %v7920 = vpop.permute.xlu0 %7919
    %v7922 = vadd.f32 %v7911, %v7920
    %s7923 = sld [smem:[#allocation5 + $0x40]]
    %v7924 = vstv %s7923
    %v7925 = vmul.f32 %v7922, %v7924
    %v7926 = vadd.f32 %v7815, %v7925
    %s7927 = scalar_lea.vmem [#allocation2], 520
    %v7928 = vld [vmem:[%s7927] sm:$0xff]
    %7930 = vrot.lane.b32.xlu0 %v7922, 112
    %v7931 = vpop.permute.xlu0 %7930
    %v7932 = vsel %vm703, %v7931, 0
    %7934 = vmatprep.subr.mxu0 0.0
    %7935 = vmatpush1.msra.mxu0 %v699
    %7936 = vmatprep.subr.mxu0 0.0
    %7937 = vmatpush1.msra.mxu0 0.0
    %7938 = vmatprep.subr.mxu0 0.0
    %7939 = vmatpush1.msra.mxu0 0.0
    %7940 = vmatprep.subr.mxu0 0.0
    %7941 = vmatpush1.msra.mxu0 0.0
    %7942 = vmatprep.subr.mxu0 0.0
    %7943 = vmatpush1.msra.mxu0 0.0
    %7944 = vmatprep.subr.mxu0 0.0
    %7945 = vmatpush1.msra.mxu0 0.0
    %7946 = vmatprep.subr.mxu0 0.0
    %7947 = vmatpush1.msra.mxu0 0.0
    %7948 = vmatprep.subr.mxu0 0.0
    %7949 = vmatpush1.msra.mxu0 0.0
    %7950 = vmatprep.subr.mxu0 0.0
    %7951 = vmatpush1.msra.mxu0 0.0
    %7952 = vmatprep.subr.mxu0 0.0
    %7953 = vmatpush1.msra.mxu0 0.0
    %7954 = vmatprep.subr.mxu0 0.0
    %7955 = vmatpush1.msra.mxu0 0.0
    %7956 = vmatprep.subr.mxu0 0.0
    %7957 = vmatpush1.msra.mxu0 0.0
    %7958 = vmatprep.subr.mxu0 0.0
    %7959 = vmatpush1.msra.mxu0 0.0
    %7960 = vmatprep.subr.mxu0 0.0
    %7961 = vmatpush1.msra.mxu0 0.0
    %7962 = vmatprep.subr.mxu0 0.0
    %7963 = vmatpush1.msra.mxu0 0.0
    %7964 = vmatprep.subr.mxu0 0.0
    %7965 = vmatpush1.msra.mxu0 0.0
    %7966 = vmatprep.subr.mxu0 0.0
    %7967 = vmatpush1.msra.mxu0 0.0
    %7968 = vmatprep.subr.mxu0 0.0
    %7969 = vmatpush1.msra.mxu0 0.0
    %7970 = vmatprep.subr.mxu0 0.0
    %7971 = vmatpush1.msra.mxu0 0.0
    %7972 = vmatprep.subr.mxu0 0.0
    %7973 = vmatpush1.msra.mxu0 0.0
    %7974 = vmatprep.subr.mxu0 0.0
    %7975 = vmatpush1.msra.mxu0 0.0
    %7976 = vmatprep.subr.mxu0 0.0
    %7977 = vmatpush1.msra.mxu0 0.0
    %7978 = vmatprep.subr.mxu0 0.0
    %7979 = vmatpush1.msra.mxu0 0.0
    %7980 = vmatprep.subr.mxu0 0.0
    %7981 = vmatpush1.msra.mxu0 0.0
    %7982 = vmatprep.subr.mxu0 0.0
    %7983 = vmatpush1.msra.mxu0 0.0
    %7984 = vmatprep.subr.mxu0 0.0
    %7985 = vmatpush1.msra.mxu0 0.0
    %7986 = vmatprep.subr.mxu0 0.0
    %7987 = vmatpush1.msra.mxu0 0.0
    %7988 = vmatprep.subr.mxu0 0.0
    %7989 = vmatpush1.msra.mxu0 0.0
    %7990 = vmatprep.subr.mxu0 0.0
    %7991 = vmatpush1.msra.mxu0 0.0
    %7992 = vmatprep.subr.mxu0 0.0
    %7993 = vmatpush1.msra.mxu0 0.0
    %7994 = vmatprep.subr.mxu0 0.0
    %7995 = vmatpush1.msra.mxu0 0.0
    %7996 = vmatprep.subr.mxu0 0.0
    %7997 = vmatpush1.msra.mxu0 0.0
    %7998 = vmatprep.mubr.f32.mxu0 0.0
    %7999 = vmatmul.mubr.f32.gmra.mrb[0].mxu0 %v7932
    %v8000 = vpop.f32.mrb[0].mxu0
    %v8001 = vadd.f32 0.0, %v8000
    %v8002 = vpop.f32.mrb[0].mxu0
    %8003 = vdwg.mxu0
    %v8004 = vadd.f32 %v7928, %v8001
    %v8005 = vxor.u32 %v8004, 2147483648
    %v8006 = vmul.f32 %v8005, 1.442695
    %v8007 = vpow.pop %v8006
    %v8008 = vadd.f32 %v8007, 1.0
    %v8009 = vrcp.pop %v8008
    %v8010 = vmul.f32 1.0, %v8009
    %v8011 = vadd.f32 %v8001, %v790
    %8013 = vrot.lane.b32.xlu0 %v8011, 112
    %v8014 = vpop.permute.xlu0 %8013
    %v8016 = vmul.f32 %v8010, %v8014
    %8018 = vrot.lane.b32.xlu0 %v8016, 16
    %v8019 = vpop.permute.xlu0 %8018
    %v8021 = vadd.f32 %v7928, %v8019
    %v8022 = vtanh.pop %v8021
    %v8023 = vsub.f32 %v7922, %v8022
    %8025 = vrot.lane.b32.xlu0 %v8023, 120
    %v8026 = vpop.permute.xlu0 %8025
    %v8028 = vmul.f32 %v8010, %v8026
    %8030 = vrot.lane.b32.xlu0 %v8028, 8
    %v8031 = vpop.permute.xlu0 %8030
    %v8033 = vadd.f32 %v8022, %v8031
    %s8034 = sld [smem:[#allocation5 + $0x41]]
    %v8035 = vstv %s8034
    %v8036 = vmul.f32 %v8033, %v8035
    %v8037 = vadd.f32 %v7926, %v8036
    %s8038 = scalar_lea.vmem [#allocation2], 528
    %v8039 = vld [vmem:[%s8038] sm:$0xff]
    %8041 = vrot.lane.b32.xlu0 %v8033, 112
    %v8042 = vpop.permute.xlu0 %8041
    %v8043 = vsel %vm703, %v8042, 0
    %8045 = vmatprep.subr.mxu0 0.0
    %8046 = vmatpush1.msra.mxu0 %v699
    %8047 = vmatprep.subr.mxu0 0.0
    %8048 = vmatpush1.msra.mxu0 0.0
    %8049 = vmatprep.subr.mxu0 0.0
    %8050 = vmatpush1.msra.mxu0 0.0
    %8051 = vmatprep.subr.mxu0 0.0
    %8052 = vmatpush1.msra.mxu0 0.0
    %8053 = vmatprep.subr.mxu0 0.0
    %8054 = vmatpush1.msra.mxu0 0.0
    %8055 = vmatprep.subr.mxu0 0.0
    %8056 = vmatpush1.msra.mxu0 0.0
    %8057 = vmatprep.subr.mxu0 0.0
    %8058 = vmatpush1.msra.mxu0 0.0
    %8059 = vmatprep.subr.mxu0 0.0
    %8060 = vmatpush1.msra.mxu0 0.0
    %8061 = vmatprep.subr.mxu0 0.0
    %8062 = vmatpush1.msra.mxu0 0.0
    %8063 = vmatprep.subr.mxu0 0.0
    %8064 = vmatpush1.msra.mxu0 0.0
    %8065 = vmatprep.subr.mxu0 0.0
    %8066 = vmatpush1.msra.mxu0 0.0
    %8067 = vmatprep.subr.mxu0 0.0
    %8068 = vmatpush1.msra.mxu0 0.0
    %8069 = vmatprep.subr.mxu0 0.0
    %8070 = vmatpush1.msra.mxu0 0.0
    %8071 = vmatprep.subr.mxu0 0.0
    %8072 = vmatpush1.msra.mxu0 0.0
    %8073 = vmatprep.subr.mxu0 0.0
    %8074 = vmatpush1.msra.mxu0 0.0
    %8075 = vmatprep.subr.mxu0 0.0
    %8076 = vmatpush1.msra.mxu0 0.0
    %8077 = vmatprep.subr.mxu0 0.0
    %8078 = vmatpush1.msra.mxu0 0.0
    %8079 = vmatprep.subr.mxu0 0.0
    %8080 = vmatpush1.msra.mxu0 0.0
    %8081 = vmatprep.subr.mxu0 0.0
    %8082 = vmatpush1.msra.mxu0 0.0
    %8083 = vmatprep.subr.mxu0 0.0
    %8084 = vmatpush1.msra.mxu0 0.0
    %8085 = vmatprep.subr.mxu0 0.0
    %8086 = vmatpush1.msra.mxu0 0.0
    %8087 = vmatprep.subr.mxu0 0.0
    %8088 = vmatpush1.msra.mxu0 0.0
    %8089 = vmatprep.subr.mxu0 0.0
    %8090 = vmatpush1.msra.mxu0 0.0
    %8091 = vmatprep.subr.mxu0 0.0
    %8092 = vmatpush1.msra.mxu0 0.0
    %8093 = vmatprep.subr.mxu0 0.0
    %8094 = vmatpush1.msra.mxu0 0.0
    %8095 = vmatprep.subr.mxu0 0.0
    %8096 = vmatpush1.msra.mxu0 0.0
    %8097 = vmatprep.subr.mxu0 0.0
    %8098 = vmatpush1.msra.mxu0 0.0
    %8099 = vmatprep.subr.mxu0 0.0
    %8100 = vmatpush1.msra.mxu0 0.0
    %8101 = vmatprep.subr.mxu0 0.0
    %8102 = vmatpush1.msra.mxu0 0.0
    %8103 = vmatprep.subr.mxu0 0.0
    %8104 = vmatpush1.msra.mxu0 0.0
    %8105 = vmatprep.subr.mxu0 0.0
    %8106 = vmatpush1.msra.mxu0 0.0
    %8107 = vmatprep.subr.mxu0 0.0
    %8108 = vmatpush1.msra.mxu0 0.0
    %8109 = vmatprep.mubr.f32.mxu0 0.0
    %8110 = vmatmul.mubr.f32.gmra.mrb[0].mxu0 %v8043
    %v8111 = vpop.f32.mrb[0].mxu0
    %v8112 = vadd.f32 0.0, %v8111
    %v8113 = vpop.f32.mrb[0].mxu0
    %8114 = vdwg.mxu0
    %v8115 = vadd.f32 %v8039, %v8112
    %v8116 = vxor.u32 %v8115, 2147483648
    %v8117 = vmul.f32 %v8116, 1.442695
    %v8118 = vpow.pop %v8117
    %v8119 = vadd.f32 %v8118, 1.0
    %v8120 = vrcp.pop %v8119
    %v8121 = vmul.f32 1.0, %v8120
    %v8122 = vadd.f32 %v8112, %v790
    %8124 = vrot.lane.b32.xlu0 %v8122, 112
    %v8125 = vpop.permute.xlu0 %8124
    %v8127 = vmul.f32 %v8121, %v8125
    %8129 = vrot.lane.b32.xlu0 %v8127, 16
    %v8130 = vpop.permute.xlu0 %8129
    %v8132 = vadd.f32 %v8039, %v8130
    %v8133 = vtanh.pop %v8132
    %v8134 = vsub.f32 %v8033, %v8133
    %8136 = vrot.lane.b32.xlu0 %v8134, 120
    %v8137 = vpop.permute.xlu0 %8136
    %v8139 = vmul.f32 %v8121, %v8137
    %8141 = vrot.lane.b32.xlu0 %v8139, 8
    %v8142 = vpop.permute.xlu0 %8141
    %v8144 = vadd.f32 %v8133, %v8142
    %s8145 = sld [smem:[#allocation5 + $0x42]]
    %v8146 = vstv %s8145
    %v8147 = vmul.f32 %v8144, %v8146
    %v8148 = vadd.f32 %v8037, %v8147
    %s8149 = scalar_lea.vmem [#allocation2], 536
    %v8150 = vld [vmem:[%s8149] sm:$0xff]
    %8152 = vrot.lane.b32.xlu0 %v8144, 112
    %v8153 = vpop.permute.xlu0 %8152
    %v8154 = vsel %vm703, %v8153, 0
    %8156 = vmatprep.subr.mxu0 0.0
    %8157 = vmatpush1.msra.mxu0 %v699
    %8158 = vmatprep.subr.mxu0 0.0
    %8159 = vmatpush1.msra.mxu0 0.0
    %8160 = vmatprep.subr.mxu0 0.0
    %8161 = vmatpush1.msra.mxu0 0.0
    %8162 = vmatprep.subr.mxu0 0.0
    %8163 = vmatpush1.msra.mxu0 0.0
    %8164 = vmatprep.subr.mxu0 0.0
    %8165 = vmatpush1.msra.mxu0 0.0
    %8166 = vmatprep.subr.mxu0 0.0
    %8167 = vmatpush1.msra.mxu0 0.0
    %8168 = vmatprep.subr.mxu0 0.0
    %8169 = vmatpush1.msra.mxu0 0.0
    %8170 = vmatprep.subr.mxu0 0.0
    %8171 = vmatpush1.msra.mxu0 0.0
    %8172 = vmatprep.subr.mxu0 0.0
    %8173 = vmatpush1.msra.mxu0 0.0
    %8174 = vmatprep.subr.mxu0 0.0
    %8175 = vmatpush1.msra.mxu0 0.0
    %8176 = vmatprep.subr.mxu0 0.0
    %8177 = vmatpush1.msra.mxu0 0.0
    %8178 = vmatprep.subr.mxu0 0.0
    %8179 = vmatpush1.msra.mxu0 0.0
    %8180 = vmatprep.subr.mxu0 0.0
    %8181 = vmatpush1.msra.mxu0 0.0
    %8182 = vmatprep.subr.mxu0 0.0
    %8183 = vmatpush1.msra.mxu0 0.0
    %8184 = vmatprep.subr.mxu0 0.0
    %8185 = vmatpush1.msra.mxu0 0.0
    %8186 = vmatprep.subr.mxu0 0.0
    %8187 = vmatpush1.msra.mxu0 0.0
    %8188 = vmatprep.subr.mxu0 0.0
    %8189 = vmatpush1.msra.mxu0 0.0
    %8190 = vmatprep.subr.mxu0 0.0
    %8191 = vmatpush1.msra.mxu0 0.0
    %8192 = vmatprep.subr.mxu0 0.0
    %8193 = vmatpush1.msra.mxu0 0.0
    %8194 = vmatprep.subr.mxu0 0.0
    %8195 = vmatpush1.msra.mxu0 0.0
    %8196 = vmatprep.subr.mxu0 0.0
    %8197 = vmatpush1.msra.mxu0 0.0
    %8198 = vmatprep.subr.mxu0 0.0
    %8199 = vmatpush1.msra.mxu0 0.0
    %8200 = vmatprep.subr.mxu0 0.0
    %8201 = vmatpush1.msra.mxu0 0.0
    %8202 = vmatprep.subr.mxu0 0.0
    %8203 = vmatpush1.msra.mxu0 0.0
    %8204 = vmatprep.subr.mxu0 0.0
    %8205 = vmatpush1.msra.mxu0 0.0
    %8206 = vmatprep.subr.mxu0 0.0
    %8207 = vmatpush1.msra.mxu0 0.0
    %8208 = vmatprep.subr.mxu0 0.0
    %8209 = vmatpush1.msra.mxu0 0.0
    %8210 = vmatprep.subr.mxu0 0.0
    %8211 = vmatpush1.msra.mxu0 0.0
    %8212 = vmatprep.subr.mxu0 0.0
    %8213 = vmatpush1.msra.mxu0 0.0
    %8214 = vmatprep.subr.mxu0 0.0
    %8215 = vmatpush1.msra.mxu0 0.0
    %8216 = vmatprep.subr.mxu0 0.0
    %8217 = vmatpush1.msra.mxu0 0.0
    %8218 = vmatprep.subr.mxu0 0.0
    %8219 = vmatpush1.msra.mxu0 0.0
    %8220 = vmatprep.mubr.f32.mxu0 0.0
    %8221 = vmatmul.mubr.f32.gmra.mrb[0].mxu0 %v8154
    %v8222 = vpop.f32.mrb[0].mxu0
    %v8223 = vadd.f32 0.0, %v8222
    %v8224 = vpop.f32.mrb[0].mxu0
    %8225 = vdwg.mxu0
    %v8226 = vadd.f32 %v8150, %v8223
    %v8227 = vxor.u32 %v8226, 2147483648
    %v8228 = vmul.f32 %v8227, 1.442695
    %v8229 = vpow.pop %v8228
    %v8230 = vadd.f32 %v8229, 1.0
    %v8231 = vrcp.pop %v8230
    %v8232 = vmul.f32 1.0, %v8231
    %v8233 = vadd.f32 %v8223, %v790
    %8235 = vrot.lane.b32.xlu0 %v8233, 112
    %v8236 = vpop.permute.xlu0 %8235
    %v8238 = vmul.f32 %v8232, %v8236
    %8240 = vrot.lane.b32.xlu0 %v8238, 16
    %v8241 = vpop.permute.xlu0 %8240
    %v8243 = vadd.f32 %v8150, %v8241
    %v8244 = vtanh.pop %v8243
    %v8245 = vsub.f32 %v8144, %v8244
    %8247 = vrot.lane.b32.xlu0 %v8245, 120
    %v8248 = vpop.permute.xlu0 %8247
    %v8250 = vmul.f32 %v8232, %v8248
    %8252 = vrot.lane.b32.xlu0 %v8250, 8
    %v8253 = vpop.permute.xlu0 %8252
    %v8255 = vadd.f32 %v8244, %v8253
    %s8256 = sld [smem:[#allocation5 + $0x43]]
    %v8257 = vstv %s8256
    %v8258 = vmul.f32 %v8255, %v8257
    %v8259 = vadd.f32 %v8148, %v8258
    %s8260 = scalar_lea.vmem [#allocation2], 544
    %v8261 = vld [vmem:[%s8260] sm:$0xff]
    %8263 = vrot.lane.b32.xlu0 %v8255, 112
    %v8264 = vpop.permute.xlu0 %8263
    %v8265 = vsel %vm703, %v8264, 0
    %8267 = vmatprep.subr.mxu0 0.0
    %8268 = vmatpush1.msra.mxu0 %v699
    %8269 = vmatprep.subr.mxu0 0.0
    %8270 = vmatpush1.msra.mxu0 0.0
    %8271 = vmatprep.subr.mxu0 0.0
    %8272 = vmatpush1.msra.mxu0 0.0
    %8273 = vmatprep.subr.mxu0 0.0
    %8274 = vmatpush1.msra.mxu0 0.0
    %8275 = vmatprep.subr.mxu0 0.0
    %8276 = vmatpush1.msra.mxu0 0.0
    %8277 = vmatprep.subr.mxu0 0.0
    %8278 = vmatpush1.msra.mxu0 0.0
    %8279 = vmatprep.subr.mxu0 0.0
    %8280 = vmatpush1.msra.mxu0 0.0
    %8281 = vmatprep.subr.mxu0 0.0
    %8282 = vmatpush1.msra.mxu0 0.0
    %8283 = vmatprep.subr.mxu0 0.0
    %8284 = vmatpush1.msra.mxu0 0.0
    %8285 = vmatprep.subr.mxu0 0.0
    %8286 = vmatpush1.msra.mxu0 0.0
    %8287 = vmatprep.subr.mxu0 0.0
    %8288 = vmatpush1.msra.mxu0 0.0
    %8289 = vmatprep.subr.mxu0 0.0
    %8290 = vmatpush1.msra.mxu0 0.0
    %8291 = vmatprep.subr.mxu0 0.0
    %8292 = vmatpush1.msra.mxu0 0.0
    %8293 = vmatprep.subr.mxu0 0.0
    %8294 = vmatpush1.msra.mxu0 0.0
    %8295 = vmatprep.subr.mxu0 0.0
    %8296 = vmatpush1.msra.mxu0 0.0
    %8297 = vmatprep.subr.mxu0 0.0
    %8298 = vmatpush1.msra.mxu0 0.0
    %8299 = vmatprep.subr.mxu0 0.0
    %8300 = vmatpush1.msra.mxu0 0.0
    %8301 = vmatprep.subr.mxu0 0.0
    %8302 = vmatpush1.msra.mxu0 0.0
    %8303 = vmatprep.subr.mxu0 0.0
    %8304 = vmatpush1.msra.mxu0 0.0
    %8305 = vmatprep.subr.mxu0 0.0
    %8306 = vmatpush1.msra.mxu0 0.0
    %8307 = vmatprep.subr.mxu0 0.0
    %8308 = vmatpush1.msra.mxu0 0.0
    %8309 = vmatprep.subr.mxu0 0.0
    %8310 = vmatpush1.msra.mxu0 0.0
    %8311 = vmatprep.subr.mxu0 0.0
    %8312 = vmatpush1.msra.mxu0 0.0
    %8313 = vmatprep.subr.mxu0 0.0
    %8314 = vmatpush1.msra.mxu0 0.0
    %8315 = vmatprep.subr.mxu0 0.0
    %8316 = vmatpush1.msra.mxu0 0.0
    %8317 = vmatprep.subr.mxu0 0.0
    %8318 = vmatpush1.msra.mxu0 0.0
    %8319 = vmatprep.subr.mxu0 0.0
    %8320 = vmatpush1.msra.mxu0 0.0
    %8321 = vmatprep.subr.mxu0 0.0
    %8322 = vmatpush1.msra.mxu0 0.0
    %8323 = vmatprep.subr.mxu0 0.0
    %8324 = vmatpush1.msra.mxu0 0.0
    %8325 = vmatprep.subr.mxu0 0.0
    %8326 = vmatpush1.msra.mxu0 0.0
    %8327 = vmatprep.subr.mxu0 0.0
    %8328 = vmatpush1.msra.mxu0 0.0
    %8329 = vmatprep.subr.mxu0 0.0
    %8330 = vmatpush1.msra.mxu0 0.0
    %8331 = vmatprep.mubr.f32.mxu0 0.0
    %8332 = vmatmul.mubr.f32.gmra.mrb[0].mxu0 %v8265
    %v8333 = vpop.f32.mrb[0].mxu0
    %v8334 = vadd.f32 0.0, %v8333
    %v8335 = vpop.f32.mrb[0].mxu0
    %8336 = vdwg.mxu0
    %v8337 = vadd.f32 %v8261, %v8334
    %v8338 = vxor.u32 %v8337, 2147483648
    %v8339 = vmul.f32 %v8338, 1.442695
    %v8340 = vpow.pop %v8339
    %v8341 = vadd.f32 %v8340, 1.0
    %v8342 = vrcp.pop %v8341
    %v8343 = vmul.f32 1.0, %v8342
    %v8344 = vadd.f32 %v8334, %v790
    %8346 = vrot.lane.b32.xlu0 %v8344, 112
    %v8347 = vpop.permute.xlu0 %8346
    %v8349 = vmul.f32 %v8343, %v8347
    %8351 = vrot.lane.b32.xlu0 %v8349, 16
    %v8352 = vpop.permute.xlu0 %8351
    %v8354 = vadd.f32 %v8261, %v8352
    %v8355 = vtanh.pop %v8354
    %v8356 = vsub.f32 %v8255, %v8355
    %8358 = vrot.lane.b32.xlu0 %v8356, 120
    %v8359 = vpop.permute.xlu0 %8358
    %v8361 = vmul.f32 %v8343, %v8359
    %8363 = vrot.lane.b32.xlu0 %v8361, 8
    %v8364 = vpop.permute.xlu0 %8363
    %v8366 = vadd.f32 %v8355, %v8364
    %s8367 = sld [smem:[#allocation5 + $0x44]]
    %v8368 = vstv %s8367
    %v8369 = vmul.f32 %v8366, %v8368
    %v8370 = vadd.f32 %v8259, %v8369
    %s8371 = scalar_lea.vmem [#allocation2], 552
    %v8372 = vld [vmem:[%s8371] sm:$0xff]
    %8374 = vrot.lane.b32.xlu0 %v8366, 112
    %v8375 = vpop.permute.xlu0 %8374
    %v8376 = vsel %vm703, %v8375, 0
    %8378 = vmatprep.subr.mxu0 0.0
    %8379 = vmatpush1.msra.mxu0 %v699
    %8380 = vmatprep.subr.mxu0 0.0
    %8381 = vmatpush1.msra.mxu0 0.0
    %8382 = vmatprep.subr.mxu0 0.0
    %8383 = vmatpush1.msra.mxu0 0.0
    %8384 = vmatprep.subr.mxu0 0.0
    %8385 = vmatpush1.msra.mxu0 0.0
    %8386 = vmatprep.subr.mxu0 0.0
    %8387 = vmatpush1.msra.mxu0 0.0
    %8388 = vmatprep.subr.mxu0 0.0
    %8389 = vmatpush1.msra.mxu0 0.0
    %8390 = vmatprep.subr.mxu0 0.0
    %8391 = vmatpush1.msra.mxu0 0.0
    %8392 = vmatprep.subr.mxu0 0.0
    %8393 = vmatpush1.msra.mxu0 0.0
    %8394 = vmatprep.subr.mxu0 0.0
    %8395 = vmatpush1.msra.mxu0 0.0
    %8396 = vmatprep.subr.mxu0 0.0
    %8397 = vmatpush1.msra.mxu0 0.0
    %8398 = vmatprep.subr.mxu0 0.0
    %8399 = vmatpush1.msra.mxu0 0.0
    %8400 = vmatprep.subr.mxu0 0.0
    %8401 = vmatpush1.msra.mxu0 0.0
    %8402 = vmatprep.subr.mxu0 0.0
    %8403 = vmatpush1.msra.mxu0 0.0
    %8404 = vmatprep.subr.mxu0 0.0
    %8405 = vmatpush1.msra.mxu0 0.0
    %8406 = vmatprep.subr.mxu0 0.0
    %8407 = vmatpush1.msra.mxu0 0.0
    %8408 = vmatprep.subr.mxu0 0.0
    %8409 = vmatpush1.msra.mxu0 0.0
    %8410 = vmatprep.subr.mxu0 0.0
    %8411 = vmatpush1.msra.mxu0 0.0
    %8412 = vmatprep.subr.mxu0 0.0
    %8413 = vmatpush1.msra.mxu0 0.0
    %8414 = vmatprep.subr.mxu0 0.0
    %8415 = vmatpush1.msra.mxu0 0.0
    %8416 = vmatprep.subr.mxu0 0.0
    %8417 = vmatpush1.msra.mxu0 0.0
    %8418 = vmatprep.subr.mxu0 0.0
    %8419 = vmatpush1.msra.mxu0 0.0
    %8420 = vmatprep.subr.mxu0 0.0
    %8421 = vmatpush1.msra.mxu0 0.0
    %8422 = vmatprep.subr.mxu0 0.0
    %8423 = vmatpush1.msra.mxu0 0.0
    %8424 = vmatprep.subr.mxu0 0.0
    %8425 = vmatpush1.msra.mxu0 0.0
    %8426 = vmatprep.subr.mxu0 0.0
    %8427 = vmatpush1.msra.mxu0 0.0
    %8428 = vmatprep.subr.mxu0 0.0
    %8429 = vmatpush1.msra.mxu0 0.0
    %8430 = vmatprep.subr.mxu0 0.0
    %8431 = vmatpush1.msra.mxu0 0.0
    %8432 = vmatprep.subr.mxu0 0.0
    %8433 = vmatpush1.msra.mxu0 0.0
    %8434 = vmatprep.subr.mxu0 0.0
    %8435 = vmatpush1.msra.mxu0 0.0
    %8436 = vmatprep.subr.mxu0 0.0
    %8437 = vmatpush1.msra.mxu0 0.0
    %8438 = vmatprep.subr.mxu0 0.0
    %8439 = vmatpush1.msra.mxu0 0.0
    %8440 = vmatprep.subr.mxu0 0.0
    %8441 = vmatpush1.msra.mxu0 0.0
    %8442 = vmatprep.mubr.f32.mxu0 0.0
    %8443 = vmatmul.mubr.f32.gmra.mrb[0].mxu0 %v8376
    %v8444 = vpop.f32.mrb[0].mxu0
    %v8445 = vadd.f32 0.0, %v8444
    %v8446 = vpop.f32.mrb[0].mxu0
    %8447 = vdwg.mxu0
    %v8448 = vadd.f32 %v8372, %v8445
    %v8449 = vxor.u32 %v8448, 2147483648
    %v8450 = vmul.f32 %v8449, 1.442695
    %v8451 = vpow.pop %v8450
    %v8452 = vadd.f32 %v8451, 1.0
    %v8453 = vrcp.pop %v8452
    %v8454 = vmul.f32 1.0, %v8453
    %v8455 = vadd.f32 %v8445, %v790
    %8457 = vrot.lane.b32.xlu0 %v8455, 112
    %v8458 = vpop.permute.xlu0 %8457
    %v8460 = vmul.f32 %v8454, %v8458
    %8462 = vrot.lane.b32.xlu0 %v8460, 16
    %v8463 = vpop.permute.xlu0 %8462
    %v8465 = vadd.f32 %v8372, %v8463
    %v8466 = vtanh.pop %v8465
    %v8467 = vsub.f32 %v8366, %v8466
    %8469 = vrot.lane.b32.xlu0 %v8467, 120
    %v8470 = vpop.permute.xlu0 %8469
    %v8472 = vmul.f32 %v8454, %v8470
    %8474 = vrot.lane.b32.xlu0 %v8472, 8
    %v8475 = vpop.permute.xlu0 %8474
    %v8477 = vadd.f32 %v8466, %v8475
    %s8478 = sld [smem:[#allocation5 + $0x45]]
    %v8479 = vstv %s8478
    %v8480 = vmul.f32 %v8477, %v8479
    %v8481 = vadd.f32 %v8370, %v8480
    %s8482 = sld [smem:[#allocation3]]
    %v8483 = vstv %s8482
    %v8484 = vadd.f32 %v8481, %v8483
    %v8485 = vld [vmem:[%s9] sm:$0xff]
    %v8486 = vld [vmem:[#allocation4] sm:$0x1]
    %v8488 = vlaneseq
    %v8489 = vshrl.u32 %v8488, 7
    %v8490 = vsub.s32 0, %v8489
    %v8491 = vrot.slane %v8486, %v8490
    %8494 = vrot.lane.b32.xlu0 %v8484, 112
    %v8495 = vpop.permute.xlu0 %8494
    %v8496 = vsel %vm703, %v8495, 0
    %8498 = vmatprep.subr.mxu0 0.0
    %8499 = vmatpush1.msra.mxu0 %v8485
    %8500 = vmatprep.subr.mxu0 0.0
    %8501 = vmatpush1.msra.mxu0 0.0
    %8502 = vmatprep.subr.mxu0 0.0
    %8503 = vmatpush1.msra.mxu0 0.0
    %8504 = vmatprep.subr.mxu0 0.0
    %8505 = vmatpush1.msra.mxu0 0.0
    %8506 = vmatprep.subr.mxu0 0.0
    %8507 = vmatpush1.msra.mxu0 0.0
    %8508 = vmatprep.subr.mxu0 0.0
    %8509 = vmatpush1.msra.mxu0 0.0
    %8510 = vmatprep.subr.mxu0 0.0
    %8511 = vmatpush1.msra.mxu0 0.0
    %8512 = vmatprep.subr.mxu0 0.0
    %8513 = vmatpush1.msra.mxu0 0.0
    %8514 = vmatprep.subr.mxu0 0.0
    %8515 = vmatpush1.msra.mxu0 0.0
    %8516 = vmatprep.subr.mxu0 0.0
    %8517 = vmatpush1.msra.mxu0 0.0
    %8518 = vmatprep.subr.mxu0 0.0
    %8519 = vmatpush1.msra.mxu0 0.0
    %8520 = vmatprep.subr.mxu0 0.0
    %8521 = vmatpush1.msra.mxu0 0.0
    %8522 = vmatprep.subr.mxu0 0.0
    %8523 = vmatpush1.msra.mxu0 0.0
    %8524 = vmatprep.subr.mxu0 0.0
    %8525 = vmatpush1.msra.mxu0 0.0
    %8526 = vmatprep.subr.mxu0 0.0
    %8527 = vmatpush1.msra.mxu0 0.0
    %8528 = vmatprep.subr.mxu0 0.0
    %8529 = vmatpush1.msra.mxu0 0.0
    %8530 = vmatprep.subr.mxu0 0.0
    %8531 = vmatpush1.msra.mxu0 0.0
    %8532 = vmatprep.subr.mxu0 0.0
    %8533 = vmatpush1.msra.mxu0 0.0
    %8534 = vmatprep.subr.mxu0 0.0
    %8535 = vmatpush1.msra.mxu0 0.0
    %8536 = vmatprep.subr.mxu0 0.0
    %8537 = vmatpush1.msra.mxu0 0.0
    %8538 = vmatprep.subr.mxu0 0.0
    %8539 = vmatpush1.msra.mxu0 0.0
    %8540 = vmatprep.subr.mxu0 0.0
    %8541 = vmatpush1.msra.mxu0 0.0
    %8542 = vmatprep.subr.mxu0 0.0
    %8543 = vmatpush1.msra.mxu0 0.0
    %8544 = vmatprep.subr.mxu0 0.0
    %8545 = vmatpush1.msra.mxu0 0.0
    %8546 = vmatprep.subr.mxu0 0.0
    %8547 = vmatpush1.msra.mxu0 0.0
    %8548 = vmatprep.subr.mxu0 0.0
    %8549 = vmatpush1.msra.mxu0 0.0
    %8550 = vmatprep.subr.mxu0 0.0
    %8551 = vmatpush1.msra.mxu0 0.0
    %8552 = vmatprep.subr.mxu0 0.0
    %8553 = vmatpush1.msra.mxu0 0.0
    %8554 = vmatprep.subr.mxu0 0.0
    %8555 = vmatpush1.msra.mxu0 0.0
    %8556 = vmatprep.subr.mxu0 0.0
    %8557 = vmatpush1.msra.mxu0 0.0
    %8558 = vmatprep.subr.mxu0 0.0
    %8559 = vmatpush1.msra.mxu0 0.0
    %8560 = vmatprep.subr.mxu0 0.0
    %8561 = vmatpush1.msra.mxu0 0.0
    %8562 = vmatprep.mubr.f32.mxu0 0.0
    %8563 = vmatmul.mubr.f32.gmra.mrb[0].mxu0 %v8496
    %v8564 = vpop.f32.mrb[0].mxu0
    %v8565 = vadd.f32 %v8491, %v8564
    %v8566 = vpop.f32.mrb[0].mxu0
    %8567 = vdwg.mxu0
    %v8568 = vld [vmem:[%s1] sm:$0xff]
    %v8569 = vmul.f32 %v8568, 5.0
    %v8570 = vsub.f32 %v8565, %v8569
    %vm8571 = vcmask 7168
    %8572 = vst.msk [vmem:[%s11] sm:$0xff] %vm8571, %v8570
    // Predicated region
    $region50: #{tpu_custom_call.1} parent=1 // pred_check
      _
    $region51: #{tpu_custom_call.1} parent=1 // pred_check_branch
      %8574 = sbr.rel (0) target = $region53
    $region52: #{tpu_custom_call.1} parent=1 // pred_region
      _
    $region53: #{tpu_custom_call.1} parent=1 // pred_fallthru
      _
    // Predicated region
    $region54: #{tpu_custom_call.1} parent=1 // pred_check
      _
    $region55: #{tpu_custom_call.1} parent=1 // pred_check_branch
      %8576 = sbr.rel (0) target = $region57
    $region56: #{tpu_custom_call.1} parent=1 // pred_region
      _
    $region57: #{tpu_custom_call.1} parent=1 // pred_fallthru
      _
    %8577 = vsyncpa [#allocation6], 1

</llo_original>
